<compile_context>
chip_gen: v7x
topology: tpu7x:2x2x1
jax: 0.10.0
libtpu: 0.0.40
codegen_flags: <defaults>
</compile_context>

<pallas_src>
import jax
import jax.numpy as jnp
from jax import lax
from jax.experimental import pallas as pl
from jax.experimental.pallas import tpu as pltpu


def _layer_specs(cfg, H, W, Cin):
    """Static per-layer shape bookkeeping (all Python ints)."""
    specs = []
    h, w, cin = H, W, Cin
    for i in range(cfg["num_layers"]):
        k = cfg["kernel_size_list"][i]
        s = cfg["stride_list"][i]
        p = cfg["padding_list"][i]
        pk = cfg["pooling_kernel_size_list"][i]
        ps = cfg["pooling_stride_list"][i]
        # TODO(synk): overlapping pooling (stride != kernel) would need a window
        # loop instead of the reshape+reduce trick used below.
        assert ps == pk, "kernel assumes pooling stride == pooling kernel size"
        cout = cfg["out_channels_list"][i]
        ho = (h + 2 * p - k) // s + 1
        wo = (w + 2 * p - k) // s + 1
        hp = (ho - pk) // ps + 1
        wp = (wo - pk) // ps + 1
        specs.append(dict(KH=k, KW=k, Cin=cin, Cout=cout, stride=s, pad=p,
                          Hin=h, Win=w, Ho=ho, Wo=wo, pool_k=pk,
                          Hp_out=hp, Wp_out=wp,
                          pool_method=cfg["pooling_method"]))
        h, w, cin = hp, wp, cout
    return specs, (h, w, cin)


def _build_fused_kernel(specs, N):
    """Fused [Conv2d -> ReLU -> Pool] x num_layers kernel for the whole batch."""
    L = len(specs)

    def kernel(*refs):
        # refs: x, (w0, b0), (w1, b1), ..., out, (pad0, patch0), (pad1, patch1), ...
        x_ref = refs[0]
        o_ref = refs[1 + 2 * L]
        scratch = refs[2 + 2 * L:]

        act = x_ref[...]                                    # (N, H, W, Cin) f32
        for li, sp in enumerate(specs):
            KH, KW = sp["KH"], sp["KW"]
            Cin, Cout = sp["Cin"], sp["Cout"]
            s, p = sp["stride"], sp["pad"]
            H, W = sp["Hin"], sp["Win"]
            Ho, Wo = sp["Ho"], sp["Wo"]
            pk = sp["pool_k"]
            Hp, Wp = sp["Hp_out"], sp["Wp_out"]
            K = KH * KW * Cin

            w_ref = refs[1 + 2 * li]                        # (K, Cout)
            b_ref = refs[2 + 2 * li]                        # (1, Cout)
            pad_ref = scratch[2 * li]                       # (N, H+2p, W+2p, Cin)
            patch_ref = scratch[2 * li + 1]                 # (N, Ho, Wo, K)

            # ---- zero-padding inside the kernel (VMEM scratch) ----
            if p > 0:
                pad_ref[...] = jnp.zeros(pad_ref.shape, pad_ref.dtype)
            pad_ref[:, p:p + H, p:p + W, :] = act

            # ---- im2col: KH*KW contiguous slice copies (no strided ref reads) ----
            for kh in range(KH):
                for kw in range(KW):
                    c0 = (kh * KW + kw) * Cin
                    if s == 1:
                        src = pad_ref[:, kh:kh + Ho, kw:kw + Wo, :]
                    else:
                        # general conv stride (value-level strided slice; not hit
                        # by the test config, traced only when stride > 1)
                        src = pad_ref[:, kh:kh + (Ho - 1) * s + 1,
                                      kw:kw + (Wo - 1) * s + 1, :][:, ::s, ::s, :]
                    patch_ref[:, :, :, c0:c0 + Cin] = src

            # ---- Conv2d as ONE MXU matmul + bias + ReLU ----
            pt = patch_ref[...].reshape(N * Ho * Wo, K)
            y = jnp.dot(pt, w_ref[...], preferred_element_type=jnp.float32)
            y = jnp.maximum(y + b_ref[...], 0.0)            # (N*Ho*Wo, Cout)

            # ---- MaxPool2d / AvgPool2d (kernel == stride) via reshape + reduce ----
            y = y.reshape(N, Ho, Wo, Cout)
            if (Hp * pk != Ho) or (Wp * pk != Wo):          # drop trailing rows/cols
                y = y[:, :Hp * pk, :Wp * pk, :]
            # H direction: splits only a leading dim -> free, then reduce.
            yh = y.reshape(N, Hp, pk, Wo, Cout)
            if sp["pool_method"] == "max":
                yh = jnp.max(yh, axis=2)                    # (N, Hp, Wo, Cout)
            else:
                yh = jnp.sum(yh, axis=2)
            # W direction: one sublane regroup, then reduce.
            yw = yh.reshape(N, Hp, Wp, pk, Cout)
            if sp["pool_method"] == "max":
                act = jnp.max(yw, axis=3)                   # (N, Hp, Wp, Cout)
            else:
                act = jnp.sum(yw, axis=3) * (1.0 / (pk * pk))
            # TODO(synk): nn.Dropout is identity at inference (dropout_positions is
            # empty here); train-mode masking would use pltpu.prng_random_bits.

        o_ref[...] = act.astype(o_ref.dtype)                # one bulk store

    return kernel


def cnn_block_forward(x_nchw, params, cfg):
    """Forward pass of CNNBlock. Input/output are NCHW (PyTorch convention)."""
    x = x_nchw
    if x.ndim == 3:                                   # mirrors `x = x.unsqueeze(1)`
        x = x[:, None, :, :]
    x = jnp.transpose(x, (0, 2, 3, 1)).astype(jnp.float32)   # NCHW -> NHWC
    N, H, W, C = x.shape

    specs, (Hf, Wf, Cf) = _layer_specs(cfg, H, W, C)

    inputs = [x]
    in_specs = [pl.BlockSpec((N, H, W, C), lambda i: (0, 0, 0, 0))]
    scratch_shapes = []
    for (wgt, b), sp in zip(params, specs):
        K = sp["KH"] * sp["KW"] * sp["Cin"]
        # Flatten HWIO weights to (KH*KW*Cin, Cout), matching patch column order.
        wf = wgt.astype(jnp.float32).reshape(K, sp["Cout"])
        bf = b.astype(jnp.float32).reshape(1, sp["Cout"])
        inputs += [wf, bf]
        in_specs += [pl.BlockSpec((K, sp["Cout"]), lambda i: (0, 0)),
                     pl.BlockSpec((1, sp["Cout"]), lambda i: (0, 0))]
        Hpad = sp["Hin"] + 2 * sp["pad"]
        Wpad = sp["Win"] + 2 * sp["pad"]
        scratch_shapes += [pltpu.VMEM((N, Hpad, Wpad, sp["Cin"]), jnp.float32),
                           pltpu.VMEM((N, sp["Ho"], sp["Wo"], K), jnp.float32)]
        # TODO(synk): for large images/channel counts, tile Ho into pool-aligned row
        # bands so scratch fits v7x's smaller (64 MiB) VMEM; trivial at these sizes.

    out_shape = (N, Hf, Wf, Cf)
    kernel = _build_fused_kernel(specs, N)

    y = pl.pallas_call(
        kernel,
        out_shape=jax.ShapeDtypeStruct(out_shape, jnp.float32),
        grid=(1,),                     # whole batch in one step: no per-step overhead
        in_specs=in_specs,
        out_specs=pl.BlockSpec(out_shape, lambda i: (0, 0, 0, 0)),
        scratch_shapes=scratch_shapes,
        compiler_params=pltpu.CompilerParams(dimension_semantics=("arbitrary",)),
    )(*inputs)
    return jnp.transpose(y, (0, 3, 1, 2))              # NHWC -> NCHW


def init_params(key, cfg):
    """Deterministic parameter init matching nn.Conv2d shapes (stored as HWIO)."""
    params = []
    cin = cfg["input_channels"]
    for i in range(cfg["num_layers"]):
        cout = cfg["out_channels_list"][i]
        k = cfg["kernel_size_list"][i]
        key, kw_key, kb_key = jax.random.split(key, 3)
        fan_in = cin * k * k
        w = jax.random.normal(kw_key, (k, k, cin, cout), jnp.float32) / jnp.sqrt(fan_in)
        b = jax.random.normal(kb_key, (cout,), jnp.float32) * 0.01
        params.append((w, b))
        cin = cout
    return params


def reference_forward(x_nchw, params, cfg):
    """Pure-JAX (XLA) reference for validation."""
    x = x_nchw
    if x.ndim == 3:
        x = x[:, None, :, :]
    x = jnp.transpose(x, (0, 2, 3, 1)).astype(jnp.float32)
    for i, (w, b) in enumerate(params):
        s = cfg["stride_list"][i]
        p = cfg["padding_list"][i]
        y = lax.conv_general_dilated(x, w, (s, s), [(p, p), (p, p)],
                                     dimension_numbers=("NHWC", "HWIO", "NHWC"))
        y = jnp.maximum(y + b.reshape(1, 1, 1, -1), 0.0)
        pk = cfg["pooling_kernel_size_list"][i]
        ps = cfg["pooling_stride_list"][i]
        if cfg["pooling_method"] == "max":
            y = lax.reduce_window(y, -jnp.inf, lax.max,
                                  (1, pk, pk, 1), (1, ps, ps, 1), "VALID")
        else:
            y = lax.reduce_window(y, 0.0, lax.add,
                                  (1, pk, pk, 1), (1, ps, ps, 1), "VALID") / (pk * pk)
        x = y
    return jnp.transpose(x, (0, 3, 1, 2))


if __name__ == "__main__":
    # Synthetic config consistent with CNNBlock.__init__
    cfg = dict(
        input_channels=4,
        num_layers=2,
        out_channels_list=[8, 8],
        kernel_size_list=[3, 3],
        stride_list=[1, 1],
        padding_list=[1, 1],
        pooling_method="max",
        pooling_kernel_size_list=[2, 2],
        pooling_stride_list=[2, 2],
        dropout_positions=[],
        dropout_rate=0.0,
    )

    key = jax.random.PRNGKey(0)
    kx, kp = jax.random.split(key)
    x = jax.random.normal(kx, (2, 4, 16, 16), jnp.float32)   # NCHW, like PyTorch
    params = init_params(kp, cfg)

    out = jax.block_until_ready(cnn_block_forward(x, params, cfg))
    ref = jax.block_until_ready(reference_forward(x, params, cfg))

    assert out.shape == ref.shape == (2, 8, 4, 4), (out.shape, ref.shape)
    max_err = float(jnp.max(jnp.abs(out - ref)))
    assert jnp.allclose(out, ref, atol=1e-4, rtol=1e-4), max_err

    print("KERNEL_OK")
</pallas_src>

<mosaic_0001>
module attributes {stable_mosaic.version = 11 : i64} {
  func.func @kernel(%arg0: i32, %arg1: memref<2x16x16x4xf32, #tpu.memory_space<vmem>>, %arg2: memref<36x8xf32, #tpu.memory_space<vmem>>, %arg3: memref<1x8xf32, #tpu.memory_space<vmem>>, %arg4: memref<72x8xf32, #tpu.memory_space<vmem>>, %arg5: memref<1x8xf32, #tpu.memory_space<vmem>>, %arg6: memref<2x4x4x8xf32, #tpu.memory_space<vmem>>, %arg7: memref<2x18x18x4xf32, #tpu.memory_space<vmem>>, %arg8: memref<2x16x16x36xf32, #tpu.memory_space<vmem>>, %arg9: memref<2x10x10x8xf32, #tpu.memory_space<vmem>>, %arg10: memref<2x8x8x72xf32, #tpu.memory_space<vmem>>) attributes {dimension_semantics = [#tpu.dimension_semantics<arbitrary>], iteration_bounds = array<i64: 1>, scalar_prefetch = 0 : i64, scratch_operands = 4 : i64, tpu.core_type = #tpu.core_type<tc>, window_params = [{pipeline_mode = #tpu.pipeline_mode<synchronous>, transform_indices = @transform_0, window_bounds = array<i64: 2, 16, 16, 4>}, {pipeline_mode = #tpu.pipeline_mode<synchronous>, transform_indices = @transform_1, window_bounds = array<i64: 36, 8>}, {pipeline_mode = #tpu.pipeline_mode<synchronous>, transform_indices = @transform_2, window_bounds = array<i64: 1, 8>}, {pipeline_mode = #tpu.pipeline_mode<synchronous>, transform_indices = @transform_3, window_bounds = array<i64: 72, 8>}, {pipeline_mode = #tpu.pipeline_mode<synchronous>, transform_indices = @transform_4, window_bounds = array<i64: 1, 8>}, {pipeline_mode = #tpu.pipeline_mode<synchronous>, transform_indices = @transform_5, window_bounds = array<i64: 2, 4, 4, 8>}]} {
    %c0 = arith.constant 0 : index
    %c0_0 = arith.constant 0 : index
    %c0_1 = arith.constant 0 : index
    %c0_2 = arith.constant 0 : index
    %0 = vector.load %arg1[%c0, %c0_0, %c0_1, %c0_2] : memref<2x16x16x4xf32, #tpu.memory_space<vmem>>, vector<2x16x16x4xf32>
    %cst = arith.constant 0.000000e+00 : f32
    %1 = vector.broadcast %cst : f32 to vector<2x18x18x4xf32>
    %c0_3 = arith.constant 0 : index
    %c0_4 = arith.constant 0 : index
    %c0_5 = arith.constant 0 : index
    %c0_6 = arith.constant 0 : index
    %2 = vector.load %arg7[%c0_3, %c0_4, %c0_5, %c0_6] : memref<2x18x18x4xf32, #tpu.memory_space<vmem>>, vector<2x18x18x4xf32>
    tpu.vector_store %arg7[%c0_3, %c0_4, %c0_5, %c0_6], %1 {strides = array<i32>} : memref<2x18x18x4xf32, #tpu.memory_space<vmem>>, vector<2x18x18x4xf32>,
    %c0_7 = arith.constant 0 : index
    %c1 = arith.constant 1 : index
    %c1_8 = arith.constant 1 : index
    %c0_9 = arith.constant 0 : index
    %3 = vector.load %arg7[%c0_7, %c1, %c1_8, %c0_9] : memref<2x18x18x4xf32, #tpu.memory_space<vmem>>, vector<2x16x16x4xf32>
    tpu.vector_store %arg7[%c0_7, %c1, %c1_8, %c0_9], %0 {strides = array<i32>} : memref<2x18x18x4xf32, #tpu.memory_space<vmem>>, vector<2x16x16x4xf32>,
    %c0_10 = arith.constant 0 : index
    %c0_11 = arith.constant 0 : index
    %c0_12 = arith.constant 0 : index
    %c0_13 = arith.constant 0 : index
    %4 = vector.load %arg7[%c0_10, %c0_11, %c0_12, %c0_13] : memref<2x18x18x4xf32, #tpu.memory_space<vmem>>, vector<2x16x16x4xf32>
    %c0_14 = arith.constant 0 : index
    %c0_15 = arith.constant 0 : index
    %c0_16 = arith.constant 0 : index
    %c0_17 = arith.constant 0 : index
    %5 = vector.load %arg8[%c0_14, %c0_15, %c0_16, %c0_17] : memref<2x16x16x36xf32, #tpu.memory_space<vmem>>, vector<2x16x16x4xf32>
    tpu.vector_store %arg8[%c0_14, %c0_15, %c0_16, %c0_17], %4 {strides = array<i32>} : memref<2x16x16x36xf32, #tpu.memory_space<vmem>>, vector<2x16x16x4xf32>,
    %c0_18 = arith.constant 0 : index
    %c0_19 = arith.constant 0 : index
    %c1_20 = arith.constant 1 : index
    %c0_21 = arith.constant 0 : index
    %6 = vector.load %arg7[%c0_18, %c0_19, %c1_20, %c0_21] : memref<2x18x18x4xf32, #tpu.memory_space<vmem>>, vector<2x16x16x4xf32>
    %c0_22 = arith.constant 0 : index
    %c0_23 = arith.constant 0 : index
    %c0_24 = arith.constant 0 : index
    %c4 = arith.constant 4 : index
    %7 = vector.load %arg8[%c0_22, %c0_23, %c0_24, %c4] : memref<2x16x16x36xf32, #tpu.memory_space<vmem>>, vector<2x16x16x4xf32>
    tpu.vector_store %arg8[%c0_22, %c0_23, %c0_24, %c4], %6 {strides = array<i32>} : memref<2x16x16x36xf32, #tpu.memory_space<vmem>>, vector<2x16x16x4xf32>,
    %c0_25 = arith.constant 0 : index
    %c0_26 = arith.constant 0 : index
    %c2 = arith.constant 2 : index
    %c0_27 = arith.constant 0 : index
    %8 = vector.load %arg7[%c0_25, %c0_26, %c2, %c0_27] : memref<2x18x18x4xf32, #tpu.memory_space<vmem>>, vector<2x16x16x4xf32>
    %c0_28 = arith.constant 0 : index
    %c0_29 = arith.constant 0 : index
    %c0_30 = arith.constant 0 : index
    %c8 = arith.constant 8 : index
    %9 = vector.load %arg8[%c0_28, %c0_29, %c0_30, %c8] : memref<2x16x16x36xf32, #tpu.memory_space<vmem>>, vector<2x16x16x4xf32>
    tpu.vector_store %arg8[%c0_28, %c0_29, %c0_30, %c8], %8 {strides = array<i32>} : memref<2x16x16x36xf32, #tpu.memory_space<vmem>>, vector<2x16x16x4xf32>,
    %c0_31 = arith.constant 0 : index
    %c1_32 = arith.constant 1 : index
    %c0_33 = arith.constant 0 : index
    %c0_34 = arith.constant 0 : index
    %10 = vector.load %arg7[%c0_31, %c1_32, %c0_33, %c0_34] : memref<2x18x18x4xf32, #tpu.memory_space<vmem>>, vector<2x16x16x4xf32>
    %c0_35 = arith.constant 0 : index
    %c0_36 = arith.constant 0 : index
    %c0_37 = arith.constant 0 : index
    %c12 = arith.constant 12 : index
    %11 = vector.load %arg8[%c0_35, %c0_36, %c0_37, %c12] : memref<2x16x16x36xf32, #tpu.memory_space<vmem>>, vector<2x16x16x4xf32>
    tpu.vector_store %arg8[%c0_35, %c0_36, %c0_37, %c12], %10 {strides = array<i32>} : memref<2x16x16x36xf32, #tpu.memory_space<vmem>>, vector<2x16x16x4xf32>,
    %c0_38 = arith.constant 0 : index
    %c1_39 = arith.constant 1 : index
    %c1_40 = arith.constant 1 : index
    %c0_41 = arith.constant 0 : index
    %12 = vector.load %arg7[%c0_38, %c1_39, %c1_40, %c0_41] : memref<2x18x18x4xf32, #tpu.memory_space<vmem>>, vector<2x16x16x4xf32>
    %c0_42 = arith.constant 0 : index
    %c0_43 = arith.constant 0 : index
    %c0_44 = arith.constant 0 : index
    %c16 = arith.constant 16 : index
    %13 = vector.load %arg8[%c0_42, %c0_43, %c0_44, %c16] : memref<2x16x16x36xf32, #tpu.memory_space<vmem>>, vector<2x16x16x4xf32>
    tpu.vector_store %arg8[%c0_42, %c0_43, %c0_44, %c16], %12 {strides = array<i32>} : memref<2x16x16x36xf32, #tpu.memory_space<vmem>>, vector<2x16x16x4xf32>,
    %c0_45 = arith.constant 0 : index
    %c1_46 = arith.constant 1 : index
    %c2_47 = arith.constant 2 : index
    %c0_48 = arith.constant 0 : index
    %14 = vector.load %arg7[%c0_45, %c1_46, %c2_47, %c0_48] : memref<2x18x18x4xf32, #tpu.memory_space<vmem>>, vector<2x16x16x4xf32>
    %c0_49 = arith.constant 0 : index
    %c0_50 = arith.constant 0 : index
    %c0_51 = arith.constant 0 : index
    %c20 = arith.constant 20 : index
    %15 = vector.load %arg8[%c0_49, %c0_50, %c0_51, %c20] : memref<2x16x16x36xf32, #tpu.memory_space<vmem>>, vector<2x16x16x4xf32>
    tpu.vector_store %arg8[%c0_49, %c0_50, %c0_51, %c20], %14 {strides = array<i32>} : memref<2x16x16x36xf32, #tpu.memory_space<vmem>>, vector<2x16x16x4xf32>,
    %c0_52 = arith.constant 0 : index
    %c2_53 = arith.constant 2 : index
    %c0_54 = arith.constant 0 : index
    %c0_55 = arith.constant 0 : index
    %16 = vector.load %arg7[%c0_52, %c2_53, %c0_54, %c0_55] : memref<2x18x18x4xf32, #tpu.memory_space<vmem>>, vector<2x16x16x4xf32>
    %c0_56 = arith.constant 0 : index
    %c0_57 = arith.constant 0 : index
    %c0_58 = arith.constant 0 : index
    %c24 = arith.constant 24 : index
    %17 = vector.load %arg8[%c0_56, %c0_57, %c0_58, %c24] : memref<2x16x16x36xf32, #tpu.memory_space<vmem>>, vector<2x16x16x4xf32>
    tpu.vector_store %arg8[%c0_56, %c0_57, %c0_58, %c24], %16 {strides = array<i32>} : memref<2x16x16x36xf32, #tpu.memory_space<vmem>>, vector<2x16x16x4xf32>,
    %c0_59 = arith.constant 0 : index
    %c2_60 = arith.constant 2 : index
    %c1_61 = arith.constant 1 : index
    %c0_62 = arith.constant 0 : index
    %18 = vector.load %arg7[%c0_59, %c2_60, %c1_61, %c0_62] : memref<2x18x18x4xf32, #tpu.memory_space<vmem>>, vector<2x16x16x4xf32>
    %c0_63 = arith.constant 0 : index
    %c0_64 = arith.constant 0 : index
    %c0_65 = arith.constant 0 : index
    %c28 = arith.constant 28 : index
    %19 = vector.load %arg8[%c0_63, %c0_64, %c0_65, %c28] : memref<2x16x16x36xf32, #tpu.memory_space<vmem>>, vector<2x16x16x4xf32>
    tpu.vector_store %arg8[%c0_63, %c0_64, %c0_65, %c28], %18 {strides = array<i32>} : memref<2x16x16x36xf32, #tpu.memory_space<vmem>>, vector<2x16x16x4xf32>,
    %c0_66 = arith.constant 0 : index
    %c2_67 = arith.constant 2 : index
    %c2_68 = arith.constant 2 : index
    %c0_69 = arith.constant 0 : index
    %20 = vector.load %arg7[%c0_66, %c2_67, %c2_68, %c0_69] : memref<2x18x18x4xf32, #tpu.memory_space<vmem>>, vector<2x16x16x4xf32>
    %c0_70 = arith.constant 0 : index
    %c0_71 = arith.constant 0 : index
    %c0_72 = arith.constant 0 : index
    %c32 = arith.constant 32 : index
    %21 = vector.load %arg8[%c0_70, %c0_71, %c0_72, %c32] : memref<2x16x16x36xf32, #tpu.memory_space<vmem>>, vector<2x16x16x4xf32>
    tpu.vector_store %arg8[%c0_70, %c0_71, %c0_72, %c32], %20 {strides = array<i32>} : memref<2x16x16x36xf32, #tpu.memory_space<vmem>>, vector<2x16x16x4xf32>,
    %c0_73 = arith.constant 0 : index
    %c0_74 = arith.constant 0 : index
    %c0_75 = arith.constant 0 : index
    %c0_76 = arith.constant 0 : index
    %22 = vector.load %arg8[%c0_73, %c0_74, %c0_75, %c0_76] : memref<2x16x16x36xf32, #tpu.memory_space<vmem>>, vector<2x16x16x36xf32>
    %23 = vector.shape_cast %22 : vector<2x16x16x36xf32> to vector<512x36xf32>
    %c0_77 = arith.constant 0 : index
    %c0_78 = arith.constant 0 : index
    %24 = vector.load %arg2[%c0_77, %c0_78] : memref<36x8xf32, #tpu.memory_space<vmem>>, vector<36x8xf32>
    %cst_79 = arith.constant dense<0.000000e+00> : vector<512x8xf32>
    %25 = tpu.matmul %23, %24, %cst_79 {dimension_numbers = #tpu.dot_dimension_numbers<[1], [0], [0], [1], [0, 0, 1, 1], [], []>} : vector<512x36xf32>, vector<36x8xf32>, vector<512x8xf32> -> vector<512x8xf32>
    %c0_80 = arith.constant 0 : index
    %c0_81 = arith.constant 0 : index
    %26 = vector.load %arg3[%c0_80, %c0_81] : memref<1x8xf32, #tpu.memory_space<vmem>>, vector<1x8xf32>
    %27 = vector.broadcast %26 : vector<1x8xf32> to vector<512x8xf32>
    %28 = arith.addf %25, %27 : vector<512x8xf32>
    %cst_82 = arith.constant 0.000000e+00 : f32
    %29 = vector.broadcast %cst_82 : f32 to vector<512x8xf32>
    %30 = arith.maximumf %28, %29 : vector<512x8xf32>
    %31 = vector.shape_cast %30 : vector<512x8xf32> to vector<2x16x16x8xf32>
    %32 = vector.shape_cast %31 : vector<2x16x16x8xf32> to vector<2x8x2x16x8xf32>
    %cst_83 = arith.constant dense<0xFF800000> : vector<2x8x16x8xf32>
    %33 = vector.multi_reduction <maximumf>, %32, %cst_83 [2] : vector<2x8x2x16x8xf32> to vector<2x8x16x8xf32>
    %34 = vector.shape_cast %33 : vector<2x8x16x8xf32> to vector<2x8x8x2x8xf32>
    %cst_84 = arith.constant dense<0xFF800000> : vector<2x8x8x8xf32>
    %35 = vector.multi_reduction <maximumf>, %34, %cst_84 [3] : vector<2x8x8x2x8xf32> to vector<2x8x8x8xf32>
    %cst_85 = arith.constant 0.000000e+00 : f32
    %36 = vector.broadcast %cst_85 : f32 to vector<2x10x10x8xf32>
    %c0_86 = arith.constant 0 : index
    %c0_87 = arith.constant 0 : index
    %c0_88 = arith.constant 0 : index
    %c0_89 = arith.constant 0 : index
    %37 = vector.load %arg9[%c0_86, %c0_87, %c0_88, %c0_89] : memref<2x10x10x8xf32, #tpu.memory_space<vmem>>, vector<2x10x10x8xf32>
    tpu.vector_store %arg9[%c0_86, %c0_87, %c0_88, %c0_89], %36 {strides = array<i32>} : memref<2x10x10x8xf32, #tpu.memory_space<vmem>>, vector<2x10x10x8xf32>,
    %c0_90 = arith.constant 0 : index
    %c1_91 = arith.constant 1 : index
    %c1_92 = arith.constant 1 : index
    %c0_93 = arith.constant 0 : index
    %38 = vector.load %arg9[%c0_90, %c1_91, %c1_92, %c0_93] : memref<2x10x10x8xf32, #tpu.memory_space<vmem>>, vector<2x8x8x8xf32>
    tpu.vector_store %arg9[%c0_90, %c1_91, %c1_92, %c0_93], %35 {strides = array<i32>} : memref<2x10x10x8xf32, #tpu.memory_space<vmem>>, vector<2x8x8x8xf32>,
    %c0_94 = arith.constant 0 : index
    %c0_95 = arith.constant 0 : index
    %c0_96 = arith.constant 0 : index
    %c0_97 = arith.constant 0 : index
    %39 = vector.load %arg9[%c0_94, %c0_95, %c0_96, %c0_97] : memref<2x10x10x8xf32, #tpu.memory_space<vmem>>, vector<2x8x8x8xf32>
    %c0_98 = arith.constant 0 : index
    %c0_99 = arith.constant 0 : index
    %c0_100 = arith.constant 0 : index
    %c0_101 = arith.constant 0 : index
    %40 = vector.load %arg10[%c0_98, %c0_99, %c0_100, %c0_101] : memref<2x8x8x72xf32, #tpu.memory_space<vmem>>, vector<2x8x8x8xf32>
    tpu.vector_store %arg10[%c0_98, %c0_99, %c0_100, %c0_101], %39 {strides = array<i32>} : memref<2x8x8x72xf32, #tpu.memory_space<vmem>>, vector<2x8x8x8xf32>,
    %c0_102 = arith.constant 0 : index
    %c0_103 = arith.constant 0 : index
    %c1_104 = arith.constant 1 : index
    %c0_105 = arith.constant 0 : index
    %41 = vector.load %arg9[%c0_102, %c0_103, %c1_104, %c0_105] : memref<2x10x10x8xf32, #tpu.memory_space<vmem>>, vector<2x8x8x8xf32>
    %c0_106 = arith.constant 0 : index
    %c0_107 = arith.constant 0 : index
    %c0_108 = arith.constant 0 : index
    %c8_109 = arith.constant 8 : index
    %42 = vector.load %arg10[%c0_106, %c0_107, %c0_108, %c8_109] : memref<2x8x8x72xf32, #tpu.memory_space<vmem>>, vector<2x8x8x8xf32>
    tpu.vector_store %arg10[%c0_106, %c0_107, %c0_108, %c8_109], %41 {strides = array<i32>} : memref<2x8x8x72xf32, #tpu.memory_space<vmem>>, vector<2x8x8x8xf32>,
    %c0_110 = arith.constant 0 : index
    %c0_111 = arith.constant 0 : index
    %c2_112 = arith.constant 2 : index
    %c0_113 = arith.constant 0 : index
    %43 = vector.load %arg9[%c0_110, %c0_111, %c2_112, %c0_113] : memref<2x10x10x8xf32, #tpu.memory_space<vmem>>, vector<2x8x8x8xf32>
    %c0_114 = arith.constant 0 : index
    %c0_115 = arith.constant 0 : index
    %c0_116 = arith.constant 0 : index
    %c16_117 = arith.constant 16 : index
    %44 = vector.load %arg10[%c0_114, %c0_115, %c0_116, %c16_117] : memref<2x8x8x72xf32, #tpu.memory_space<vmem>>, vector<2x8x8x8xf32>
    tpu.vector_store %arg10[%c0_114, %c0_115, %c0_116, %c16_117], %43 {strides = array<i32>} : memref<2x8x8x72xf32, #tpu.memory_space<vmem>>, vector<2x8x8x8xf32>,
    %c0_118 = arith.constant 0 : index
    %c1_119 = arith.constant 1 : index
    %c0_120 = arith.constant 0 : index
    %c0_121 = arith.constant 0 : index
    %45 = vector.load %arg9[%c0_118, %c1_119, %c0_120, %c0_121] : memref<2x10x10x8xf32, #tpu.memory_space<vmem>>, vector<2x8x8x8xf32>
    %c0_122 = arith.constant 0 : index
    %c0_123 = arith.constant 0 : index
    %c0_124 = arith.constant 0 : index
    %c24_125 = arith.constant 24 : index
    %46 = vector.load %arg10[%c0_122, %c0_123, %c0_124, %c24_125] : memref<2x8x8x72xf32, #tpu.memory_space<vmem>>, vector<2x8x8x8xf32>
    tpu.vector_store %arg10[%c0_122, %c0_123, %c0_124, %c24_125], %45 {strides = array<i32>} : memref<2x8x8x72xf32, #tpu.memory_space<vmem>>, vector<2x8x8x8xf32>,
    %c0_126 = arith.constant 0 : index
    %c1_127 = arith.constant 1 : index
    %c1_128 = arith.constant 1 : index
    %c0_129 = arith.constant 0 : index
    %47 = vector.load %arg9[%c0_126, %c1_127, %c1_128, %c0_129] : memref<2x10x10x8xf32, #tpu.memory_space<vmem>>, vector<2x8x8x8xf32>
    %c0_130 = arith.constant 0 : index
    %c0_131 = arith.constant 0 : index
    %c0_132 = arith.constant 0 : index
    %c32_133 = arith.constant 32 : index
    %48 = vector.load %arg10[%c0_130, %c0_131, %c0_132, %c32_133] : memref<2x8x8x72xf32, #tpu.memory_space<vmem>>, vector<2x8x8x8xf32>
    tpu.vector_store %arg10[%c0_130, %c0_131, %c0_132, %c32_133], %47 {strides = array<i32>} : memref<2x8x8x72xf32, #tpu.memory_space<vmem>>, vector<2x8x8x8xf32>,
    %c0_134 = arith.constant 0 : index
    %c1_135 = arith.constant 1 : index
    %c2_136 = arith.constant 2 : index
    %c0_137 = arith.constant 0 : index
    %49 = vector.load %arg9[%c0_134, %c1_135, %c2_136, %c0_137] : memref<2x10x10x8xf32, #tpu.memory_space<vmem>>, vector<2x8x8x8xf32>
    %c0_138 = arith.constant 0 : index
    %c0_139 = arith.constant 0 : index
    %c0_140 = arith.constant 0 : index
    %c40 = arith.constant 40 : index
    %50 = vector.load %arg10[%c0_138, %c0_139, %c0_140, %c40] : memref<2x8x8x72xf32, #tpu.memory_space<vmem>>, vector<2x8x8x8xf32>
    tpu.vector_store %arg10[%c0_138, %c0_139, %c0_140, %c40], %49 {strides = array<i32>} : memref<2x8x8x72xf32, #tpu.memory_space<vmem>>, vector<2x8x8x8xf32>,
    %c0_141 = arith.constant 0 : index
    %c2_142 = arith.constant 2 : index
    %c0_143 = arith.constant 0 : index
    %c0_144 = arith.constant 0 : index
    %51 = vector.load %arg9[%c0_141, %c2_142, %c0_143, %c0_144] : memref<2x10x10x8xf32, #tpu.memory_space<vmem>>, vector<2x8x8x8xf32>
    %c0_145 = arith.constant 0 : index
    %c0_146 = arith.constant 0 : index
    %c0_147 = arith.constant 0 : index
    %c48 = arith.constant 48 : index
    %52 = vector.load %arg10[%c0_145, %c0_146, %c0_147, %c48] : memref<2x8x8x72xf32, #tpu.memory_space<vmem>>, vector<2x8x8x8xf32>
    tpu.vector_store %arg10[%c0_145, %c0_146, %c0_147, %c48], %51 {strides = array<i32>} : memref<2x8x8x72xf32, #tpu.memory_space<vmem>>, vector<2x8x8x8xf32>,
    %c0_148 = arith.constant 0 : index
    %c2_149 = arith.constant 2 : index
    %c1_150 = arith.constant 1 : index
    %c0_151 = arith.constant 0 : index
    %53 = vector.load %arg9[%c0_148, %c2_149, %c1_150, %c0_151] : memref<2x10x10x8xf32, #tpu.memory_space<vmem>>, vector<2x8x8x8xf32>
    %c0_152 = arith.constant 0 : index
    %c0_153 = arith.constant 0 : index
    %c0_154 = arith.constant 0 : index
    %c56 = arith.constant 56 : index
    %54 = vector.load %arg10[%c0_152, %c0_153, %c0_154, %c56] : memref<2x8x8x72xf32, #tpu.memory_space<vmem>>, vector<2x8x8x8xf32>
    tpu.vector_store %arg10[%c0_152, %c0_153, %c0_154, %c56], %53 {strides = array<i32>} : memref<2x8x8x72xf32, #tpu.memory_space<vmem>>, vector<2x8x8x8xf32>,
    %c0_155 = arith.constant 0 : index
    %c2_156 = arith.constant 2 : index
    %c2_157 = arith.constant 2 : index
    %c0_158 = arith.constant 0 : index
    %55 = vector.load %arg9[%c0_155, %c2_156, %c2_157, %c0_158] : memref<2x10x10x8xf32, #tpu.memory_space<vmem>>, vector<2x8x8x8xf32>
    %c0_159 = arith.constant 0 : index
    %c0_160 = arith.constant 0 : index
    %c0_161 = arith.constant 0 : index
    %c64 = arith.constant 64 : index
    %56 = vector.load %arg10[%c0_159, %c0_160, %c0_161, %c64] : memref<2x8x8x72xf32, #tpu.memory_space<vmem>>, vector<2x8x8x8xf32>
    tpu.vector_store %arg10[%c0_159, %c0_160, %c0_161, %c64], %55 {strides = array<i32>} : memref<2x8x8x72xf32, #tpu.memory_space<vmem>>, vector<2x8x8x8xf32>,
    %c0_162 = arith.constant 0 : index
    %c0_163 = arith.constant 0 : index
    %c0_164 = arith.constant 0 : index
    %c0_165 = arith.constant 0 : index
    %57 = vector.load %arg10[%c0_162, %c0_163, %c0_164, %c0_165] : memref<2x8x8x72xf32, #tpu.memory_space<vmem>>, vector<2x8x8x72xf32>
    %58 = vector.shape_cast %57 : vector<2x8x8x72xf32> to vector<128x72xf32>
    %c0_166 = arith.constant 0 : index
    %c0_167 = arith.constant 0 : index
    %59 = vector.load %arg4[%c0_166, %c0_167] : memref<72x8xf32, #tpu.memory_space<vmem>>, vector<72x8xf32>
    %cst_168 = arith.constant dense<0.000000e+00> : vector<128x8xf32>
    %60 = tpu.matmul %58, %59, %cst_168 {dimension_numbers = #tpu.dot_dimension_numbers<[1], [0], [0], [1], [0, 0, 1, 1], [], []>} : vector<128x72xf32>, vector<72x8xf32>, vector<128x8xf32> -> vector<128x8xf32>
    %c0_169 = arith.constant 0 : index
    %c0_170 = arith.constant 0 : index
    %61 = vector.load %arg5[%c0_169, %c0_170] : memref<1x8xf32, #tpu.memory_space<vmem>>, vector<1x8xf32>
    %62 = vector.broadcast %61 : vector<1x8xf32> to vector<128x8xf32>
    %63 = arith.addf %60, %62 : vector<128x8xf32>
    %cst_171 = arith.constant 0.000000e+00 : f32
    %64 = vector.broadcast %cst_171 : f32 to vector<128x8xf32>
    %65 = arith.maximumf %63, %64 : vector<128x8xf32>
    %66 = vector.shape_cast %65 : vector<128x8xf32> to vector<2x8x8x8xf32>
    %67 = vector.shape_cast %66 : vector<2x8x8x8xf32> to vector<2x4x2x8x8xf32>
    %cst_172 = arith.constant dense<0xFF800000> : vector<2x4x8x8xf32>
    %68 = vector.multi_reduction <maximumf>, %67, %cst_172 [2] : vector<2x4x2x8x8xf32> to vector<2x4x8x8xf32>
    %69 = vector.shape_cast %68 : vector<2x4x8x8xf32> to vector<2x4x4x2x8xf32>
    %cst_173 = arith.constant dense<0xFF800000> : vector<2x4x4x8xf32>
    %70 = vector.multi_reduction <maximumf>, %69, %cst_173 [3] : vector<2x4x4x2x8xf32> to vector<2x4x4x8xf32>
    %c0_174 = arith.constant 0 : index
    %c0_175 = arith.constant 0 : index
    %c0_176 = arith.constant 0 : index
    %c0_177 = arith.constant 0 : index
    %71 = vector.load %arg6[%c0_174, %c0_175, %c0_176, %c0_177] : memref<2x4x4x8xf32, #tpu.memory_space<vmem>>, vector<2x4x4x8xf32>
    tpu.vector_store %arg6[%c0_174, %c0_175, %c0_176, %c0_177], %70 {strides = array<i32>} : memref<2x4x4x8xf32, #tpu.memory_space<vmem>>, vector<2x4x4x8xf32>,
    return
  }
  func.func @transform_0(%arg0: i32) -> (i32, i32, i32, i32) {
    %c0_i32 = arith.constant 0 : i32
    %c0_i32_0 = arith.constant 0 : i32
    %c0_i32_1 = arith.constant 0 : i32
    %c0_i32_2 = arith.constant 0 : i32
    %c0_i32_3 = arith.constant 0 : i32
    return %c0_i32, %c0_i32_0, %c0_i32_1, %c0_i32_2 : i32, i32, i32, i32
  }
  func.func @transform_1(%arg0: i32) -> (i32, i32) {
    %c0_i32 = arith.constant 0 : i32
    %c0_i32_0 = arith.constant 0 : i32
    %c0_i32_1 = arith.constant 0 : i32
    return %c0_i32, %c0_i32_0 : i32, i32
  }
  func.func @transform_2(%arg0: i32) -> (i32, i32) {
    %c0_i32 = arith.constant 0 : i32
    %c0_i32_0 = arith.constant 0 : i32
    %c0_i32_1 = arith.constant 0 : i32
    return %c0_i32, %c0_i32_0 : i32, i32
  }
  func.func @transform_3(%arg0: i32) -> (i32, i32) {
    %c0_i32 = arith.constant 0 : i32
    %c0_i32_0 = arith.constant 0 : i32
    %c0_i32_1 = arith.constant 0 : i32
    return %c0_i32, %c0_i32_0 : i32, i32
  }
  func.func @transform_4(%arg0: i32) -> (i32, i32) {
    %c0_i32 = arith.constant 0 : i32
    %c0_i32_0 = arith.constant 0 : i32
    %c0_i32_1 = arith.constant 0 : i32
    return %c0_i32, %c0_i32_0 : i32, i32
  }
  func.func @transform_5(%arg0: i32) -> (i32, i32, i32, i32) {
    %c0_i32 = arith.constant 0 : i32
    %c0_i32_0 = arith.constant 0 : i32
    %c0_i32_1 = arith.constant 0 : i32
    %c0_i32_2 = arith.constant 0 : i32
    %c0_i32_3 = arith.constant 0 : i32
    return %c0_i32, %c0_i32_0, %c0_i32_1, %c0_i32_2 : i32, i32, i32, i32
  }
}

</mosaic_0001>

<llo_original>
// kernel: tpu_custom_call.1
$region0: #{tpu_custom_call.1}
  #allocation0 [shape = 'u32[]', space=smem, size = 0x4, offset = 0x4, fixed_abs, tag = 'smem constant byte address 0x4 - core index']
  #allocation1 [shape = 'u32[144,128]{1,0:T(1,128)}', space=vmem, size = 0x12000, scoped, tag = 'internal scratch']
  #allocation2 [shape = 'f32[2,18,18,4]{3,2,1,0:T(8,128)}', space=vmem, size = 0x6c000, scoped, tag = 'scratch operand']
  #allocation3 [shape = 'f32[2,16,16,36]{3,2,1,0:T(8,128)}', space=vmem, size = 0x40000, scoped, tag = 'scratch operand']
  #allocation4 [shape = 'f32[2,10,10,8]{3,2,1,0:T(8,128)}', space=vmem, size = 0x28000, scoped, tag = 'scratch operand']
  #allocation5 [shape = 'f32[2,8,8,72]{3,2,1,0:T(8,128)}', space=vmem, size = 0x10000, scoped, tag = 'scratch operand']
  %s0 = inlined_call_operand.vmem [shape: f32[2,16,16,4], index: 0, kind: input, shape index: {}]
  %s1 = inlined_call_operand.vmem [shape: f32[36,8], index: 1, kind: input, shape index: {}]
  %s2 = inlined_call_operand.vmem [shape: f32[1,8], index: 2, kind: input, shape index: {}]
  %s3 = inlined_call_operand.vmem [shape: f32[72,8], index: 3, kind: input, shape index: {}]
  %s4 = inlined_call_operand.vmem [shape: f32[1,8], index: 4, kind: input, shape index: {}]
  %s5 = inlined_call_operand.hbm [shape: f32[2,4,4,8], index: 5, kind: output, shape index: {}]
  %s6 = sld [smem:[#allocation0]]
  $region30: #{tpu_custom_call.1} parent=0
    _
  %s8 = ssub.s32 1, %s6
  %s9 = scalar_select 0, %s8, %s6
  $region1: #{tpu_custom_call.1} parent=0
    #allocation6 [shape = 'u8[16384]{0}', space=vmem, size = 0x4000, scoped, tag = 'output window, operand 0, single buffered']
    #allocation7 [shape = 's32[1]{0}', space=sflag, size = 0x4, scoped, tag = 'scoped memory for tpu_custom_call.1']
    %10 = vsyncpa [#allocation7], 0
    // Predicated region
    $region2: #{tpu_custom_call.1} parent=1 // pred_check
      _
    $region3: #{tpu_custom_call.1} parent=1 // pred_check_branch
      %12 = sbr.rel (0) target = $region5
    $region4: #{tpu_custom_call.1} parent=1 // pred_region
      _
    $region5: #{tpu_custom_call.1} parent=1 // pred_fallthru
      _
    // Predicated region
    $region6: #{tpu_custom_call.1} parent=1 // pred_check
      _
    $region7: #{tpu_custom_call.1} parent=1 // pred_check_branch
      %14 = sbr.rel (0) target = $region9
    $region8: #{tpu_custom_call.1} parent=1 // pred_region
      _
    $region9: #{tpu_custom_call.1} parent=1 // pred_fallthru
      _
    // Predicated region
    $region10: #{tpu_custom_call.1} parent=1 // pred_check
      _
    $region11: #{tpu_custom_call.1} parent=1 // pred_check_branch
      %16 = sbr.rel (0) target = $region13
    $region12: #{tpu_custom_call.1} parent=1 // pred_region
      _
    $region13: #{tpu_custom_call.1} parent=1 // pred_fallthru
      _
    // Predicated region
    $region14: #{tpu_custom_call.1} parent=1 // pred_check
      _
    $region15: #{tpu_custom_call.1} parent=1 // pred_check_branch
      %18 = sbr.rel (0) target = $region17
    $region16: #{tpu_custom_call.1} parent=1 // pred_region
      _
    $region17: #{tpu_custom_call.1} parent=1 // pred_fallthru
      _
    // Predicated region
    $region18: #{tpu_custom_call.1} parent=1 // pred_check
      _
    $region19: #{tpu_custom_call.1} parent=1 // pred_check_branch
      %20 = sbr.rel (0) target = $region21
    $region20: #{tpu_custom_call.1} parent=1 // pred_region
      _
    $region21: #{tpu_custom_call.1} parent=1 // pred_fallthru
      _
    %v21 = vld [vmem:[%s0] sm:$0xff]
    %v22 = vld [vmem:[%s0 + $0x8] sm:$0xff]
    %v23 = vld [vmem:[%s0 + $0x10] sm:$0xff]
    %v24 = vld [vmem:[%s0 + $0x18] sm:$0xff]
    %v25 = vld [vmem:[%s0 + $0x20] sm:$0xff]
    %v26 = vld [vmem:[%s0 + $0x28] sm:$0xff]
    %v27 = vld [vmem:[%s0 + $0x30] sm:$0xff]
    %v28 = vld [vmem:[%s0 + $0x38] sm:$0xff]
    %v29 = vld [vmem:[%s0 + $0x40] sm:$0xff]
    %v30 = vld [vmem:[%s0 + $0x48] sm:$0xff]
    %v31 = vld [vmem:[%s0 + $0x50] sm:$0xff]
    %v32 = vld [vmem:[%s0 + $0x58] sm:$0xff]
    %v33 = vld [vmem:[%s0 + $0x60] sm:$0xff]
    %v34 = vld [vmem:[%s0 + $0x68] sm:$0xff]
    %v35 = vld [vmem:[%s0 + $0x70] sm:$0xff]
    %v36 = vld [vmem:[%s0 + $0x78] sm:$0xff]
    %v37 = vld [vmem:[%s0 + $0x80] sm:$0xff]
    %v38 = vld [vmem:[%s0 + $0x88] sm:$0xff]
    %v39 = vld [vmem:[%s0 + $0x90] sm:$0xff]
    %v40 = vld [vmem:[%s0 + $0x98] sm:$0xff]
    %v41 = vld [vmem:[%s0 + $0xa0] sm:$0xff]
    %v42 = vld [vmem:[%s0 + $0xa8] sm:$0xff]
    %v43 = vld [vmem:[%s0 + $0xb0] sm:$0xff]
    %v44 = vld [vmem:[%s0 + $0xb8] sm:$0xff]
    %v45 = vld [vmem:[%s0 + $0xc0] sm:$0xff]
    %v46 = vld [vmem:[%s0 + $0xc8] sm:$0xff]
    %v47 = vld [vmem:[%s0 + $0xd0] sm:$0xff]
    %v48 = vld [vmem:[%s0 + $0xd8] sm:$0xff]
    %v49 = vld [vmem:[%s0 + $0xe0] sm:$0xff]
    %v50 = vld [vmem:[%s0 + $0xe8] sm:$0xff]
    %v51 = vld [vmem:[%s0 + $0xf0] sm:$0xff]
    %v52 = vld [vmem:[%s0 + $0xf8] sm:$0xff]
    %v53 = vld [vmem:[%s0 + $0x100] sm:$0xff]
    %v54 = vld [vmem:[%s0 + $0x108] sm:$0xff]
    %v55 = vld [vmem:[%s0 + $0x110] sm:$0xff]
    %v56 = vld [vmem:[%s0 + $0x118] sm:$0xff]
    %v57 = vld [vmem:[%s0 + $0x120] sm:$0xff]
    %v58 = vld [vmem:[%s0 + $0x128] sm:$0xff]
    %v59 = vld [vmem:[%s0 + $0x130] sm:$0xff]
    %v60 = vld [vmem:[%s0 + $0x138] sm:$0xff]
    %v61 = vld [vmem:[%s0 + $0x140] sm:$0xff]
    %v62 = vld [vmem:[%s0 + $0x148] sm:$0xff]
    %v63 = vld [vmem:[%s0 + $0x150] sm:$0xff]
    %v64 = vld [vmem:[%s0 + $0x158] sm:$0xff]
    %v65 = vld [vmem:[%s0 + $0x160] sm:$0xff]
    %v66 = vld [vmem:[%s0 + $0x168] sm:$0xff]
    %v67 = vld [vmem:[%s0 + $0x170] sm:$0xff]
    %v68 = vld [vmem:[%s0 + $0x178] sm:$0xff]
    %v69 = vld [vmem:[%s0 + $0x180] sm:$0xff]
    %v70 = vld [vmem:[%s0 + $0x188] sm:$0xff]
    %v71 = vld [vmem:[%s0 + $0x190] sm:$0xff]
    %v72 = vld [vmem:[%s0 + $0x198] sm:$0xff]
    %v73 = vld [vmem:[%s0 + $0x1a0] sm:$0xff]
    %v74 = vld [vmem:[%s0 + $0x1a8] sm:$0xff]
    %v75 = vld [vmem:[%s0 + $0x1b0] sm:$0xff]
    %v76 = vld [vmem:[%s0 + $0x1b8] sm:$0xff]
    %v77 = vld [vmem:[%s0 + $0x1c0] sm:$0xff]
    %v78 = vld [vmem:[%s0 + $0x1c8] sm:$0xff]
    %v79 = vld [vmem:[%s0 + $0x1d0] sm:$0xff]
    %v80 = vld [vmem:[%s0 + $0x1d8] sm:$0xff]
    %v81 = vld [vmem:[%s0 + $0x1e0] sm:$0xff]
    %v82 = vld [vmem:[%s0 + $0x1e8] sm:$0xff]
    %v83 = vld [vmem:[%s0 + $0x1f0] sm:$0xff]
    %v84 = vld [vmem:[%s0 + $0x1f8] sm:$0xff]
    %vm85 = vcmask 31744
    %86 = vst.msk [vmem:[#allocation2] sm:$0xff] %vm85, 0.0
    %87 = vst.msk [vmem:[#allocation2 + $0x8] sm:$0xff] %vm85, 0.0
    %vm88 = vcmask 25600
    %89 = vst.msk [vmem:[#allocation2 + $0x10] sm:$0x3] %vm88, 0.0
    %90 = vst.msk [vmem:[#allocation2 + $0x18] sm:$0xff] %vm85, 0.0
    %91 = vst.msk [vmem:[#allocation2 + $0x20] sm:$0xff] %vm85, 0.0
    %92 = vst.msk [vmem:[#allocation2 + $0x28] sm:$0x3] %vm88, 0.0
    %93 = vst.msk [vmem:[#allocation2 + $0x30] sm:$0xff] %vm85, 0.0
    %94 = vst.msk [vmem:[#allocation2 + $0x38] sm:$0xff] %vm85, 0.0
    %95 = vst.msk [vmem:[#allocation2 + $0x40] sm:$0x3] %vm88, 0.0
    %96 = vst.msk [vmem:[#allocation2 + $0x48] sm:$0xff] %vm85, 0.0
    %97 = vst.msk [vmem:[#allocation2 + $0x50] sm:$0xff] %vm85, 0.0
    %98 = vst.msk [vmem:[#allocation2 + $0x58] sm:$0x3] %vm88, 0.0
    %99 = vst.msk [vmem:[#allocation2 + $0x60] sm:$0xff] %vm85, 0.0
    %100 = vst.msk [vmem:[#allocation2 + $0x68] sm:$0xff] %vm85, 0.0
    %101 = vst.msk [vmem:[#allocation2 + $0x70] sm:$0x3] %vm88, 0.0
    %102 = vst.msk [vmem:[#allocation2 + $0x78] sm:$0xff] %vm85, 0.0
    %103 = vst.msk [vmem:[#allocation2 + $0x80] sm:$0xff] %vm85, 0.0
    %104 = vst.msk [vmem:[#allocation2 + $0x88] sm:$0x3] %vm88, 0.0
    %105 = vst.msk [vmem:[#allocation2 + $0x90] sm:$0xff] %vm85, 0.0
    %106 = vst.msk [vmem:[#allocation2 + $0x98] sm:$0xff] %vm85, 0.0
    %107 = vst.msk [vmem:[#allocation2 + $0xa0] sm:$0x3] %vm88, 0.0
    %108 = vst.msk [vmem:[#allocation2 + $0xa8] sm:$0xff] %vm85, 0.0
    %109 = vst.msk [vmem:[#allocation2 + $0xb0] sm:$0xff] %vm85, 0.0
    %110 = vst.msk [vmem:[#allocation2 + $0xb8] sm:$0x3] %vm88, 0.0
    %111 = vst.msk [vmem:[#allocation2 + $0xc0] sm:$0xff] %vm85, 0.0
    %112 = vst.msk [vmem:[#allocation2 + $0xc8] sm:$0xff] %vm85, 0.0
    %113 = vst.msk [vmem:[#allocation2 + $0xd0] sm:$0x3] %vm88, 0.0
    %114 = vst.msk [vmem:[#allocation2 + $0xd8] sm:$0xff] %vm85, 0.0
    %115 = vst.msk [vmem:[#allocation2 + $0xe0] sm:$0xff] %vm85, 0.0
    %116 = vst.msk [vmem:[#allocation2 + $0xe8] sm:$0x3] %vm88, 0.0
    %117 = vst.msk [vmem:[#allocation2 + $0xf0] sm:$0xff] %vm85, 0.0
    %118 = vst.msk [vmem:[#allocation2 + $0xf8] sm:$0xff] %vm85, 0.0
    %119 = vst.msk [vmem:[#allocation2 + $0x100] sm:$0x3] %vm88, 0.0
    %120 = vst.msk [vmem:[#allocation2 + $0x108] sm:$0xff] %vm85, 0.0
    %121 = vst.msk [vmem:[#allocation2 + $0x110] sm:$0xff] %vm85, 0.0
    %122 = vst.msk [vmem:[#allocation2 + $0x118] sm:$0x3] %vm88, 0.0
    %123 = vst.msk [vmem:[#allocation2 + $0x120] sm:$0xff] %vm85, 0.0
    %124 = vst.msk [vmem:[#allocation2 + $0x128] sm:$0xff] %vm85, 0.0
    %125 = vst.msk [vmem:[#allocation2 + $0x130] sm:$0x3] %vm88, 0.0
    %126 = vst.msk [vmem:[#allocation2 + $0x138] sm:$0xff] %vm85, 0.0
    %127 = vst.msk [vmem:[#allocation2 + $0x140] sm:$0xff] %vm85, 0.0
    %128 = vst.msk [vmem:[#allocation2 + $0x148] sm:$0x3] %vm88, 0.0
    %129 = vst.msk [vmem:[#allocation2 + $0x150] sm:$0xff] %vm85, 0.0
    %130 = vst.msk [vmem:[#allocation2 + $0x158] sm:$0xff] %vm85, 0.0
    %131 = vst.msk [vmem:[#allocation2 + $0x160] sm:$0x3] %vm88, 0.0
    %132 = vst.msk [vmem:[#allocation2 + $0x168] sm:$0xff] %vm85, 0.0
    %133 = vst.msk [vmem:[#allocation2 + $0x170] sm:$0xff] %vm85, 0.0
    %134 = vst.msk [vmem:[#allocation2 + $0x178] sm:$0x3] %vm88, 0.0
    %135 = vst.msk [vmem:[#allocation2 + $0x180] sm:$0xff] %vm85, 0.0
    %136 = vst.msk [vmem:[#allocation2 + $0x188] sm:$0xff] %vm85, 0.0
    %137 = vst.msk [vmem:[#allocation2 + $0x190] sm:$0x3] %vm88, 0.0
    %138 = vst.msk [vmem:[#allocation2 + $0x198] sm:$0xff] %vm85, 0.0
    %139 = vst.msk [vmem:[#allocation2 + $0x1a0] sm:$0xff] %vm85, 0.0
    %140 = vst.msk [vmem:[#allocation2 + $0x1a8] sm:$0x3] %vm88, 0.0
    %141 = vst.msk [vmem:[#allocation2 + $0x1b0] sm:$0xff] %vm85, 0.0
    %142 = vst.msk [vmem:[#allocation2 + $0x1b8] sm:$0xff] %vm85, 0.0
    %143 = vst.msk [vmem:[#allocation2 + $0x1c0] sm:$0x3] %vm88, 0.0
    %144 = vst.msk [vmem:[#allocation2 + $0x1c8] sm:$0xff] %vm85, 0.0
    %145 = vst.msk [vmem:[#allocation2 + $0x1d0] sm:$0xff] %vm85, 0.0
    %146 = vst.msk [vmem:[#allocation2 + $0x1d8] sm:$0x3] %vm88, 0.0
    %147 = vst.msk [vmem:[#allocation2 + $0x1e0] sm:$0xff] %vm85, 0.0
    %148 = vst.msk [vmem:[#allocation2 + $0x1e8] sm:$0xff] %vm85, 0.0
    %149 = vst.msk [vmem:[#allocation2 + $0x1f0] sm:$0x3] %vm88, 0.0
    %150 = vst.msk [vmem:[#allocation2 + $0x1f8] sm:$0xff] %vm85, 0.0
    %151 = vst.msk [vmem:[#allocation2 + $0x200] sm:$0xff] %vm85, 0.0
    %152 = vst.msk [vmem:[#allocation2 + $0x208] sm:$0x3] %vm88, 0.0
    %153 = vst.msk [vmem:[#allocation2 + $0x210] sm:$0xff] %vm85, 0.0
    %154 = vst.msk [vmem:[#allocation2 + $0x218] sm:$0xff] %vm85, 0.0
    %155 = vst.msk [vmem:[#allocation2 + $0x220] sm:$0x3] %vm88, 0.0
    %156 = vst.msk [vmem:[#allocation2 + $0x228] sm:$0xff] %vm85, 0.0
    %157 = vst.msk [vmem:[#allocation2 + $0x230] sm:$0xff] %vm85, 0.0
    %158 = vst.msk [vmem:[#allocation2 + $0x238] sm:$0x3] %vm88, 0.0
    %159 = vst.msk [vmem:[#allocation2 + $0x240] sm:$0xff] %vm85, 0.0
    %160 = vst.msk [vmem:[#allocation2 + $0x248] sm:$0xff] %vm85, 0.0
    %161 = vst.msk [vmem:[#allocation2 + $0x250] sm:$0x3] %vm88, 0.0
    %162 = vst.msk [vmem:[#allocation2 + $0x258] sm:$0xff] %vm85, 0.0
    %163 = vst.msk [vmem:[#allocation2 + $0x260] sm:$0xff] %vm85, 0.0
    %164 = vst.msk [vmem:[#allocation2 + $0x268] sm:$0x3] %vm88, 0.0
    %165 = vst.msk [vmem:[#allocation2 + $0x270] sm:$0xff] %vm85, 0.0
    %166 = vst.msk [vmem:[#allocation2 + $0x278] sm:$0xff] %vm85, 0.0
    %167 = vst.msk [vmem:[#allocation2 + $0x280] sm:$0x3] %vm88, 0.0
    %168 = vst.msk [vmem:[#allocation2 + $0x288] sm:$0xff] %vm85, 0.0
    %169 = vst.msk [vmem:[#allocation2 + $0x290] sm:$0xff] %vm85, 0.0
    %170 = vst.msk [vmem:[#allocation2 + $0x298] sm:$0x3] %vm88, 0.0
    %171 = vst.msk [vmem:[#allocation2 + $0x2a0] sm:$0xff] %vm85, 0.0
    %172 = vst.msk [vmem:[#allocation2 + $0x2a8] sm:$0xff] %vm85, 0.0
    %173 = vst.msk [vmem:[#allocation2 + $0x2b0] sm:$0x3] %vm88, 0.0
    %174 = vst.msk [vmem:[#allocation2 + $0x2b8] sm:$0xff] %vm85, 0.0
    %175 = vst.msk [vmem:[#allocation2 + $0x2c0] sm:$0xff] %vm85, 0.0
    %176 = vst.msk [vmem:[#allocation2 + $0x2c8] sm:$0x3] %vm88, 0.0
    %177 = vst.msk [vmem:[#allocation2 + $0x2d0] sm:$0xff] %vm85, 0.0
    %178 = vst.msk [vmem:[#allocation2 + $0x2d8] sm:$0xff] %vm85, 0.0
    %179 = vst.msk [vmem:[#allocation2 + $0x2e0] sm:$0x3] %vm88, 0.0
    %180 = vst.msk [vmem:[#allocation2 + $0x2e8] sm:$0xff] %vm85, 0.0
    %181 = vst.msk [vmem:[#allocation2 + $0x2f0] sm:$0xff] %vm85, 0.0
    %182 = vst.msk [vmem:[#allocation2 + $0x2f8] sm:$0x3] %vm88, 0.0
    %183 = vst.msk [vmem:[#allocation2 + $0x300] sm:$0xff] %vm85, 0.0
    %184 = vst.msk [vmem:[#allocation2 + $0x308] sm:$0xff] %vm85, 0.0
    %185 = vst.msk [vmem:[#allocation2 + $0x310] sm:$0x3] %vm88, 0.0
    %186 = vst.msk [vmem:[#allocation2 + $0x318] sm:$0xff] %vm85, 0.0
    %187 = vst.msk [vmem:[#allocation2 + $0x320] sm:$0xff] %vm85, 0.0
    %188 = vst.msk [vmem:[#allocation2 + $0x328] sm:$0x3] %vm88, 0.0
    %189 = vst.msk [vmem:[#allocation2 + $0x330] sm:$0xff] %vm85, 0.0
    %190 = vst.msk [vmem:[#allocation2 + $0x338] sm:$0xff] %vm85, 0.0
    %191 = vst.msk [vmem:[#allocation2 + $0x340] sm:$0x3] %vm88, 0.0
    %192 = vst.msk [vmem:[#allocation2 + $0x348] sm:$0xff] %vm85, 0.0
    %193 = vst.msk [vmem:[#allocation2 + $0x350] sm:$0xff] %vm85, 0.0
    %194 = vst.msk [vmem:[#allocation2 + $0x358] sm:$0x3] %vm88, 0.0
    %s195 = scalar_lea.vmem [#allocation2], 24
    %196 = vst.msk [vmem:[%s195 + $0x1] sm:$0xff] %vm85, %v21
    %197 = vst.msk [vmem:[%s195 + $0x9] sm:$0xff] %vm85, %v22
    %198 = vst.msk [vmem:[%s195 + $0x19] sm:$0xff] %vm85, %v23
    %199 = vst.msk [vmem:[%s195 + $0x21] sm:$0xff] %vm85, %v24
    %200 = vst.msk [vmem:[%s195 + $0x31] sm:$0xff] %vm85, %v25
    %201 = vst.msk [vmem:[%s195 + $0x39] sm:$0xff] %vm85, %v26
    %202 = vst.msk [vmem:[%s195 + $0x49] sm:$0xff] %vm85, %v27
    %203 = vst.msk [vmem:[%s195 + $0x51] sm:$0xff] %vm85, %v28
    %204 = vst.msk [vmem:[%s195 + $0x61] sm:$0xff] %vm85, %v29
    %205 = vst.msk [vmem:[%s195 + $0x69] sm:$0xff] %vm85, %v30
    %206 = vst.msk [vmem:[%s195 + $0x79] sm:$0xff] %vm85, %v31
    %207 = vst.msk [vmem:[%s195 + $0x81] sm:$0xff] %vm85, %v32
    %208 = vst.msk [vmem:[%s195 + $0x91] sm:$0xff] %vm85, %v33
    %209 = vst.msk [vmem:[%s195 + $0x99] sm:$0xff] %vm85, %v34
    %210 = vst.msk [vmem:[%s195 + $0xa9] sm:$0xff] %vm85, %v35
    %211 = vst.msk [vmem:[%s195 + $0xb1] sm:$0xff] %vm85, %v36
    %212 = vst.msk [vmem:[%s195 + $0xc1] sm:$0xff] %vm85, %v37
    %213 = vst.msk [vmem:[%s195 + $0xc9] sm:$0xff] %vm85, %v38
    %214 = vst.msk [vmem:[%s195 + $0xd9] sm:$0xff] %vm85, %v39
    %215 = vst.msk [vmem:[%s195 + $0xe1] sm:$0xff] %vm85, %v40
    %216 = vst.msk [vmem:[%s195 + $0xf1] sm:$0xff] %vm85, %v41
    %217 = vst.msk [vmem:[%s195 + $0xf9] sm:$0xff] %vm85, %v42
    %218 = vst.msk [vmem:[%s195 + $0x109] sm:$0xff] %vm85, %v43
    %219 = vst.msk [vmem:[%s195 + $0x111] sm:$0xff] %vm85, %v44
    %220 = vst.msk [vmem:[%s195 + $0x121] sm:$0xff] %vm85, %v45
    %221 = vst.msk [vmem:[%s195 + $0x129] sm:$0xff] %vm85, %v46
    %222 = vst.msk [vmem:[%s195 + $0x139] sm:$0xff] %vm85, %v47
    %223 = vst.msk [vmem:[%s195 + $0x141] sm:$0xff] %vm85, %v48
    %224 = vst.msk [vmem:[%s195 + $0x151] sm:$0xff] %vm85, %v49
    %225 = vst.msk [vmem:[%s195 + $0x159] sm:$0xff] %vm85, %v50
    %226 = vst.msk [vmem:[%s195 + $0x169] sm:$0xff] %vm85, %v51
    %227 = vst.msk [vmem:[%s195 + $0x171] sm:$0xff] %vm85, %v52
    %228 = vst.msk [vmem:[%s195 + $0x1b1] sm:$0xff] %vm85, %v53
    %229 = vst.msk [vmem:[%s195 + $0x1b9] sm:$0xff] %vm85, %v54
    %230 = vst.msk [vmem:[%s195 + $0x1c9] sm:$0xff] %vm85, %v55
    %231 = vst.msk [vmem:[%s195 + $0x1d1] sm:$0xff] %vm85, %v56
    %232 = vst.msk [vmem:[%s195 + $0x1e1] sm:$0xff] %vm85, %v57
    %233 = vst.msk [vmem:[%s195 + $0x1e9] sm:$0xff] %vm85, %v58
    %234 = vst.msk [vmem:[%s195 + $0x1f9] sm:$0xff] %vm85, %v59
    %235 = vst.msk [vmem:[%s195 + $0x201] sm:$0xff] %vm85, %v60
    %236 = vst.msk [vmem:[%s195 + $0x211] sm:$0xff] %vm85, %v61
    %237 = vst.msk [vmem:[%s195 + $0x219] sm:$0xff] %vm85, %v62
    %238 = vst.msk [vmem:[%s195 + $0x229] sm:$0xff] %vm85, %v63
    %239 = vst.msk [vmem:[%s195 + $0x231] sm:$0xff] %vm85, %v64
    %240 = vst.msk [vmem:[%s195 + $0x241] sm:$0xff] %vm85, %v65
    %241 = vst.msk [vmem:[%s195 + $0x249] sm:$0xff] %vm85, %v66
    %242 = vst.msk [vmem:[%s195 + $0x259] sm:$0xff] %vm85, %v67
    %243 = vst.msk [vmem:[%s195 + $0x261] sm:$0xff] %vm85, %v68
    %244 = vst.msk [vmem:[%s195 + $0x271] sm:$0xff] %vm85, %v69
    %245 = vst.msk [vmem:[%s195 + $0x279] sm:$0xff] %vm85, %v70
    %246 = vst.msk [vmem:[%s195 + $0x289] sm:$0xff] %vm85, %v71
    %247 = vst.msk [vmem:[%s195 + $0x291] sm:$0xff] %vm85, %v72
    %248 = vst.msk [vmem:[%s195 + $0x2a1] sm:$0xff] %vm85, %v73
    %249 = vst.msk [vmem:[%s195 + $0x2a9] sm:$0xff] %vm85, %v74
    %250 = vst.msk [vmem:[%s195 + $0x2b9] sm:$0xff] %vm85, %v75
    %251 = vst.msk [vmem:[%s195 + $0x2c1] sm:$0xff] %vm85, %v76
    %252 = vst.msk [vmem:[%s195 + $0x2d1] sm:$0xff] %vm85, %v77
    %253 = vst.msk [vmem:[%s195 + $0x2d9] sm:$0xff] %vm85, %v78
    %254 = vst.msk [vmem:[%s195 + $0x2e9] sm:$0xff] %vm85, %v79
    %255 = vst.msk [vmem:[%s195 + $0x2f1] sm:$0xff] %vm85, %v80
    %256 = vst.msk [vmem:[%s195 + $0x301] sm:$0xff] %vm85, %v81
    %257 = vst.msk [vmem:[%s195 + $0x309] sm:$0xff] %vm85, %v82
    %258 = vst.msk [vmem:[%s195 + $0x319] sm:$0xff] %vm85, %v83
    %259 = vst.msk [vmem:[%s195 + $0x321] sm:$0xff] %vm85, %v84
    %v260 = vld [vmem:[#allocation2] sm:$0xff]
    %v261 = vld [vmem:[#allocation2 + $0x8] sm:$0xff]
    %v262 = vld [vmem:[#allocation2 + $0x18] sm:$0xff]
    %v263 = vld [vmem:[#allocation2 + $0x20] sm:$0xff]
    %v264 = vld [vmem:[#allocation2 + $0x30] sm:$0xff]
    %v265 = vld [vmem:[#allocation2 + $0x38] sm:$0xff]
    %v266 = vld [vmem:[#allocation2 + $0x48] sm:$0xff]
    %v267 = vld [vmem:[#allocation2 + $0x50] sm:$0xff]
    %v268 = vld [vmem:[#allocation2 + $0x60] sm:$0xff]
    %v269 = vld [vmem:[#allocation2 + $0x68] sm:$0xff]
    %v270 = vld [vmem:[#allocation2 + $0x78] sm:$0xff]
    %v271 = vld [vmem:[#allocation2 + $0x80] sm:$0xff]
    %v272 = vld [vmem:[#allocation2 + $0x90] sm:$0xff]
    %v273 = vld [vmem:[#allocation2 + $0x98] sm:$0xff]
    %v274 = vld [vmem:[#allocation2 + $0xa8] sm:$0xff]
    %v275 = vld [vmem:[#allocation2 + $0xb0] sm:$0xff]
    %v276 = vld [vmem:[#allocation2 + $0xc0] sm:$0xff]
    %v277 = vld [vmem:[#allocation2 + $0xc8] sm:$0xff]
    %v278 = vld [vmem:[#allocation2 + $0xd8] sm:$0xff]
    %v279 = vld [vmem:[#allocation2 + $0xe0] sm:$0xff]
    %v280 = vld [vmem:[#allocation2 + $0xf0] sm:$0xff]
    %v281 = vld [vmem:[#allocation2 + $0xf8] sm:$0xff]
    %v282 = vld [vmem:[#allocation2 + $0x108] sm:$0xff]
    %v283 = vld [vmem:[#allocation2 + $0x110] sm:$0xff]
    %v284 = vld [vmem:[#allocation2 + $0x120] sm:$0xff]
    %v285 = vld [vmem:[#allocation2 + $0x128] sm:$0xff]
    %v286 = vld [vmem:[#allocation2 + $0x138] sm:$0xff]
    %v287 = vld [vmem:[#allocation2 + $0x140] sm:$0xff]
    %v288 = vld [vmem:[#allocation2 + $0x150] sm:$0xff]
    %v289 = vld [vmem:[#allocation2 + $0x158] sm:$0xff]
    %v290 = vld [vmem:[#allocation2 + $0x168] sm:$0xff]
    %v291 = vld [vmem:[#allocation2 + $0x170] sm:$0xff]
    %v292 = vld [vmem:[#allocation2 + $0x1b0] sm:$0xff]
    %v293 = vld [vmem:[#allocation2 + $0x1b8] sm:$0xff]
    %v294 = vld [vmem:[#allocation2 + $0x1c8] sm:$0xff]
    %v295 = vld [vmem:[#allocation2 + $0x1d0] sm:$0xff]
    %v296 = vld [vmem:[#allocation2 + $0x1e0] sm:$0xff]
    %v297 = vld [vmem:[#allocation2 + $0x1e8] sm:$0xff]
    %v298 = vld [vmem:[#allocation2 + $0x1f8] sm:$0xff]
    %v299 = vld [vmem:[#allocation2 + $0x200] sm:$0xff]
    %v300 = vld [vmem:[#allocation2 + $0x210] sm:$0xff]
    %v301 = vld [vmem:[#allocation2 + $0x218] sm:$0xff]
    %v302 = vld [vmem:[#allocation2 + $0x228] sm:$0xff]
    %v303 = vld [vmem:[#allocation2 + $0x230] sm:$0xff]
    %v304 = vld [vmem:[#allocation2 + $0x240] sm:$0xff]
    %v305 = vld [vmem:[#allocation2 + $0x248] sm:$0xff]
    %v306 = vld [vmem:[#allocation2 + $0x258] sm:$0xff]
    %v307 = vld [vmem:[#allocation2 + $0x260] sm:$0xff]
    %v308 = vld [vmem:[#allocation2 + $0x270] sm:$0xff]
    %v309 = vld [vmem:[#allocation2 + $0x278] sm:$0xff]
    %v310 = vld [vmem:[#allocation2 + $0x288] sm:$0xff]
    %v311 = vld [vmem:[#allocation2 + $0x290] sm:$0xff]
    %v312 = vld [vmem:[#allocation2 + $0x2a0] sm:$0xff]
    %v313 = vld [vmem:[#allocation2 + $0x2a8] sm:$0xff]
    %v314 = vld [vmem:[#allocation2 + $0x2b8] sm:$0xff]
    %v315 = vld [vmem:[#allocation2 + $0x2c0] sm:$0xff]
    %v316 = vld [vmem:[#allocation2 + $0x2d0] sm:$0xff]
    %v317 = vld [vmem:[#allocation2 + $0x2d8] sm:$0xff]
    %v318 = vld [vmem:[#allocation2 + $0x2e8] sm:$0xff]
    %v319 = vld [vmem:[#allocation2 + $0x2f0] sm:$0xff]
    %v320 = vld [vmem:[#allocation2 + $0x300] sm:$0xff]
    %v321 = vld [vmem:[#allocation2 + $0x308] sm:$0xff]
    %v322 = vld [vmem:[#allocation2 + $0x318] sm:$0xff]
    %v323 = vld [vmem:[#allocation2 + $0x320] sm:$0xff]
    %324 = vst.msk [vmem:[#allocation3] sm:$0xff] %vm85, %v260
    %325 = vst.msk [vmem:[#allocation3 + $0x8] sm:$0xff] %vm85, %v261
    %326 = vst.msk [vmem:[#allocation3 + $0x10] sm:$0xff] %vm85, %v262
    %327 = vst.msk [vmem:[#allocation3 + $0x18] sm:$0xff] %vm85, %v263
    %328 = vst.msk [vmem:[#allocation3 + $0x20] sm:$0xff] %vm85, %v264
    %329 = vst.msk [vmem:[#allocation3 + $0x28] sm:$0xff] %vm85, %v265
    %330 = vst.msk [vmem:[#allocation3 + $0x30] sm:$0xff] %vm85, %v266
    %331 = vst.msk [vmem:[#allocation3 + $0x38] sm:$0xff] %vm85, %v267
    %332 = vst.msk [vmem:[#allocation3 + $0x40] sm:$0xff] %vm85, %v268
    %333 = vst.msk [vmem:[#allocation3 + $0x48] sm:$0xff] %vm85, %v269
    %334 = vst.msk [vmem:[#allocation3 + $0x50] sm:$0xff] %vm85, %v270
    %335 = vst.msk [vmem:[#allocation3 + $0x58] sm:$0xff] %vm85, %v271
    %336 = vst.msk [vmem:[#allocation3 + $0x60] sm:$0xff] %vm85, %v272
    %337 = vst.msk [vmem:[#allocation3 + $0x68] sm:$0xff] %vm85, %v273
    %338 = vst.msk [vmem:[#allocation3 + $0x70] sm:$0xff] %vm85, %v274
    %339 = vst.msk [vmem:[#allocation3 + $0x78] sm:$0xff] %vm85, %v275
    %340 = vst.msk [vmem:[#allocation3 + $0x80] sm:$0xff] %vm85, %v276
    %341 = vst.msk [vmem:[#allocation3 + $0x88] sm:$0xff] %vm85, %v277
    %342 = vst.msk [vmem:[#allocation3 + $0x90] sm:$0xff] %vm85, %v278
    %343 = vst.msk [vmem:[#allocation3 + $0x98] sm:$0xff] %vm85, %v279
    %344 = vst.msk [vmem:[#allocation3 + $0xa0] sm:$0xff] %vm85, %v280
    %345 = vst.msk [vmem:[#allocation3 + $0xa8] sm:$0xff] %vm85, %v281
    %346 = vst.msk [vmem:[#allocation3 + $0xb0] sm:$0xff] %vm85, %v282
    %347 = vst.msk [vmem:[#allocation3 + $0xb8] sm:$0xff] %vm85, %v283
    %348 = vst.msk [vmem:[#allocation3 + $0xc0] sm:$0xff] %vm85, %v284
    %349 = vst.msk [vmem:[#allocation3 + $0xc8] sm:$0xff] %vm85, %v285
    %350 = vst.msk [vmem:[#allocation3 + $0xd0] sm:$0xff] %vm85, %v286
    %351 = vst.msk [vmem:[#allocation3 + $0xd8] sm:$0xff] %vm85, %v287
    %352 = vst.msk [vmem:[#allocation3 + $0xe0] sm:$0xff] %vm85, %v288
    %353 = vst.msk [vmem:[#allocation3 + $0xe8] sm:$0xff] %vm85, %v289
    %354 = vst.msk [vmem:[#allocation3 + $0xf0] sm:$0xff] %vm85, %v290
    %355 = vst.msk [vmem:[#allocation3 + $0xf8] sm:$0xff] %vm85, %v291
    %356 = vst.msk [vmem:[#allocation3 + $0x100] sm:$0xff] %vm85, %v292
    %357 = vst.msk [vmem:[#allocation3 + $0x108] sm:$0xff] %vm85, %v293
    %358 = vst.msk [vmem:[#allocation3 + $0x110] sm:$0xff] %vm85, %v294
    %359 = vst.msk [vmem:[#allocation3 + $0x118] sm:$0xff] %vm85, %v295
    %360 = vst.msk [vmem:[#allocation3 + $0x120] sm:$0xff] %vm85, %v296
    %361 = vst.msk [vmem:[#allocation3 + $0x128] sm:$0xff] %vm85, %v297
    %362 = vst.msk [vmem:[#allocation3 + $0x130] sm:$0xff] %vm85, %v298
    %363 = vst.msk [vmem:[#allocation3 + $0x138] sm:$0xff] %vm85, %v299
    %364 = vst.msk [vmem:[#allocation3 + $0x140] sm:$0xff] %vm85, %v300
    %365 = vst.msk [vmem:[#allocation3 + $0x148] sm:$0xff] %vm85, %v301
    %366 = vst.msk [vmem:[#allocation3 + $0x150] sm:$0xff] %vm85, %v302
    %367 = vst.msk [vmem:[#allocation3 + $0x158] sm:$0xff] %vm85, %v303
    %368 = vst.msk [vmem:[#allocation3 + $0x160] sm:$0xff] %vm85, %v304
    %369 = vst.msk [vmem:[#allocation3 + $0x168] sm:$0xff] %vm85, %v305
    %370 = vst.msk [vmem:[#allocation3 + $0x170] sm:$0xff] %vm85, %v306
    %371 = vst.msk [vmem:[#allocation3 + $0x178] sm:$0xff] %vm85, %v307
    %372 = vst.msk [vmem:[#allocation3 + $0x180] sm:$0xff] %vm85, %v308
    %373 = vst.msk [vmem:[#allocation3 + $0x188] sm:$0xff] %vm85, %v309
    %374 = vst.msk [vmem:[#allocation3 + $0x190] sm:$0xff] %vm85, %v310
    %375 = vst.msk [vmem:[#allocation3 + $0x198] sm:$0xff] %vm85, %v311
    %376 = vst.msk [vmem:[#allocation3 + $0x1a0] sm:$0xff] %vm85, %v312
    %377 = vst.msk [vmem:[#allocation3 + $0x1a8] sm:$0xff] %vm85, %v313
    %378 = vst.msk [vmem:[#allocation3 + $0x1b0] sm:$0xff] %vm85, %v314
    %379 = vst.msk [vmem:[#allocation3 + $0x1b8] sm:$0xff] %vm85, %v315
    %380 = vst.msk [vmem:[#allocation3 + $0x1c0] sm:$0xff] %vm85, %v316
    %381 = vst.msk [vmem:[#allocation3 + $0x1c8] sm:$0xff] %vm85, %v317
    %382 = vst.msk [vmem:[#allocation3 + $0x1d0] sm:$0xff] %vm85, %v318
    %383 = vst.msk [vmem:[#allocation3 + $0x1d8] sm:$0xff] %vm85, %v319
    %384 = vst.msk [vmem:[#allocation3 + $0x1e0] sm:$0xff] %vm85, %v320
    %385 = vst.msk [vmem:[#allocation3 + $0x1e8] sm:$0xff] %vm85, %v321
    %386 = vst.msk [vmem:[#allocation3 + $0x1f0] sm:$0xff] %vm85, %v322
    %387 = vst.msk [vmem:[#allocation3 + $0x1f8] sm:$0xff] %vm85, %v323
    %v388 = vld [vmem:[#allocation2 + $0x1] sm:$0xff]
    %v389 = vld [vmem:[#allocation2 + $0x9] sm:$0xff]
    %v390 = vld [vmem:[#allocation2 + $0x19] sm:$0xff]
    %v391 = vld [vmem:[#allocation2 + $0x21] sm:$0xff]
    %v392 = vld [vmem:[#allocation2 + $0x31] sm:$0xff]
    %v393 = vld [vmem:[#allocation2 + $0x39] sm:$0xff]
    %v394 = vld [vmem:[#allocation2 + $0x49] sm:$0xff]
    %v395 = vld [vmem:[#allocation2 + $0x51] sm:$0xff]
    %v396 = vld [vmem:[#allocation2 + $0x61] sm:$0xff]
    %v397 = vld [vmem:[#allocation2 + $0x69] sm:$0xff]
    %v398 = vld [vmem:[#allocation2 + $0x79] sm:$0xff]
    %v399 = vld [vmem:[#allocation2 + $0x81] sm:$0xff]
    %v400 = vld [vmem:[#allocation2 + $0x91] sm:$0xff]
    %v401 = vld [vmem:[#allocation2 + $0x99] sm:$0xff]
    %v402 = vld [vmem:[#allocation2 + $0xa9] sm:$0xff]
    %v403 = vld [vmem:[#allocation2 + $0xb1] sm:$0xff]
    %v404 = vld [vmem:[#allocation2 + $0xc1] sm:$0xff]
    %v405 = vld [vmem:[#allocation2 + $0xc9] sm:$0xff]
    %v406 = vld [vmem:[#allocation2 + $0xd9] sm:$0xff]
    %v407 = vld [vmem:[#allocation2 + $0xe1] sm:$0xff]
    %v408 = vld [vmem:[#allocation2 + $0xf1] sm:$0xff]
    %v409 = vld [vmem:[#allocation2 + $0xf9] sm:$0xff]
    %v410 = vld [vmem:[#allocation2 + $0x109] sm:$0xff]
    %v411 = vld [vmem:[#allocation2 + $0x111] sm:$0xff]
    %v412 = vld [vmem:[#allocation2 + $0x121] sm:$0xff]
    %v413 = vld [vmem:[#allocation2 + $0x129] sm:$0xff]
    %v414 = vld [vmem:[#allocation2 + $0x139] sm:$0xff]
    %v415 = vld [vmem:[#allocation2 + $0x141] sm:$0xff]
    %v416 = vld [vmem:[#allocation2 + $0x151] sm:$0xff]
    %v417 = vld [vmem:[#allocation2 + $0x159] sm:$0xff]
    %v418 = vld [vmem:[#allocation2 + $0x169] sm:$0xff]
    %v419 = vld [vmem:[#allocation2 + $0x171] sm:$0xff]
    %v420 = vld [vmem:[#allocation2 + $0x1b1] sm:$0xff]
    %v421 = vld [vmem:[#allocation2 + $0x1b9] sm:$0xff]
    %v422 = vld [vmem:[#allocation2 + $0x1c9] sm:$0xff]
    %v423 = vld [vmem:[#allocation2 + $0x1d1] sm:$0xff]
    %v424 = vld [vmem:[#allocation2 + $0x1e1] sm:$0xff]
    %v425 = vld [vmem:[#allocation2 + $0x1e9] sm:$0xff]
    %v426 = vld [vmem:[#allocation2 + $0x1f9] sm:$0xff]
    %v427 = vld [vmem:[#allocation2 + $0x201] sm:$0xff]
    %v428 = vld [vmem:[#allocation2 + $0x211] sm:$0xff]
    %v429 = vld [vmem:[#allocation2 + $0x219] sm:$0xff]
    %v430 = vld [vmem:[#allocation2 + $0x229] sm:$0xff]
    %v431 = vld [vmem:[#allocation2 + $0x231] sm:$0xff]
    %v432 = vld [vmem:[#allocation2 + $0x241] sm:$0xff]
    %v433 = vld [vmem:[#allocation2 + $0x249] sm:$0xff]
    %v434 = vld [vmem:[#allocation2 + $0x259] sm:$0xff]
    %v435 = vld [vmem:[#allocation2 + $0x261] sm:$0xff]
    %v436 = vld [vmem:[#allocation2 + $0x271] sm:$0xff]
    %v437 = vld [vmem:[#allocation2 + $0x279] sm:$0xff]
    %v438 = vld [vmem:[#allocation2 + $0x289] sm:$0xff]
    %v439 = vld [vmem:[#allocation2 + $0x291] sm:$0xff]
    %v440 = vld [vmem:[#allocation2 + $0x2a1] sm:$0xff]
    %v441 = vld [vmem:[#allocation2 + $0x2a9] sm:$0xff]
    %v442 = vld [vmem:[#allocation2 + $0x2b9] sm:$0xff]
    %v443 = vld [vmem:[#allocation2 + $0x2c1] sm:$0xff]
    %v444 = vld [vmem:[#allocation2 + $0x2d1] sm:$0xff]
    %v445 = vld [vmem:[#allocation2 + $0x2d9] sm:$0xff]
    %v446 = vld [vmem:[#allocation2 + $0x2e9] sm:$0xff]
    %v447 = vld [vmem:[#allocation2 + $0x2f1] sm:$0xff]
    %v448 = vld [vmem:[#allocation2 + $0x301] sm:$0xff]
    %v449 = vld [vmem:[#allocation2 + $0x309] sm:$0xff]
    %v450 = vld [vmem:[#allocation2 + $0x319] sm:$0xff]
    %v451 = vld [vmem:[#allocation2 + $0x321] sm:$0xff]
    %516 = vrot.lane.b32.xlu0 %v388, 4
    %v517 = vpop.permute.xlu0 %516
    %518 = vrot.lane.b32.xlu0 %v389, 4
    %v519 = vpop.permute.xlu0 %518
    %520 = vrot.lane.b32.xlu0 %v390, 4
    %v521 = vpop.permute.xlu0 %520
    %522 = vrot.lane.b32.xlu0 %v391, 4
    %v523 = vpop.permute.xlu0 %522
    %524 = vrot.lane.b32.xlu0 %v392, 4
    %v525 = vpop.permute.xlu0 %524
    %526 = vrot.lane.b32.xlu0 %v393, 4
    %v527 = vpop.permute.xlu0 %526
    %528 = vrot.lane.b32.xlu0 %v394, 4
    %v529 = vpop.permute.xlu0 %528
    %530 = vrot.lane.b32.xlu0 %v395, 4
    %v531 = vpop.permute.xlu0 %530
    %532 = vrot.lane.b32.xlu0 %v396, 4
    %v533 = vpop.permute.xlu0 %532
    %534 = vrot.lane.b32.xlu0 %v397, 4
    %v535 = vpop.permute.xlu0 %534
    %536 = vrot.lane.b32.xlu0 %v398, 4
    %v537 = vpop.permute.xlu0 %536
    %538 = vrot.lane.b32.xlu0 %v399, 4
    %v539 = vpop.permute.xlu0 %538
    %540 = vrot.lane.b32.xlu0 %v400, 4
    %v541 = vpop.permute.xlu0 %540
    %542 = vrot.lane.b32.xlu0 %v401, 4
    %v543 = vpop.permute.xlu0 %542
    %544 = vrot.lane.b32.xlu0 %v402, 4
    %v545 = vpop.permute.xlu0 %544
    %546 = vrot.lane.b32.xlu0 %v403, 4
    %v547 = vpop.permute.xlu0 %546
    %548 = vrot.lane.b32.xlu0 %v404, 4
    %v549 = vpop.permute.xlu0 %548
    %550 = vrot.lane.b32.xlu0 %v405, 4
    %v551 = vpop.permute.xlu0 %550
    %552 = vrot.lane.b32.xlu0 %v406, 4
    %v553 = vpop.permute.xlu0 %552
    %554 = vrot.lane.b32.xlu0 %v407, 4
    %v555 = vpop.permute.xlu0 %554
    %556 = vrot.lane.b32.xlu0 %v408, 4
    %v557 = vpop.permute.xlu0 %556
    %558 = vrot.lane.b32.xlu0 %v409, 4
    %v559 = vpop.permute.xlu0 %558
    %560 = vrot.lane.b32.xlu0 %v410, 4
    %v561 = vpop.permute.xlu0 %560
    %562 = vrot.lane.b32.xlu0 %v411, 4
    %v563 = vpop.permute.xlu0 %562
    %564 = vrot.lane.b32.xlu0 %v412, 4
    %v565 = vpop.permute.xlu0 %564
    %566 = vrot.lane.b32.xlu0 %v413, 4
    %v567 = vpop.permute.xlu0 %566
    %568 = vrot.lane.b32.xlu0 %v414, 4
    %v569 = vpop.permute.xlu0 %568
    %570 = vrot.lane.b32.xlu0 %v415, 4
    %v571 = vpop.permute.xlu0 %570
    %572 = vrot.lane.b32.xlu0 %v416, 4
    %v573 = vpop.permute.xlu0 %572
    %574 = vrot.lane.b32.xlu0 %v417, 4
    %v575 = vpop.permute.xlu0 %574
    %576 = vrot.lane.b32.xlu0 %v418, 4
    %v577 = vpop.permute.xlu0 %576
    %578 = vrot.lane.b32.xlu0 %v419, 4
    %v579 = vpop.permute.xlu0 %578
    %580 = vrot.lane.b32.xlu0 %v420, 4
    %v581 = vpop.permute.xlu0 %580
    %582 = vrot.lane.b32.xlu0 %v421, 4
    %v583 = vpop.permute.xlu0 %582
    %584 = vrot.lane.b32.xlu0 %v422, 4
    %v585 = vpop.permute.xlu0 %584
    %586 = vrot.lane.b32.xlu0 %v423, 4
    %v587 = vpop.permute.xlu0 %586
    %588 = vrot.lane.b32.xlu0 %v424, 4
    %v589 = vpop.permute.xlu0 %588
    %590 = vrot.lane.b32.xlu0 %v425, 4
    %v591 = vpop.permute.xlu0 %590
    %592 = vrot.lane.b32.xlu0 %v426, 4
    %v593 = vpop.permute.xlu0 %592
    %594 = vrot.lane.b32.xlu0 %v427, 4
    %v595 = vpop.permute.xlu0 %594
    %596 = vrot.lane.b32.xlu0 %v428, 4
    %v597 = vpop.permute.xlu0 %596
    %598 = vrot.lane.b32.xlu0 %v429, 4
    %v599 = vpop.permute.xlu0 %598
    %600 = vrot.lane.b32.xlu0 %v430, 4
    %v601 = vpop.permute.xlu0 %600
    %602 = vrot.lane.b32.xlu0 %v431, 4
    %v603 = vpop.permute.xlu0 %602
    %604 = vrot.lane.b32.xlu0 %v432, 4
    %v605 = vpop.permute.xlu0 %604
    %606 = vrot.lane.b32.xlu0 %v433, 4
    %v607 = vpop.permute.xlu0 %606
    %608 = vrot.lane.b32.xlu0 %v434, 4
    %v609 = vpop.permute.xlu0 %608
    %610 = vrot.lane.b32.xlu0 %v435, 4
    %v611 = vpop.permute.xlu0 %610
    %612 = vrot.lane.b32.xlu0 %v436, 4
    %v613 = vpop.permute.xlu0 %612
    %614 = vrot.lane.b32.xlu0 %v437, 4
    %v615 = vpop.permute.xlu0 %614
    %616 = vrot.lane.b32.xlu0 %v438, 4
    %v617 = vpop.permute.xlu0 %616
    %618 = vrot.lane.b32.xlu0 %v439, 4
    %v619 = vpop.permute.xlu0 %618
    %620 = vrot.lane.b32.xlu0 %v440, 4
    %v621 = vpop.permute.xlu0 %620
    %622 = vrot.lane.b32.xlu0 %v441, 4
    %v623 = vpop.permute.xlu0 %622
    %624 = vrot.lane.b32.xlu0 %v442, 4
    %v625 = vpop.permute.xlu0 %624
    %626 = vrot.lane.b32.xlu0 %v443, 4
    %v627 = vpop.permute.xlu0 %626
    %628 = vrot.lane.b32.xlu0 %v444, 4
    %v629 = vpop.permute.xlu0 %628
    %630 = vrot.lane.b32.xlu0 %v445, 4
    %v631 = vpop.permute.xlu0 %630
    %632 = vrot.lane.b32.xlu0 %v446, 4
    %v633 = vpop.permute.xlu0 %632
    %634 = vrot.lane.b32.xlu0 %v447, 4
    %v635 = vpop.permute.xlu0 %634
    %636 = vrot.lane.b32.xlu0 %v448, 4
    %v637 = vpop.permute.xlu0 %636
    %638 = vrot.lane.b32.xlu0 %v449, 4
    %v639 = vpop.permute.xlu0 %638
    %640 = vrot.lane.b32.xlu0 %v450, 4
    %v641 = vpop.permute.xlu0 %640
    %642 = vrot.lane.b32.xlu0 %v451, 4
    %v643 = vpop.permute.xlu0 %642
    %vm708 = vcmask 64544
    %709 = vst.msk [vmem:[#allocation3] sm:$0xff] %vm708, %v517
    %710 = vst.msk [vmem:[#allocation3 + $0x8] sm:$0xff] %vm708, %v519
    %711 = vst.msk [vmem:[#allocation3 + $0x10] sm:$0xff] %vm708, %v521
    %712 = vst.msk [vmem:[#allocation3 + $0x18] sm:$0xff] %vm708, %v523
    %713 = vst.msk [vmem:[#allocation3 + $0x20] sm:$0xff] %vm708, %v525
    %714 = vst.msk [vmem:[#allocation3 + $0x28] sm:$0xff] %vm708, %v527
    %715 = vst.msk [vmem:[#allocation3 + $0x30] sm:$0xff] %vm708, %v529
    %716 = vst.msk [vmem:[#allocation3 + $0x38] sm:$0xff] %vm708, %v531
    %717 = vst.msk [vmem:[#allocation3 + $0x40] sm:$0xff] %vm708, %v533
    %718 = vst.msk [vmem:[#allocation3 + $0x48] sm:$0xff] %vm708, %v535
    %719 = vst.msk [vmem:[#allocation3 + $0x50] sm:$0xff] %vm708, %v537
    %720 = vst.msk [vmem:[#allocation3 + $0x58] sm:$0xff] %vm708, %v539
    %721 = vst.msk [vmem:[#allocation3 + $0x60] sm:$0xff] %vm708, %v541
    %722 = vst.msk [vmem:[#allocation3 + $0x68] sm:$0xff] %vm708, %v543
    %723 = vst.msk [vmem:[#allocation3 + $0x70] sm:$0xff] %vm708, %v545
    %724 = vst.msk [vmem:[#allocation3 + $0x78] sm:$0xff] %vm708, %v547
    %725 = vst.msk [vmem:[#allocation3 + $0x80] sm:$0xff] %vm708, %v549
    %726 = vst.msk [vmem:[#allocation3 + $0x88] sm:$0xff] %vm708, %v551
    %727 = vst.msk [vmem:[#allocation3 + $0x90] sm:$0xff] %vm708, %v553
    %728 = vst.msk [vmem:[#allocation3 + $0x98] sm:$0xff] %vm708, %v555
    %729 = vst.msk [vmem:[#allocation3 + $0xa0] sm:$0xff] %vm708, %v557
    %730 = vst.msk [vmem:[#allocation3 + $0xa8] sm:$0xff] %vm708, %v559
    %731 = vst.msk [vmem:[#allocation3 + $0xb0] sm:$0xff] %vm708, %v561
    %732 = vst.msk [vmem:[#allocation3 + $0xb8] sm:$0xff] %vm708, %v563
    %733 = vst.msk [vmem:[#allocation3 + $0xc0] sm:$0xff] %vm708, %v565
    %734 = vst.msk [vmem:[#allocation3 + $0xc8] sm:$0xff] %vm708, %v567
    %735 = vst.msk [vmem:[#allocation3 + $0xd0] sm:$0xff] %vm708, %v569
    %736 = vst.msk [vmem:[#allocation3 + $0xd8] sm:$0xff] %vm708, %v571
    %737 = vst.msk [vmem:[#allocation3 + $0xe0] sm:$0xff] %vm708, %v573
    %738 = vst.msk [vmem:[#allocation3 + $0xe8] sm:$0xff] %vm708, %v575
    %739 = vst.msk [vmem:[#allocation3 + $0xf0] sm:$0xff] %vm708, %v577
    %740 = vst.msk [vmem:[#allocation3 + $0xf8] sm:$0xff] %vm708, %v579
    %741 = vst.msk [vmem:[#allocation3 + $0x100] sm:$0xff] %vm708, %v581
    %742 = vst.msk [vmem:[#allocation3 + $0x108] sm:$0xff] %vm708, %v583
    %743 = vst.msk [vmem:[#allocation3 + $0x110] sm:$0xff] %vm708, %v585
    %744 = vst.msk [vmem:[#allocation3 + $0x118] sm:$0xff] %vm708, %v587
    %745 = vst.msk [vmem:[#allocation3 + $0x120] sm:$0xff] %vm708, %v589
    %746 = vst.msk [vmem:[#allocation3 + $0x128] sm:$0xff] %vm708, %v591
    %747 = vst.msk [vmem:[#allocation3 + $0x130] sm:$0xff] %vm708, %v593
    %748 = vst.msk [vmem:[#allocation3 + $0x138] sm:$0xff] %vm708, %v595
    %749 = vst.msk [vmem:[#allocation3 + $0x140] sm:$0xff] %vm708, %v597
    %750 = vst.msk [vmem:[#allocation3 + $0x148] sm:$0xff] %vm708, %v599
    %751 = vst.msk [vmem:[#allocation3 + $0x150] sm:$0xff] %vm708, %v601
    %752 = vst.msk [vmem:[#allocation3 + $0x158] sm:$0xff] %vm708, %v603
    %753 = vst.msk [vmem:[#allocation3 + $0x160] sm:$0xff] %vm708, %v605
    %754 = vst.msk [vmem:[#allocation3 + $0x168] sm:$0xff] %vm708, %v607
    %755 = vst.msk [vmem:[#allocation3 + $0x170] sm:$0xff] %vm708, %v609
    %756 = vst.msk [vmem:[#allocation3 + $0x178] sm:$0xff] %vm708, %v611
    %757 = vst.msk [vmem:[#allocation3 + $0x180] sm:$0xff] %vm708, %v613
    %758 = vst.msk [vmem:[#allocation3 + $0x188] sm:$0xff] %vm708, %v615
    %759 = vst.msk [vmem:[#allocation3 + $0x190] sm:$0xff] %vm708, %v617
    %760 = vst.msk [vmem:[#allocation3 + $0x198] sm:$0xff] %vm708, %v619
    %761 = vst.msk [vmem:[#allocation3 + $0x1a0] sm:$0xff] %vm708, %v621
    %762 = vst.msk [vmem:[#allocation3 + $0x1a8] sm:$0xff] %vm708, %v623
    %763 = vst.msk [vmem:[#allocation3 + $0x1b0] sm:$0xff] %vm708, %v625
    %764 = vst.msk [vmem:[#allocation3 + $0x1b8] sm:$0xff] %vm708, %v627
    %765 = vst.msk [vmem:[#allocation3 + $0x1c0] sm:$0xff] %vm708, %v629
    %766 = vst.msk [vmem:[#allocation3 + $0x1c8] sm:$0xff] %vm708, %v631
    %767 = vst.msk [vmem:[#allocation3 + $0x1d0] sm:$0xff] %vm708, %v633
    %768 = vst.msk [vmem:[#allocation3 + $0x1d8] sm:$0xff] %vm708, %v635
    %769 = vst.msk [vmem:[#allocation3 + $0x1e0] sm:$0xff] %vm708, %v637
    %770 = vst.msk [vmem:[#allocation3 + $0x1e8] sm:$0xff] %vm708, %v639
    %771 = vst.msk [vmem:[#allocation3 + $0x1f0] sm:$0xff] %vm708, %v641
    %772 = vst.msk [vmem:[#allocation3 + $0x1f8] sm:$0xff] %vm708, %v643
    %v773 = vld [vmem:[#allocation2 + $0x2] sm:$0xff]
    %v774 = vld [vmem:[#allocation2 + $0xa] sm:$0xff]
    %v775 = vld [vmem:[#allocation2 + $0x1a] sm:$0xff]
    %v776 = vld [vmem:[#allocation2 + $0x22] sm:$0xff]
    %v777 = vld [vmem:[#allocation2 + $0x32] sm:$0xff]
    %v778 = vld [vmem:[#allocation2 + $0x3a] sm:$0xff]
    %v779 = vld [vmem:[#allocation2 + $0x4a] sm:$0xff]
    %v780 = vld [vmem:[#allocation2 + $0x52] sm:$0xff]
    %v781 = vld [vmem:[#allocation2 + $0x62] sm:$0xff]
    %v782 = vld [vmem:[#allocation2 + $0x6a] sm:$0xff]
    %v783 = vld [vmem:[#allocation2 + $0x7a] sm:$0xff]
    %v784 = vld [vmem:[#allocation2 + $0x82] sm:$0xff]
    %v785 = vld [vmem:[#allocation2 + $0x92] sm:$0xff]
    %v786 = vld [vmem:[#allocation2 + $0x9a] sm:$0xff]
    %v787 = vld [vmem:[#allocation2 + $0xaa] sm:$0xff]
    %v788 = vld [vmem:[#allocation2 + $0xb2] sm:$0xff]
    %v789 = vld [vmem:[#allocation2 + $0xc2] sm:$0xff]
    %v790 = vld [vmem:[#allocation2 + $0xca] sm:$0xff]
    %v791 = vld [vmem:[#allocation2 + $0xda] sm:$0xff]
    %v792 = vld [vmem:[#allocation2 + $0xe2] sm:$0xff]
    %v793 = vld [vmem:[#allocation2 + $0xf2] sm:$0xff]
    %v794 = vld [vmem:[#allocation2 + $0xfa] sm:$0xff]
    %v795 = vld [vmem:[#allocation2 + $0x10a] sm:$0xff]
    %v796 = vld [vmem:[#allocation2 + $0x112] sm:$0xff]
    %v797 = vld [vmem:[#allocation2 + $0x122] sm:$0xff]
    %v798 = vld [vmem:[#allocation2 + $0x12a] sm:$0xff]
    %v799 = vld [vmem:[#allocation2 + $0x13a] sm:$0xff]
    %v800 = vld [vmem:[#allocation2 + $0x142] sm:$0xff]
    %v801 = vld [vmem:[#allocation2 + $0x152] sm:$0xff]
    %v802 = vld [vmem:[#allocation2 + $0x15a] sm:$0xff]
    %v803 = vld [vmem:[#allocation2 + $0x16a] sm:$0xff]
    %v804 = vld [vmem:[#allocation2 + $0x172] sm:$0xff]
    %v805 = vld [vmem:[#allocation2 + $0x1b2] sm:$0xff]
    %v806 = vld [vmem:[#allocation2 + $0x1ba] sm:$0xff]
    %v807 = vld [vmem:[#allocation2 + $0x1ca] sm:$0xff]
    %v808 = vld [vmem:[#allocation2 + $0x1d2] sm:$0xff]
    %v809 = vld [vmem:[#allocation2 + $0x1e2] sm:$0xff]
    %v810 = vld [vmem:[#allocation2 + $0x1ea] sm:$0xff]
    %v811 = vld [vmem:[#allocation2 + $0x1fa] sm:$0xff]
    %v812 = vld [vmem:[#allocation2 + $0x202] sm:$0xff]
    %v813 = vld [vmem:[#allocation2 + $0x212] sm:$0xff]
    %v814 = vld [vmem:[#allocation2 + $0x21a] sm:$0xff]
    %v815 = vld [vmem:[#allocation2 + $0x22a] sm:$0xff]
    %v816 = vld [vmem:[#allocation2 + $0x232] sm:$0xff]
    %v817 = vld [vmem:[#allocation2 + $0x242] sm:$0xff]
    %v818 = vld [vmem:[#allocation2 + $0x24a] sm:$0xff]
    %v819 = vld [vmem:[#allocation2 + $0x25a] sm:$0xff]
    %v820 = vld [vmem:[#allocation2 + $0x262] sm:$0xff]
    %v821 = vld [vmem:[#allocation2 + $0x272] sm:$0xff]
    %v822 = vld [vmem:[#allocation2 + $0x27a] sm:$0xff]
    %v823 = vld [vmem:[#allocation2 + $0x28a] sm:$0xff]
    %v824 = vld [vmem:[#allocation2 + $0x292] sm:$0xff]
    %v825 = vld [vmem:[#allocation2 + $0x2a2] sm:$0xff]
    %v826 = vld [vmem:[#allocation2 + $0x2aa] sm:$0xff]
    %v827 = vld [vmem:[#allocation2 + $0x2ba] sm:$0xff]
    %v828 = vld [vmem:[#allocation2 + $0x2c2] sm:$0xff]
    %v829 = vld [vmem:[#allocation2 + $0x2d2] sm:$0xff]
    %v830 = vld [vmem:[#allocation2 + $0x2da] sm:$0xff]
    %v831 = vld [vmem:[#allocation2 + $0x2ea] sm:$0xff]
    %v832 = vld [vmem:[#allocation2 + $0x2f2] sm:$0xff]
    %v833 = vld [vmem:[#allocation2 + $0x302] sm:$0xff]
    %v834 = vld [vmem:[#allocation2 + $0x30a] sm:$0xff]
    %v835 = vld [vmem:[#allocation2 + $0x31a] sm:$0xff]
    %v836 = vld [vmem:[#allocation2 + $0x322] sm:$0xff]
    %901 = vrot.lane.b32.xlu0 %v773, 8
    %v902 = vpop.permute.xlu0 %901
    %903 = vrot.lane.b32.xlu0 %v774, 8
    %v904 = vpop.permute.xlu0 %903
    %905 = vrot.lane.b32.xlu0 %v775, 8
    %v906 = vpop.permute.xlu0 %905
    %907 = vrot.lane.b32.xlu0 %v776, 8
    %v908 = vpop.permute.xlu0 %907
    %909 = vrot.lane.b32.xlu0 %v777, 8
    %v910 = vpop.permute.xlu0 %909
    %911 = vrot.lane.b32.xlu0 %v778, 8
    %v912 = vpop.permute.xlu0 %911
    %913 = vrot.lane.b32.xlu0 %v779, 8
    %v914 = vpop.permute.xlu0 %913
    %915 = vrot.lane.b32.xlu0 %v780, 8
    %v916 = vpop.permute.xlu0 %915
    %917 = vrot.lane.b32.xlu0 %v781, 8
    %v918 = vpop.permute.xlu0 %917
    %919 = vrot.lane.b32.xlu0 %v782, 8
    %v920 = vpop.permute.xlu0 %919
    %921 = vrot.lane.b32.xlu0 %v783, 8
    %v922 = vpop.permute.xlu0 %921
    %923 = vrot.lane.b32.xlu0 %v784, 8
    %v924 = vpop.permute.xlu0 %923
    %925 = vrot.lane.b32.xlu0 %v785, 8
    %v926 = vpop.permute.xlu0 %925
    %927 = vrot.lane.b32.xlu0 %v786, 8
    %v928 = vpop.permute.xlu0 %927
    %929 = vrot.lane.b32.xlu0 %v787, 8
    %v930 = vpop.permute.xlu0 %929
    %931 = vrot.lane.b32.xlu0 %v788, 8
    %v932 = vpop.permute.xlu0 %931
    %933 = vrot.lane.b32.xlu0 %v789, 8
    %v934 = vpop.permute.xlu0 %933
    %935 = vrot.lane.b32.xlu0 %v790, 8
    %v936 = vpop.permute.xlu0 %935
    %937 = vrot.lane.b32.xlu0 %v791, 8
    %v938 = vpop.permute.xlu0 %937
    %939 = vrot.lane.b32.xlu0 %v792, 8
    %v940 = vpop.permute.xlu0 %939
    %941 = vrot.lane.b32.xlu0 %v793, 8
    %v942 = vpop.permute.xlu0 %941
    %943 = vrot.lane.b32.xlu0 %v794, 8
    %v944 = vpop.permute.xlu0 %943
    %945 = vrot.lane.b32.xlu0 %v795, 8
    %v946 = vpop.permute.xlu0 %945
    %947 = vrot.lane.b32.xlu0 %v796, 8
    %v948 = vpop.permute.xlu0 %947
    %949 = vrot.lane.b32.xlu0 %v797, 8
    %v950 = vpop.permute.xlu0 %949
    %951 = vrot.lane.b32.xlu0 %v798, 8
    %v952 = vpop.permute.xlu0 %951
    %953 = vrot.lane.b32.xlu0 %v799, 8
    %v954 = vpop.permute.xlu0 %953
    %955 = vrot.lane.b32.xlu0 %v800, 8
    %v956 = vpop.permute.xlu0 %955
    %957 = vrot.lane.b32.xlu0 %v801, 8
    %v958 = vpop.permute.xlu0 %957
    %959 = vrot.lane.b32.xlu0 %v802, 8
    %v960 = vpop.permute.xlu0 %959
    %961 = vrot.lane.b32.xlu0 %v803, 8
    %v962 = vpop.permute.xlu0 %961
    %963 = vrot.lane.b32.xlu0 %v804, 8
    %v964 = vpop.permute.xlu0 %963
    %965 = vrot.lane.b32.xlu0 %v805, 8
    %v966 = vpop.permute.xlu0 %965
    %967 = vrot.lane.b32.xlu0 %v806, 8
    %v968 = vpop.permute.xlu0 %967
    %969 = vrot.lane.b32.xlu0 %v807, 8
    %v970 = vpop.permute.xlu0 %969
    %971 = vrot.lane.b32.xlu0 %v808, 8
    %v972 = vpop.permute.xlu0 %971
    %973 = vrot.lane.b32.xlu0 %v809, 8
    %v974 = vpop.permute.xlu0 %973
    %975 = vrot.lane.b32.xlu0 %v810, 8
    %v976 = vpop.permute.xlu0 %975
    %977 = vrot.lane.b32.xlu0 %v811, 8
    %v978 = vpop.permute.xlu0 %977
    %979 = vrot.lane.b32.xlu0 %v812, 8
    %v980 = vpop.permute.xlu0 %979
    %981 = vrot.lane.b32.xlu0 %v813, 8
    %v982 = vpop.permute.xlu0 %981
    %983 = vrot.lane.b32.xlu0 %v814, 8
    %v984 = vpop.permute.xlu0 %983
    %985 = vrot.lane.b32.xlu0 %v815, 8
    %v986 = vpop.permute.xlu0 %985
    %987 = vrot.lane.b32.xlu0 %v816, 8
    %v988 = vpop.permute.xlu0 %987
    %989 = vrot.lane.b32.xlu0 %v817, 8
    %v990 = vpop.permute.xlu0 %989
    %991 = vrot.lane.b32.xlu0 %v818, 8
    %v992 = vpop.permute.xlu0 %991
    %993 = vrot.lane.b32.xlu0 %v819, 8
    %v994 = vpop.permute.xlu0 %993
    %995 = vrot.lane.b32.xlu0 %v820, 8
    %v996 = vpop.permute.xlu0 %995
    %997 = vrot.lane.b32.xlu0 %v821, 8
    %v998 = vpop.permute.xlu0 %997
    %999 = vrot.lane.b32.xlu0 %v822, 8
    %v1000 = vpop.permute.xlu0 %999
    %1001 = vrot.lane.b32.xlu0 %v823, 8
    %v1002 = vpop.permute.xlu0 %1001
    %1003 = vrot.lane.b32.xlu0 %v824, 8
    %v1004 = vpop.permute.xlu0 %1003
    %1005 = vrot.lane.b32.xlu0 %v825, 8
    %v1006 = vpop.permute.xlu0 %1005
    %1007 = vrot.lane.b32.xlu0 %v826, 8
    %v1008 = vpop.permute.xlu0 %1007
    %1009 = vrot.lane.b32.xlu0 %v827, 8
    %v1010 = vpop.permute.xlu0 %1009
    %1011 = vrot.lane.b32.xlu0 %v828, 8
    %v1012 = vpop.permute.xlu0 %1011
    %1013 = vrot.lane.b32.xlu0 %v829, 8
    %v1014 = vpop.permute.xlu0 %1013
    %1015 = vrot.lane.b32.xlu0 %v830, 8
    %v1016 = vpop.permute.xlu0 %1015
    %1017 = vrot.lane.b32.xlu0 %v831, 8
    %v1018 = vpop.permute.xlu0 %1017
    %1019 = vrot.lane.b32.xlu0 %v832, 8
    %v1020 = vpop.permute.xlu0 %1019
    %1021 = vrot.lane.b32.xlu0 %v833, 8
    %v1022 = vpop.permute.xlu0 %1021
    %1023 = vrot.lane.b32.xlu0 %v834, 8
    %v1024 = vpop.permute.xlu0 %1023
    %1025 = vrot.lane.b32.xlu0 %v835, 8
    %v1026 = vpop.permute.xlu0 %1025
    %1027 = vrot.lane.b32.xlu0 %v836, 8
    %v1028 = vpop.permute.xlu0 %1027
    %vm1093 = vcmask 97344
    %1094 = vst.msk [vmem:[#allocation3] sm:$0xff] %vm1093, %v902
    %1095 = vst.msk [vmem:[#allocation3 + $0x8] sm:$0xff] %vm1093, %v904
    %1096 = vst.msk [vmem:[#allocation3 + $0x10] sm:$0xff] %vm1093, %v906
    %1097 = vst.msk [vmem:[#allocation3 + $0x18] sm:$0xff] %vm1093, %v908
    %1098 = vst.msk [vmem:[#allocation3 + $0x20] sm:$0xff] %vm1093, %v910
    %1099 = vst.msk [vmem:[#allocation3 + $0x28] sm:$0xff] %vm1093, %v912
    %1100 = vst.msk [vmem:[#allocation3 + $0x30] sm:$0xff] %vm1093, %v914
    %1101 = vst.msk [vmem:[#allocation3 + $0x38] sm:$0xff] %vm1093, %v916
    %1102 = vst.msk [vmem:[#allocation3 + $0x40] sm:$0xff] %vm1093, %v918
    %1103 = vst.msk [vmem:[#allocation3 + $0x48] sm:$0xff] %vm1093, %v920
    %1104 = vst.msk [vmem:[#allocation3 + $0x50] sm:$0xff] %vm1093, %v922
    %1105 = vst.msk [vmem:[#allocation3 + $0x58] sm:$0xff] %vm1093, %v924
    %1106 = vst.msk [vmem:[#allocation3 + $0x60] sm:$0xff] %vm1093, %v926
    %1107 = vst.msk [vmem:[#allocation3 + $0x68] sm:$0xff] %vm1093, %v928
    %1108 = vst.msk [vmem:[#allocation3 + $0x70] sm:$0xff] %vm1093, %v930
    %1109 = vst.msk [vmem:[#allocation3 + $0x78] sm:$0xff] %vm1093, %v932
    %1110 = vst.msk [vmem:[#allocation3 + $0x80] sm:$0xff] %vm1093, %v934
    %1111 = vst.msk [vmem:[#allocation3 + $0x88] sm:$0xff] %vm1093, %v936
    %1112 = vst.msk [vmem:[#allocation3 + $0x90] sm:$0xff] %vm1093, %v938
    %1113 = vst.msk [vmem:[#allocation3 + $0x98] sm:$0xff] %vm1093, %v940
    %1114 = vst.msk [vmem:[#allocation3 + $0xa0] sm:$0xff] %vm1093, %v942
    %1115 = vst.msk [vmem:[#allocation3 + $0xa8] sm:$0xff] %vm1093, %v944
    %1116 = vst.msk [vmem:[#allocation3 + $0xb0] sm:$0xff] %vm1093, %v946
    %1117 = vst.msk [vmem:[#allocation3 + $0xb8] sm:$0xff] %vm1093, %v948
    %1118 = vst.msk [vmem:[#allocation3 + $0xc0] sm:$0xff] %vm1093, %v950
    %1119 = vst.msk [vmem:[#allocation3 + $0xc8] sm:$0xff] %vm1093, %v952
    %1120 = vst.msk [vmem:[#allocation3 + $0xd0] sm:$0xff] %vm1093, %v954
    %1121 = vst.msk [vmem:[#allocation3 + $0xd8] sm:$0xff] %vm1093, %v956
    %1122 = vst.msk [vmem:[#allocation3 + $0xe0] sm:$0xff] %vm1093, %v958
    %1123 = vst.msk [vmem:[#allocation3 + $0xe8] sm:$0xff] %vm1093, %v960
    %1124 = vst.msk [vmem:[#allocation3 + $0xf0] sm:$0xff] %vm1093, %v962
    %1125 = vst.msk [vmem:[#allocation3 + $0xf8] sm:$0xff] %vm1093, %v964
    %1126 = vst.msk [vmem:[#allocation3 + $0x100] sm:$0xff] %vm1093, %v966
    %1127 = vst.msk [vmem:[#allocation3 + $0x108] sm:$0xff] %vm1093, %v968
    %1128 = vst.msk [vmem:[#allocation3 + $0x110] sm:$0xff] %vm1093, %v970
    %1129 = vst.msk [vmem:[#allocation3 + $0x118] sm:$0xff] %vm1093, %v972
    %1130 = vst.msk [vmem:[#allocation3 + $0x120] sm:$0xff] %vm1093, %v974
    %1131 = vst.msk [vmem:[#allocation3 + $0x128] sm:$0xff] %vm1093, %v976
    %1132 = vst.msk [vmem:[#allocation3 + $0x130] sm:$0xff] %vm1093, %v978
    %1133 = vst.msk [vmem:[#allocation3 + $0x138] sm:$0xff] %vm1093, %v980
    %1134 = vst.msk [vmem:[#allocation3 + $0x140] sm:$0xff] %vm1093, %v982
    %1135 = vst.msk [vmem:[#allocation3 + $0x148] sm:$0xff] %vm1093, %v984
    %1136 = vst.msk [vmem:[#allocation3 + $0x150] sm:$0xff] %vm1093, %v986
    %1137 = vst.msk [vmem:[#allocation3 + $0x158] sm:$0xff] %vm1093, %v988
    %1138 = vst.msk [vmem:[#allocation3 + $0x160] sm:$0xff] %vm1093, %v990
    %1139 = vst.msk [vmem:[#allocation3 + $0x168] sm:$0xff] %vm1093, %v992
    %1140 = vst.msk [vmem:[#allocation3 + $0x170] sm:$0xff] %vm1093, %v994
    %1141 = vst.msk [vmem:[#allocation3 + $0x178] sm:$0xff] %vm1093, %v996
    %1142 = vst.msk [vmem:[#allocation3 + $0x180] sm:$0xff] %vm1093, %v998
    %1143 = vst.msk [vmem:[#allocation3 + $0x188] sm:$0xff] %vm1093, %v1000
    %1144 = vst.msk [vmem:[#allocation3 + $0x190] sm:$0xff] %vm1093, %v1002
    %1145 = vst.msk [vmem:[#allocation3 + $0x198] sm:$0xff] %vm1093, %v1004
    %1146 = vst.msk [vmem:[#allocation3 + $0x1a0] sm:$0xff] %vm1093, %v1006
    %1147 = vst.msk [vmem:[#allocation3 + $0x1a8] sm:$0xff] %vm1093, %v1008
    %1148 = vst.msk [vmem:[#allocation3 + $0x1b0] sm:$0xff] %vm1093, %v1010
    %1149 = vst.msk [vmem:[#allocation3 + $0x1b8] sm:$0xff] %vm1093, %v1012
    %1150 = vst.msk [vmem:[#allocation3 + $0x1c0] sm:$0xff] %vm1093, %v1014
    %1151 = vst.msk [vmem:[#allocation3 + $0x1c8] sm:$0xff] %vm1093, %v1016
    %1152 = vst.msk [vmem:[#allocation3 + $0x1d0] sm:$0xff] %vm1093, %v1018
    %1153 = vst.msk [vmem:[#allocation3 + $0x1d8] sm:$0xff] %vm1093, %v1020
    %1154 = vst.msk [vmem:[#allocation3 + $0x1e0] sm:$0xff] %vm1093, %v1022
    %1155 = vst.msk [vmem:[#allocation3 + $0x1e8] sm:$0xff] %vm1093, %v1024
    %1156 = vst.msk [vmem:[#allocation3 + $0x1f0] sm:$0xff] %vm1093, %v1026
    %1157 = vst.msk [vmem:[#allocation3 + $0x1f8] sm:$0xff] %vm1093, %v1028
    %v1158 = vld [vmem:[%s195] sm:$0xff]
    %v1159 = vld [vmem:[%s195 + $0x8] sm:$0xff]
    %v1160 = vld [vmem:[%s195 + $0x18] sm:$0xff]
    %v1161 = vld [vmem:[%s195 + $0x20] sm:$0xff]
    %v1162 = vld [vmem:[%s195 + $0x30] sm:$0xff]
    %v1163 = vld [vmem:[%s195 + $0x38] sm:$0xff]
    %v1164 = vld [vmem:[%s195 + $0x48] sm:$0xff]
    %v1165 = vld [vmem:[%s195 + $0x50] sm:$0xff]
    %v1166 = vld [vmem:[%s195 + $0x60] sm:$0xff]
    %v1167 = vld [vmem:[%s195 + $0x68] sm:$0xff]
    %v1168 = vld [vmem:[%s195 + $0x78] sm:$0xff]
    %v1169 = vld [vmem:[%s195 + $0x80] sm:$0xff]
    %v1170 = vld [vmem:[%s195 + $0x90] sm:$0xff]
    %v1171 = vld [vmem:[%s195 + $0x98] sm:$0xff]
    %v1172 = vld [vmem:[%s195 + $0xa8] sm:$0xff]
    %v1173 = vld [vmem:[%s195 + $0xb0] sm:$0xff]
    %v1174 = vld [vmem:[%s195 + $0xc0] sm:$0xff]
    %v1175 = vld [vmem:[%s195 + $0xc8] sm:$0xff]
    %v1176 = vld [vmem:[%s195 + $0xd8] sm:$0xff]
    %v1177 = vld [vmem:[%s195 + $0xe0] sm:$0xff]
    %v1178 = vld [vmem:[%s195 + $0xf0] sm:$0xff]
    %v1179 = vld [vmem:[%s195 + $0xf8] sm:$0xff]
    %v1180 = vld [vmem:[%s195 + $0x108] sm:$0xff]
    %v1181 = vld [vmem:[%s195 + $0x110] sm:$0xff]
    %v1182 = vld [vmem:[%s195 + $0x120] sm:$0xff]
    %v1183 = vld [vmem:[%s195 + $0x128] sm:$0xff]
    %v1184 = vld [vmem:[%s195 + $0x138] sm:$0xff]
    %v1185 = vld [vmem:[%s195 + $0x140] sm:$0xff]
    %v1186 = vld [vmem:[%s195 + $0x150] sm:$0xff]
    %v1187 = vld [vmem:[%s195 + $0x158] sm:$0xff]
    %v1188 = vld [vmem:[%s195 + $0x168] sm:$0xff]
    %v1189 = vld [vmem:[%s195 + $0x170] sm:$0xff]
    %v1190 = vld [vmem:[%s195 + $0x1b0] sm:$0xff]
    %v1191 = vld [vmem:[%s195 + $0x1b8] sm:$0xff]
    %v1192 = vld [vmem:[%s195 + $0x1c8] sm:$0xff]
    %v1193 = vld [vmem:[%s195 + $0x1d0] sm:$0xff]
    %v1194 = vld [vmem:[%s195 + $0x1e0] sm:$0xff]
    %v1195 = vld [vmem:[%s195 + $0x1e8] sm:$0xff]
    %v1196 = vld [vmem:[%s195 + $0x1f8] sm:$0xff]
    %v1197 = vld [vmem:[%s195 + $0x200] sm:$0xff]
    %v1198 = vld [vmem:[%s195 + $0x210] sm:$0xff]
    %v1199 = vld [vmem:[%s195 + $0x218] sm:$0xff]
    %v1200 = vld [vmem:[%s195 + $0x228] sm:$0xff]
    %v1201 = vld [vmem:[%s195 + $0x230] sm:$0xff]
    %v1202 = vld [vmem:[%s195 + $0x240] sm:$0xff]
    %v1203 = vld [vmem:[%s195 + $0x248] sm:$0xff]
    %v1204 = vld [vmem:[%s195 + $0x258] sm:$0xff]
    %v1205 = vld [vmem:[%s195 + $0x260] sm:$0xff]
    %v1206 = vld [vmem:[%s195 + $0x270] sm:$0xff]
    %v1207 = vld [vmem:[%s195 + $0x278] sm:$0xff]
    %v1208 = vld [vmem:[%s195 + $0x288] sm:$0xff]
    %v1209 = vld [vmem:[%s195 + $0x290] sm:$0xff]
    %v1210 = vld [vmem:[%s195 + $0x2a0] sm:$0xff]
    %v1211 = vld [vmem:[%s195 + $0x2a8] sm:$0xff]
    %v1212 = vld [vmem:[%s195 + $0x2b8] sm:$0xff]
    %v1213 = vld [vmem:[%s195 + $0x2c0] sm:$0xff]
    %v1214 = vld [vmem:[%s195 + $0x2d0] sm:$0xff]
    %v1215 = vld [vmem:[%s195 + $0x2d8] sm:$0xff]
    %v1216 = vld [vmem:[%s195 + $0x2e8] sm:$0xff]
    %v1217 = vld [vmem:[%s195 + $0x2f0] sm:$0xff]
    %v1218 = vld [vmem:[%s195 + $0x300] sm:$0xff]
    %v1219 = vld [vmem:[%s195 + $0x308] sm:$0xff]
    %v1220 = vld [vmem:[%s195 + $0x318] sm:$0xff]
    %v1221 = vld [vmem:[%s195 + $0x320] sm:$0xff]
    %1286 = vrot.lane.b32.xlu0 %v1158, 12
    %v1287 = vpop.permute.xlu0 %1286
    %1288 = vrot.lane.b32.xlu0 %v1159, 12
    %v1289 = vpop.permute.xlu0 %1288
    %1290 = vrot.lane.b32.xlu0 %v1160, 12
    %v1291 = vpop.permute.xlu0 %1290
    %1292 = vrot.lane.b32.xlu0 %v1161, 12
    %v1293 = vpop.permute.xlu0 %1292
    %1294 = vrot.lane.b32.xlu0 %v1162, 12
    %v1295 = vpop.permute.xlu0 %1294
    %1296 = vrot.lane.b32.xlu0 %v1163, 12
    %v1297 = vpop.permute.xlu0 %1296
    %1298 = vrot.lane.b32.xlu0 %v1164, 12
    %v1299 = vpop.permute.xlu0 %1298
    %1300 = vrot.lane.b32.xlu0 %v1165, 12
    %v1301 = vpop.permute.xlu0 %1300
    %1302 = vrot.lane.b32.xlu0 %v1166, 12
    %v1303 = vpop.permute.xlu0 %1302
    %1304 = vrot.lane.b32.xlu0 %v1167, 12
    %v1305 = vpop.permute.xlu0 %1304
    %1306 = vrot.lane.b32.xlu0 %v1168, 12
    %v1307 = vpop.permute.xlu0 %1306
    %1308 = vrot.lane.b32.xlu0 %v1169, 12
    %v1309 = vpop.permute.xlu0 %1308
    %1310 = vrot.lane.b32.xlu0 %v1170, 12
    %v1311 = vpop.permute.xlu0 %1310
    %1312 = vrot.lane.b32.xlu0 %v1171, 12
    %v1313 = vpop.permute.xlu0 %1312
    %1314 = vrot.lane.b32.xlu0 %v1172, 12
    %v1315 = vpop.permute.xlu0 %1314
    %1316 = vrot.lane.b32.xlu0 %v1173, 12
    %v1317 = vpop.permute.xlu0 %1316
    %1318 = vrot.lane.b32.xlu0 %v1174, 12
    %v1319 = vpop.permute.xlu0 %1318
    %1320 = vrot.lane.b32.xlu0 %v1175, 12
    %v1321 = vpop.permute.xlu0 %1320
    %1322 = vrot.lane.b32.xlu0 %v1176, 12
    %v1323 = vpop.permute.xlu0 %1322
    %1324 = vrot.lane.b32.xlu0 %v1177, 12
    %v1325 = vpop.permute.xlu0 %1324
    %1326 = vrot.lane.b32.xlu0 %v1178, 12
    %v1327 = vpop.permute.xlu0 %1326
    %1328 = vrot.lane.b32.xlu0 %v1179, 12
    %v1329 = vpop.permute.xlu0 %1328
    %1330 = vrot.lane.b32.xlu0 %v1180, 12
    %v1331 = vpop.permute.xlu0 %1330
    %1332 = vrot.lane.b32.xlu0 %v1181, 12
    %v1333 = vpop.permute.xlu0 %1332
    %1334 = vrot.lane.b32.xlu0 %v1182, 12
    %v1335 = vpop.permute.xlu0 %1334
    %1336 = vrot.lane.b32.xlu0 %v1183, 12
    %v1337 = vpop.permute.xlu0 %1336
    %1338 = vrot.lane.b32.xlu0 %v1184, 12
    %v1339 = vpop.permute.xlu0 %1338
    %1340 = vrot.lane.b32.xlu0 %v1185, 12
    %v1341 = vpop.permute.xlu0 %1340
    %1342 = vrot.lane.b32.xlu0 %v1186, 12
    %v1343 = vpop.permute.xlu0 %1342
    %1344 = vrot.lane.b32.xlu0 %v1187, 12
    %v1345 = vpop.permute.xlu0 %1344
    %1346 = vrot.lane.b32.xlu0 %v1188, 12
    %v1347 = vpop.permute.xlu0 %1346
    %1348 = vrot.lane.b32.xlu0 %v1189, 12
    %v1349 = vpop.permute.xlu0 %1348
    %1350 = vrot.lane.b32.xlu0 %v1190, 12
    %v1351 = vpop.permute.xlu0 %1350
    %1352 = vrot.lane.b32.xlu0 %v1191, 12
    %v1353 = vpop.permute.xlu0 %1352
    %1354 = vrot.lane.b32.xlu0 %v1192, 12
    %v1355 = vpop.permute.xlu0 %1354
    %1356 = vrot.lane.b32.xlu0 %v1193, 12
    %v1357 = vpop.permute.xlu0 %1356
    %1358 = vrot.lane.b32.xlu0 %v1194, 12
    %v1359 = vpop.permute.xlu0 %1358
    %1360 = vrot.lane.b32.xlu0 %v1195, 12
    %v1361 = vpop.permute.xlu0 %1360
    %1362 = vrot.lane.b32.xlu0 %v1196, 12
    %v1363 = vpop.permute.xlu0 %1362
    %1364 = vrot.lane.b32.xlu0 %v1197, 12
    %v1365 = vpop.permute.xlu0 %1364
    %1366 = vrot.lane.b32.xlu0 %v1198, 12
    %v1367 = vpop.permute.xlu0 %1366
    %1368 = vrot.lane.b32.xlu0 %v1199, 12
    %v1369 = vpop.permute.xlu0 %1368
    %1370 = vrot.lane.b32.xlu0 %v1200, 12
    %v1371 = vpop.permute.xlu0 %1370
    %1372 = vrot.lane.b32.xlu0 %v1201, 12
    %v1373 = vpop.permute.xlu0 %1372
    %1374 = vrot.lane.b32.xlu0 %v1202, 12
    %v1375 = vpop.permute.xlu0 %1374
    %1376 = vrot.lane.b32.xlu0 %v1203, 12
    %v1377 = vpop.permute.xlu0 %1376
    %1378 = vrot.lane.b32.xlu0 %v1204, 12
    %v1379 = vpop.permute.xlu0 %1378
    %1380 = vrot.lane.b32.xlu0 %v1205, 12
    %v1381 = vpop.permute.xlu0 %1380
    %1382 = vrot.lane.b32.xlu0 %v1206, 12
    %v1383 = vpop.permute.xlu0 %1382
    %1384 = vrot.lane.b32.xlu0 %v1207, 12
    %v1385 = vpop.permute.xlu0 %1384
    %1386 = vrot.lane.b32.xlu0 %v1208, 12
    %v1387 = vpop.permute.xlu0 %1386
    %1388 = vrot.lane.b32.xlu0 %v1209, 12
    %v1389 = vpop.permute.xlu0 %1388
    %1390 = vrot.lane.b32.xlu0 %v1210, 12
    %v1391 = vpop.permute.xlu0 %1390
    %1392 = vrot.lane.b32.xlu0 %v1211, 12
    %v1393 = vpop.permute.xlu0 %1392
    %1394 = vrot.lane.b32.xlu0 %v1212, 12
    %v1395 = vpop.permute.xlu0 %1394
    %1396 = vrot.lane.b32.xlu0 %v1213, 12
    %v1397 = vpop.permute.xlu0 %1396
    %1398 = vrot.lane.b32.xlu0 %v1214, 12
    %v1399 = vpop.permute.xlu0 %1398
    %1400 = vrot.lane.b32.xlu0 %v1215, 12
    %v1401 = vpop.permute.xlu0 %1400
    %1402 = vrot.lane.b32.xlu0 %v1216, 12
    %v1403 = vpop.permute.xlu0 %1402
    %1404 = vrot.lane.b32.xlu0 %v1217, 12
    %v1405 = vpop.permute.xlu0 %1404
    %1406 = vrot.lane.b32.xlu0 %v1218, 12
    %v1407 = vpop.permute.xlu0 %1406
    %1408 = vrot.lane.b32.xlu0 %v1219, 12
    %v1409 = vpop.permute.xlu0 %1408
    %1410 = vrot.lane.b32.xlu0 %v1220, 12
    %v1411 = vpop.permute.xlu0 %1410
    %1412 = vrot.lane.b32.xlu0 %v1221, 12
    %v1413 = vpop.permute.xlu0 %1412
    %vm1478 = vcmask 130144
    %1479 = vst.msk [vmem:[#allocation3] sm:$0xff] %vm1478, %v1287
    %1480 = vst.msk [vmem:[#allocation3 + $0x8] sm:$0xff] %vm1478, %v1289
    %1481 = vst.msk [vmem:[#allocation3 + $0x10] sm:$0xff] %vm1478, %v1291
    %1482 = vst.msk [vmem:[#allocation3 + $0x18] sm:$0xff] %vm1478, %v1293
    %1483 = vst.msk [vmem:[#allocation3 + $0x20] sm:$0xff] %vm1478, %v1295
    %1484 = vst.msk [vmem:[#allocation3 + $0x28] sm:$0xff] %vm1478, %v1297
    %1485 = vst.msk [vmem:[#allocation3 + $0x30] sm:$0xff] %vm1478, %v1299
    %1486 = vst.msk [vmem:[#allocation3 + $0x38] sm:$0xff] %vm1478, %v1301
    %1487 = vst.msk [vmem:[#allocation3 + $0x40] sm:$0xff] %vm1478, %v1303
    %1488 = vst.msk [vmem:[#allocation3 + $0x48] sm:$0xff] %vm1478, %v1305
    %1489 = vst.msk [vmem:[#allocation3 + $0x50] sm:$0xff] %vm1478, %v1307
    %1490 = vst.msk [vmem:[#allocation3 + $0x58] sm:$0xff] %vm1478, %v1309
    %1491 = vst.msk [vmem:[#allocation3 + $0x60] sm:$0xff] %vm1478, %v1311
    %1492 = vst.msk [vmem:[#allocation3 + $0x68] sm:$0xff] %vm1478, %v1313
    %1493 = vst.msk [vmem:[#allocation3 + $0x70] sm:$0xff] %vm1478, %v1315
    %1494 = vst.msk [vmem:[#allocation3 + $0x78] sm:$0xff] %vm1478, %v1317
    %1495 = vst.msk [vmem:[#allocation3 + $0x80] sm:$0xff] %vm1478, %v1319
    %1496 = vst.msk [vmem:[#allocation3 + $0x88] sm:$0xff] %vm1478, %v1321
    %1497 = vst.msk [vmem:[#allocation3 + $0x90] sm:$0xff] %vm1478, %v1323
    %1498 = vst.msk [vmem:[#allocation3 + $0x98] sm:$0xff] %vm1478, %v1325
    %1499 = vst.msk [vmem:[#allocation3 + $0xa0] sm:$0xff] %vm1478, %v1327
    %1500 = vst.msk [vmem:[#allocation3 + $0xa8] sm:$0xff] %vm1478, %v1329
    %1501 = vst.msk [vmem:[#allocation3 + $0xb0] sm:$0xff] %vm1478, %v1331
    %1502 = vst.msk [vmem:[#allocation3 + $0xb8] sm:$0xff] %vm1478, %v1333
    %1503 = vst.msk [vmem:[#allocation3 + $0xc0] sm:$0xff] %vm1478, %v1335
    %1504 = vst.msk [vmem:[#allocation3 + $0xc8] sm:$0xff] %vm1478, %v1337
    %1505 = vst.msk [vmem:[#allocation3 + $0xd0] sm:$0xff] %vm1478, %v1339
    %1506 = vst.msk [vmem:[#allocation3 + $0xd8] sm:$0xff] %vm1478, %v1341
    %1507 = vst.msk [vmem:[#allocation3 + $0xe0] sm:$0xff] %vm1478, %v1343
    %1508 = vst.msk [vmem:[#allocation3 + $0xe8] sm:$0xff] %vm1478, %v1345
    %1509 = vst.msk [vmem:[#allocation3 + $0xf0] sm:$0xff] %vm1478, %v1347
    %1510 = vst.msk [vmem:[#allocation3 + $0xf8] sm:$0xff] %vm1478, %v1349
    %1511 = vst.msk [vmem:[#allocation3 + $0x100] sm:$0xff] %vm1478, %v1351
    %1512 = vst.msk [vmem:[#allocation3 + $0x108] sm:$0xff] %vm1478, %v1353
    %1513 = vst.msk [vmem:[#allocation3 + $0x110] sm:$0xff] %vm1478, %v1355
    %1514 = vst.msk [vmem:[#allocation3 + $0x118] sm:$0xff] %vm1478, %v1357
    %1515 = vst.msk [vmem:[#allocation3 + $0x120] sm:$0xff] %vm1478, %v1359
    %1516 = vst.msk [vmem:[#allocation3 + $0x128] sm:$0xff] %vm1478, %v1361
    %1517 = vst.msk [vmem:[#allocation3 + $0x130] sm:$0xff] %vm1478, %v1363
    %1518 = vst.msk [vmem:[#allocation3 + $0x138] sm:$0xff] %vm1478, %v1365
    %1519 = vst.msk [vmem:[#allocation3 + $0x140] sm:$0xff] %vm1478, %v1367
    %1520 = vst.msk [vmem:[#allocation3 + $0x148] sm:$0xff] %vm1478, %v1369
    %1521 = vst.msk [vmem:[#allocation3 + $0x150] sm:$0xff] %vm1478, %v1371
    %1522 = vst.msk [vmem:[#allocation3 + $0x158] sm:$0xff] %vm1478, %v1373
    %1523 = vst.msk [vmem:[#allocation3 + $0x160] sm:$0xff] %vm1478, %v1375
    %1524 = vst.msk [vmem:[#allocation3 + $0x168] sm:$0xff] %vm1478, %v1377
    %1525 = vst.msk [vmem:[#allocation3 + $0x170] sm:$0xff] %vm1478, %v1379
    %1526 = vst.msk [vmem:[#allocation3 + $0x178] sm:$0xff] %vm1478, %v1381
    %1527 = vst.msk [vmem:[#allocation3 + $0x180] sm:$0xff] %vm1478, %v1383
    %1528 = vst.msk [vmem:[#allocation3 + $0x188] sm:$0xff] %vm1478, %v1385
    %1529 = vst.msk [vmem:[#allocation3 + $0x190] sm:$0xff] %vm1478, %v1387
    %1530 = vst.msk [vmem:[#allocation3 + $0x198] sm:$0xff] %vm1478, %v1389
    %1531 = vst.msk [vmem:[#allocation3 + $0x1a0] sm:$0xff] %vm1478, %v1391
    %1532 = vst.msk [vmem:[#allocation3 + $0x1a8] sm:$0xff] %vm1478, %v1393
    %1533 = vst.msk [vmem:[#allocation3 + $0x1b0] sm:$0xff] %vm1478, %v1395
    %1534 = vst.msk [vmem:[#allocation3 + $0x1b8] sm:$0xff] %vm1478, %v1397
    %1535 = vst.msk [vmem:[#allocation3 + $0x1c0] sm:$0xff] %vm1478, %v1399
    %1536 = vst.msk [vmem:[#allocation3 + $0x1c8] sm:$0xff] %vm1478, %v1401
    %1537 = vst.msk [vmem:[#allocation3 + $0x1d0] sm:$0xff] %vm1478, %v1403
    %1538 = vst.msk [vmem:[#allocation3 + $0x1d8] sm:$0xff] %vm1478, %v1405
    %1539 = vst.msk [vmem:[#allocation3 + $0x1e0] sm:$0xff] %vm1478, %v1407
    %1540 = vst.msk [vmem:[#allocation3 + $0x1e8] sm:$0xff] %vm1478, %v1409
    %1541 = vst.msk [vmem:[#allocation3 + $0x1f0] sm:$0xff] %vm1478, %v1411
    %1542 = vst.msk [vmem:[#allocation3 + $0x1f8] sm:$0xff] %vm1478, %v1413
    %v1543 = vld [vmem:[%s195 + $0x1] sm:$0xff]
    %v1544 = vld [vmem:[%s195 + $0x9] sm:$0xff]
    %v1545 = vld [vmem:[%s195 + $0x19] sm:$0xff]
    %v1546 = vld [vmem:[%s195 + $0x21] sm:$0xff]
    %v1547 = vld [vmem:[%s195 + $0x31] sm:$0xff]
    %v1548 = vld [vmem:[%s195 + $0x39] sm:$0xff]
    %v1549 = vld [vmem:[%s195 + $0x49] sm:$0xff]
    %v1550 = vld [vmem:[%s195 + $0x51] sm:$0xff]
    %v1551 = vld [vmem:[%s195 + $0x61] sm:$0xff]
    %v1552 = vld [vmem:[%s195 + $0x69] sm:$0xff]
    %v1553 = vld [vmem:[%s195 + $0x79] sm:$0xff]
    %v1554 = vld [vmem:[%s195 + $0x81] sm:$0xff]
    %v1555 = vld [vmem:[%s195 + $0x91] sm:$0xff]
    %v1556 = vld [vmem:[%s195 + $0x99] sm:$0xff]
    %v1557 = vld [vmem:[%s195 + $0xa9] sm:$0xff]
    %v1558 = vld [vmem:[%s195 + $0xb1] sm:$0xff]
    %v1559 = vld [vmem:[%s195 + $0xc1] sm:$0xff]
    %v1560 = vld [vmem:[%s195 + $0xc9] sm:$0xff]
    %v1561 = vld [vmem:[%s195 + $0xd9] sm:$0xff]
    %v1562 = vld [vmem:[%s195 + $0xe1] sm:$0xff]
    %v1563 = vld [vmem:[%s195 + $0xf1] sm:$0xff]
    %v1564 = vld [vmem:[%s195 + $0xf9] sm:$0xff]
    %v1565 = vld [vmem:[%s195 + $0x109] sm:$0xff]
    %v1566 = vld [vmem:[%s195 + $0x111] sm:$0xff]
    %v1567 = vld [vmem:[%s195 + $0x121] sm:$0xff]
    %v1568 = vld [vmem:[%s195 + $0x129] sm:$0xff]
    %v1569 = vld [vmem:[%s195 + $0x139] sm:$0xff]
    %v1570 = vld [vmem:[%s195 + $0x141] sm:$0xff]
    %v1571 = vld [vmem:[%s195 + $0x151] sm:$0xff]
    %v1572 = vld [vmem:[%s195 + $0x159] sm:$0xff]
    %v1573 = vld [vmem:[%s195 + $0x169] sm:$0xff]
    %v1574 = vld [vmem:[%s195 + $0x171] sm:$0xff]
    %v1575 = vld [vmem:[%s195 + $0x1b1] sm:$0xff]
    %v1576 = vld [vmem:[%s195 + $0x1b9] sm:$0xff]
    %v1577 = vld [vmem:[%s195 + $0x1c9] sm:$0xff]
    %v1578 = vld [vmem:[%s195 + $0x1d1] sm:$0xff]
    %v1579 = vld [vmem:[%s195 + $0x1e1] sm:$0xff]
    %v1580 = vld [vmem:[%s195 + $0x1e9] sm:$0xff]
    %v1581 = vld [vmem:[%s195 + $0x1f9] sm:$0xff]
    %v1582 = vld [vmem:[%s195 + $0x201] sm:$0xff]
    %v1583 = vld [vmem:[%s195 + $0x211] sm:$0xff]
    %v1584 = vld [vmem:[%s195 + $0x219] sm:$0xff]
    %v1585 = vld [vmem:[%s195 + $0x229] sm:$0xff]
    %v1586 = vld [vmem:[%s195 + $0x231] sm:$0xff]
    %v1587 = vld [vmem:[%s195 + $0x241] sm:$0xff]
    %v1588 = vld [vmem:[%s195 + $0x249] sm:$0xff]
    %v1589 = vld [vmem:[%s195 + $0x259] sm:$0xff]
    %v1590 = vld [vmem:[%s195 + $0x261] sm:$0xff]
    %v1591 = vld [vmem:[%s195 + $0x271] sm:$0xff]
    %v1592 = vld [vmem:[%s195 + $0x279] sm:$0xff]
    %v1593 = vld [vmem:[%s195 + $0x289] sm:$0xff]
    %v1594 = vld [vmem:[%s195 + $0x291] sm:$0xff]
    %v1595 = vld [vmem:[%s195 + $0x2a1] sm:$0xff]
    %v1596 = vld [vmem:[%s195 + $0x2a9] sm:$0xff]
    %v1597 = vld [vmem:[%s195 + $0x2b9] sm:$0xff]
    %v1598 = vld [vmem:[%s195 + $0x2c1] sm:$0xff]
    %v1599 = vld [vmem:[%s195 + $0x2d1] sm:$0xff]
    %v1600 = vld [vmem:[%s195 + $0x2d9] sm:$0xff]
    %v1601 = vld [vmem:[%s195 + $0x2e9] sm:$0xff]
    %v1602 = vld [vmem:[%s195 + $0x2f1] sm:$0xff]
    %v1603 = vld [vmem:[%s195 + $0x301] sm:$0xff]
    %v1604 = vld [vmem:[%s195 + $0x309] sm:$0xff]
    %v1605 = vld [vmem:[%s195 + $0x319] sm:$0xff]
    %v1606 = vld [vmem:[%s195 + $0x321] sm:$0xff]
    %1671 = vrot.lane.b32.xlu0 %v1543, 16
    %v1672 = vpop.permute.xlu0 %1671
    %1673 = vrot.lane.b32.xlu0 %v1544, 16
    %v1674 = vpop.permute.xlu0 %1673
    %1675 = vrot.lane.b32.xlu0 %v1545, 16
    %v1676 = vpop.permute.xlu0 %1675
    %1677 = vrot.lane.b32.xlu0 %v1546, 16
    %v1678 = vpop.permute.xlu0 %1677
    %1679 = vrot.lane.b32.xlu0 %v1547, 16
    %v1680 = vpop.permute.xlu0 %1679
    %1681 = vrot.lane.b32.xlu0 %v1548, 16
    %v1682 = vpop.permute.xlu0 %1681
    %1683 = vrot.lane.b32.xlu0 %v1549, 16
    %v1684 = vpop.permute.xlu0 %1683
    %1685 = vrot.lane.b32.xlu0 %v1550, 16
    %v1686 = vpop.permute.xlu0 %1685
    %1687 = vrot.lane.b32.xlu0 %v1551, 16
    %v1688 = vpop.permute.xlu0 %1687
    %1689 = vrot.lane.b32.xlu0 %v1552, 16
    %v1690 = vpop.permute.xlu0 %1689
    %1691 = vrot.lane.b32.xlu0 %v1553, 16
    %v1692 = vpop.permute.xlu0 %1691
    %1693 = vrot.lane.b32.xlu0 %v1554, 16
    %v1694 = vpop.permute.xlu0 %1693
    %1695 = vrot.lane.b32.xlu0 %v1555, 16
    %v1696 = vpop.permute.xlu0 %1695
    %1697 = vrot.lane.b32.xlu0 %v1556, 16
    %v1698 = vpop.permute.xlu0 %1697
    %1699 = vrot.lane.b32.xlu0 %v1557, 16
    %v1700 = vpop.permute.xlu0 %1699
    %1701 = vrot.lane.b32.xlu0 %v1558, 16
    %v1702 = vpop.permute.xlu0 %1701
    %1703 = vrot.lane.b32.xlu0 %v1559, 16
    %v1704 = vpop.permute.xlu0 %1703
    %1705 = vrot.lane.b32.xlu0 %v1560, 16
    %v1706 = vpop.permute.xlu0 %1705
    %1707 = vrot.lane.b32.xlu0 %v1561, 16
    %v1708 = vpop.permute.xlu0 %1707
    %1709 = vrot.lane.b32.xlu0 %v1562, 16
    %v1710 = vpop.permute.xlu0 %1709
    %1711 = vrot.lane.b32.xlu0 %v1563, 16
    %v1712 = vpop.permute.xlu0 %1711
    %1713 = vrot.lane.b32.xlu0 %v1564, 16
    %v1714 = vpop.permute.xlu0 %1713
    %1715 = vrot.lane.b32.xlu0 %v1565, 16
    %v1716 = vpop.permute.xlu0 %1715
    %1717 = vrot.lane.b32.xlu0 %v1566, 16
    %v1718 = vpop.permute.xlu0 %1717
    %1719 = vrot.lane.b32.xlu0 %v1567, 16
    %v1720 = vpop.permute.xlu0 %1719
    %1721 = vrot.lane.b32.xlu0 %v1568, 16
    %v1722 = vpop.permute.xlu0 %1721
    %1723 = vrot.lane.b32.xlu0 %v1569, 16
    %v1724 = vpop.permute.xlu0 %1723
    %1725 = vrot.lane.b32.xlu0 %v1570, 16
    %v1726 = vpop.permute.xlu0 %1725
    %1727 = vrot.lane.b32.xlu0 %v1571, 16
    %v1728 = vpop.permute.xlu0 %1727
    %1729 = vrot.lane.b32.xlu0 %v1572, 16
    %v1730 = vpop.permute.xlu0 %1729
    %1731 = vrot.lane.b32.xlu0 %v1573, 16
    %v1732 = vpop.permute.xlu0 %1731
    %1733 = vrot.lane.b32.xlu0 %v1574, 16
    %v1734 = vpop.permute.xlu0 %1733
    %1735 = vrot.lane.b32.xlu0 %v1575, 16
    %v1736 = vpop.permute.xlu0 %1735
    %1737 = vrot.lane.b32.xlu0 %v1576, 16
    %v1738 = vpop.permute.xlu0 %1737
    %1739 = vrot.lane.b32.xlu0 %v1577, 16
    %v1740 = vpop.permute.xlu0 %1739
    %1741 = vrot.lane.b32.xlu0 %v1578, 16
    %v1742 = vpop.permute.xlu0 %1741
    %1743 = vrot.lane.b32.xlu0 %v1579, 16
    %v1744 = vpop.permute.xlu0 %1743
    %1745 = vrot.lane.b32.xlu0 %v1580, 16
    %v1746 = vpop.permute.xlu0 %1745
    %1747 = vrot.lane.b32.xlu0 %v1581, 16
    %v1748 = vpop.permute.xlu0 %1747
    %1749 = vrot.lane.b32.xlu0 %v1582, 16
    %v1750 = vpop.permute.xlu0 %1749
    %1751 = vrot.lane.b32.xlu0 %v1583, 16
    %v1752 = vpop.permute.xlu0 %1751
    %1753 = vrot.lane.b32.xlu0 %v1584, 16
    %v1754 = vpop.permute.xlu0 %1753
    %1755 = vrot.lane.b32.xlu0 %v1585, 16
    %v1756 = vpop.permute.xlu0 %1755
    %1757 = vrot.lane.b32.xlu0 %v1586, 16
    %v1758 = vpop.permute.xlu0 %1757
    %1759 = vrot.lane.b32.xlu0 %v1587, 16
    %v1760 = vpop.permute.xlu0 %1759
    %1761 = vrot.lane.b32.xlu0 %v1588, 16
    %v1762 = vpop.permute.xlu0 %1761
    %1763 = vrot.lane.b32.xlu0 %v1589, 16
    %v1764 = vpop.permute.xlu0 %1763
    %1765 = vrot.lane.b32.xlu0 %v1590, 16
    %v1766 = vpop.permute.xlu0 %1765
    %1767 = vrot.lane.b32.xlu0 %v1591, 16
    %v1768 = vpop.permute.xlu0 %1767
    %1769 = vrot.lane.b32.xlu0 %v1592, 16
    %v1770 = vpop.permute.xlu0 %1769
    %1771 = vrot.lane.b32.xlu0 %v1593, 16
    %v1772 = vpop.permute.xlu0 %1771
    %1773 = vrot.lane.b32.xlu0 %v1594, 16
    %v1774 = vpop.permute.xlu0 %1773
    %1775 = vrot.lane.b32.xlu0 %v1595, 16
    %v1776 = vpop.permute.xlu0 %1775
    %1777 = vrot.lane.b32.xlu0 %v1596, 16
    %v1778 = vpop.permute.xlu0 %1777
    %1779 = vrot.lane.b32.xlu0 %v1597, 16
    %v1780 = vpop.permute.xlu0 %1779
    %1781 = vrot.lane.b32.xlu0 %v1598, 16
    %v1782 = vpop.permute.xlu0 %1781
    %1783 = vrot.lane.b32.xlu0 %v1599, 16
    %v1784 = vpop.permute.xlu0 %1783
    %1785 = vrot.lane.b32.xlu0 %v1600, 16
    %v1786 = vpop.permute.xlu0 %1785
    %1787 = vrot.lane.b32.xlu0 %v1601, 16
    %v1788 = vpop.permute.xlu0 %1787
    %1789 = vrot.lane.b32.xlu0 %v1602, 16
    %v1790 = vpop.permute.xlu0 %1789
    %1791 = vrot.lane.b32.xlu0 %v1603, 16
    %v1792 = vpop.permute.xlu0 %1791
    %1793 = vrot.lane.b32.xlu0 %v1604, 16
    %v1794 = vpop.permute.xlu0 %1793
    %1795 = vrot.lane.b32.xlu0 %v1605, 16
    %v1796 = vpop.permute.xlu0 %1795
    %1797 = vrot.lane.b32.xlu0 %v1606, 16
    %v1798 = vpop.permute.xlu0 %1797
    %vm1863 = vcmask 162944
    %1864 = vst.msk [vmem:[#allocation3] sm:$0xff] %vm1863, %v1672
    %1865 = vst.msk [vmem:[#allocation3 + $0x8] sm:$0xff] %vm1863, %v1674
    %1866 = vst.msk [vmem:[#allocation3 + $0x10] sm:$0xff] %vm1863, %v1676
    %1867 = vst.msk [vmem:[#allocation3 + $0x18] sm:$0xff] %vm1863, %v1678
    %1868 = vst.msk [vmem:[#allocation3 + $0x20] sm:$0xff] %vm1863, %v1680
    %1869 = vst.msk [vmem:[#allocation3 + $0x28] sm:$0xff] %vm1863, %v1682
    %1870 = vst.msk [vmem:[#allocation3 + $0x30] sm:$0xff] %vm1863, %v1684
    %1871 = vst.msk [vmem:[#allocation3 + $0x38] sm:$0xff] %vm1863, %v1686
    %1872 = vst.msk [vmem:[#allocation3 + $0x40] sm:$0xff] %vm1863, %v1688
    %1873 = vst.msk [vmem:[#allocation3 + $0x48] sm:$0xff] %vm1863, %v1690
    %1874 = vst.msk [vmem:[#allocation3 + $0x50] sm:$0xff] %vm1863, %v1692
    %1875 = vst.msk [vmem:[#allocation3 + $0x58] sm:$0xff] %vm1863, %v1694
    %1876 = vst.msk [vmem:[#allocation3 + $0x60] sm:$0xff] %vm1863, %v1696
    %1877 = vst.msk [vmem:[#allocation3 + $0x68] sm:$0xff] %vm1863, %v1698
    %1878 = vst.msk [vmem:[#allocation3 + $0x70] sm:$0xff] %vm1863, %v1700
    %1879 = vst.msk [vmem:[#allocation3 + $0x78] sm:$0xff] %vm1863, %v1702
    %1880 = vst.msk [vmem:[#allocation3 + $0x80] sm:$0xff] %vm1863, %v1704
    %1881 = vst.msk [vmem:[#allocation3 + $0x88] sm:$0xff] %vm1863, %v1706
    %1882 = vst.msk [vmem:[#allocation3 + $0x90] sm:$0xff] %vm1863, %v1708
    %1883 = vst.msk [vmem:[#allocation3 + $0x98] sm:$0xff] %vm1863, %v1710
    %1884 = vst.msk [vmem:[#allocation3 + $0xa0] sm:$0xff] %vm1863, %v1712
    %1885 = vst.msk [vmem:[#allocation3 + $0xa8] sm:$0xff] %vm1863, %v1714
    %1886 = vst.msk [vmem:[#allocation3 + $0xb0] sm:$0xff] %vm1863, %v1716
    %1887 = vst.msk [vmem:[#allocation3 + $0xb8] sm:$0xff] %vm1863, %v1718
    %1888 = vst.msk [vmem:[#allocation3 + $0xc0] sm:$0xff] %vm1863, %v1720
    %1889 = vst.msk [vmem:[#allocation3 + $0xc8] sm:$0xff] %vm1863, %v1722
    %1890 = vst.msk [vmem:[#allocation3 + $0xd0] sm:$0xff] %vm1863, %v1724
    %1891 = vst.msk [vmem:[#allocation3 + $0xd8] sm:$0xff] %vm1863, %v1726
    %1892 = vst.msk [vmem:[#allocation3 + $0xe0] sm:$0xff] %vm1863, %v1728
    %1893 = vst.msk [vmem:[#allocation3 + $0xe8] sm:$0xff] %vm1863, %v1730
    %1894 = vst.msk [vmem:[#allocation3 + $0xf0] sm:$0xff] %vm1863, %v1732
    %1895 = vst.msk [vmem:[#allocation3 + $0xf8] sm:$0xff] %vm1863, %v1734
    %1896 = vst.msk [vmem:[#allocation3 + $0x100] sm:$0xff] %vm1863, %v1736
    %1897 = vst.msk [vmem:[#allocation3 + $0x108] sm:$0xff] %vm1863, %v1738
    %1898 = vst.msk [vmem:[#allocation3 + $0x110] sm:$0xff] %vm1863, %v1740
    %1899 = vst.msk [vmem:[#allocation3 + $0x118] sm:$0xff] %vm1863, %v1742
    %1900 = vst.msk [vmem:[#allocation3 + $0x120] sm:$0xff] %vm1863, %v1744
    %1901 = vst.msk [vmem:[#allocation3 + $0x128] sm:$0xff] %vm1863, %v1746
    %1902 = vst.msk [vmem:[#allocation3 + $0x130] sm:$0xff] %vm1863, %v1748
    %1903 = vst.msk [vmem:[#allocation3 + $0x138] sm:$0xff] %vm1863, %v1750
    %1904 = vst.msk [vmem:[#allocation3 + $0x140] sm:$0xff] %vm1863, %v1752
    %1905 = vst.msk [vmem:[#allocation3 + $0x148] sm:$0xff] %vm1863, %v1754
    %1906 = vst.msk [vmem:[#allocation3 + $0x150] sm:$0xff] %vm1863, %v1756
    %1907 = vst.msk [vmem:[#allocation3 + $0x158] sm:$0xff] %vm1863, %v1758
    %1908 = vst.msk [vmem:[#allocation3 + $0x160] sm:$0xff] %vm1863, %v1760
    %1909 = vst.msk [vmem:[#allocation3 + $0x168] sm:$0xff] %vm1863, %v1762
    %1910 = vst.msk [vmem:[#allocation3 + $0x170] sm:$0xff] %vm1863, %v1764
    %1911 = vst.msk [vmem:[#allocation3 + $0x178] sm:$0xff] %vm1863, %v1766
    %1912 = vst.msk [vmem:[#allocation3 + $0x180] sm:$0xff] %vm1863, %v1768
    %1913 = vst.msk [vmem:[#allocation3 + $0x188] sm:$0xff] %vm1863, %v1770
    %1914 = vst.msk [vmem:[#allocation3 + $0x190] sm:$0xff] %vm1863, %v1772
    %1915 = vst.msk [vmem:[#allocation3 + $0x198] sm:$0xff] %vm1863, %v1774
    %1916 = vst.msk [vmem:[#allocation3 + $0x1a0] sm:$0xff] %vm1863, %v1776
    %1917 = vst.msk [vmem:[#allocation3 + $0x1a8] sm:$0xff] %vm1863, %v1778
    %1918 = vst.msk [vmem:[#allocation3 + $0x1b0] sm:$0xff] %vm1863, %v1780
    %1919 = vst.msk [vmem:[#allocation3 + $0x1b8] sm:$0xff] %vm1863, %v1782
    %1920 = vst.msk [vmem:[#allocation3 + $0x1c0] sm:$0xff] %vm1863, %v1784
    %1921 = vst.msk [vmem:[#allocation3 + $0x1c8] sm:$0xff] %vm1863, %v1786
    %1922 = vst.msk [vmem:[#allocation3 + $0x1d0] sm:$0xff] %vm1863, %v1788
    %1923 = vst.msk [vmem:[#allocation3 + $0x1d8] sm:$0xff] %vm1863, %v1790
    %1924 = vst.msk [vmem:[#allocation3 + $0x1e0] sm:$0xff] %vm1863, %v1792
    %1925 = vst.msk [vmem:[#allocation3 + $0x1e8] sm:$0xff] %vm1863, %v1794
    %1926 = vst.msk [vmem:[#allocation3 + $0x1f0] sm:$0xff] %vm1863, %v1796
    %1927 = vst.msk [vmem:[#allocation3 + $0x1f8] sm:$0xff] %vm1863, %v1798
    %v1928 = vld [vmem:[%s195 + $0x2] sm:$0xff]
    %v1929 = vld [vmem:[%s195 + $0xa] sm:$0xff]
    %v1930 = vld [vmem:[%s195 + $0x1a] sm:$0xff]
    %v1931 = vld [vmem:[%s195 + $0x22] sm:$0xff]
    %v1932 = vld [vmem:[%s195 + $0x32] sm:$0xff]
    %v1933 = vld [vmem:[%s195 + $0x3a] sm:$0xff]
    %v1934 = vld [vmem:[%s195 + $0x4a] sm:$0xff]
    %v1935 = vld [vmem:[%s195 + $0x52] sm:$0xff]
    %v1936 = vld [vmem:[%s195 + $0x62] sm:$0xff]
    %v1937 = vld [vmem:[%s195 + $0x6a] sm:$0xff]
    %v1938 = vld [vmem:[%s195 + $0x7a] sm:$0xff]
    %v1939 = vld [vmem:[%s195 + $0x82] sm:$0xff]
    %v1940 = vld [vmem:[%s195 + $0x92] sm:$0xff]
    %v1941 = vld [vmem:[%s195 + $0x9a] sm:$0xff]
    %v1942 = vld [vmem:[%s195 + $0xaa] sm:$0xff]
    %v1943 = vld [vmem:[%s195 + $0xb2] sm:$0xff]
    %v1944 = vld [vmem:[%s195 + $0xc2] sm:$0xff]
    %v1945 = vld [vmem:[%s195 + $0xca] sm:$0xff]
    %v1946 = vld [vmem:[%s195 + $0xda] sm:$0xff]
    %v1947 = vld [vmem:[%s195 + $0xe2] sm:$0xff]
    %v1948 = vld [vmem:[%s195 + $0xf2] sm:$0xff]
    %v1949 = vld [vmem:[%s195 + $0xfa] sm:$0xff]
    %v1950 = vld [vmem:[%s195 + $0x10a] sm:$0xff]
    %v1951 = vld [vmem:[%s195 + $0x112] sm:$0xff]
    %v1952 = vld [vmem:[%s195 + $0x122] sm:$0xff]
    %v1953 = vld [vmem:[%s195 + $0x12a] sm:$0xff]
    %v1954 = vld [vmem:[%s195 + $0x13a] sm:$0xff]
    %v1955 = vld [vmem:[%s195 + $0x142] sm:$0xff]
    %v1956 = vld [vmem:[%s195 + $0x152] sm:$0xff]
    %v1957 = vld [vmem:[%s195 + $0x15a] sm:$0xff]
    %v1958 = vld [vmem:[%s195 + $0x16a] sm:$0xff]
    %v1959 = vld [vmem:[%s195 + $0x172] sm:$0xff]
    %v1960 = vld [vmem:[%s195 + $0x1b2] sm:$0xff]
    %v1961 = vld [vmem:[%s195 + $0x1ba] sm:$0xff]
    %v1962 = vld [vmem:[%s195 + $0x1ca] sm:$0xff]
    %v1963 = vld [vmem:[%s195 + $0x1d2] sm:$0xff]
    %v1964 = vld [vmem:[%s195 + $0x1e2] sm:$0xff]
    %v1965 = vld [vmem:[%s195 + $0x1ea] sm:$0xff]
    %v1966 = vld [vmem:[%s195 + $0x1fa] sm:$0xff]
    %v1967 = vld [vmem:[%s195 + $0x202] sm:$0xff]
    %v1968 = vld [vmem:[%s195 + $0x212] sm:$0xff]
    %v1969 = vld [vmem:[%s195 + $0x21a] sm:$0xff]
    %v1970 = vld [vmem:[%s195 + $0x22a] sm:$0xff]
    %v1971 = vld [vmem:[%s195 + $0x232] sm:$0xff]
    %v1972 = vld [vmem:[%s195 + $0x242] sm:$0xff]
    %v1973 = vld [vmem:[%s195 + $0x24a] sm:$0xff]
    %v1974 = vld [vmem:[%s195 + $0x25a] sm:$0xff]
    %v1975 = vld [vmem:[%s195 + $0x262] sm:$0xff]
    %v1976 = vld [vmem:[%s195 + $0x272] sm:$0xff]
    %v1977 = vld [vmem:[%s195 + $0x27a] sm:$0xff]
    %v1978 = vld [vmem:[%s195 + $0x28a] sm:$0xff]
    %v1979 = vld [vmem:[%s195 + $0x292] sm:$0xff]
    %v1980 = vld [vmem:[%s195 + $0x2a2] sm:$0xff]
    %v1981 = vld [vmem:[%s195 + $0x2aa] sm:$0xff]
    %v1982 = vld [vmem:[%s195 + $0x2ba] sm:$0xff]
    %v1983 = vld [vmem:[%s195 + $0x2c2] sm:$0xff]
    %v1984 = vld [vmem:[%s195 + $0x2d2] sm:$0xff]
    %v1985 = vld [vmem:[%s195 + $0x2da] sm:$0xff]
    %v1986 = vld [vmem:[%s195 + $0x2ea] sm:$0xff]
    %v1987 = vld [vmem:[%s195 + $0x2f2] sm:$0xff]
    %v1988 = vld [vmem:[%s195 + $0x302] sm:$0xff]
    %v1989 = vld [vmem:[%s195 + $0x30a] sm:$0xff]
    %v1990 = vld [vmem:[%s195 + $0x31a] sm:$0xff]
    %v1991 = vld [vmem:[%s195 + $0x322] sm:$0xff]
    %2056 = vrot.lane.b32.xlu0 %v1928, 20
    %v2057 = vpop.permute.xlu0 %2056
    %2058 = vrot.lane.b32.xlu0 %v1929, 20
    %v2059 = vpop.permute.xlu0 %2058
    %2060 = vrot.lane.b32.xlu0 %v1930, 20
    %v2061 = vpop.permute.xlu0 %2060
    %2062 = vrot.lane.b32.xlu0 %v1931, 20
    %v2063 = vpop.permute.xlu0 %2062
    %2064 = vrot.lane.b32.xlu0 %v1932, 20
    %v2065 = vpop.permute.xlu0 %2064
    %2066 = vrot.lane.b32.xlu0 %v1933, 20
    %v2067 = vpop.permute.xlu0 %2066
    %2068 = vrot.lane.b32.xlu0 %v1934, 20
    %v2069 = vpop.permute.xlu0 %2068
    %2070 = vrot.lane.b32.xlu0 %v1935, 20
    %v2071 = vpop.permute.xlu0 %2070
    %2072 = vrot.lane.b32.xlu0 %v1936, 20
    %v2073 = vpop.permute.xlu0 %2072
    %2074 = vrot.lane.b32.xlu0 %v1937, 20
    %v2075 = vpop.permute.xlu0 %2074
    %2076 = vrot.lane.b32.xlu0 %v1938, 20
    %v2077 = vpop.permute.xlu0 %2076
    %2078 = vrot.lane.b32.xlu0 %v1939, 20
    %v2079 = vpop.permute.xlu0 %2078
    %2080 = vrot.lane.b32.xlu0 %v1940, 20
    %v2081 = vpop.permute.xlu0 %2080
    %2082 = vrot.lane.b32.xlu0 %v1941, 20
    %v2083 = vpop.permute.xlu0 %2082
    %2084 = vrot.lane.b32.xlu0 %v1942, 20
    %v2085 = vpop.permute.xlu0 %2084
    %2086 = vrot.lane.b32.xlu0 %v1943, 20
    %v2087 = vpop.permute.xlu0 %2086
    %2088 = vrot.lane.b32.xlu0 %v1944, 20
    %v2089 = vpop.permute.xlu0 %2088
    %2090 = vrot.lane.b32.xlu0 %v1945, 20
    %v2091 = vpop.permute.xlu0 %2090
    %2092 = vrot.lane.b32.xlu0 %v1946, 20
    %v2093 = vpop.permute.xlu0 %2092
    %2094 = vrot.lane.b32.xlu0 %v1947, 20
    %v2095 = vpop.permute.xlu0 %2094
    %2096 = vrot.lane.b32.xlu0 %v1948, 20
    %v2097 = vpop.permute.xlu0 %2096
    %2098 = vrot.lane.b32.xlu0 %v1949, 20
    %v2099 = vpop.permute.xlu0 %2098
    %2100 = vrot.lane.b32.xlu0 %v1950, 20
    %v2101 = vpop.permute.xlu0 %2100
    %2102 = vrot.lane.b32.xlu0 %v1951, 20
    %v2103 = vpop.permute.xlu0 %2102
    %2104 = vrot.lane.b32.xlu0 %v1952, 20
    %v2105 = vpop.permute.xlu0 %2104
    %2106 = vrot.lane.b32.xlu0 %v1953, 20
    %v2107 = vpop.permute.xlu0 %2106
    %2108 = vrot.lane.b32.xlu0 %v1954, 20
    %v2109 = vpop.permute.xlu0 %2108
    %2110 = vrot.lane.b32.xlu0 %v1955, 20
    %v2111 = vpop.permute.xlu0 %2110
    %2112 = vrot.lane.b32.xlu0 %v1956, 20
    %v2113 = vpop.permute.xlu0 %2112
    %2114 = vrot.lane.b32.xlu0 %v1957, 20
    %v2115 = vpop.permute.xlu0 %2114
    %2116 = vrot.lane.b32.xlu0 %v1958, 20
    %v2117 = vpop.permute.xlu0 %2116
    %2118 = vrot.lane.b32.xlu0 %v1959, 20
    %v2119 = vpop.permute.xlu0 %2118
    %2120 = vrot.lane.b32.xlu0 %v1960, 20
    %v2121 = vpop.permute.xlu0 %2120
    %2122 = vrot.lane.b32.xlu0 %v1961, 20
    %v2123 = vpop.permute.xlu0 %2122
    %2124 = vrot.lane.b32.xlu0 %v1962, 20
    %v2125 = vpop.permute.xlu0 %2124
    %2126 = vrot.lane.b32.xlu0 %v1963, 20
    %v2127 = vpop.permute.xlu0 %2126
    %2128 = vrot.lane.b32.xlu0 %v1964, 20
    %v2129 = vpop.permute.xlu0 %2128
    %2130 = vrot.lane.b32.xlu0 %v1965, 20
    %v2131 = vpop.permute.xlu0 %2130
    %2132 = vrot.lane.b32.xlu0 %v1966, 20
    %v2133 = vpop.permute.xlu0 %2132
    %2134 = vrot.lane.b32.xlu0 %v1967, 20
    %v2135 = vpop.permute.xlu0 %2134
    %2136 = vrot.lane.b32.xlu0 %v1968, 20
    %v2137 = vpop.permute.xlu0 %2136
    %2138 = vrot.lane.b32.xlu0 %v1969, 20
    %v2139 = vpop.permute.xlu0 %2138
    %2140 = vrot.lane.b32.xlu0 %v1970, 20
    %v2141 = vpop.permute.xlu0 %2140
    %2142 = vrot.lane.b32.xlu0 %v1971, 20
    %v2143 = vpop.permute.xlu0 %2142
    %2144 = vrot.lane.b32.xlu0 %v1972, 20
    %v2145 = vpop.permute.xlu0 %2144
    %2146 = vrot.lane.b32.xlu0 %v1973, 20
    %v2147 = vpop.permute.xlu0 %2146
    %2148 = vrot.lane.b32.xlu0 %v1974, 20
    %v2149 = vpop.permute.xlu0 %2148
    %2150 = vrot.lane.b32.xlu0 %v1975, 20
    %v2151 = vpop.permute.xlu0 %2150
    %2152 = vrot.lane.b32.xlu0 %v1976, 20
    %v2153 = vpop.permute.xlu0 %2152
    %2154 = vrot.lane.b32.xlu0 %v1977, 20
    %v2155 = vpop.permute.xlu0 %2154
    %2156 = vrot.lane.b32.xlu0 %v1978, 20
    %v2157 = vpop.permute.xlu0 %2156
    %2158 = vrot.lane.b32.xlu0 %v1979, 20
    %v2159 = vpop.permute.xlu0 %2158
    %2160 = vrot.lane.b32.xlu0 %v1980, 20
    %v2161 = vpop.permute.xlu0 %2160
    %2162 = vrot.lane.b32.xlu0 %v1981, 20
    %v2163 = vpop.permute.xlu0 %2162
    %2164 = vrot.lane.b32.xlu0 %v1982, 20
    %v2165 = vpop.permute.xlu0 %2164
    %2166 = vrot.lane.b32.xlu0 %v1983, 20
    %v2167 = vpop.permute.xlu0 %2166
    %2168 = vrot.lane.b32.xlu0 %v1984, 20
    %v2169 = vpop.permute.xlu0 %2168
    %2170 = vrot.lane.b32.xlu0 %v1985, 20
    %v2171 = vpop.permute.xlu0 %2170
    %2172 = vrot.lane.b32.xlu0 %v1986, 20
    %v2173 = vpop.permute.xlu0 %2172
    %2174 = vrot.lane.b32.xlu0 %v1987, 20
    %v2175 = vpop.permute.xlu0 %2174
    %2176 = vrot.lane.b32.xlu0 %v1988, 20
    %v2177 = vpop.permute.xlu0 %2176
    %2178 = vrot.lane.b32.xlu0 %v1989, 20
    %v2179 = vpop.permute.xlu0 %2178
    %2180 = vrot.lane.b32.xlu0 %v1990, 20
    %v2181 = vpop.permute.xlu0 %2180
    %2182 = vrot.lane.b32.xlu0 %v1991, 20
    %v2183 = vpop.permute.xlu0 %2182
    %vm2248 = vcmask 195744
    %2249 = vst.msk [vmem:[#allocation3] sm:$0xff] %vm2248, %v2057
    %2250 = vst.msk [vmem:[#allocation3 + $0x8] sm:$0xff] %vm2248, %v2059
    %2251 = vst.msk [vmem:[#allocation3 + $0x10] sm:$0xff] %vm2248, %v2061
    %2252 = vst.msk [vmem:[#allocation3 + $0x18] sm:$0xff] %vm2248, %v2063
    %2253 = vst.msk [vmem:[#allocation3 + $0x20] sm:$0xff] %vm2248, %v2065
    %2254 = vst.msk [vmem:[#allocation3 + $0x28] sm:$0xff] %vm2248, %v2067
    %2255 = vst.msk [vmem:[#allocation3 + $0x30] sm:$0xff] %vm2248, %v2069
    %2256 = vst.msk [vmem:[#allocation3 + $0x38] sm:$0xff] %vm2248, %v2071
    %2257 = vst.msk [vmem:[#allocation3 + $0x40] sm:$0xff] %vm2248, %v2073
    %2258 = vst.msk [vmem:[#allocation3 + $0x48] sm:$0xff] %vm2248, %v2075
    %2259 = vst.msk [vmem:[#allocation3 + $0x50] sm:$0xff] %vm2248, %v2077
    %2260 = vst.msk [vmem:[#allocation3 + $0x58] sm:$0xff] %vm2248, %v2079
    %2261 = vst.msk [vmem:[#allocation3 + $0x60] sm:$0xff] %vm2248, %v2081
    %2262 = vst.msk [vmem:[#allocation3 + $0x68] sm:$0xff] %vm2248, %v2083
    %2263 = vst.msk [vmem:[#allocation3 + $0x70] sm:$0xff] %vm2248, %v2085
    %2264 = vst.msk [vmem:[#allocation3 + $0x78] sm:$0xff] %vm2248, %v2087
    %2265 = vst.msk [vmem:[#allocation3 + $0x80] sm:$0xff] %vm2248, %v2089
    %2266 = vst.msk [vmem:[#allocation3 + $0x88] sm:$0xff] %vm2248, %v2091
    %2267 = vst.msk [vmem:[#allocation3 + $0x90] sm:$0xff] %vm2248, %v2093
    %2268 = vst.msk [vmem:[#allocation3 + $0x98] sm:$0xff] %vm2248, %v2095
    %2269 = vst.msk [vmem:[#allocation3 + $0xa0] sm:$0xff] %vm2248, %v2097
    %2270 = vst.msk [vmem:[#allocation3 + $0xa8] sm:$0xff] %vm2248, %v2099
    %2271 = vst.msk [vmem:[#allocation3 + $0xb0] sm:$0xff] %vm2248, %v2101
    %2272 = vst.msk [vmem:[#allocation3 + $0xb8] sm:$0xff] %vm2248, %v2103
    %2273 = vst.msk [vmem:[#allocation3 + $0xc0] sm:$0xff] %vm2248, %v2105
    %2274 = vst.msk [vmem:[#allocation3 + $0xc8] sm:$0xff] %vm2248, %v2107
    %2275 = vst.msk [vmem:[#allocation3 + $0xd0] sm:$0xff] %vm2248, %v2109
    %2276 = vst.msk [vmem:[#allocation3 + $0xd8] sm:$0xff] %vm2248, %v2111
    %2277 = vst.msk [vmem:[#allocation3 + $0xe0] sm:$0xff] %vm2248, %v2113
    %2278 = vst.msk [vmem:[#allocation3 + $0xe8] sm:$0xff] %vm2248, %v2115
    %2279 = vst.msk [vmem:[#allocation3 + $0xf0] sm:$0xff] %vm2248, %v2117
    %2280 = vst.msk [vmem:[#allocation3 + $0xf8] sm:$0xff] %vm2248, %v2119
    %2281 = vst.msk [vmem:[#allocation3 + $0x100] sm:$0xff] %vm2248, %v2121
    %2282 = vst.msk [vmem:[#allocation3 + $0x108] sm:$0xff] %vm2248, %v2123
    %2283 = vst.msk [vmem:[#allocation3 + $0x110] sm:$0xff] %vm2248, %v2125
    %2284 = vst.msk [vmem:[#allocation3 + $0x118] sm:$0xff] %vm2248, %v2127
    %2285 = vst.msk [vmem:[#allocation3 + $0x120] sm:$0xff] %vm2248, %v2129
    %2286 = vst.msk [vmem:[#allocation3 + $0x128] sm:$0xff] %vm2248, %v2131
    %2287 = vst.msk [vmem:[#allocation3 + $0x130] sm:$0xff] %vm2248, %v2133
    %2288 = vst.msk [vmem:[#allocation3 + $0x138] sm:$0xff] %vm2248, %v2135
    %2289 = vst.msk [vmem:[#allocation3 + $0x140] sm:$0xff] %vm2248, %v2137
    %2290 = vst.msk [vmem:[#allocation3 + $0x148] sm:$0xff] %vm2248, %v2139
    %2291 = vst.msk [vmem:[#allocation3 + $0x150] sm:$0xff] %vm2248, %v2141
    %2292 = vst.msk [vmem:[#allocation3 + $0x158] sm:$0xff] %vm2248, %v2143
    %2293 = vst.msk [vmem:[#allocation3 + $0x160] sm:$0xff] %vm2248, %v2145
    %2294 = vst.msk [vmem:[#allocation3 + $0x168] sm:$0xff] %vm2248, %v2147
    %2295 = vst.msk [vmem:[#allocation3 + $0x170] sm:$0xff] %vm2248, %v2149
    %2296 = vst.msk [vmem:[#allocation3 + $0x178] sm:$0xff] %vm2248, %v2151
    %2297 = vst.msk [vmem:[#allocation3 + $0x180] sm:$0xff] %vm2248, %v2153
    %2298 = vst.msk [vmem:[#allocation3 + $0x188] sm:$0xff] %vm2248, %v2155
    %2299 = vst.msk [vmem:[#allocation3 + $0x190] sm:$0xff] %vm2248, %v2157
    %2300 = vst.msk [vmem:[#allocation3 + $0x198] sm:$0xff] %vm2248, %v2159
    %2301 = vst.msk [vmem:[#allocation3 + $0x1a0] sm:$0xff] %vm2248, %v2161
    %2302 = vst.msk [vmem:[#allocation3 + $0x1a8] sm:$0xff] %vm2248, %v2163
    %2303 = vst.msk [vmem:[#allocation3 + $0x1b0] sm:$0xff] %vm2248, %v2165
    %2304 = vst.msk [vmem:[#allocation3 + $0x1b8] sm:$0xff] %vm2248, %v2167
    %2305 = vst.msk [vmem:[#allocation3 + $0x1c0] sm:$0xff] %vm2248, %v2169
    %2306 = vst.msk [vmem:[#allocation3 + $0x1c8] sm:$0xff] %vm2248, %v2171
    %2307 = vst.msk [vmem:[#allocation3 + $0x1d0] sm:$0xff] %vm2248, %v2173
    %2308 = vst.msk [vmem:[#allocation3 + $0x1d8] sm:$0xff] %vm2248, %v2175
    %2309 = vst.msk [vmem:[#allocation3 + $0x1e0] sm:$0xff] %vm2248, %v2177
    %2310 = vst.msk [vmem:[#allocation3 + $0x1e8] sm:$0xff] %vm2248, %v2179
    %2311 = vst.msk [vmem:[#allocation3 + $0x1f0] sm:$0xff] %vm2248, %v2181
    %2312 = vst.msk [vmem:[#allocation3 + $0x1f8] sm:$0xff] %vm2248, %v2183
    %s2313 = scalar_lea.vmem [#allocation2], 48
    %v2314 = vld [vmem:[%s2313] sm:$0xff]
    %v2315 = vld [vmem:[%s2313 + $0x8] sm:$0xff]
    %v2316 = vld [vmem:[%s2313 + $0x18] sm:$0xff]
    %v2317 = vld [vmem:[%s2313 + $0x20] sm:$0xff]
    %v2318 = vld [vmem:[%s2313 + $0x30] sm:$0xff]
    %v2319 = vld [vmem:[%s2313 + $0x38] sm:$0xff]
    %v2320 = vld [vmem:[%s2313 + $0x48] sm:$0xff]
    %v2321 = vld [vmem:[%s2313 + $0x50] sm:$0xff]
    %v2322 = vld [vmem:[%s2313 + $0x60] sm:$0xff]
    %v2323 = vld [vmem:[%s2313 + $0x68] sm:$0xff]
    %v2324 = vld [vmem:[%s2313 + $0x78] sm:$0xff]
    %v2325 = vld [vmem:[%s2313 + $0x80] sm:$0xff]
    %v2326 = vld [vmem:[%s2313 + $0x90] sm:$0xff]
    %v2327 = vld [vmem:[%s2313 + $0x98] sm:$0xff]
    %v2328 = vld [vmem:[%s2313 + $0xa8] sm:$0xff]
    %v2329 = vld [vmem:[%s2313 + $0xb0] sm:$0xff]
    %v2330 = vld [vmem:[%s2313 + $0xc0] sm:$0xff]
    %v2331 = vld [vmem:[%s2313 + $0xc8] sm:$0xff]
    %v2332 = vld [vmem:[%s2313 + $0xd8] sm:$0xff]
    %v2333 = vld [vmem:[%s2313 + $0xe0] sm:$0xff]
    %v2334 = vld [vmem:[%s2313 + $0xf0] sm:$0xff]
    %v2335 = vld [vmem:[%s2313 + $0xf8] sm:$0xff]
    %v2336 = vld [vmem:[%s2313 + $0x108] sm:$0xff]
    %v2337 = vld [vmem:[%s2313 + $0x110] sm:$0xff]
    %v2338 = vld [vmem:[%s2313 + $0x120] sm:$0xff]
    %v2339 = vld [vmem:[%s2313 + $0x128] sm:$0xff]
    %v2340 = vld [vmem:[%s2313 + $0x138] sm:$0xff]
    %v2341 = vld [vmem:[%s2313 + $0x140] sm:$0xff]
    %v2342 = vld [vmem:[%s2313 + $0x150] sm:$0xff]
    %v2343 = vld [vmem:[%s2313 + $0x158] sm:$0xff]
    %v2344 = vld [vmem:[%s2313 + $0x168] sm:$0xff]
    %v2345 = vld [vmem:[%s2313 + $0x170] sm:$0xff]
    %v2346 = vld [vmem:[%s2313 + $0x1b0] sm:$0xff]
    %v2347 = vld [vmem:[%s2313 + $0x1b8] sm:$0xff]
    %v2348 = vld [vmem:[%s2313 + $0x1c8] sm:$0xff]
    %v2349 = vld [vmem:[%s2313 + $0x1d0] sm:$0xff]
    %v2350 = vld [vmem:[%s2313 + $0x1e0] sm:$0xff]
    %v2351 = vld [vmem:[%s2313 + $0x1e8] sm:$0xff]
    %v2352 = vld [vmem:[%s2313 + $0x1f8] sm:$0xff]
    %v2353 = vld [vmem:[%s2313 + $0x200] sm:$0xff]
    %v2354 = vld [vmem:[%s2313 + $0x210] sm:$0xff]
    %v2355 = vld [vmem:[%s2313 + $0x218] sm:$0xff]
    %v2356 = vld [vmem:[%s2313 + $0x228] sm:$0xff]
    %v2357 = vld [vmem:[%s2313 + $0x230] sm:$0xff]
    %v2358 = vld [vmem:[%s2313 + $0x240] sm:$0xff]
    %v2359 = vld [vmem:[%s2313 + $0x248] sm:$0xff]
    %v2360 = vld [vmem:[%s2313 + $0x258] sm:$0xff]
    %v2361 = vld [vmem:[%s2313 + $0x260] sm:$0xff]
    %v2362 = vld [vmem:[%s2313 + $0x270] sm:$0xff]
    %v2363 = vld [vmem:[%s2313 + $0x278] sm:$0xff]
    %v2364 = vld [vmem:[%s2313 + $0x288] sm:$0xff]
    %v2365 = vld [vmem:[%s2313 + $0x290] sm:$0xff]
    %v2366 = vld [vmem:[%s2313 + $0x2a0] sm:$0xff]
    %v2367 = vld [vmem:[%s2313 + $0x2a8] sm:$0xff]
    %v2368 = vld [vmem:[%s2313 + $0x2b8] sm:$0xff]
    %v2369 = vld [vmem:[%s2313 + $0x2c0] sm:$0xff]
    %v2370 = vld [vmem:[%s2313 + $0x2d0] sm:$0xff]
    %v2371 = vld [vmem:[%s2313 + $0x2d8] sm:$0xff]
    %v2372 = vld [vmem:[%s2313 + $0x2e8] sm:$0xff]
    %v2373 = vld [vmem:[%s2313 + $0x2f0] sm:$0xff]
    %v2374 = vld [vmem:[%s2313 + $0x300] sm:$0xff]
    %v2375 = vld [vmem:[%s2313 + $0x308] sm:$0xff]
    %v2376 = vld [vmem:[%s2313 + $0x318] sm:$0xff]
    %v2377 = vld [vmem:[%s2313 + $0x320] sm:$0xff]
    %2442 = vrot.lane.b32.xlu0 %v2314, 24
    %v2443 = vpop.permute.xlu0 %2442
    %2444 = vrot.lane.b32.xlu0 %v2315, 24
    %v2445 = vpop.permute.xlu0 %2444
    %2446 = vrot.lane.b32.xlu0 %v2316, 24
    %v2447 = vpop.permute.xlu0 %2446
    %2448 = vrot.lane.b32.xlu0 %v2317, 24
    %v2449 = vpop.permute.xlu0 %2448
    %2450 = vrot.lane.b32.xlu0 %v2318, 24
    %v2451 = vpop.permute.xlu0 %2450
    %2452 = vrot.lane.b32.xlu0 %v2319, 24
    %v2453 = vpop.permute.xlu0 %2452
    %2454 = vrot.lane.b32.xlu0 %v2320, 24
    %v2455 = vpop.permute.xlu0 %2454
    %2456 = vrot.lane.b32.xlu0 %v2321, 24
    %v2457 = vpop.permute.xlu0 %2456
    %2458 = vrot.lane.b32.xlu0 %v2322, 24
    %v2459 = vpop.permute.xlu0 %2458
    %2460 = vrot.lane.b32.xlu0 %v2323, 24
    %v2461 = vpop.permute.xlu0 %2460
    %2462 = vrot.lane.b32.xlu0 %v2324, 24
    %v2463 = vpop.permute.xlu0 %2462
    %2464 = vrot.lane.b32.xlu0 %v2325, 24
    %v2465 = vpop.permute.xlu0 %2464
    %2466 = vrot.lane.b32.xlu0 %v2326, 24
    %v2467 = vpop.permute.xlu0 %2466
    %2468 = vrot.lane.b32.xlu0 %v2327, 24
    %v2469 = vpop.permute.xlu0 %2468
    %2470 = vrot.lane.b32.xlu0 %v2328, 24
    %v2471 = vpop.permute.xlu0 %2470
    %2472 = vrot.lane.b32.xlu0 %v2329, 24
    %v2473 = vpop.permute.xlu0 %2472
    %2474 = vrot.lane.b32.xlu0 %v2330, 24
    %v2475 = vpop.permute.xlu0 %2474
    %2476 = vrot.lane.b32.xlu0 %v2331, 24
    %v2477 = vpop.permute.xlu0 %2476
    %2478 = vrot.lane.b32.xlu0 %v2332, 24
    %v2479 = vpop.permute.xlu0 %2478
    %2480 = vrot.lane.b32.xlu0 %v2333, 24
    %v2481 = vpop.permute.xlu0 %2480
    %2482 = vrot.lane.b32.xlu0 %v2334, 24
    %v2483 = vpop.permute.xlu0 %2482
    %2484 = vrot.lane.b32.xlu0 %v2335, 24
    %v2485 = vpop.permute.xlu0 %2484
    %2486 = vrot.lane.b32.xlu0 %v2336, 24
    %v2487 = vpop.permute.xlu0 %2486
    %2488 = vrot.lane.b32.xlu0 %v2337, 24
    %v2489 = vpop.permute.xlu0 %2488
    %2490 = vrot.lane.b32.xlu0 %v2338, 24
    %v2491 = vpop.permute.xlu0 %2490
    %2492 = vrot.lane.b32.xlu0 %v2339, 24
    %v2493 = vpop.permute.xlu0 %2492
    %2494 = vrot.lane.b32.xlu0 %v2340, 24
    %v2495 = vpop.permute.xlu0 %2494
    %2496 = vrot.lane.b32.xlu0 %v2341, 24
    %v2497 = vpop.permute.xlu0 %2496
    %2498 = vrot.lane.b32.xlu0 %v2342, 24
    %v2499 = vpop.permute.xlu0 %2498
    %2500 = vrot.lane.b32.xlu0 %v2343, 24
    %v2501 = vpop.permute.xlu0 %2500
    %2502 = vrot.lane.b32.xlu0 %v2344, 24
    %v2503 = vpop.permute.xlu0 %2502
    %2504 = vrot.lane.b32.xlu0 %v2345, 24
    %v2505 = vpop.permute.xlu0 %2504
    %2506 = vrot.lane.b32.xlu0 %v2346, 24
    %v2507 = vpop.permute.xlu0 %2506
    %2508 = vrot.lane.b32.xlu0 %v2347, 24
    %v2509 = vpop.permute.xlu0 %2508
    %2510 = vrot.lane.b32.xlu0 %v2348, 24
    %v2511 = vpop.permute.xlu0 %2510
    %2512 = vrot.lane.b32.xlu0 %v2349, 24
    %v2513 = vpop.permute.xlu0 %2512
    %2514 = vrot.lane.b32.xlu0 %v2350, 24
    %v2515 = vpop.permute.xlu0 %2514
    %2516 = vrot.lane.b32.xlu0 %v2351, 24
    %v2517 = vpop.permute.xlu0 %2516
    %2518 = vrot.lane.b32.xlu0 %v2352, 24
    %v2519 = vpop.permute.xlu0 %2518
    %2520 = vrot.lane.b32.xlu0 %v2353, 24
    %v2521 = vpop.permute.xlu0 %2520
    %2522 = vrot.lane.b32.xlu0 %v2354, 24
    %v2523 = vpop.permute.xlu0 %2522
    %2524 = vrot.lane.b32.xlu0 %v2355, 24
    %v2525 = vpop.permute.xlu0 %2524
    %2526 = vrot.lane.b32.xlu0 %v2356, 24
    %v2527 = vpop.permute.xlu0 %2526
    %2528 = vrot.lane.b32.xlu0 %v2357, 24
    %v2529 = vpop.permute.xlu0 %2528
    %2530 = vrot.lane.b32.xlu0 %v2358, 24
    %v2531 = vpop.permute.xlu0 %2530
    %2532 = vrot.lane.b32.xlu0 %v2359, 24
    %v2533 = vpop.permute.xlu0 %2532
    %2534 = vrot.lane.b32.xlu0 %v2360, 24
    %v2535 = vpop.permute.xlu0 %2534
    %2536 = vrot.lane.b32.xlu0 %v2361, 24
    %v2537 = vpop.permute.xlu0 %2536
    %2538 = vrot.lane.b32.xlu0 %v2362, 24
    %v2539 = vpop.permute.xlu0 %2538
    %2540 = vrot.lane.b32.xlu0 %v2363, 24
    %v2541 = vpop.permute.xlu0 %2540
    %2542 = vrot.lane.b32.xlu0 %v2364, 24
    %v2543 = vpop.permute.xlu0 %2542
    %2544 = vrot.lane.b32.xlu0 %v2365, 24
    %v2545 = vpop.permute.xlu0 %2544
    %2546 = vrot.lane.b32.xlu0 %v2366, 24
    %v2547 = vpop.permute.xlu0 %2546
    %2548 = vrot.lane.b32.xlu0 %v2367, 24
    %v2549 = vpop.permute.xlu0 %2548
    %2550 = vrot.lane.b32.xlu0 %v2368, 24
    %v2551 = vpop.permute.xlu0 %2550
    %2552 = vrot.lane.b32.xlu0 %v2369, 24
    %v2553 = vpop.permute.xlu0 %2552
    %2554 = vrot.lane.b32.xlu0 %v2370, 24
    %v2555 = vpop.permute.xlu0 %2554
    %2556 = vrot.lane.b32.xlu0 %v2371, 24
    %v2557 = vpop.permute.xlu0 %2556
    %2558 = vrot.lane.b32.xlu0 %v2372, 24
    %v2559 = vpop.permute.xlu0 %2558
    %2560 = vrot.lane.b32.xlu0 %v2373, 24
    %v2561 = vpop.permute.xlu0 %2560
    %2562 = vrot.lane.b32.xlu0 %v2374, 24
    %v2563 = vpop.permute.xlu0 %2562
    %2564 = vrot.lane.b32.xlu0 %v2375, 24
    %v2565 = vpop.permute.xlu0 %2564
    %2566 = vrot.lane.b32.xlu0 %v2376, 24
    %v2567 = vpop.permute.xlu0 %2566
    %2568 = vrot.lane.b32.xlu0 %v2377, 24
    %v2569 = vpop.permute.xlu0 %2568
    %vm2634 = vcmask 228544
    %2635 = vst.msk [vmem:[#allocation3] sm:$0xff] %vm2634, %v2443
    %2636 = vst.msk [vmem:[#allocation3 + $0x8] sm:$0xff] %vm2634, %v2445
    %2637 = vst.msk [vmem:[#allocation3 + $0x10] sm:$0xff] %vm2634, %v2447
    %2638 = vst.msk [vmem:[#allocation3 + $0x18] sm:$0xff] %vm2634, %v2449
    %2639 = vst.msk [vmem:[#allocation3 + $0x20] sm:$0xff] %vm2634, %v2451
    %2640 = vst.msk [vmem:[#allocation3 + $0x28] sm:$0xff] %vm2634, %v2453
    %2641 = vst.msk [vmem:[#allocation3 + $0x30] sm:$0xff] %vm2634, %v2455
    %2642 = vst.msk [vmem:[#allocation3 + $0x38] sm:$0xff] %vm2634, %v2457
    %2643 = vst.msk [vmem:[#allocation3 + $0x40] sm:$0xff] %vm2634, %v2459
    %2644 = vst.msk [vmem:[#allocation3 + $0x48] sm:$0xff] %vm2634, %v2461
    %2645 = vst.msk [vmem:[#allocation3 + $0x50] sm:$0xff] %vm2634, %v2463
    %2646 = vst.msk [vmem:[#allocation3 + $0x58] sm:$0xff] %vm2634, %v2465
    %2647 = vst.msk [vmem:[#allocation3 + $0x60] sm:$0xff] %vm2634, %v2467
    %2648 = vst.msk [vmem:[#allocation3 + $0x68] sm:$0xff] %vm2634, %v2469
    %2649 = vst.msk [vmem:[#allocation3 + $0x70] sm:$0xff] %vm2634, %v2471
    %2650 = vst.msk [vmem:[#allocation3 + $0x78] sm:$0xff] %vm2634, %v2473
    %2651 = vst.msk [vmem:[#allocation3 + $0x80] sm:$0xff] %vm2634, %v2475
    %2652 = vst.msk [vmem:[#allocation3 + $0x88] sm:$0xff] %vm2634, %v2477
    %2653 = vst.msk [vmem:[#allocation3 + $0x90] sm:$0xff] %vm2634, %v2479
    %2654 = vst.msk [vmem:[#allocation3 + $0x98] sm:$0xff] %vm2634, %v2481
    %2655 = vst.msk [vmem:[#allocation3 + $0xa0] sm:$0xff] %vm2634, %v2483
    %2656 = vst.msk [vmem:[#allocation3 + $0xa8] sm:$0xff] %vm2634, %v2485
    %2657 = vst.msk [vmem:[#allocation3 + $0xb0] sm:$0xff] %vm2634, %v2487
    %2658 = vst.msk [vmem:[#allocation3 + $0xb8] sm:$0xff] %vm2634, %v2489
    %2659 = vst.msk [vmem:[#allocation3 + $0xc0] sm:$0xff] %vm2634, %v2491
    %2660 = vst.msk [vmem:[#allocation3 + $0xc8] sm:$0xff] %vm2634, %v2493
    %2661 = vst.msk [vmem:[#allocation3 + $0xd0] sm:$0xff] %vm2634, %v2495
    %2662 = vst.msk [vmem:[#allocation3 + $0xd8] sm:$0xff] %vm2634, %v2497
    %2663 = vst.msk [vmem:[#allocation3 + $0xe0] sm:$0xff] %vm2634, %v2499
    %2664 = vst.msk [vmem:[#allocation3 + $0xe8] sm:$0xff] %vm2634, %v2501
    %2665 = vst.msk [vmem:[#allocation3 + $0xf0] sm:$0xff] %vm2634, %v2503
    %2666 = vst.msk [vmem:[#allocation3 + $0xf8] sm:$0xff] %vm2634, %v2505
    %2667 = vst.msk [vmem:[#allocation3 + $0x100] sm:$0xff] %vm2634, %v2507
    %2668 = vst.msk [vmem:[#allocation3 + $0x108] sm:$0xff] %vm2634, %v2509
    %2669 = vst.msk [vmem:[#allocation3 + $0x110] sm:$0xff] %vm2634, %v2511
    %2670 = vst.msk [vmem:[#allocation3 + $0x118] sm:$0xff] %vm2634, %v2513
    %2671 = vst.msk [vmem:[#allocation3 + $0x120] sm:$0xff] %vm2634, %v2515
    %2672 = vst.msk [vmem:[#allocation3 + $0x128] sm:$0xff] %vm2634, %v2517
    %2673 = vst.msk [vmem:[#allocation3 + $0x130] sm:$0xff] %vm2634, %v2519
    %2674 = vst.msk [vmem:[#allocation3 + $0x138] sm:$0xff] %vm2634, %v2521
    %2675 = vst.msk [vmem:[#allocation3 + $0x140] sm:$0xff] %vm2634, %v2523
    %2676 = vst.msk [vmem:[#allocation3 + $0x148] sm:$0xff] %vm2634, %v2525
    %2677 = vst.msk [vmem:[#allocation3 + $0x150] sm:$0xff] %vm2634, %v2527
    %2678 = vst.msk [vmem:[#allocation3 + $0x158] sm:$0xff] %vm2634, %v2529
    %2679 = vst.msk [vmem:[#allocation3 + $0x160] sm:$0xff] %vm2634, %v2531
    %2680 = vst.msk [vmem:[#allocation3 + $0x168] sm:$0xff] %vm2634, %v2533
    %2681 = vst.msk [vmem:[#allocation3 + $0x170] sm:$0xff] %vm2634, %v2535
    %2682 = vst.msk [vmem:[#allocation3 + $0x178] sm:$0xff] %vm2634, %v2537
    %2683 = vst.msk [vmem:[#allocation3 + $0x180] sm:$0xff] %vm2634, %v2539
    %2684 = vst.msk [vmem:[#allocation3 + $0x188] sm:$0xff] %vm2634, %v2541
    %2685 = vst.msk [vmem:[#allocation3 + $0x190] sm:$0xff] %vm2634, %v2543
    %2686 = vst.msk [vmem:[#allocation3 + $0x198] sm:$0xff] %vm2634, %v2545
    %2687 = vst.msk [vmem:[#allocation3 + $0x1a0] sm:$0xff] %vm2634, %v2547
    %2688 = vst.msk [vmem:[#allocation3 + $0x1a8] sm:$0xff] %vm2634, %v2549
    %2689 = vst.msk [vmem:[#allocation3 + $0x1b0] sm:$0xff] %vm2634, %v2551
    %2690 = vst.msk [vmem:[#allocation3 + $0x1b8] sm:$0xff] %vm2634, %v2553
    %2691 = vst.msk [vmem:[#allocation3 + $0x1c0] sm:$0xff] %vm2634, %v2555
    %2692 = vst.msk [vmem:[#allocation3 + $0x1c8] sm:$0xff] %vm2634, %v2557
    %2693 = vst.msk [vmem:[#allocation3 + $0x1d0] sm:$0xff] %vm2634, %v2559
    %2694 = vst.msk [vmem:[#allocation3 + $0x1d8] sm:$0xff] %vm2634, %v2561
    %2695 = vst.msk [vmem:[#allocation3 + $0x1e0] sm:$0xff] %vm2634, %v2563
    %2696 = vst.msk [vmem:[#allocation3 + $0x1e8] sm:$0xff] %vm2634, %v2565
    %2697 = vst.msk [vmem:[#allocation3 + $0x1f0] sm:$0xff] %vm2634, %v2567
    %2698 = vst.msk [vmem:[#allocation3 + $0x1f8] sm:$0xff] %vm2634, %v2569
    %v2699 = vld [vmem:[%s2313 + $0x1] sm:$0xff]
    %v2700 = vld [vmem:[%s2313 + $0x9] sm:$0xff]
    %v2701 = vld [vmem:[%s2313 + $0x19] sm:$0xff]
    %v2702 = vld [vmem:[%s2313 + $0x21] sm:$0xff]
    %v2703 = vld [vmem:[%s2313 + $0x31] sm:$0xff]
    %v2704 = vld [vmem:[%s2313 + $0x39] sm:$0xff]
    %v2705 = vld [vmem:[%s2313 + $0x49] sm:$0xff]
    %v2706 = vld [vmem:[%s2313 + $0x51] sm:$0xff]
    %v2707 = vld [vmem:[%s2313 + $0x61] sm:$0xff]
    %v2708 = vld [vmem:[%s2313 + $0x69] sm:$0xff]
    %v2709 = vld [vmem:[%s2313 + $0x79] sm:$0xff]
    %v2710 = vld [vmem:[%s2313 + $0x81] sm:$0xff]
    %v2711 = vld [vmem:[%s2313 + $0x91] sm:$0xff]
    %v2712 = vld [vmem:[%s2313 + $0x99] sm:$0xff]
    %v2713 = vld [vmem:[%s2313 + $0xa9] sm:$0xff]
    %v2714 = vld [vmem:[%s2313 + $0xb1] sm:$0xff]
    %v2715 = vld [vmem:[%s2313 + $0xc1] sm:$0xff]
    %v2716 = vld [vmem:[%s2313 + $0xc9] sm:$0xff]
    %v2717 = vld [vmem:[%s2313 + $0xd9] sm:$0xff]
    %v2718 = vld [vmem:[%s2313 + $0xe1] sm:$0xff]
    %v2719 = vld [vmem:[%s2313 + $0xf1] sm:$0xff]
    %v2720 = vld [vmem:[%s2313 + $0xf9] sm:$0xff]
    %v2721 = vld [vmem:[%s2313 + $0x109] sm:$0xff]
    %v2722 = vld [vmem:[%s2313 + $0x111] sm:$0xff]
    %v2723 = vld [vmem:[%s2313 + $0x121] sm:$0xff]
    %v2724 = vld [vmem:[%s2313 + $0x129] sm:$0xff]
    %v2725 = vld [vmem:[%s2313 + $0x139] sm:$0xff]
    %v2726 = vld [vmem:[%s2313 + $0x141] sm:$0xff]
    %v2727 = vld [vmem:[%s2313 + $0x151] sm:$0xff]
    %v2728 = vld [vmem:[%s2313 + $0x159] sm:$0xff]
    %v2729 = vld [vmem:[%s2313 + $0x169] sm:$0xff]
    %v2730 = vld [vmem:[%s2313 + $0x171] sm:$0xff]
    %v2731 = vld [vmem:[%s2313 + $0x1b1] sm:$0xff]
    %v2732 = vld [vmem:[%s2313 + $0x1b9] sm:$0xff]
    %v2733 = vld [vmem:[%s2313 + $0x1c9] sm:$0xff]
    %v2734 = vld [vmem:[%s2313 + $0x1d1] sm:$0xff]
    %v2735 = vld [vmem:[%s2313 + $0x1e1] sm:$0xff]
    %v2736 = vld [vmem:[%s2313 + $0x1e9] sm:$0xff]
    %v2737 = vld [vmem:[%s2313 + $0x1f9] sm:$0xff]
    %v2738 = vld [vmem:[%s2313 + $0x201] sm:$0xff]
    %v2739 = vld [vmem:[%s2313 + $0x211] sm:$0xff]
    %v2740 = vld [vmem:[%s2313 + $0x219] sm:$0xff]
    %v2741 = vld [vmem:[%s2313 + $0x229] sm:$0xff]
    %v2742 = vld [vmem:[%s2313 + $0x231] sm:$0xff]
    %v2743 = vld [vmem:[%s2313 + $0x241] sm:$0xff]
    %v2744 = vld [vmem:[%s2313 + $0x249] sm:$0xff]
    %v2745 = vld [vmem:[%s2313 + $0x259] sm:$0xff]
    %v2746 = vld [vmem:[%s2313 + $0x261] sm:$0xff]
    %v2747 = vld [vmem:[%s2313 + $0x271] sm:$0xff]
    %v2748 = vld [vmem:[%s2313 + $0x279] sm:$0xff]
    %v2749 = vld [vmem:[%s2313 + $0x289] sm:$0xff]
    %v2750 = vld [vmem:[%s2313 + $0x291] sm:$0xff]
    %v2751 = vld [vmem:[%s2313 + $0x2a1] sm:$0xff]
    %v2752 = vld [vmem:[%s2313 + $0x2a9] sm:$0xff]
    %v2753 = vld [vmem:[%s2313 + $0x2b9] sm:$0xff]
    %v2754 = vld [vmem:[%s2313 + $0x2c1] sm:$0xff]
    %v2755 = vld [vmem:[%s2313 + $0x2d1] sm:$0xff]
    %v2756 = vld [vmem:[%s2313 + $0x2d9] sm:$0xff]
    %v2757 = vld [vmem:[%s2313 + $0x2e9] sm:$0xff]
    %v2758 = vld [vmem:[%s2313 + $0x2f1] sm:$0xff]
    %v2759 = vld [vmem:[%s2313 + $0x301] sm:$0xff]
    %v2760 = vld [vmem:[%s2313 + $0x309] sm:$0xff]
    %v2761 = vld [vmem:[%s2313 + $0x319] sm:$0xff]
    %v2762 = vld [vmem:[%s2313 + $0x321] sm:$0xff]
    %2827 = vrot.lane.b32.xlu0 %v2699, 28
    %v2828 = vpop.permute.xlu0 %2827
    %2829 = vrot.lane.b32.xlu0 %v2700, 28
    %v2830 = vpop.permute.xlu0 %2829
    %2831 = vrot.lane.b32.xlu0 %v2701, 28
    %v2832 = vpop.permute.xlu0 %2831
    %2833 = vrot.lane.b32.xlu0 %v2702, 28
    %v2834 = vpop.permute.xlu0 %2833
    %2835 = vrot.lane.b32.xlu0 %v2703, 28
    %v2836 = vpop.permute.xlu0 %2835
    %2837 = vrot.lane.b32.xlu0 %v2704, 28
    %v2838 = vpop.permute.xlu0 %2837
    %2839 = vrot.lane.b32.xlu0 %v2705, 28
    %v2840 = vpop.permute.xlu0 %2839
    %2841 = vrot.lane.b32.xlu0 %v2706, 28
    %v2842 = vpop.permute.xlu0 %2841
    %2843 = vrot.lane.b32.xlu0 %v2707, 28
    %v2844 = vpop.permute.xlu0 %2843
    %2845 = vrot.lane.b32.xlu0 %v2708, 28
    %v2846 = vpop.permute.xlu0 %2845
    %2847 = vrot.lane.b32.xlu0 %v2709, 28
    %v2848 = vpop.permute.xlu0 %2847
    %2849 = vrot.lane.b32.xlu0 %v2710, 28
    %v2850 = vpop.permute.xlu0 %2849
    %2851 = vrot.lane.b32.xlu0 %v2711, 28
    %v2852 = vpop.permute.xlu0 %2851
    %2853 = vrot.lane.b32.xlu0 %v2712, 28
    %v2854 = vpop.permute.xlu0 %2853
    %2855 = vrot.lane.b32.xlu0 %v2713, 28
    %v2856 = vpop.permute.xlu0 %2855
    %2857 = vrot.lane.b32.xlu0 %v2714, 28
    %v2858 = vpop.permute.xlu0 %2857
    %2859 = vrot.lane.b32.xlu0 %v2715, 28
    %v2860 = vpop.permute.xlu0 %2859
    %2861 = vrot.lane.b32.xlu0 %v2716, 28
    %v2862 = vpop.permute.xlu0 %2861
    %2863 = vrot.lane.b32.xlu0 %v2717, 28
    %v2864 = vpop.permute.xlu0 %2863
    %2865 = vrot.lane.b32.xlu0 %v2718, 28
    %v2866 = vpop.permute.xlu0 %2865
    %2867 = vrot.lane.b32.xlu0 %v2719, 28
    %v2868 = vpop.permute.xlu0 %2867
    %2869 = vrot.lane.b32.xlu0 %v2720, 28
    %v2870 = vpop.permute.xlu0 %2869
    %2871 = vrot.lane.b32.xlu0 %v2721, 28
    %v2872 = vpop.permute.xlu0 %2871
    %2873 = vrot.lane.b32.xlu0 %v2722, 28
    %v2874 = vpop.permute.xlu0 %2873
    %2875 = vrot.lane.b32.xlu0 %v2723, 28
    %v2876 = vpop.permute.xlu0 %2875
    %2877 = vrot.lane.b32.xlu0 %v2724, 28
    %v2878 = vpop.permute.xlu0 %2877
    %2879 = vrot.lane.b32.xlu0 %v2725, 28
    %v2880 = vpop.permute.xlu0 %2879
    %2881 = vrot.lane.b32.xlu0 %v2726, 28
    %v2882 = vpop.permute.xlu0 %2881
    %2883 = vrot.lane.b32.xlu0 %v2727, 28
    %v2884 = vpop.permute.xlu0 %2883
    %2885 = vrot.lane.b32.xlu0 %v2728, 28
    %v2886 = vpop.permute.xlu0 %2885
    %2887 = vrot.lane.b32.xlu0 %v2729, 28
    %v2888 = vpop.permute.xlu0 %2887
    %2889 = vrot.lane.b32.xlu0 %v2730, 28
    %v2890 = vpop.permute.xlu0 %2889
    %2891 = vrot.lane.b32.xlu0 %v2731, 28
    %v2892 = vpop.permute.xlu0 %2891
    %2893 = vrot.lane.b32.xlu0 %v2732, 28
    %v2894 = vpop.permute.xlu0 %2893
    %2895 = vrot.lane.b32.xlu0 %v2733, 28
    %v2896 = vpop.permute.xlu0 %2895
    %2897 = vrot.lane.b32.xlu0 %v2734, 28
    %v2898 = vpop.permute.xlu0 %2897
    %2899 = vrot.lane.b32.xlu0 %v2735, 28
    %v2900 = vpop.permute.xlu0 %2899
    %2901 = vrot.lane.b32.xlu0 %v2736, 28
    %v2902 = vpop.permute.xlu0 %2901
    %2903 = vrot.lane.b32.xlu0 %v2737, 28
    %v2904 = vpop.permute.xlu0 %2903
    %2905 = vrot.lane.b32.xlu0 %v2738, 28
    %v2906 = vpop.permute.xlu0 %2905
    %2907 = vrot.lane.b32.xlu0 %v2739, 28
    %v2908 = vpop.permute.xlu0 %2907
    %2909 = vrot.lane.b32.xlu0 %v2740, 28
    %v2910 = vpop.permute.xlu0 %2909
    %2911 = vrot.lane.b32.xlu0 %v2741, 28
    %v2912 = vpop.permute.xlu0 %2911
    %2913 = vrot.lane.b32.xlu0 %v2742, 28
    %v2914 = vpop.permute.xlu0 %2913
    %2915 = vrot.lane.b32.xlu0 %v2743, 28
    %v2916 = vpop.permute.xlu0 %2915
    %2917 = vrot.lane.b32.xlu0 %v2744, 28
    %v2918 = vpop.permute.xlu0 %2917
    %2919 = vrot.lane.b32.xlu0 %v2745, 28
    %v2920 = vpop.permute.xlu0 %2919
    %2921 = vrot.lane.b32.xlu0 %v2746, 28
    %v2922 = vpop.permute.xlu0 %2921
    %2923 = vrot.lane.b32.xlu0 %v2747, 28
    %v2924 = vpop.permute.xlu0 %2923
    %2925 = vrot.lane.b32.xlu0 %v2748, 28
    %v2926 = vpop.permute.xlu0 %2925
    %2927 = vrot.lane.b32.xlu0 %v2749, 28
    %v2928 = vpop.permute.xlu0 %2927
    %2929 = vrot.lane.b32.xlu0 %v2750, 28
    %v2930 = vpop.permute.xlu0 %2929
    %2931 = vrot.lane.b32.xlu0 %v2751, 28
    %v2932 = vpop.permute.xlu0 %2931
    %2933 = vrot.lane.b32.xlu0 %v2752, 28
    %v2934 = vpop.permute.xlu0 %2933
    %2935 = vrot.lane.b32.xlu0 %v2753, 28
    %v2936 = vpop.permute.xlu0 %2935
    %2937 = vrot.lane.b32.xlu0 %v2754, 28
    %v2938 = vpop.permute.xlu0 %2937
    %2939 = vrot.lane.b32.xlu0 %v2755, 28
    %v2940 = vpop.permute.xlu0 %2939
    %2941 = vrot.lane.b32.xlu0 %v2756, 28
    %v2942 = vpop.permute.xlu0 %2941
    %2943 = vrot.lane.b32.xlu0 %v2757, 28
    %v2944 = vpop.permute.xlu0 %2943
    %2945 = vrot.lane.b32.xlu0 %v2758, 28
    %v2946 = vpop.permute.xlu0 %2945
    %2947 = vrot.lane.b32.xlu0 %v2759, 28
    %v2948 = vpop.permute.xlu0 %2947
    %2949 = vrot.lane.b32.xlu0 %v2760, 28
    %v2950 = vpop.permute.xlu0 %2949
    %2951 = vrot.lane.b32.xlu0 %v2761, 28
    %v2952 = vpop.permute.xlu0 %2951
    %2953 = vrot.lane.b32.xlu0 %v2762, 28
    %v2954 = vpop.permute.xlu0 %2953
    %vm3019 = vcmask 261344
    %3020 = vst.msk [vmem:[#allocation3] sm:$0xff] %vm3019, %v2828
    %3021 = vst.msk [vmem:[#allocation3 + $0x8] sm:$0xff] %vm3019, %v2830
    %3022 = vst.msk [vmem:[#allocation3 + $0x10] sm:$0xff] %vm3019, %v2832
    %3023 = vst.msk [vmem:[#allocation3 + $0x18] sm:$0xff] %vm3019, %v2834
    %3024 = vst.msk [vmem:[#allocation3 + $0x20] sm:$0xff] %vm3019, %v2836
    %3025 = vst.msk [vmem:[#allocation3 + $0x28] sm:$0xff] %vm3019, %v2838
    %3026 = vst.msk [vmem:[#allocation3 + $0x30] sm:$0xff] %vm3019, %v2840
    %3027 = vst.msk [vmem:[#allocation3 + $0x38] sm:$0xff] %vm3019, %v2842
    %3028 = vst.msk [vmem:[#allocation3 + $0x40] sm:$0xff] %vm3019, %v2844
    %3029 = vst.msk [vmem:[#allocation3 + $0x48] sm:$0xff] %vm3019, %v2846
    %3030 = vst.msk [vmem:[#allocation3 + $0x50] sm:$0xff] %vm3019, %v2848
    %3031 = vst.msk [vmem:[#allocation3 + $0x58] sm:$0xff] %vm3019, %v2850
    %3032 = vst.msk [vmem:[#allocation3 + $0x60] sm:$0xff] %vm3019, %v2852
    %3033 = vst.msk [vmem:[#allocation3 + $0x68] sm:$0xff] %vm3019, %v2854
    %3034 = vst.msk [vmem:[#allocation3 + $0x70] sm:$0xff] %vm3019, %v2856
    %3035 = vst.msk [vmem:[#allocation3 + $0x78] sm:$0xff] %vm3019, %v2858
    %3036 = vst.msk [vmem:[#allocation3 + $0x80] sm:$0xff] %vm3019, %v2860
    %3037 = vst.msk [vmem:[#allocation3 + $0x88] sm:$0xff] %vm3019, %v2862
    %3038 = vst.msk [vmem:[#allocation3 + $0x90] sm:$0xff] %vm3019, %v2864
    %3039 = vst.msk [vmem:[#allocation3 + $0x98] sm:$0xff] %vm3019, %v2866
    %3040 = vst.msk [vmem:[#allocation3 + $0xa0] sm:$0xff] %vm3019, %v2868
    %3041 = vst.msk [vmem:[#allocation3 + $0xa8] sm:$0xff] %vm3019, %v2870
    %3042 = vst.msk [vmem:[#allocation3 + $0xb0] sm:$0xff] %vm3019, %v2872
    %3043 = vst.msk [vmem:[#allocation3 + $0xb8] sm:$0xff] %vm3019, %v2874
    %3044 = vst.msk [vmem:[#allocation3 + $0xc0] sm:$0xff] %vm3019, %v2876
    %3045 = vst.msk [vmem:[#allocation3 + $0xc8] sm:$0xff] %vm3019, %v2878
    %3046 = vst.msk [vmem:[#allocation3 + $0xd0] sm:$0xff] %vm3019, %v2880
    %3047 = vst.msk [vmem:[#allocation3 + $0xd8] sm:$0xff] %vm3019, %v2882
    %3048 = vst.msk [vmem:[#allocation3 + $0xe0] sm:$0xff] %vm3019, %v2884
    %3049 = vst.msk [vmem:[#allocation3 + $0xe8] sm:$0xff] %vm3019, %v2886
    %3050 = vst.msk [vmem:[#allocation3 + $0xf0] sm:$0xff] %vm3019, %v2888
    %3051 = vst.msk [vmem:[#allocation3 + $0xf8] sm:$0xff] %vm3019, %v2890
    %3052 = vst.msk [vmem:[#allocation3 + $0x100] sm:$0xff] %vm3019, %v2892
    %3053 = vst.msk [vmem:[#allocation3 + $0x108] sm:$0xff] %vm3019, %v2894
    %3054 = vst.msk [vmem:[#allocation3 + $0x110] sm:$0xff] %vm3019, %v2896
    %3055 = vst.msk [vmem:[#allocation3 + $0x118] sm:$0xff] %vm3019, %v2898
    %3056 = vst.msk [vmem:[#allocation3 + $0x120] sm:$0xff] %vm3019, %v2900
    %3057 = vst.msk [vmem:[#allocation3 + $0x128] sm:$0xff] %vm3019, %v2902
    %3058 = vst.msk [vmem:[#allocation3 + $0x130] sm:$0xff] %vm3019, %v2904
    %3059 = vst.msk [vmem:[#allocation3 + $0x138] sm:$0xff] %vm3019, %v2906
    %3060 = vst.msk [vmem:[#allocation3 + $0x140] sm:$0xff] %vm3019, %v2908
    %3061 = vst.msk [vmem:[#allocation3 + $0x148] sm:$0xff] %vm3019, %v2910
    %3062 = vst.msk [vmem:[#allocation3 + $0x150] sm:$0xff] %vm3019, %v2912
    %3063 = vst.msk [vmem:[#allocation3 + $0x158] sm:$0xff] %vm3019, %v2914
    %3064 = vst.msk [vmem:[#allocation3 + $0x160] sm:$0xff] %vm3019, %v2916
    %3065 = vst.msk [vmem:[#allocation3 + $0x168] sm:$0xff] %vm3019, %v2918
    %3066 = vst.msk [vmem:[#allocation3 + $0x170] sm:$0xff] %vm3019, %v2920
    %3067 = vst.msk [vmem:[#allocation3 + $0x178] sm:$0xff] %vm3019, %v2922
    %3068 = vst.msk [vmem:[#allocation3 + $0x180] sm:$0xff] %vm3019, %v2924
    %3069 = vst.msk [vmem:[#allocation3 + $0x188] sm:$0xff] %vm3019, %v2926
    %3070 = vst.msk [vmem:[#allocation3 + $0x190] sm:$0xff] %vm3019, %v2928
    %3071 = vst.msk [vmem:[#allocation3 + $0x198] sm:$0xff] %vm3019, %v2930
    %3072 = vst.msk [vmem:[#allocation3 + $0x1a0] sm:$0xff] %vm3019, %v2932
    %3073 = vst.msk [vmem:[#allocation3 + $0x1a8] sm:$0xff] %vm3019, %v2934
    %3074 = vst.msk [vmem:[#allocation3 + $0x1b0] sm:$0xff] %vm3019, %v2936
    %3075 = vst.msk [vmem:[#allocation3 + $0x1b8] sm:$0xff] %vm3019, %v2938
    %3076 = vst.msk [vmem:[#allocation3 + $0x1c0] sm:$0xff] %vm3019, %v2940
    %3077 = vst.msk [vmem:[#allocation3 + $0x1c8] sm:$0xff] %vm3019, %v2942
    %3078 = vst.msk [vmem:[#allocation3 + $0x1d0] sm:$0xff] %vm3019, %v2944
    %3079 = vst.msk [vmem:[#allocation3 + $0x1d8] sm:$0xff] %vm3019, %v2946
    %3080 = vst.msk [vmem:[#allocation3 + $0x1e0] sm:$0xff] %vm3019, %v2948
    %3081 = vst.msk [vmem:[#allocation3 + $0x1e8] sm:$0xff] %vm3019, %v2950
    %3082 = vst.msk [vmem:[#allocation3 + $0x1f0] sm:$0xff] %vm3019, %v2952
    %3083 = vst.msk [vmem:[#allocation3 + $0x1f8] sm:$0xff] %vm3019, %v2954
    %v3084 = vld [vmem:[%s2313 + $0x2] sm:$0xff]
    %v3085 = vld [vmem:[%s2313 + $0xa] sm:$0xff]
    %v3086 = vld [vmem:[%s2313 + $0x1a] sm:$0xff]
    %v3087 = vld [vmem:[%s2313 + $0x22] sm:$0xff]
    %v3088 = vld [vmem:[%s2313 + $0x32] sm:$0xff]
    %v3089 = vld [vmem:[%s2313 + $0x3a] sm:$0xff]
    %v3090 = vld [vmem:[%s2313 + $0x4a] sm:$0xff]
    %v3091 = vld [vmem:[%s2313 + $0x52] sm:$0xff]
    %v3092 = vld [vmem:[%s2313 + $0x62] sm:$0xff]
    %v3093 = vld [vmem:[%s2313 + $0x6a] sm:$0xff]
    %v3094 = vld [vmem:[%s2313 + $0x7a] sm:$0xff]
    %v3095 = vld [vmem:[%s2313 + $0x82] sm:$0xff]
    %v3096 = vld [vmem:[%s2313 + $0x92] sm:$0xff]
    %v3097 = vld [vmem:[%s2313 + $0x9a] sm:$0xff]
    %v3098 = vld [vmem:[%s2313 + $0xaa] sm:$0xff]
    %v3099 = vld [vmem:[%s2313 + $0xb2] sm:$0xff]
    %v3100 = vld [vmem:[%s2313 + $0xc2] sm:$0xff]
    %v3101 = vld [vmem:[%s2313 + $0xca] sm:$0xff]
    %v3102 = vld [vmem:[%s2313 + $0xda] sm:$0xff]
    %v3103 = vld [vmem:[%s2313 + $0xe2] sm:$0xff]
    %v3104 = vld [vmem:[%s2313 + $0xf2] sm:$0xff]
    %v3105 = vld [vmem:[%s2313 + $0xfa] sm:$0xff]
    %v3106 = vld [vmem:[%s2313 + $0x10a] sm:$0xff]
    %v3107 = vld [vmem:[%s2313 + $0x112] sm:$0xff]
    %v3108 = vld [vmem:[%s2313 + $0x122] sm:$0xff]
    %v3109 = vld [vmem:[%s2313 + $0x12a] sm:$0xff]
    %v3110 = vld [vmem:[%s2313 + $0x13a] sm:$0xff]
    %v3111 = vld [vmem:[%s2313 + $0x142] sm:$0xff]
    %v3112 = vld [vmem:[%s2313 + $0x152] sm:$0xff]
    %v3113 = vld [vmem:[%s2313 + $0x15a] sm:$0xff]
    %v3114 = vld [vmem:[%s2313 + $0x16a] sm:$0xff]
    %v3115 = vld [vmem:[%s2313 + $0x172] sm:$0xff]
    %v3116 = vld [vmem:[%s2313 + $0x1b2] sm:$0xff]
    %v3117 = vld [vmem:[%s2313 + $0x1ba] sm:$0xff]
    %v3118 = vld [vmem:[%s2313 + $0x1ca] sm:$0xff]
    %v3119 = vld [vmem:[%s2313 + $0x1d2] sm:$0xff]
    %v3120 = vld [vmem:[%s2313 + $0x1e2] sm:$0xff]
    %v3121 = vld [vmem:[%s2313 + $0x1ea] sm:$0xff]
    %v3122 = vld [vmem:[%s2313 + $0x1fa] sm:$0xff]
    %v3123 = vld [vmem:[%s2313 + $0x202] sm:$0xff]
    %v3124 = vld [vmem:[%s2313 + $0x212] sm:$0xff]
    %v3125 = vld [vmem:[%s2313 + $0x21a] sm:$0xff]
    %v3126 = vld [vmem:[%s2313 + $0x22a] sm:$0xff]
    %v3127 = vld [vmem:[%s2313 + $0x232] sm:$0xff]
    %v3128 = vld [vmem:[%s2313 + $0x242] sm:$0xff]
    %v3129 = vld [vmem:[%s2313 + $0x24a] sm:$0xff]
    %v3130 = vld [vmem:[%s2313 + $0x25a] sm:$0xff]
    %v3131 = vld [vmem:[%s2313 + $0x262] sm:$0xff]
    %v3132 = vld [vmem:[%s2313 + $0x272] sm:$0xff]
    %v3133 = vld [vmem:[%s2313 + $0x27a] sm:$0xff]
    %v3134 = vld [vmem:[%s2313 + $0x28a] sm:$0xff]
    %v3135 = vld [vmem:[%s2313 + $0x292] sm:$0xff]
    %v3136 = vld [vmem:[%s2313 + $0x2a2] sm:$0xff]
    %v3137 = vld [vmem:[%s2313 + $0x2aa] sm:$0xff]
    %v3138 = vld [vmem:[%s2313 + $0x2ba] sm:$0xff]
    %v3139 = vld [vmem:[%s2313 + $0x2c2] sm:$0xff]
    %v3140 = vld [vmem:[%s2313 + $0x2d2] sm:$0xff]
    %v3141 = vld [vmem:[%s2313 + $0x2da] sm:$0xff]
    %v3142 = vld [vmem:[%s2313 + $0x2ea] sm:$0xff]
    %v3143 = vld [vmem:[%s2313 + $0x2f2] sm:$0xff]
    %v3144 = vld [vmem:[%s2313 + $0x302] sm:$0xff]
    %v3145 = vld [vmem:[%s2313 + $0x30a] sm:$0xff]
    %v3146 = vld [vmem:[%s2313 + $0x31a] sm:$0xff]
    %v3147 = vld [vmem:[%s2313 + $0x322] sm:$0xff]
    %3212 = vrot.lane.b32.xlu0 %v3084, 32
    %v3213 = vpop.permute.xlu0 %3212
    %3214 = vrot.lane.b32.xlu0 %v3085, 32
    %v3215 = vpop.permute.xlu0 %3214
    %3216 = vrot.lane.b32.xlu0 %v3086, 32
    %v3217 = vpop.permute.xlu0 %3216
    %3218 = vrot.lane.b32.xlu0 %v3087, 32
    %v3219 = vpop.permute.xlu0 %3218
    %3220 = vrot.lane.b32.xlu0 %v3088, 32
    %v3221 = vpop.permute.xlu0 %3220
    %3222 = vrot.lane.b32.xlu0 %v3089, 32
    %v3223 = vpop.permute.xlu0 %3222
    %3224 = vrot.lane.b32.xlu0 %v3090, 32
    %v3225 = vpop.permute.xlu0 %3224
    %3226 = vrot.lane.b32.xlu0 %v3091, 32
    %v3227 = vpop.permute.xlu0 %3226
    %3228 = vrot.lane.b32.xlu0 %v3092, 32
    %v3229 = vpop.permute.xlu0 %3228
    %3230 = vrot.lane.b32.xlu0 %v3093, 32
    %v3231 = vpop.permute.xlu0 %3230
    %3232 = vrot.lane.b32.xlu0 %v3094, 32
    %v3233 = vpop.permute.xlu0 %3232
    %3234 = vrot.lane.b32.xlu0 %v3095, 32
    %v3235 = vpop.permute.xlu0 %3234
    %3236 = vrot.lane.b32.xlu0 %v3096, 32
    %v3237 = vpop.permute.xlu0 %3236
    %3238 = vrot.lane.b32.xlu0 %v3097, 32
    %v3239 = vpop.permute.xlu0 %3238
    %3240 = vrot.lane.b32.xlu0 %v3098, 32
    %v3241 = vpop.permute.xlu0 %3240
    %3242 = vrot.lane.b32.xlu0 %v3099, 32
    %v3243 = vpop.permute.xlu0 %3242
    %3244 = vrot.lane.b32.xlu0 %v3100, 32
    %v3245 = vpop.permute.xlu0 %3244
    %3246 = vrot.lane.b32.xlu0 %v3101, 32
    %v3247 = vpop.permute.xlu0 %3246
    %3248 = vrot.lane.b32.xlu0 %v3102, 32
    %v3249 = vpop.permute.xlu0 %3248
    %3250 = vrot.lane.b32.xlu0 %v3103, 32
    %v3251 = vpop.permute.xlu0 %3250
    %3252 = vrot.lane.b32.xlu0 %v3104, 32
    %v3253 = vpop.permute.xlu0 %3252
    %3254 = vrot.lane.b32.xlu0 %v3105, 32
    %v3255 = vpop.permute.xlu0 %3254
    %3256 = vrot.lane.b32.xlu0 %v3106, 32
    %v3257 = vpop.permute.xlu0 %3256
    %3258 = vrot.lane.b32.xlu0 %v3107, 32
    %v3259 = vpop.permute.xlu0 %3258
    %3260 = vrot.lane.b32.xlu0 %v3108, 32
    %v3261 = vpop.permute.xlu0 %3260
    %3262 = vrot.lane.b32.xlu0 %v3109, 32
    %v3263 = vpop.permute.xlu0 %3262
    %3264 = vrot.lane.b32.xlu0 %v3110, 32
    %v3265 = vpop.permute.xlu0 %3264
    %3266 = vrot.lane.b32.xlu0 %v3111, 32
    %v3267 = vpop.permute.xlu0 %3266
    %3268 = vrot.lane.b32.xlu0 %v3112, 32
    %v3269 = vpop.permute.xlu0 %3268
    %3270 = vrot.lane.b32.xlu0 %v3113, 32
    %v3271 = vpop.permute.xlu0 %3270
    %3272 = vrot.lane.b32.xlu0 %v3114, 32
    %v3273 = vpop.permute.xlu0 %3272
    %3274 = vrot.lane.b32.xlu0 %v3115, 32
    %v3275 = vpop.permute.xlu0 %3274
    %3276 = vrot.lane.b32.xlu0 %v3116, 32
    %v3277 = vpop.permute.xlu0 %3276
    %3278 = vrot.lane.b32.xlu0 %v3117, 32
    %v3279 = vpop.permute.xlu0 %3278
    %3280 = vrot.lane.b32.xlu0 %v3118, 32
    %v3281 = vpop.permute.xlu0 %3280
    %3282 = vrot.lane.b32.xlu0 %v3119, 32
    %v3283 = vpop.permute.xlu0 %3282
    %3284 = vrot.lane.b32.xlu0 %v3120, 32
    %v3285 = vpop.permute.xlu0 %3284
    %3286 = vrot.lane.b32.xlu0 %v3121, 32
    %v3287 = vpop.permute.xlu0 %3286
    %3288 = vrot.lane.b32.xlu0 %v3122, 32
    %v3289 = vpop.permute.xlu0 %3288
    %3290 = vrot.lane.b32.xlu0 %v3123, 32
    %v3291 = vpop.permute.xlu0 %3290
    %3292 = vrot.lane.b32.xlu0 %v3124, 32
    %v3293 = vpop.permute.xlu0 %3292
    %3294 = vrot.lane.b32.xlu0 %v3125, 32
    %v3295 = vpop.permute.xlu0 %3294
    %3296 = vrot.lane.b32.xlu0 %v3126, 32
    %v3297 = vpop.permute.xlu0 %3296
    %3298 = vrot.lane.b32.xlu0 %v3127, 32
    %v3299 = vpop.permute.xlu0 %3298
    %3300 = vrot.lane.b32.xlu0 %v3128, 32
    %v3301 = vpop.permute.xlu0 %3300
    %3302 = vrot.lane.b32.xlu0 %v3129, 32
    %v3303 = vpop.permute.xlu0 %3302
    %3304 = vrot.lane.b32.xlu0 %v3130, 32
    %v3305 = vpop.permute.xlu0 %3304
    %3306 = vrot.lane.b32.xlu0 %v3131, 32
    %v3307 = vpop.permute.xlu0 %3306
    %3308 = vrot.lane.b32.xlu0 %v3132, 32
    %v3309 = vpop.permute.xlu0 %3308
    %3310 = vrot.lane.b32.xlu0 %v3133, 32
    %v3311 = vpop.permute.xlu0 %3310
    %3312 = vrot.lane.b32.xlu0 %v3134, 32
    %v3313 = vpop.permute.xlu0 %3312
    %3314 = vrot.lane.b32.xlu0 %v3135, 32
    %v3315 = vpop.permute.xlu0 %3314
    %3316 = vrot.lane.b32.xlu0 %v3136, 32
    %v3317 = vpop.permute.xlu0 %3316
    %3318 = vrot.lane.b32.xlu0 %v3137, 32
    %v3319 = vpop.permute.xlu0 %3318
    %3320 = vrot.lane.b32.xlu0 %v3138, 32
    %v3321 = vpop.permute.xlu0 %3320
    %3322 = vrot.lane.b32.xlu0 %v3139, 32
    %v3323 = vpop.permute.xlu0 %3322
    %3324 = vrot.lane.b32.xlu0 %v3140, 32
    %v3325 = vpop.permute.xlu0 %3324
    %3326 = vrot.lane.b32.xlu0 %v3141, 32
    %v3327 = vpop.permute.xlu0 %3326
    %3328 = vrot.lane.b32.xlu0 %v3142, 32
    %v3329 = vpop.permute.xlu0 %3328
    %3330 = vrot.lane.b32.xlu0 %v3143, 32
    %v3331 = vpop.permute.xlu0 %3330
    %3332 = vrot.lane.b32.xlu0 %v3144, 32
    %v3333 = vpop.permute.xlu0 %3332
    %3334 = vrot.lane.b32.xlu0 %v3145, 32
    %v3335 = vpop.permute.xlu0 %3334
    %3336 = vrot.lane.b32.xlu0 %v3146, 32
    %v3337 = vpop.permute.xlu0 %3336
    %3338 = vrot.lane.b32.xlu0 %v3147, 32
    %v3339 = vpop.permute.xlu0 %3338
    %vm3404 = vcmask 294144
    %3405 = vst.msk [vmem:[#allocation3] sm:$0xff] %vm3404, %v3213
    %3406 = vst.msk [vmem:[#allocation3 + $0x8] sm:$0xff] %vm3404, %v3215
    %3407 = vst.msk [vmem:[#allocation3 + $0x10] sm:$0xff] %vm3404, %v3217
    %3408 = vst.msk [vmem:[#allocation3 + $0x18] sm:$0xff] %vm3404, %v3219
    %3409 = vst.msk [vmem:[#allocation3 + $0x20] sm:$0xff] %vm3404, %v3221
    %3410 = vst.msk [vmem:[#allocation3 + $0x28] sm:$0xff] %vm3404, %v3223
    %3411 = vst.msk [vmem:[#allocation3 + $0x30] sm:$0xff] %vm3404, %v3225
    %3412 = vst.msk [vmem:[#allocation3 + $0x38] sm:$0xff] %vm3404, %v3227
    %3413 = vst.msk [vmem:[#allocation3 + $0x40] sm:$0xff] %vm3404, %v3229
    %3414 = vst.msk [vmem:[#allocation3 + $0x48] sm:$0xff] %vm3404, %v3231
    %3415 = vst.msk [vmem:[#allocation3 + $0x50] sm:$0xff] %vm3404, %v3233
    %3416 = vst.msk [vmem:[#allocation3 + $0x58] sm:$0xff] %vm3404, %v3235
    %3417 = vst.msk [vmem:[#allocation3 + $0x60] sm:$0xff] %vm3404, %v3237
    %3418 = vst.msk [vmem:[#allocation3 + $0x68] sm:$0xff] %vm3404, %v3239
    %3419 = vst.msk [vmem:[#allocation3 + $0x70] sm:$0xff] %vm3404, %v3241
    %3420 = vst.msk [vmem:[#allocation3 + $0x78] sm:$0xff] %vm3404, %v3243
    %3421 = vst.msk [vmem:[#allocation3 + $0x80] sm:$0xff] %vm3404, %v3245
    %3422 = vst.msk [vmem:[#allocation3 + $0x88] sm:$0xff] %vm3404, %v3247
    %3423 = vst.msk [vmem:[#allocation3 + $0x90] sm:$0xff] %vm3404, %v3249
    %3424 = vst.msk [vmem:[#allocation3 + $0x98] sm:$0xff] %vm3404, %v3251
    %3425 = vst.msk [vmem:[#allocation3 + $0xa0] sm:$0xff] %vm3404, %v3253
    %3426 = vst.msk [vmem:[#allocation3 + $0xa8] sm:$0xff] %vm3404, %v3255
    %3427 = vst.msk [vmem:[#allocation3 + $0xb0] sm:$0xff] %vm3404, %v3257
    %3428 = vst.msk [vmem:[#allocation3 + $0xb8] sm:$0xff] %vm3404, %v3259
    %3429 = vst.msk [vmem:[#allocation3 + $0xc0] sm:$0xff] %vm3404, %v3261
    %3430 = vst.msk [vmem:[#allocation3 + $0xc8] sm:$0xff] %vm3404, %v3263
    %3431 = vst.msk [vmem:[#allocation3 + $0xd0] sm:$0xff] %vm3404, %v3265
    %3432 = vst.msk [vmem:[#allocation3 + $0xd8] sm:$0xff] %vm3404, %v3267
    %3433 = vst.msk [vmem:[#allocation3 + $0xe0] sm:$0xff] %vm3404, %v3269
    %3434 = vst.msk [vmem:[#allocation3 + $0xe8] sm:$0xff] %vm3404, %v3271
    %3435 = vst.msk [vmem:[#allocation3 + $0xf0] sm:$0xff] %vm3404, %v3273
    %3436 = vst.msk [vmem:[#allocation3 + $0xf8] sm:$0xff] %vm3404, %v3275
    %3437 = vst.msk [vmem:[#allocation3 + $0x100] sm:$0xff] %vm3404, %v3277
    %3438 = vst.msk [vmem:[#allocation3 + $0x108] sm:$0xff] %vm3404, %v3279
    %3439 = vst.msk [vmem:[#allocation3 + $0x110] sm:$0xff] %vm3404, %v3281
    %3440 = vst.msk [vmem:[#allocation3 + $0x118] sm:$0xff] %vm3404, %v3283
    %3441 = vst.msk [vmem:[#allocation3 + $0x120] sm:$0xff] %vm3404, %v3285
    %3442 = vst.msk [vmem:[#allocation3 + $0x128] sm:$0xff] %vm3404, %v3287
    %3443 = vst.msk [vmem:[#allocation3 + $0x130] sm:$0xff] %vm3404, %v3289
    %3444 = vst.msk [vmem:[#allocation3 + $0x138] sm:$0xff] %vm3404, %v3291
    %3445 = vst.msk [vmem:[#allocation3 + $0x140] sm:$0xff] %vm3404, %v3293
    %3446 = vst.msk [vmem:[#allocation3 + $0x148] sm:$0xff] %vm3404, %v3295
    %3447 = vst.msk [vmem:[#allocation3 + $0x150] sm:$0xff] %vm3404, %v3297
    %3448 = vst.msk [vmem:[#allocation3 + $0x158] sm:$0xff] %vm3404, %v3299
    %3449 = vst.msk [vmem:[#allocation3 + $0x160] sm:$0xff] %vm3404, %v3301
    %3450 = vst.msk [vmem:[#allocation3 + $0x168] sm:$0xff] %vm3404, %v3303
    %3451 = vst.msk [vmem:[#allocation3 + $0x170] sm:$0xff] %vm3404, %v3305
    %3452 = vst.msk [vmem:[#allocation3 + $0x178] sm:$0xff] %vm3404, %v3307
    %3453 = vst.msk [vmem:[#allocation3 + $0x180] sm:$0xff] %vm3404, %v3309
    %3454 = vst.msk [vmem:[#allocation3 + $0x188] sm:$0xff] %vm3404, %v3311
    %3455 = vst.msk [vmem:[#allocation3 + $0x190] sm:$0xff] %vm3404, %v3313
    %3456 = vst.msk [vmem:[#allocation3 + $0x198] sm:$0xff] %vm3404, %v3315
    %3457 = vst.msk [vmem:[#allocation3 + $0x1a0] sm:$0xff] %vm3404, %v3317
    %3458 = vst.msk [vmem:[#allocation3 + $0x1a8] sm:$0xff] %vm3404, %v3319
    %3459 = vst.msk [vmem:[#allocation3 + $0x1b0] sm:$0xff] %vm3404, %v3321
    %3460 = vst.msk [vmem:[#allocation3 + $0x1b8] sm:$0xff] %vm3404, %v3323
    %3461 = vst.msk [vmem:[#allocation3 + $0x1c0] sm:$0xff] %vm3404, %v3325
    %3462 = vst.msk [vmem:[#allocation3 + $0x1c8] sm:$0xff] %vm3404, %v3327
    %3463 = vst.msk [vmem:[#allocation3 + $0x1d0] sm:$0xff] %vm3404, %v3329
    %3464 = vst.msk [vmem:[#allocation3 + $0x1d8] sm:$0xff] %vm3404, %v3331
    %3465 = vst.msk [vmem:[#allocation3 + $0x1e0] sm:$0xff] %vm3404, %v3333
    %3466 = vst.msk [vmem:[#allocation3 + $0x1e8] sm:$0xff] %vm3404, %v3335
    %3467 = vst.msk [vmem:[#allocation3 + $0x1f0] sm:$0xff] %vm3404, %v3337
    %3468 = vst.msk [vmem:[#allocation3 + $0x1f8] sm:$0xff] %vm3404, %v3339
    %v3469 = vld [vmem:[#allocation3] sm:$0xff]
    %v3470 = vld [vmem:[#allocation3 + $0x8] sm:$0xff]
    %v3471 = vld [vmem:[#allocation3 + $0x10] sm:$0xff]
    %v3472 = vld [vmem:[#allocation3 + $0x18] sm:$0xff]
    %v3473 = vld [vmem:[#allocation3 + $0x20] sm:$0xff]
    %v3474 = vld [vmem:[#allocation3 + $0x28] sm:$0xff]
    %v3475 = vld [vmem:[#allocation3 + $0x30] sm:$0xff]
    %v3476 = vld [vmem:[#allocation3 + $0x38] sm:$0xff]
    %v3477 = vld [vmem:[#allocation3 + $0x40] sm:$0xff]
    %v3478 = vld [vmem:[#allocation3 + $0x48] sm:$0xff]
    %v3479 = vld [vmem:[#allocation3 + $0x50] sm:$0xff]
    %v3480 = vld [vmem:[#allocation3 + $0x58] sm:$0xff]
    %v3481 = vld [vmem:[#allocation3 + $0x60] sm:$0xff]
    %v3482 = vld [vmem:[#allocation3 + $0x68] sm:$0xff]
    %v3483 = vld [vmem:[#allocation3 + $0x70] sm:$0xff]
    %v3484 = vld [vmem:[#allocation3 + $0x78] sm:$0xff]
    %v3485 = vld [vmem:[#allocation3 + $0x80] sm:$0xff]
    %v3486 = vld [vmem:[#allocation3 + $0x88] sm:$0xff]
    %v3487 = vld [vmem:[#allocation3 + $0x90] sm:$0xff]
    %v3488 = vld [vmem:[#allocation3 + $0x98] sm:$0xff]
    %v3489 = vld [vmem:[#allocation3 + $0xa0] sm:$0xff]
    %v3490 = vld [vmem:[#allocation3 + $0xa8] sm:$0xff]
    %v3491 = vld [vmem:[#allocation3 + $0xb0] sm:$0xff]
    %v3492 = vld [vmem:[#allocation3 + $0xb8] sm:$0xff]
    %v3493 = vld [vmem:[#allocation3 + $0xc0] sm:$0xff]
    %v3494 = vld [vmem:[#allocation3 + $0xc8] sm:$0xff]
    %v3495 = vld [vmem:[#allocation3 + $0xd0] sm:$0xff]
    %v3496 = vld [vmem:[#allocation3 + $0xd8] sm:$0xff]
    %v3497 = vld [vmem:[#allocation3 + $0xe0] sm:$0xff]
    %v3498 = vld [vmem:[#allocation3 + $0xe8] sm:$0xff]
    %v3499 = vld [vmem:[#allocation3 + $0xf0] sm:$0xff]
    %v3500 = vld [vmem:[#allocation3 + $0xf8] sm:$0xff]
    %v3501 = vld [vmem:[#allocation3 + $0x100] sm:$0xff]
    %v3502 = vld [vmem:[#allocation3 + $0x108] sm:$0xff]
    %v3503 = vld [vmem:[#allocation3 + $0x110] sm:$0xff]
    %v3504 = vld [vmem:[#allocation3 + $0x118] sm:$0xff]
    %v3505 = vld [vmem:[#allocation3 + $0x120] sm:$0xff]
    %v3506 = vld [vmem:[#allocation3 + $0x128] sm:$0xff]
    %v3507 = vld [vmem:[#allocation3 + $0x130] sm:$0xff]
    %v3508 = vld [vmem:[#allocation3 + $0x138] sm:$0xff]
    %v3509 = vld [vmem:[#allocation3 + $0x140] sm:$0xff]
    %v3510 = vld [vmem:[#allocation3 + $0x148] sm:$0xff]
    %v3511 = vld [vmem:[#allocation3 + $0x150] sm:$0xff]
    %v3512 = vld [vmem:[#allocation3 + $0x158] sm:$0xff]
    %v3513 = vld [vmem:[#allocation3 + $0x160] sm:$0xff]
    %v3514 = vld [vmem:[#allocation3 + $0x168] sm:$0xff]
    %v3515 = vld [vmem:[#allocation3 + $0x170] sm:$0xff]
    %v3516 = vld [vmem:[#allocation3 + $0x178] sm:$0xff]
    %v3517 = vld [vmem:[#allocation3 + $0x180] sm:$0xff]
    %v3518 = vld [vmem:[#allocation3 + $0x188] sm:$0xff]
    %v3519 = vld [vmem:[#allocation3 + $0x190] sm:$0xff]
    %v3520 = vld [vmem:[#allocation3 + $0x198] sm:$0xff]
    %v3521 = vld [vmem:[#allocation3 + $0x1a0] sm:$0xff]
    %v3522 = vld [vmem:[#allocation3 + $0x1a8] sm:$0xff]
    %v3523 = vld [vmem:[#allocation3 + $0x1b0] sm:$0xff]
    %v3524 = vld [vmem:[#allocation3 + $0x1b8] sm:$0xff]
    %v3525 = vld [vmem:[#allocation3 + $0x1c0] sm:$0xff]
    %v3526 = vld [vmem:[#allocation3 + $0x1c8] sm:$0xff]
    %v3527 = vld [vmem:[#allocation3 + $0x1d0] sm:$0xff]
    %v3528 = vld [vmem:[#allocation3 + $0x1d8] sm:$0xff]
    %v3529 = vld [vmem:[#allocation3 + $0x1e0] sm:$0xff]
    %v3530 = vld [vmem:[#allocation3 + $0x1e8] sm:$0xff]
    %v3531 = vld [vmem:[#allocation3 + $0x1f0] sm:$0xff]
    %v3532 = vld [vmem:[#allocation3 + $0x1f8] sm:$0xff]
    %v3533 = vld [vmem:[%s1] sm:$0xff]
    %v3534 = vld [vmem:[%s1 + $0x8] sm:$0xff]
    %v3535 = vld [vmem:[%s1 + $0x10] sm:$0xff]
    %v3536 = vld [vmem:[%s1 + $0x18] sm:$0xff]
    %v3537 = vld [vmem:[%s1 + $0x20] sm:$0xf]
    %v3538 = vld [vmem:[%s2] sm:$0x1]
    %v3540 = vlaneseq
    %v3541 = vshrl.u32 %v3540, 7
    %v3542 = vsub.s32 0, %v3541
    %v3543 = vrot.slane %v3538, %v3542
    %vm3545 = vcmask 293888
    %v3547 = vsel %vm3545, %v3469, 0
    %v3550 = vsel %vm3545, %v3470, 0
    %v3553 = vsel %vm3545, %v3471, 0
    %v3556 = vsel %vm3545, %v3472, 0
    %v3559 = vsel %vm3545, %v3473, 0
    %v3562 = vsel %vm3545, %v3474, 0
    %v3565 = vsel %vm3545, %v3475, 0
    %v3568 = vsel %vm3545, %v3476, 0
    %v3571 = vsel %vm3545, %v3477, 0
    %v3574 = vsel %vm3545, %v3478, 0
    %v3577 = vsel %vm3545, %v3479, 0
    %v3580 = vsel %vm3545, %v3480, 0
    %v3583 = vsel %vm3545, %v3481, 0
    %v3586 = vsel %vm3545, %v3482, 0
    %v3589 = vsel %vm3545, %v3483, 0
    %v3592 = vsel %vm3545, %v3484, 0
    %v3595 = vsel %vm3545, %v3485, 0
    %v3598 = vsel %vm3545, %v3486, 0
    %v3601 = vsel %vm3545, %v3487, 0
    %v3604 = vsel %vm3545, %v3488, 0
    %v3607 = vsel %vm3545, %v3489, 0
    %v3610 = vsel %vm3545, %v3490, 0
    %v3613 = vsel %vm3545, %v3491, 0
    %v3616 = vsel %vm3545, %v3492, 0
    %v3619 = vsel %vm3545, %v3493, 0
    %v3622 = vsel %vm3545, %v3494, 0
    %v3625 = vsel %vm3545, %v3495, 0
    %v3628 = vsel %vm3545, %v3496, 0
    %v3631 = vsel %vm3545, %v3497, 0
    %v3634 = vsel %vm3545, %v3498, 0
    %v3637 = vsel %vm3545, %v3499, 0
    %v3640 = vsel %vm3545, %v3500, 0
    %v3643 = vsel %vm3545, %v3501, 0
    %v3646 = vsel %vm3545, %v3502, 0
    %v3649 = vsel %vm3545, %v3503, 0
    %v3652 = vsel %vm3545, %v3504, 0
    %v3655 = vsel %vm3545, %v3505, 0
    %v3658 = vsel %vm3545, %v3506, 0
    %v3661 = vsel %vm3545, %v3507, 0
    %v3664 = vsel %vm3545, %v3508, 0
    %v3667 = vsel %vm3545, %v3509, 0
    %v3670 = vsel %vm3545, %v3510, 0
    %v3673 = vsel %vm3545, %v3511, 0
    %v3676 = vsel %vm3545, %v3512, 0
    %v3679 = vsel %vm3545, %v3513, 0
    %v3682 = vsel %vm3545, %v3514, 0
    %v3685 = vsel %vm3545, %v3515, 0
    %v3688 = vsel %vm3545, %v3516, 0
    %v3691 = vsel %vm3545, %v3517, 0
    %v3694 = vsel %vm3545, %v3518, 0
    %v3697 = vsel %vm3545, %v3519, 0
    %v3700 = vsel %vm3545, %v3520, 0
    %v3703 = vsel %vm3545, %v3521, 0
    %v3706 = vsel %vm3545, %v3522, 0
    %v3709 = vsel %vm3545, %v3523, 0
    %v3712 = vsel %vm3545, %v3524, 0
    %v3715 = vsel %vm3545, %v3525, 0
    %v3718 = vsel %vm3545, %v3526, 0
    %v3721 = vsel %vm3545, %v3527, 0
    %v3724 = vsel %vm3545, %v3528, 0
    %v3727 = vsel %vm3545, %v3529, 0
    %v3730 = vsel %vm3545, %v3530, 0
    %v3733 = vsel %vm3545, %v3531, 0
    %v3736 = vsel %vm3545, %v3532, 0
    %vm3738 = vcmask 1043456
    %v3740 = vsel %vm3738, %v3537, 0
    %3742 = vmatprep.subr.mxu0 0.0
    %3743 = vmatpush1.msra.mxu0 %v3533
    %3744 = vmatprep.subr.mxu0 0.0
    %3745 = vmatpush1.msra.mxu0 %v3534
    %3746 = vmatprep.subr.mxu0 0.0
    %3747 = vmatpush1.msra.mxu0 %v3535
    %3748 = vmatprep.subr.mxu0 0.0
    %3749 = vmatpush1.msra.mxu0 %v3536
    %3750 = vmatprep.subr.mxu0 0.0
    %3751 = vmatpush1.msra.mxu0 %v3740
    %3752 = vmatprep.subr.mxu0 0.0
    %3753 = vmatpush1.msra.mxu0 0.0
    %3754 = vmatprep.subr.mxu0 0.0
    %3755 = vmatpush1.msra.mxu0 0.0
    %3756 = vmatprep.subr.mxu0 0.0
    %3757 = vmatpush1.msra.mxu0 0.0
    %3758 = vmatprep.subr.mxu0 0.0
    %3759 = vmatpush1.msra.mxu0 0.0
    %3760 = vmatprep.subr.mxu0 0.0
    %3761 = vmatpush1.msra.mxu0 0.0
    %3762 = vmatprep.subr.mxu0 0.0
    %3763 = vmatpush1.msra.mxu0 0.0
    %3764 = vmatprep.subr.mxu0 0.0
    %3765 = vmatpush1.msra.mxu0 0.0
    %3766 = vmatprep.subr.mxu0 0.0
    %3767 = vmatpush1.msra.mxu0 0.0
    %3768 = vmatprep.subr.mxu0 0.0
    %3769 = vmatpush1.msra.mxu0 0.0
    %3770 = vmatprep.subr.mxu0 0.0
    %3771 = vmatpush1.msra.mxu0 0.0
    %3772 = vmatprep.subr.mxu0 0.0
    %3773 = vmatpush1.msra.mxu0 0.0
    %3774 = vmatprep.subr.mxu0 0.0
    %3775 = vmatpush1.msra.mxu0 0.0
    %3776 = vmatprep.subr.mxu0 0.0
    %3777 = vmatpush1.msra.mxu0 0.0
    %3778 = vmatprep.subr.mxu0 0.0
    %3779 = vmatpush1.msra.mxu0 0.0
    %3780 = vmatprep.subr.mxu0 0.0
    %3781 = vmatpush1.msra.mxu0 0.0
    %3782 = vmatprep.subr.mxu0 0.0
    %3783 = vmatpush1.msra.mxu0 0.0
    %3784 = vmatprep.subr.mxu0 0.0
    %3785 = vmatpush1.msra.mxu0 0.0
    %3786 = vmatprep.subr.mxu0 0.0
    %3787 = vmatpush1.msra.mxu0 0.0
    %3788 = vmatprep.subr.mxu0 0.0
    %3789 = vmatpush1.msra.mxu0 0.0
    %3790 = vmatprep.subr.mxu0 0.0
    %3791 = vmatpush1.msra.mxu0 0.0
    %3792 = vmatprep.subr.mxu0 0.0
    %3793 = vmatpush1.msra.mxu0 0.0
    %3794 = vmatprep.subr.mxu0 0.0
    %3795 = vmatpush1.msra.mxu0 0.0
    %3796 = vmatprep.subr.mxu0 0.0
    %3797 = vmatpush1.msra.mxu0 0.0
    %3798 = vmatprep.subr.mxu0 0.0
    %3799 = vmatpush1.msra.mxu0 0.0
    %3800 = vmatprep.subr.mxu0 0.0
    %3801 = vmatpush1.msra.mxu0 0.0
    %3802 = vmatprep.subr.mxu0 0.0
    %3803 = vmatpush1.msra.mxu0 0.0
    %3804 = vmatprep.subr.mxu0 0.0
    %3805 = vmatpush1.msra.mxu0 0.0
    %3806 = vmatprep.mubr.f32.mxu0 0.0
    %3807 = vmatmul.mubr.f32.gmra.mrb[0].mxu0 %v3547
    %v3808 = vpop.f32.mrb[0].mxu0
    %v3809 = vadd.f32 %v3543, %v3808
    %v3810 = vpop.f32.mrb[0].mxu0
    %3811 = vmatprep.mubr.f32.mxu0 0.0
    %3812 = vmatmul.mubr.f32.gmra.mrb[0].mxu0 %v3550
    %v3813 = vpop.f32.mrb[0].mxu0
    %v3814 = vadd.f32 %v3543, %v3813
    %v3815 = vpop.f32.mrb[0].mxu0
    %3816 = vmatprep.mubr.f32.mxu0 0.0
    %3817 = vmatmul.mubr.f32.gmra.mrb[0].mxu0 %v3553
    %v3818 = vpop.f32.mrb[0].mxu0
    %v3819 = vadd.f32 %v3543, %v3818
    %v3820 = vpop.f32.mrb[0].mxu0
    %3821 = vmatprep.mubr.f32.mxu0 0.0
    %3822 = vmatmul.mubr.f32.gmra.mrb[0].mxu0 %v3556
    %v3823 = vpop.f32.mrb[0].mxu0
    %v3824 = vadd.f32 %v3543, %v3823
    %v3825 = vpop.f32.mrb[0].mxu0
    %3826 = vmatprep.mubr.f32.mxu0 0.0
    %3827 = vmatmul.mubr.f32.gmra.mrb[0].mxu0 %v3559
    %v3828 = vpop.f32.mrb[0].mxu0
    %v3829 = vadd.f32 %v3543, %v3828
    %v3830 = vpop.f32.mrb[0].mxu0
    %3831 = vmatprep.mubr.f32.mxu0 0.0
    %3832 = vmatmul.mubr.f32.gmra.mrb[0].mxu0 %v3562
    %v3833 = vpop.f32.mrb[0].mxu0
    %v3834 = vadd.f32 %v3543, %v3833
    %v3835 = vpop.f32.mrb[0].mxu0
    %3836 = vmatprep.mubr.f32.mxu0 0.0
    %3837 = vmatmul.mubr.f32.gmra.mrb[0].mxu0 %v3565
    %v3838 = vpop.f32.mrb[0].mxu0
    %v3839 = vadd.f32 %v3543, %v3838
    %v3840 = vpop.f32.mrb[0].mxu0
    %3841 = vmatprep.mubr.f32.mxu0 0.0
    %3842 = vmatmul.mubr.f32.gmra.mrb[0].mxu0 %v3568
    %v3843 = vpop.f32.mrb[0].mxu0
    %v3844 = vadd.f32 %v3543, %v3843
    %v3845 = vpop.f32.mrb[0].mxu0
    %3846 = vmatprep.mubr.f32.mxu0 0.0
    %3847 = vmatmul.mubr.f32.gmra.mrb[0].mxu0 %v3571
    %v3848 = vpop.f32.mrb[0].mxu0
    %v3849 = vadd.f32 %v3543, %v3848
    %v3850 = vpop.f32.mrb[0].mxu0
    %3851 = vmatprep.mubr.f32.mxu0 0.0
    %3852 = vmatmul.mubr.f32.gmra.mrb[0].mxu0 %v3574
    %v3853 = vpop.f32.mrb[0].mxu0
    %v3854 = vadd.f32 %v3543, %v3853
    %v3855 = vpop.f32.mrb[0].mxu0
    %3856 = vmatprep.mubr.f32.mxu0 0.0
    %3857 = vmatmul.mubr.f32.gmra.mrb[0].mxu0 %v3577
    %v3858 = vpop.f32.mrb[0].mxu0
    %v3859 = vadd.f32 %v3543, %v3858
    %v3860 = vpop.f32.mrb[0].mxu0
    %3861 = vmatprep.mubr.f32.mxu0 0.0
    %3862 = vmatmul.mubr.f32.gmra.mrb[0].mxu0 %v3580
    %v3863 = vpop.f32.mrb[0].mxu0
    %v3864 = vadd.f32 %v3543, %v3863
    %v3865 = vpop.f32.mrb[0].mxu0
    %3866 = vmatprep.mubr.f32.mxu0 0.0
    %3867 = vmatmul.mubr.f32.gmra.mrb[0].mxu0 %v3583
    %v3868 = vpop.f32.mrb[0].mxu0
    %v3869 = vadd.f32 %v3543, %v3868
    %v3870 = vpop.f32.mrb[0].mxu0
    %3871 = vmatprep.mubr.f32.mxu0 0.0
    %3872 = vmatmul.mubr.f32.gmra.mrb[0].mxu0 %v3586
    %v3873 = vpop.f32.mrb[0].mxu0
    %v3874 = vadd.f32 %v3543, %v3873
    %v3875 = vpop.f32.mrb[0].mxu0
    %3876 = vmatprep.mubr.f32.mxu0 0.0
    %3877 = vmatmul.mubr.f32.gmra.mrb[0].mxu0 %v3589
    %v3878 = vpop.f32.mrb[0].mxu0
    %v3879 = vadd.f32 %v3543, %v3878
    %v3880 = vpop.f32.mrb[0].mxu0
    %3881 = vmatprep.mubr.f32.mxu0 0.0
    %3882 = vmatmul.mubr.f32.gmra.mrb[0].mxu0 %v3592
    %v3883 = vpop.f32.mrb[0].mxu0
    %v3884 = vadd.f32 %v3543, %v3883
    %v3885 = vpop.f32.mrb[0].mxu0
    %3886 = vmatprep.mubr.f32.mxu0 0.0
    %3887 = vmatmul.mubr.f32.gmra.mrb[0].mxu0 %v3595
    %v3888 = vpop.f32.mrb[0].mxu0
    %v3889 = vadd.f32 %v3543, %v3888
    %v3890 = vpop.f32.mrb[0].mxu0
    %3891 = vmatprep.mubr.f32.mxu0 0.0
    %3892 = vmatmul.mubr.f32.gmra.mrb[0].mxu0 %v3598
    %v3893 = vpop.f32.mrb[0].mxu0
    %v3894 = vadd.f32 %v3543, %v3893
    %v3895 = vpop.f32.mrb[0].mxu0
    %3896 = vmatprep.mubr.f32.mxu0 0.0
    %3897 = vmatmul.mubr.f32.gmra.mrb[0].mxu0 %v3601
    %v3898 = vpop.f32.mrb[0].mxu0
    %v3899 = vadd.f32 %v3543, %v3898
    %v3900 = vpop.f32.mrb[0].mxu0
    %3901 = vmatprep.mubr.f32.mxu0 0.0
    %3902 = vmatmul.mubr.f32.gmra.mrb[0].mxu0 %v3604
    %v3903 = vpop.f32.mrb[0].mxu0
    %v3904 = vadd.f32 %v3543, %v3903
    %v3905 = vpop.f32.mrb[0].mxu0
    %3906 = vmatprep.mubr.f32.mxu0 0.0
    %3907 = vmatmul.mubr.f32.gmra.mrb[0].mxu0 %v3607
    %v3908 = vpop.f32.mrb[0].mxu0
    %v3909 = vadd.f32 %v3543, %v3908
    %v3910 = vpop.f32.mrb[0].mxu0
    %3911 = vmatprep.mubr.f32.mxu0 0.0
    %3912 = vmatmul.mubr.f32.gmra.mrb[0].mxu0 %v3610
    %v3913 = vpop.f32.mrb[0].mxu0
    %v3914 = vadd.f32 %v3543, %v3913
    %v3915 = vpop.f32.mrb[0].mxu0
    %3916 = vmatprep.mubr.f32.mxu0 0.0
    %3917 = vmatmul.mubr.f32.gmra.mrb[0].mxu0 %v3613
    %v3918 = vpop.f32.mrb[0].mxu0
    %v3919 = vadd.f32 %v3543, %v3918
    %v3920 = vpop.f32.mrb[0].mxu0
    %3921 = vmatprep.mubr.f32.mxu0 0.0
    %3922 = vmatmul.mubr.f32.gmra.mrb[0].mxu0 %v3616
    %v3923 = vpop.f32.mrb[0].mxu0
    %v3924 = vadd.f32 %v3543, %v3923
    %v3925 = vpop.f32.mrb[0].mxu0
    %3926 = vmatprep.mubr.f32.mxu0 0.0
    %3927 = vmatmul.mubr.f32.gmra.mrb[0].mxu0 %v3619
    %v3928 = vpop.f32.mrb[0].mxu0
    %v3929 = vadd.f32 %v3543, %v3928
    %v3930 = vpop.f32.mrb[0].mxu0
    %3931 = vmatprep.mubr.f32.mxu0 0.0
    %3932 = vmatmul.mubr.f32.gmra.mrb[0].mxu0 %v3622
    %v3933 = vpop.f32.mrb[0].mxu0
    %v3934 = vadd.f32 %v3543, %v3933
    %v3935 = vpop.f32.mrb[0].mxu0
    %3936 = vmatprep.mubr.f32.mxu0 0.0
    %3937 = vmatmul.mubr.f32.gmra.mrb[0].mxu0 %v3625
    %v3938 = vpop.f32.mrb[0].mxu0
    %v3939 = vadd.f32 %v3543, %v3938
    %v3940 = vpop.f32.mrb[0].mxu0
    %3941 = vmatprep.mubr.f32.mxu0 0.0
    %3942 = vmatmul.mubr.f32.gmra.mrb[0].mxu0 %v3628
    %v3943 = vpop.f32.mrb[0].mxu0
    %v3944 = vadd.f32 %v3543, %v3943
    %v3945 = vpop.f32.mrb[0].mxu0
    %3946 = vmatprep.mubr.f32.mxu0 0.0
    %3947 = vmatmul.mubr.f32.gmra.mrb[0].mxu0 %v3631
    %v3948 = vpop.f32.mrb[0].mxu0
    %v3949 = vadd.f32 %v3543, %v3948
    %v3950 = vpop.f32.mrb[0].mxu0
    %3951 = vmatprep.mubr.f32.mxu0 0.0
    %3952 = vmatmul.mubr.f32.gmra.mrb[0].mxu0 %v3634
    %v3953 = vpop.f32.mrb[0].mxu0
    %v3954 = vadd.f32 %v3543, %v3953
    %v3955 = vpop.f32.mrb[0].mxu0
    %3956 = vmatprep.mubr.f32.mxu0 0.0
    %3957 = vmatmul.mubr.f32.gmra.mrb[0].mxu0 %v3637
    %v3958 = vpop.f32.mrb[0].mxu0
    %v3959 = vadd.f32 %v3543, %v3958
    %v3960 = vpop.f32.mrb[0].mxu0
    %3961 = vmatprep.mubr.f32.mxu0 0.0
    %3962 = vmatmul.mubr.f32.gmra.mrb[0].mxu0 %v3640
    %v3963 = vpop.f32.mrb[0].mxu0
    %v3964 = vadd.f32 %v3543, %v3963
    %v3965 = vpop.f32.mrb[0].mxu0
    %3966 = vmatprep.mubr.f32.mxu0 0.0
    %3967 = vmatmul.mubr.f32.gmra.mrb[0].mxu0 %v3643
    %v3968 = vpop.f32.mrb[0].mxu0
    %v3969 = vadd.f32 %v3543, %v3968
    %v3970 = vpop.f32.mrb[0].mxu0
    %3971 = vmatprep.mubr.f32.mxu0 0.0
    %3972 = vmatmul.mubr.f32.gmra.mrb[0].mxu0 %v3646
    %v3973 = vpop.f32.mrb[0].mxu0
    %v3974 = vadd.f32 %v3543, %v3973
    %v3975 = vpop.f32.mrb[0].mxu0
    %3976 = vmatprep.mubr.f32.mxu0 0.0
    %3977 = vmatmul.mubr.f32.gmra.mrb[0].mxu0 %v3649
    %v3978 = vpop.f32.mrb[0].mxu0
    %v3979 = vadd.f32 %v3543, %v3978
    %v3980 = vpop.f32.mrb[0].mxu0
    %3981 = vmatprep.mubr.f32.mxu0 0.0
    %3982 = vmatmul.mubr.f32.gmra.mrb[0].mxu0 %v3652
    %v3983 = vpop.f32.mrb[0].mxu0
    %v3984 = vadd.f32 %v3543, %v3983
    %v3985 = vpop.f32.mrb[0].mxu0
    %3986 = vmatprep.mubr.f32.mxu0 0.0
    %3987 = vmatmul.mubr.f32.gmra.mrb[0].mxu0 %v3655
    %v3988 = vpop.f32.mrb[0].mxu0
    %v3989 = vadd.f32 %v3543, %v3988
    %v3990 = vpop.f32.mrb[0].mxu0
    %3991 = vmatprep.mubr.f32.mxu0 0.0
    %3992 = vmatmul.mubr.f32.gmra.mrb[0].mxu0 %v3658
    %v3993 = vpop.f32.mrb[0].mxu0
    %v3994 = vadd.f32 %v3543, %v3993
    %v3995 = vpop.f32.mrb[0].mxu0
    %3996 = vmatprep.mubr.f32.mxu0 0.0
    %3997 = vmatmul.mubr.f32.gmra.mrb[0].mxu0 %v3661
    %v3998 = vpop.f32.mrb[0].mxu0
    %v3999 = vadd.f32 %v3543, %v3998
    %v4000 = vpop.f32.mrb[0].mxu0
    %4001 = vmatprep.mubr.f32.mxu0 0.0
    %4002 = vmatmul.mubr.f32.gmra.mrb[0].mxu0 %v3664
    %v4003 = vpop.f32.mrb[0].mxu0
    %v4004 = vadd.f32 %v3543, %v4003
    %v4005 = vpop.f32.mrb[0].mxu0
    %4006 = vmatprep.mubr.f32.mxu0 0.0
    %4007 = vmatmul.mubr.f32.gmra.mrb[0].mxu0 %v3667
    %v4008 = vpop.f32.mrb[0].mxu0
    %v4009 = vadd.f32 %v3543, %v4008
    %v4010 = vpop.f32.mrb[0].mxu0
    %4011 = vmatprep.mubr.f32.mxu0 0.0
    %4012 = vmatmul.mubr.f32.gmra.mrb[0].mxu0 %v3670
    %v4013 = vpop.f32.mrb[0].mxu0
    %v4014 = vadd.f32 %v3543, %v4013
    %v4015 = vpop.f32.mrb[0].mxu0
    %4016 = vmatprep.mubr.f32.mxu0 0.0
    %4017 = vmatmul.mubr.f32.gmra.mrb[0].mxu0 %v3673
    %v4018 = vpop.f32.mrb[0].mxu0
    %v4019 = vadd.f32 %v3543, %v4018
    %v4020 = vpop.f32.mrb[0].mxu0
    %4021 = vmatprep.mubr.f32.mxu0 0.0
    %4022 = vmatmul.mubr.f32.gmra.mrb[0].mxu0 %v3676
    %v4023 = vpop.f32.mrb[0].mxu0
    %v4024 = vadd.f32 %v3543, %v4023
    %v4025 = vpop.f32.mrb[0].mxu0
    %4026 = vmatprep.mubr.f32.mxu0 0.0
    %4027 = vmatmul.mubr.f32.gmra.mrb[0].mxu0 %v3679
    %v4028 = vpop.f32.mrb[0].mxu0
    %v4029 = vadd.f32 %v3543, %v4028
    %v4030 = vpop.f32.mrb[0].mxu0
    %4031 = vmatprep.mubr.f32.mxu0 0.0
    %4032 = vmatmul.mubr.f32.gmra.mrb[0].mxu0 %v3682
    %v4033 = vpop.f32.mrb[0].mxu0
    %v4034 = vadd.f32 %v3543, %v4033
    %v4035 = vpop.f32.mrb[0].mxu0
    %4036 = vmatprep.mubr.f32.mxu0 0.0
    %4037 = vmatmul.mubr.f32.gmra.mrb[0].mxu0 %v3685
    %v4038 = vpop.f32.mrb[0].mxu0
    %v4039 = vadd.f32 %v3543, %v4038
    %v4040 = vpop.f32.mrb[0].mxu0
    %4041 = vmatprep.mubr.f32.mxu0 0.0
    %4042 = vmatmul.mubr.f32.gmra.mrb[0].mxu0 %v3688
    %v4043 = vpop.f32.mrb[0].mxu0
    %v4044 = vadd.f32 %v3543, %v4043
    %v4045 = vpop.f32.mrb[0].mxu0
    %4046 = vmatprep.mubr.f32.mxu0 0.0
    %4047 = vmatmul.mubr.f32.gmra.mrb[0].mxu0 %v3691
    %v4048 = vpop.f32.mrb[0].mxu0
    %v4049 = vadd.f32 %v3543, %v4048
    %v4050 = vpop.f32.mrb[0].mxu0
    %4051 = vmatprep.mubr.f32.mxu0 0.0
    %4052 = vmatmul.mubr.f32.gmra.mrb[0].mxu0 %v3694
    %v4053 = vpop.f32.mrb[0].mxu0
    %v4054 = vadd.f32 %v3543, %v4053
    %v4055 = vpop.f32.mrb[0].mxu0
    %4056 = vmatprep.mubr.f32.mxu0 0.0
    %4057 = vmatmul.mubr.f32.gmra.mrb[0].mxu0 %v3697
    %v4058 = vpop.f32.mrb[0].mxu0
    %v4059 = vadd.f32 %v3543, %v4058
    %v4060 = vpop.f32.mrb[0].mxu0
    %4061 = vmatprep.mubr.f32.mxu0 0.0
    %4062 = vmatmul.mubr.f32.gmra.mrb[0].mxu0 %v3700
    %v4063 = vpop.f32.mrb[0].mxu0
    %v4064 = vadd.f32 %v3543, %v4063
    %v4065 = vpop.f32.mrb[0].mxu0
    %4066 = vmatprep.mubr.f32.mxu0 0.0
    %4067 = vmatmul.mubr.f32.gmra.mrb[0].mxu0 %v3703
    %v4068 = vpop.f32.mrb[0].mxu0
    %v4069 = vadd.f32 %v3543, %v4068
    %v4070 = vpop.f32.mrb[0].mxu0
    %4071 = vmatprep.mubr.f32.mxu0 0.0
    %4072 = vmatmul.mubr.f32.gmra.mrb[0].mxu0 %v3706
    %v4073 = vpop.f32.mrb[0].mxu0
    %v4074 = vadd.f32 %v3543, %v4073
    %v4075 = vpop.f32.mrb[0].mxu0
    %4076 = vmatprep.mubr.f32.mxu0 0.0
    %4077 = vmatmul.mubr.f32.gmra.mrb[0].mxu0 %v3709
    %v4078 = vpop.f32.mrb[0].mxu0
    %v4079 = vadd.f32 %v3543, %v4078
    %v4080 = vpop.f32.mrb[0].mxu0
    %4081 = vmatprep.mubr.f32.mxu0 0.0
    %4082 = vmatmul.mubr.f32.gmra.mrb[0].mxu0 %v3712
    %v4083 = vpop.f32.mrb[0].mxu0
    %v4084 = vadd.f32 %v3543, %v4083
    %v4085 = vpop.f32.mrb[0].mxu0
    %4086 = vmatprep.mubr.f32.mxu0 0.0
    %4087 = vmatmul.mubr.f32.gmra.mrb[0].mxu0 %v3715
    %v4088 = vpop.f32.mrb[0].mxu0
    %v4089 = vadd.f32 %v3543, %v4088
    %v4090 = vpop.f32.mrb[0].mxu0
    %4091 = vmatprep.mubr.f32.mxu0 0.0
    %4092 = vmatmul.mubr.f32.gmra.mrb[0].mxu0 %v3718
    %v4093 = vpop.f32.mrb[0].mxu0
    %v4094 = vadd.f32 %v3543, %v4093
    %v4095 = vpop.f32.mrb[0].mxu0
    %4096 = vmatprep.mubr.f32.mxu0 0.0
    %4097 = vmatmul.mubr.f32.gmra.mrb[0].mxu0 %v3721
    %v4098 = vpop.f32.mrb[0].mxu0
    %v4099 = vadd.f32 %v3543, %v4098
    %v4100 = vpop.f32.mrb[0].mxu0
    %4101 = vmatprep.mubr.f32.mxu0 0.0
    %4102 = vmatmul.mubr.f32.gmra.mrb[0].mxu0 %v3724
    %v4103 = vpop.f32.mrb[0].mxu0
    %v4104 = vadd.f32 %v3543, %v4103
    %v4105 = vpop.f32.mrb[0].mxu0
    %4106 = vmatprep.mubr.f32.mxu0 0.0
    %4107 = vmatmul.mubr.f32.gmra.mrb[0].mxu0 %v3727
    %v4108 = vpop.f32.mrb[0].mxu0
    %v4109 = vadd.f32 %v3543, %v4108
    %v4110 = vpop.f32.mrb[0].mxu0
    %4111 = vmatprep.mubr.f32.mxu0 0.0
    %4112 = vmatmul.mubr.f32.gmra.mrb[0].mxu0 %v3730
    %v4113 = vpop.f32.mrb[0].mxu0
    %v4114 = vadd.f32 %v3543, %v4113
    %v4115 = vpop.f32.mrb[0].mxu0
    %4116 = vmatprep.mubr.f32.mxu0 0.0
    %4117 = vmatmul.mubr.f32.gmra.mrb[0].mxu0 %v3733
    %v4118 = vpop.f32.mrb[0].mxu0
    %v4119 = vadd.f32 %v3543, %v4118
    %v4120 = vpop.f32.mrb[0].mxu0
    %4121 = vmatprep.mubr.f32.mxu0 0.0
    %4122 = vmatmul.mubr.f32.gmra.mrb[0].mxu0 %v3736
    %v4123 = vpop.f32.mrb[0].mxu0
    %v4124 = vadd.f32 %v3543, %v4123
    %v4125 = vpop.f32.mrb[0].mxu0
    %4126 = vdwg.mxu0
    %v4127 = vmax.f32 %v3809, 0.0
    %v4128 = vmax.f32 %v3814, 0.0
    %v4129 = vmax.f32 %v3819, 0.0
    %v4130 = vmax.f32 %v3824, 0.0
    %v4131 = vmax.f32 %v3829, 0.0
    %v4132 = vmax.f32 %v3834, 0.0
    %v4133 = vmax.f32 %v3839, 0.0
    %v4134 = vmax.f32 %v3844, 0.0
    %v4135 = vmax.f32 %v3849, 0.0
    %v4136 = vmax.f32 %v3854, 0.0
    %v4137 = vmax.f32 %v3859, 0.0
    %v4138 = vmax.f32 %v3864, 0.0
    %v4139 = vmax.f32 %v3869, 0.0
    %v4140 = vmax.f32 %v3874, 0.0
    %v4141 = vmax.f32 %v3879, 0.0
    %v4142 = vmax.f32 %v3884, 0.0
    %v4143 = vmax.f32 %v3889, 0.0
    %v4144 = vmax.f32 %v3894, 0.0
    %v4145 = vmax.f32 %v3899, 0.0
    %v4146 = vmax.f32 %v3904, 0.0
    %v4147 = vmax.f32 %v3909, 0.0
    %v4148 = vmax.f32 %v3914, 0.0
    %v4149 = vmax.f32 %v3919, 0.0
    %v4150 = vmax.f32 %v3924, 0.0
    %v4151 = vmax.f32 %v3929, 0.0
    %v4152 = vmax.f32 %v3934, 0.0
    %v4153 = vmax.f32 %v3939, 0.0
    %v4154 = vmax.f32 %v3944, 0.0
    %v4155 = vmax.f32 %v3949, 0.0
    %v4156 = vmax.f32 %v3954, 0.0
    %v4157 = vmax.f32 %v3959, 0.0
    %v4158 = vmax.f32 %v3964, 0.0
    %v4159 = vmax.f32 %v3969, 0.0
    %v4160 = vmax.f32 %v3974, 0.0
    %v4161 = vmax.f32 %v3979, 0.0
    %v4162 = vmax.f32 %v3984, 0.0
    %v4163 = vmax.f32 %v3989, 0.0
    %v4164 = vmax.f32 %v3994, 0.0
    %v4165 = vmax.f32 %v3999, 0.0
    %v4166 = vmax.f32 %v4004, 0.0
    %v4167 = vmax.f32 %v4009, 0.0
    %v4168 = vmax.f32 %v4014, 0.0
    %v4169 = vmax.f32 %v4019, 0.0
    %v4170 = vmax.f32 %v4024, 0.0
    %v4171 = vmax.f32 %v4029, 0.0
    %v4172 = vmax.f32 %v4034, 0.0
    %v4173 = vmax.f32 %v4039, 0.0
    %v4174 = vmax.f32 %v4044, 0.0
    %v4175 = vmax.f32 %v4049, 0.0
    %v4176 = vmax.f32 %v4054, 0.0
    %v4177 = vmax.f32 %v4059, 0.0
    %v4178 = vmax.f32 %v4064, 0.0
    %v4179 = vmax.f32 %v4069, 0.0
    %v4180 = vmax.f32 %v4074, 0.0
    %v4181 = vmax.f32 %v4079, 0.0
    %v4182 = vmax.f32 %v4084, 0.0
    %v4183 = vmax.f32 %v4089, 0.0
    %v4184 = vmax.f32 %v4094, 0.0
    %v4185 = vmax.f32 %v4099, 0.0
    %v4186 = vmax.f32 %v4104, 0.0
    %v4187 = vmax.f32 %v4109, 0.0
    %v4188 = vmax.f32 %v4114, 0.0
    %v4189 = vmax.f32 %v4119, 0.0
    %v4190 = vmax.f32 %v4124, 0.0
    %vm4191 = vcmask 64512
    %v4192 = vsel %vm4191, %v4127, -inf
    %v4193 = vsel %vm4191, %v4129, -inf
    %v4194 = vmax.f32 %v4192, %v4193
    %v4195 = vsel %vm4191, %v4128, -inf
    %v4196 = vsel %vm4191, %v4130, -inf
    %v4197 = vmax.f32 %v4195, %v4196
    %v4198 = vsel %vm4191, %v4131, -inf
    %v4199 = vsel %vm4191, %v4133, -inf
    %v4200 = vmax.f32 %v4198, %v4199
    %v4201 = vsel %vm4191, %v4132, -inf
    %v4202 = vsel %vm4191, %v4134, -inf
    %v4203 = vmax.f32 %v4201, %v4202
    %v4204 = vsel %vm4191, %v4135, -inf
    %v4205 = vsel %vm4191, %v4137, -inf
    %v4206 = vmax.f32 %v4204, %v4205
    %v4207 = vsel %vm4191, %v4136, -inf
    %v4208 = vsel %vm4191, %v4138, -inf
    %v4209 = vmax.f32 %v4207, %v4208
    %v4210 = vsel %vm4191, %v4139, -inf
    %v4211 = vsel %vm4191, %v4141, -inf
    %v4212 = vmax.f32 %v4210, %v4211
    %v4213 = vsel %vm4191, %v4140, -inf
    %v4214 = vsel %vm4191, %v4142, -inf
    %v4215 = vmax.f32 %v4213, %v4214
    %v4216 = vsel %vm4191, %v4143, -inf
    %v4217 = vsel %vm4191, %v4145, -inf
    %v4218 = vmax.f32 %v4216, %v4217
    %v4219 = vsel %vm4191, %v4144, -inf
    %v4220 = vsel %vm4191, %v4146, -inf
    %v4221 = vmax.f32 %v4219, %v4220
    %v4222 = vsel %vm4191, %v4147, -inf
    %v4223 = vsel %vm4191, %v4149, -inf
    %v4224 = vmax.f32 %v4222, %v4223
    %v4225 = vsel %vm4191, %v4148, -inf
    %v4226 = vsel %vm4191, %v4150, -inf
    %v4227 = vmax.f32 %v4225, %v4226
    %v4228 = vsel %vm4191, %v4151, -inf
    %v4229 = vsel %vm4191, %v4153, -inf
    %v4230 = vmax.f32 %v4228, %v4229
    %v4231 = vsel %vm4191, %v4152, -inf
    %v4232 = vsel %vm4191, %v4154, -inf
    %v4233 = vmax.f32 %v4231, %v4232
    %v4234 = vsel %vm4191, %v4155, -inf
    %v4235 = vsel %vm4191, %v4157, -inf
    %v4236 = vmax.f32 %v4234, %v4235
    %v4237 = vsel %vm4191, %v4156, -inf
    %v4238 = vsel %vm4191, %v4158, -inf
    %v4239 = vmax.f32 %v4237, %v4238
    %v4240 = vsel %vm4191, %v4159, -inf
    %v4241 = vsel %vm4191, %v4161, -inf
    %v4242 = vmax.f32 %v4240, %v4241
    %v4243 = vsel %vm4191, %v4160, -inf
    %v4244 = vsel %vm4191, %v4162, -inf
    %v4245 = vmax.f32 %v4243, %v4244
    %v4246 = vsel %vm4191, %v4163, -inf
    %v4247 = vsel %vm4191, %v4165, -inf
    %v4248 = vmax.f32 %v4246, %v4247
    %v4249 = vsel %vm4191, %v4164, -inf
    %v4250 = vsel %vm4191, %v4166, -inf
    %v4251 = vmax.f32 %v4249, %v4250
    %v4252 = vsel %vm4191, %v4167, -inf
    %v4253 = vsel %vm4191, %v4169, -inf
    %v4254 = vmax.f32 %v4252, %v4253
    %v4255 = vsel %vm4191, %v4168, -inf
    %v4256 = vsel %vm4191, %v4170, -inf
    %v4257 = vmax.f32 %v4255, %v4256
    %v4258 = vsel %vm4191, %v4171, -inf
    %v4259 = vsel %vm4191, %v4173, -inf
    %v4260 = vmax.f32 %v4258, %v4259
    %v4261 = vsel %vm4191, %v4172, -inf
    %v4262 = vsel %vm4191, %v4174, -inf
    %v4263 = vmax.f32 %v4261, %v4262
    %v4264 = vsel %vm4191, %v4175, -inf
    %v4265 = vsel %vm4191, %v4177, -inf
    %v4266 = vmax.f32 %v4264, %v4265
    %v4267 = vsel %vm4191, %v4176, -inf
    %v4268 = vsel %vm4191, %v4178, -inf
    %v4269 = vmax.f32 %v4267, %v4268
    %v4270 = vsel %vm4191, %v4179, -inf
    %v4271 = vsel %vm4191, %v4181, -inf
    %v4272 = vmax.f32 %v4270, %v4271
    %v4273 = vsel %vm4191, %v4180, -inf
    %v4274 = vsel %vm4191, %v4182, -inf
    %v4275 = vmax.f32 %v4273, %v4274
    %v4276 = vsel %vm4191, %v4183, -inf
    %v4277 = vsel %vm4191, %v4185, -inf
    %v4278 = vmax.f32 %v4276, %v4277
    %v4279 = vsel %vm4191, %v4184, -inf
    %v4280 = vsel %vm4191, %v4186, -inf
    %v4281 = vmax.f32 %v4279, %v4280
    %v4282 = vsel %vm4191, %v4187, -inf
    %v4283 = vsel %vm4191, %v4189, -inf
    %v4284 = vmax.f32 %v4282, %v4283
    %v4285 = vsel %vm4191, %v4188, -inf
    %v4286 = vsel %vm4191, %v4190, -inf
    %v4287 = vmax.f32 %v4285, %v4286
    %v4320 = vcombine.high %v4194, %v4194
    %v4322 = vunpack.c.l.s4 1983009808
    %v4323 = vunpack.c.0.s8 %v4322
    %v4324 = vlaneseq
    %v4325 = vshrl.u32 %v4324, 7
    %v4326 = vsub.s32 %v4323, %v4325
    %v4327 = vrot.slane %v4194, %v4326
    %v4329 = vunpack.c.l.s4 1983009808
    %v4330 = vunpack.c.0.s8 %v4329
    %v4331 = vlaneseq
    %v4332 = vshrl.u32 %v4331, 7
    %v4333 = vsub.s32 %v4330, %v4332
    %v4334 = vrot.slane %v4320, %v4333
    %v4335 = vcombine.high %v4327, %v4327
    %v4336 = vcombine.high %v4334, %v4334
    %v4337 = vcombine.high %v4197, %v4197
    %v4339 = vunpack.c.l.s4 1983009808
    %v4340 = vunpack.c.0.s8 %v4339
    %v4341 = vlaneseq
    %v4342 = vshrl.u32 %v4341, 7
    %v4343 = vsub.s32 %v4340, %v4342
    %v4344 = vrot.slane %v4197, %v4343
    %v4346 = vunpack.c.l.s4 1983009808
    %v4347 = vunpack.c.0.s8 %v4346
    %v4348 = vlaneseq
    %v4349 = vshrl.u32 %v4348, 7
    %v4350 = vsub.s32 %v4347, %v4349
    %v4351 = vrot.slane %v4337, %v4350
    %v4352 = vcombine.high %v4344, %v4344
    %v4353 = vcombine.high %v4351, %v4351
    %v4354 = vcombine.high %v4200, %v4200
    %v4356 = vunpack.c.l.s4 1983009808
    %v4357 = vunpack.c.0.s8 %v4356
    %v4358 = vlaneseq
    %v4359 = vshrl.u32 %v4358, 7
    %v4360 = vsub.s32 %v4357, %v4359
    %v4361 = vrot.slane %v4200, %v4360
    %v4363 = vunpack.c.l.s4 1983009808
    %v4364 = vunpack.c.0.s8 %v4363
    %v4365 = vlaneseq
    %v4366 = vshrl.u32 %v4365, 7
    %v4367 = vsub.s32 %v4364, %v4366
    %v4368 = vrot.slane %v4354, %v4367
    %v4369 = vcombine.high %v4361, %v4361
    %v4370 = vcombine.high %v4368, %v4368
    %v4371 = vcombine.high %v4203, %v4203
    %v4373 = vunpack.c.l.s4 1983009808
    %v4374 = vunpack.c.0.s8 %v4373
    %v4375 = vlaneseq
    %v4376 = vshrl.u32 %v4375, 7
    %v4377 = vsub.s32 %v4374, %v4376
    %v4378 = vrot.slane %v4203, %v4377
    %v4380 = vunpack.c.l.s4 1983009808
    %v4381 = vunpack.c.0.s8 %v4380
    %v4382 = vlaneseq
    %v4383 = vshrl.u32 %v4382, 7
    %v4384 = vsub.s32 %v4381, %v4383
    %v4385 = vrot.slane %v4371, %v4384
    %v4386 = vcombine.high %v4378, %v4378
    %v4387 = vcombine.high %v4385, %v4385
    %v4388 = vcombine.high %v4206, %v4206
    %v4390 = vunpack.c.l.s4 1983009808
    %v4391 = vunpack.c.0.s8 %v4390
    %v4392 = vlaneseq
    %v4393 = vshrl.u32 %v4392, 7
    %v4394 = vsub.s32 %v4391, %v4393
    %v4395 = vrot.slane %v4206, %v4394
    %v4397 = vunpack.c.l.s4 1983009808
    %v4398 = vunpack.c.0.s8 %v4397
    %v4399 = vlaneseq
    %v4400 = vshrl.u32 %v4399, 7
    %v4401 = vsub.s32 %v4398, %v4400
    %v4402 = vrot.slane %v4388, %v4401
    %v4403 = vcombine.high %v4395, %v4395
    %v4404 = vcombine.high %v4402, %v4402
    %v4405 = vcombine.high %v4209, %v4209
    %v4407 = vunpack.c.l.s4 1983009808
    %v4408 = vunpack.c.0.s8 %v4407
    %v4409 = vlaneseq
    %v4410 = vshrl.u32 %v4409, 7
    %v4411 = vsub.s32 %v4408, %v4410
    %v4412 = vrot.slane %v4209, %v4411
    %v4414 = vunpack.c.l.s4 1983009808
    %v4415 = vunpack.c.0.s8 %v4414
    %v4416 = vlaneseq
    %v4417 = vshrl.u32 %v4416, 7
    %v4418 = vsub.s32 %v4415, %v4417
    %v4419 = vrot.slane %v4405, %v4418
    %v4420 = vcombine.high %v4412, %v4412
    %v4421 = vcombine.high %v4419, %v4419
    %v4422 = vcombine.high %v4212, %v4212
    %v4424 = vunpack.c.l.s4 1983009808
    %v4425 = vunpack.c.0.s8 %v4424
    %v4426 = vlaneseq
    %v4427 = vshrl.u32 %v4426, 7
    %v4428 = vsub.s32 %v4425, %v4427
    %v4429 = vrot.slane %v4212, %v4428
    %v4431 = vunpack.c.l.s4 1983009808
    %v4432 = vunpack.c.0.s8 %v4431
    %v4433 = vlaneseq
    %v4434 = vshrl.u32 %v4433, 7
    %v4435 = vsub.s32 %v4432, %v4434
    %v4436 = vrot.slane %v4422, %v4435
    %v4437 = vcombine.high %v4429, %v4429
    %v4438 = vcombine.high %v4436, %v4436
    %v4439 = vcombine.high %v4215, %v4215
    %v4441 = vunpack.c.l.s4 1983009808
    %v4442 = vunpack.c.0.s8 %v4441
    %v4443 = vlaneseq
    %v4444 = vshrl.u32 %v4443, 7
    %v4445 = vsub.s32 %v4442, %v4444
    %v4446 = vrot.slane %v4215, %v4445
    %v4448 = vunpack.c.l.s4 1983009808
    %v4449 = vunpack.c.0.s8 %v4448
    %v4450 = vlaneseq
    %v4451 = vshrl.u32 %v4450, 7
    %v4452 = vsub.s32 %v4449, %v4451
    %v4453 = vrot.slane %v4439, %v4452
    %v4454 = vcombine.high %v4446, %v4446
    %v4455 = vcombine.high %v4453, %v4453
    %v4456 = vcombine.high %v4218, %v4218
    %v4458 = vunpack.c.l.s4 1983009808
    %v4459 = vunpack.c.0.s8 %v4458
    %v4460 = vlaneseq
    %v4461 = vshrl.u32 %v4460, 7
    %v4462 = vsub.s32 %v4459, %v4461
    %v4463 = vrot.slane %v4218, %v4462
    %v4465 = vunpack.c.l.s4 1983009808
    %v4466 = vunpack.c.0.s8 %v4465
    %v4467 = vlaneseq
    %v4468 = vshrl.u32 %v4467, 7
    %v4469 = vsub.s32 %v4466, %v4468
    %v4470 = vrot.slane %v4456, %v4469
    %v4471 = vcombine.high %v4463, %v4463
    %v4472 = vcombine.high %v4470, %v4470
    %v4473 = vcombine.high %v4221, %v4221
    %v4475 = vunpack.c.l.s4 1983009808
    %v4476 = vunpack.c.0.s8 %v4475
    %v4477 = vlaneseq
    %v4478 = vshrl.u32 %v4477, 7
    %v4479 = vsub.s32 %v4476, %v4478
    %v4480 = vrot.slane %v4221, %v4479
    %v4482 = vunpack.c.l.s4 1983009808
    %v4483 = vunpack.c.0.s8 %v4482
    %v4484 = vlaneseq
    %v4485 = vshrl.u32 %v4484, 7
    %v4486 = vsub.s32 %v4483, %v4485
    %v4487 = vrot.slane %v4473, %v4486
    %v4488 = vcombine.high %v4480, %v4480
    %v4489 = vcombine.high %v4487, %v4487
    %v4490 = vcombine.high %v4224, %v4224
    %v4492 = vunpack.c.l.s4 1983009808
    %v4493 = vunpack.c.0.s8 %v4492
    %v4494 = vlaneseq
    %v4495 = vshrl.u32 %v4494, 7
    %v4496 = vsub.s32 %v4493, %v4495
    %v4497 = vrot.slane %v4224, %v4496
    %v4499 = vunpack.c.l.s4 1983009808
    %v4500 = vunpack.c.0.s8 %v4499
    %v4501 = vlaneseq
    %v4502 = vshrl.u32 %v4501, 7
    %v4503 = vsub.s32 %v4500, %v4502
    %v4504 = vrot.slane %v4490, %v4503
    %v4505 = vcombine.high %v4497, %v4497
    %v4506 = vcombine.high %v4504, %v4504
    %v4507 = vcombine.high %v4227, %v4227
    %v4509 = vunpack.c.l.s4 1983009808
    %v4510 = vunpack.c.0.s8 %v4509
    %v4511 = vlaneseq
    %v4512 = vshrl.u32 %v4511, 7
    %v4513 = vsub.s32 %v4510, %v4512
    %v4514 = vrot.slane %v4227, %v4513
    %v4516 = vunpack.c.l.s4 1983009808
    %v4517 = vunpack.c.0.s8 %v4516
    %v4518 = vlaneseq
    %v4519 = vshrl.u32 %v4518, 7
    %v4520 = vsub.s32 %v4517, %v4519
    %v4521 = vrot.slane %v4507, %v4520
    %v4522 = vcombine.high %v4514, %v4514
    %v4523 = vcombine.high %v4521, %v4521
    %v4524 = vcombine.high %v4230, %v4230
    %v4526 = vunpack.c.l.s4 1983009808
    %v4527 = vunpack.c.0.s8 %v4526
    %v4528 = vlaneseq
    %v4529 = vshrl.u32 %v4528, 7
    %v4530 = vsub.s32 %v4527, %v4529
    %v4531 = vrot.slane %v4230, %v4530
    %v4533 = vunpack.c.l.s4 1983009808
    %v4534 = vunpack.c.0.s8 %v4533
    %v4535 = vlaneseq
    %v4536 = vshrl.u32 %v4535, 7
    %v4537 = vsub.s32 %v4534, %v4536
    %v4538 = vrot.slane %v4524, %v4537
    %v4539 = vcombine.high %v4531, %v4531
    %v4540 = vcombine.high %v4538, %v4538
    %v4541 = vcombine.high %v4233, %v4233
    %v4543 = vunpack.c.l.s4 1983009808
    %v4544 = vunpack.c.0.s8 %v4543
    %v4545 = vlaneseq
    %v4546 = vshrl.u32 %v4545, 7
    %v4547 = vsub.s32 %v4544, %v4546
    %v4548 = vrot.slane %v4233, %v4547
    %v4550 = vunpack.c.l.s4 1983009808
    %v4551 = vunpack.c.0.s8 %v4550
    %v4552 = vlaneseq
    %v4553 = vshrl.u32 %v4552, 7
    %v4554 = vsub.s32 %v4551, %v4553
    %v4555 = vrot.slane %v4541, %v4554
    %v4556 = vcombine.high %v4548, %v4548
    %v4557 = vcombine.high %v4555, %v4555
    %v4558 = vcombine.high %v4236, %v4236
    %v4560 = vunpack.c.l.s4 1983009808
    %v4561 = vunpack.c.0.s8 %v4560
    %v4562 = vlaneseq
    %v4563 = vshrl.u32 %v4562, 7
    %v4564 = vsub.s32 %v4561, %v4563
    %v4565 = vrot.slane %v4236, %v4564
    %v4567 = vunpack.c.l.s4 1983009808
    %v4568 = vunpack.c.0.s8 %v4567
    %v4569 = vlaneseq
    %v4570 = vshrl.u32 %v4569, 7
    %v4571 = vsub.s32 %v4568, %v4570
    %v4572 = vrot.slane %v4558, %v4571
    %v4573 = vcombine.high %v4565, %v4565
    %v4574 = vcombine.high %v4572, %v4572
    %v4575 = vcombine.high %v4239, %v4239
    %v4577 = vunpack.c.l.s4 1983009808
    %v4578 = vunpack.c.0.s8 %v4577
    %v4579 = vlaneseq
    %v4580 = vshrl.u32 %v4579, 7
    %v4581 = vsub.s32 %v4578, %v4580
    %v4582 = vrot.slane %v4239, %v4581
    %v4584 = vunpack.c.l.s4 1983009808
    %v4585 = vunpack.c.0.s8 %v4584
    %v4586 = vlaneseq
    %v4587 = vshrl.u32 %v4586, 7
    %v4588 = vsub.s32 %v4585, %v4587
    %v4589 = vrot.slane %v4575, %v4588
    %v4590 = vcombine.high %v4582, %v4582
    %v4591 = vcombine.high %v4589, %v4589
    %v4592 = vcombine.high %v4242, %v4242
    %v4594 = vunpack.c.l.s4 1983009808
    %v4595 = vunpack.c.0.s8 %v4594
    %v4596 = vlaneseq
    %v4597 = vshrl.u32 %v4596, 7
    %v4598 = vsub.s32 %v4595, %v4597
    %v4599 = vrot.slane %v4242, %v4598
    %v4601 = vunpack.c.l.s4 1983009808
    %v4602 = vunpack.c.0.s8 %v4601
    %v4603 = vlaneseq
    %v4604 = vshrl.u32 %v4603, 7
    %v4605 = vsub.s32 %v4602, %v4604
    %v4606 = vrot.slane %v4592, %v4605
    %v4607 = vcombine.high %v4599, %v4599
    %v4608 = vcombine.high %v4606, %v4606
    %v4609 = vcombine.high %v4245, %v4245
    %v4611 = vunpack.c.l.s4 1983009808
    %v4612 = vunpack.c.0.s8 %v4611
    %v4613 = vlaneseq
    %v4614 = vshrl.u32 %v4613, 7
    %v4615 = vsub.s32 %v4612, %v4614
    %v4616 = vrot.slane %v4245, %v4615
    %v4618 = vunpack.c.l.s4 1983009808
    %v4619 = vunpack.c.0.s8 %v4618
    %v4620 = vlaneseq
    %v4621 = vshrl.u32 %v4620, 7
    %v4622 = vsub.s32 %v4619, %v4621
    %v4623 = vrot.slane %v4609, %v4622
    %v4624 = vcombine.high %v4616, %v4616
    %v4625 = vcombine.high %v4623, %v4623
    %v4626 = vcombine.high %v4248, %v4248
    %v4628 = vunpack.c.l.s4 1983009808
    %v4629 = vunpack.c.0.s8 %v4628
    %v4630 = vlaneseq
    %v4631 = vshrl.u32 %v4630, 7
    %v4632 = vsub.s32 %v4629, %v4631
    %v4633 = vrot.slane %v4248, %v4632
    %v4635 = vunpack.c.l.s4 1983009808
    %v4636 = vunpack.c.0.s8 %v4635
    %v4637 = vlaneseq
    %v4638 = vshrl.u32 %v4637, 7
    %v4639 = vsub.s32 %v4636, %v4638
    %v4640 = vrot.slane %v4626, %v4639
    %v4641 = vcombine.high %v4633, %v4633
    %v4642 = vcombine.high %v4640, %v4640
    %v4643 = vcombine.high %v4251, %v4251
    %v4645 = vunpack.c.l.s4 1983009808
    %v4646 = vunpack.c.0.s8 %v4645
    %v4647 = vlaneseq
    %v4648 = vshrl.u32 %v4647, 7
    %v4649 = vsub.s32 %v4646, %v4648
    %v4650 = vrot.slane %v4251, %v4649
    %v4652 = vunpack.c.l.s4 1983009808
    %v4653 = vunpack.c.0.s8 %v4652
    %v4654 = vlaneseq
    %v4655 = vshrl.u32 %v4654, 7
    %v4656 = vsub.s32 %v4653, %v4655
    %v4657 = vrot.slane %v4643, %v4656
    %v4658 = vcombine.high %v4650, %v4650
    %v4659 = vcombine.high %v4657, %v4657
    %v4660 = vcombine.high %v4254, %v4254
    %v4662 = vunpack.c.l.s4 1983009808
    %v4663 = vunpack.c.0.s8 %v4662
    %v4664 = vlaneseq
    %v4665 = vshrl.u32 %v4664, 7
    %v4666 = vsub.s32 %v4663, %v4665
    %v4667 = vrot.slane %v4254, %v4666
    %v4669 = vunpack.c.l.s4 1983009808
    %v4670 = vunpack.c.0.s8 %v4669
    %v4671 = vlaneseq
    %v4672 = vshrl.u32 %v4671, 7
    %v4673 = vsub.s32 %v4670, %v4672
    %v4674 = vrot.slane %v4660, %v4673
    %v4675 = vcombine.high %v4667, %v4667
    %v4676 = vcombine.high %v4674, %v4674
    %v4677 = vcombine.high %v4257, %v4257
    %v4679 = vunpack.c.l.s4 1983009808
    %v4680 = vunpack.c.0.s8 %v4679
    %v4681 = vlaneseq
    %v4682 = vshrl.u32 %v4681, 7
    %v4683 = vsub.s32 %v4680, %v4682
    %v4684 = vrot.slane %v4257, %v4683
    %v4686 = vunpack.c.l.s4 1983009808
    %v4687 = vunpack.c.0.s8 %v4686
    %v4688 = vlaneseq
    %v4689 = vshrl.u32 %v4688, 7
    %v4690 = vsub.s32 %v4687, %v4689
    %v4691 = vrot.slane %v4677, %v4690
    %v4692 = vcombine.high %v4684, %v4684
    %v4693 = vcombine.high %v4691, %v4691
    %v4694 = vcombine.high %v4260, %v4260
    %v4696 = vunpack.c.l.s4 1983009808
    %v4697 = vunpack.c.0.s8 %v4696
    %v4698 = vlaneseq
    %v4699 = vshrl.u32 %v4698, 7
    %v4700 = vsub.s32 %v4697, %v4699
    %v4701 = vrot.slane %v4260, %v4700
    %v4703 = vunpack.c.l.s4 1983009808
    %v4704 = vunpack.c.0.s8 %v4703
    %v4705 = vlaneseq
    %v4706 = vshrl.u32 %v4705, 7
    %v4707 = vsub.s32 %v4704, %v4706
    %v4708 = vrot.slane %v4694, %v4707
    %v4709 = vcombine.high %v4701, %v4701
    %v4710 = vcombine.high %v4708, %v4708
    %v4711 = vcombine.high %v4263, %v4263
    %v4713 = vunpack.c.l.s4 1983009808
    %v4714 = vunpack.c.0.s8 %v4713
    %v4715 = vlaneseq
    %v4716 = vshrl.u32 %v4715, 7
    %v4717 = vsub.s32 %v4714, %v4716
    %v4718 = vrot.slane %v4263, %v4717
    %v4720 = vunpack.c.l.s4 1983009808
    %v4721 = vunpack.c.0.s8 %v4720
    %v4722 = vlaneseq
    %v4723 = vshrl.u32 %v4722, 7
    %v4724 = vsub.s32 %v4721, %v4723
    %v4725 = vrot.slane %v4711, %v4724
    %v4726 = vcombine.high %v4718, %v4718
    %v4727 = vcombine.high %v4725, %v4725
    %v4728 = vcombine.high %v4266, %v4266
    %v4730 = vunpack.c.l.s4 1983009808
    %v4731 = vunpack.c.0.s8 %v4730
    %v4732 = vlaneseq
    %v4733 = vshrl.u32 %v4732, 7
    %v4734 = vsub.s32 %v4731, %v4733
    %v4735 = vrot.slane %v4266, %v4734
    %v4737 = vunpack.c.l.s4 1983009808
    %v4738 = vunpack.c.0.s8 %v4737
    %v4739 = vlaneseq
    %v4740 = vshrl.u32 %v4739, 7
    %v4741 = vsub.s32 %v4738, %v4740
    %v4742 = vrot.slane %v4728, %v4741
    %v4743 = vcombine.high %v4735, %v4735
    %v4744 = vcombine.high %v4742, %v4742
    %v4745 = vcombine.high %v4269, %v4269
    %v4747 = vunpack.c.l.s4 1983009808
    %v4748 = vunpack.c.0.s8 %v4747
    %v4749 = vlaneseq
    %v4750 = vshrl.u32 %v4749, 7
    %v4751 = vsub.s32 %v4748, %v4750
    %v4752 = vrot.slane %v4269, %v4751
    %v4754 = vunpack.c.l.s4 1983009808
    %v4755 = vunpack.c.0.s8 %v4754
    %v4756 = vlaneseq
    %v4757 = vshrl.u32 %v4756, 7
    %v4758 = vsub.s32 %v4755, %v4757
    %v4759 = vrot.slane %v4745, %v4758
    %v4760 = vcombine.high %v4752, %v4752
    %v4761 = vcombine.high %v4759, %v4759
    %v4762 = vcombine.high %v4272, %v4272
    %v4764 = vunpack.c.l.s4 1983009808
    %v4765 = vunpack.c.0.s8 %v4764
    %v4766 = vlaneseq
    %v4767 = vshrl.u32 %v4766, 7
    %v4768 = vsub.s32 %v4765, %v4767
    %v4769 = vrot.slane %v4272, %v4768
    %v4771 = vunpack.c.l.s4 1983009808
    %v4772 = vunpack.c.0.s8 %v4771
    %v4773 = vlaneseq
    %v4774 = vshrl.u32 %v4773, 7
    %v4775 = vsub.s32 %v4772, %v4774
    %v4776 = vrot.slane %v4762, %v4775
    %v4777 = vcombine.high %v4769, %v4769
    %v4778 = vcombine.high %v4776, %v4776
    %v4779 = vcombine.high %v4275, %v4275
    %v4781 = vunpack.c.l.s4 1983009808
    %v4782 = vunpack.c.0.s8 %v4781
    %v4783 = vlaneseq
    %v4784 = vshrl.u32 %v4783, 7
    %v4785 = vsub.s32 %v4782, %v4784
    %v4786 = vrot.slane %v4275, %v4785
    %v4788 = vunpack.c.l.s4 1983009808
    %v4789 = vunpack.c.0.s8 %v4788
    %v4790 = vlaneseq
    %v4791 = vshrl.u32 %v4790, 7
    %v4792 = vsub.s32 %v4789, %v4791
    %v4793 = vrot.slane %v4779, %v4792
    %v4794 = vcombine.high %v4786, %v4786
    %v4795 = vcombine.high %v4793, %v4793
    %v4796 = vcombine.high %v4278, %v4278
    %v4798 = vunpack.c.l.s4 1983009808
    %v4799 = vunpack.c.0.s8 %v4798
    %v4800 = vlaneseq
    %v4801 = vshrl.u32 %v4800, 7
    %v4802 = vsub.s32 %v4799, %v4801
    %v4803 = vrot.slane %v4278, %v4802
    %v4805 = vunpack.c.l.s4 1983009808
    %v4806 = vunpack.c.0.s8 %v4805
    %v4807 = vlaneseq
    %v4808 = vshrl.u32 %v4807, 7
    %v4809 = vsub.s32 %v4806, %v4808
    %v4810 = vrot.slane %v4796, %v4809
    %v4811 = vcombine.high %v4803, %v4803
    %v4812 = vcombine.high %v4810, %v4810
    %v4813 = vcombine.high %v4281, %v4281
    %v4815 = vunpack.c.l.s4 1983009808
    %v4816 = vunpack.c.0.s8 %v4815
    %v4817 = vlaneseq
    %v4818 = vshrl.u32 %v4817, 7
    %v4819 = vsub.s32 %v4816, %v4818
    %v4820 = vrot.slane %v4281, %v4819
    %v4822 = vunpack.c.l.s4 1983009808
    %v4823 = vunpack.c.0.s8 %v4822
    %v4824 = vlaneseq
    %v4825 = vshrl.u32 %v4824, 7
    %v4826 = vsub.s32 %v4823, %v4825
    %v4827 = vrot.slane %v4813, %v4826
    %v4828 = vcombine.high %v4820, %v4820
    %v4829 = vcombine.high %v4827, %v4827
    %v4830 = vcombine.high %v4284, %v4284
    %v4832 = vunpack.c.l.s4 1983009808
    %v4833 = vunpack.c.0.s8 %v4832
    %v4834 = vlaneseq
    %v4835 = vshrl.u32 %v4834, 7
    %v4836 = vsub.s32 %v4833, %v4835
    %v4837 = vrot.slane %v4284, %v4836
    %v4839 = vunpack.c.l.s4 1983009808
    %v4840 = vunpack.c.0.s8 %v4839
    %v4841 = vlaneseq
    %v4842 = vshrl.u32 %v4841, 7
    %v4843 = vsub.s32 %v4840, %v4842
    %v4844 = vrot.slane %v4830, %v4843
    %v4845 = vcombine.high %v4837, %v4837
    %v4846 = vcombine.high %v4844, %v4844
    %v4847 = vcombine.high %v4287, %v4287
    %v4849 = vunpack.c.l.s4 1983009808
    %v4850 = vunpack.c.0.s8 %v4849
    %v4851 = vlaneseq
    %v4852 = vshrl.u32 %v4851, 7
    %v4853 = vsub.s32 %v4850, %v4852
    %v4854 = vrot.slane %v4287, %v4853
    %v4856 = vunpack.c.l.s4 1983009808
    %v4857 = vunpack.c.0.s8 %v4856
    %v4858 = vlaneseq
    %v4859 = vshrl.u32 %v4858, 7
    %v4860 = vsub.s32 %v4857, %v4859
    %v4861 = vrot.slane %v4847, %v4860
    %v4862 = vcombine.high %v4854, %v4854
    %v4863 = vcombine.high %v4861, %v4861
    %vm4992 = vcmask 58368
    %v4993 = vsel %vm4992, %v4327, -inf
    %v4994 = vrot.slane %v4993, 4
    %v4995 = vmax.f32 %v4993, %v4994
    %v4996 = vrot.slane %v4995, 2
    %v4997 = vmax.f32 %v4995, %v4996
    %v4998 = vrot.slane %v4997, 1
    %v4999 = vmax.f32 %v4997, %v4998
    %v5000 = vsel %vm4992, %v4335, -inf
    %v5001 = vrot.slane %v5000, 4
    %v5002 = vmax.f32 %v5000, %v5001
    %v5003 = vrot.slane %v5002, 2
    %v5004 = vmax.f32 %v5002, %v5003
    %v5005 = vrot.slane %v5004, 1
    %v5006 = vmax.f32 %v5004, %v5005
    %v5007 = vsel %vm4992, %v4334, -inf
    %v5008 = vrot.slane %v5007, 4
    %v5009 = vmax.f32 %v5007, %v5008
    %v5010 = vrot.slane %v5009, 2
    %v5011 = vmax.f32 %v5009, %v5010
    %v5012 = vrot.slane %v5011, 1
    %v5013 = vmax.f32 %v5011, %v5012
    %v5014 = vsel %vm4992, %v4336, -inf
    %v5015 = vrot.slane %v5014, 4
    %v5016 = vmax.f32 %v5014, %v5015
    %v5017 = vrot.slane %v5016, 2
    %v5018 = vmax.f32 %v5016, %v5017
    %v5019 = vrot.slane %v5018, 1
    %v5020 = vmax.f32 %v5018, %v5019
    %v5021 = vsel %vm4992, %v4344, -inf
    %v5022 = vrot.slane %v5021, 4
    %v5023 = vmax.f32 %v5021, %v5022
    %v5024 = vrot.slane %v5023, 2
    %v5025 = vmax.f32 %v5023, %v5024
    %v5026 = vrot.slane %v5025, 1
    %v5027 = vmax.f32 %v5025, %v5026
    %v5028 = vsel %vm4992, %v4352, -inf
    %v5029 = vrot.slane %v5028, 4
    %v5030 = vmax.f32 %v5028, %v5029
    %v5031 = vrot.slane %v5030, 2
    %v5032 = vmax.f32 %v5030, %v5031
    %v5033 = vrot.slane %v5032, 1
    %v5034 = vmax.f32 %v5032, %v5033
    %v5035 = vsel %vm4992, %v4351, -inf
    %v5036 = vrot.slane %v5035, 4
    %v5037 = vmax.f32 %v5035, %v5036
    %v5038 = vrot.slane %v5037, 2
    %v5039 = vmax.f32 %v5037, %v5038
    %v5040 = vrot.slane %v5039, 1
    %v5041 = vmax.f32 %v5039, %v5040
    %v5042 = vsel %vm4992, %v4353, -inf
    %v5043 = vrot.slane %v5042, 4
    %v5044 = vmax.f32 %v5042, %v5043
    %v5045 = vrot.slane %v5044, 2
    %v5046 = vmax.f32 %v5044, %v5045
    %v5047 = vrot.slane %v5046, 1
    %v5048 = vmax.f32 %v5046, %v5047
    %v5049 = vsel %vm4992, %v4361, -inf
    %v5050 = vrot.slane %v5049, 4
    %v5051 = vmax.f32 %v5049, %v5050
    %v5052 = vrot.slane %v5051, 2
    %v5053 = vmax.f32 %v5051, %v5052
    %v5054 = vrot.slane %v5053, 1
    %v5055 = vmax.f32 %v5053, %v5054
    %v5056 = vsel %vm4992, %v4369, -inf
    %v5057 = vrot.slane %v5056, 4
    %v5058 = vmax.f32 %v5056, %v5057
    %v5059 = vrot.slane %v5058, 2
    %v5060 = vmax.f32 %v5058, %v5059
    %v5061 = vrot.slane %v5060, 1
    %v5062 = vmax.f32 %v5060, %v5061
    %v5063 = vsel %vm4992, %v4368, -inf
    %v5064 = vrot.slane %v5063, 4
    %v5065 = vmax.f32 %v5063, %v5064
    %v5066 = vrot.slane %v5065, 2
    %v5067 = vmax.f32 %v5065, %v5066
    %v5068 = vrot.slane %v5067, 1
    %v5069 = vmax.f32 %v5067, %v5068
    %v5070 = vsel %vm4992, %v4370, -inf
    %v5071 = vrot.slane %v5070, 4
    %v5072 = vmax.f32 %v5070, %v5071
    %v5073 = vrot.slane %v5072, 2
    %v5074 = vmax.f32 %v5072, %v5073
    %v5075 = vrot.slane %v5074, 1
    %v5076 = vmax.f32 %v5074, %v5075
    %v5077 = vsel %vm4992, %v4378, -inf
    %v5078 = vrot.slane %v5077, 4
    %v5079 = vmax.f32 %v5077, %v5078
    %v5080 = vrot.slane %v5079, 2
    %v5081 = vmax.f32 %v5079, %v5080
    %v5082 = vrot.slane %v5081, 1
    %v5083 = vmax.f32 %v5081, %v5082
    %v5084 = vsel %vm4992, %v4386, -inf
    %v5085 = vrot.slane %v5084, 4
    %v5086 = vmax.f32 %v5084, %v5085
    %v5087 = vrot.slane %v5086, 2
    %v5088 = vmax.f32 %v5086, %v5087
    %v5089 = vrot.slane %v5088, 1
    %v5090 = vmax.f32 %v5088, %v5089
    %v5091 = vsel %vm4992, %v4385, -inf
    %v5092 = vrot.slane %v5091, 4
    %v5093 = vmax.f32 %v5091, %v5092
    %v5094 = vrot.slane %v5093, 2
    %v5095 = vmax.f32 %v5093, %v5094
    %v5096 = vrot.slane %v5095, 1
    %v5097 = vmax.f32 %v5095, %v5096
    %v5098 = vsel %vm4992, %v4387, -inf
    %v5099 = vrot.slane %v5098, 4
    %v5100 = vmax.f32 %v5098, %v5099
    %v5101 = vrot.slane %v5100, 2
    %v5102 = vmax.f32 %v5100, %v5101
    %v5103 = vrot.slane %v5102, 1
    %v5104 = vmax.f32 %v5102, %v5103
    %v5105 = vsel %vm4992, %v4395, -inf
    %v5106 = vrot.slane %v5105, 4
    %v5107 = vmax.f32 %v5105, %v5106
    %v5108 = vrot.slane %v5107, 2
    %v5109 = vmax.f32 %v5107, %v5108
    %v5110 = vrot.slane %v5109, 1
    %v5111 = vmax.f32 %v5109, %v5110
    %v5112 = vsel %vm4992, %v4403, -inf
    %v5113 = vrot.slane %v5112, 4
    %v5114 = vmax.f32 %v5112, %v5113
    %v5115 = vrot.slane %v5114, 2
    %v5116 = vmax.f32 %v5114, %v5115
    %v5117 = vrot.slane %v5116, 1
    %v5118 = vmax.f32 %v5116, %v5117
    %v5119 = vsel %vm4992, %v4402, -inf
    %v5120 = vrot.slane %v5119, 4
    %v5121 = vmax.f32 %v5119, %v5120
    %v5122 = vrot.slane %v5121, 2
    %v5123 = vmax.f32 %v5121, %v5122
    %v5124 = vrot.slane %v5123, 1
    %v5125 = vmax.f32 %v5123, %v5124
    %v5126 = vsel %vm4992, %v4404, -inf
    %v5127 = vrot.slane %v5126, 4
    %v5128 = vmax.f32 %v5126, %v5127
    %v5129 = vrot.slane %v5128, 2
    %v5130 = vmax.f32 %v5128, %v5129
    %v5131 = vrot.slane %v5130, 1
    %v5132 = vmax.f32 %v5130, %v5131
    %v5133 = vsel %vm4992, %v4412, -inf
    %v5134 = vrot.slane %v5133, 4
    %v5135 = vmax.f32 %v5133, %v5134
    %v5136 = vrot.slane %v5135, 2
    %v5137 = vmax.f32 %v5135, %v5136
    %v5138 = vrot.slane %v5137, 1
    %v5139 = vmax.f32 %v5137, %v5138
    %v5140 = vsel %vm4992, %v4420, -inf
    %v5141 = vrot.slane %v5140, 4
    %v5142 = vmax.f32 %v5140, %v5141
    %v5143 = vrot.slane %v5142, 2
    %v5144 = vmax.f32 %v5142, %v5143
    %v5145 = vrot.slane %v5144, 1
    %v5146 = vmax.f32 %v5144, %v5145
    %v5147 = vsel %vm4992, %v4419, -inf
    %v5148 = vrot.slane %v5147, 4
    %v5149 = vmax.f32 %v5147, %v5148
    %v5150 = vrot.slane %v5149, 2
    %v5151 = vmax.f32 %v5149, %v5150
    %v5152 = vrot.slane %v5151, 1
    %v5153 = vmax.f32 %v5151, %v5152
    %v5154 = vsel %vm4992, %v4421, -inf
    %v5155 = vrot.slane %v5154, 4
    %v5156 = vmax.f32 %v5154, %v5155
    %v5157 = vrot.slane %v5156, 2
    %v5158 = vmax.f32 %v5156, %v5157
    %v5159 = vrot.slane %v5158, 1
    %v5160 = vmax.f32 %v5158, %v5159
    %v5161 = vsel %vm4992, %v4429, -inf
    %v5162 = vrot.slane %v5161, 4
    %v5163 = vmax.f32 %v5161, %v5162
    %v5164 = vrot.slane %v5163, 2
    %v5165 = vmax.f32 %v5163, %v5164
    %v5166 = vrot.slane %v5165, 1
    %v5167 = vmax.f32 %v5165, %v5166
    %v5168 = vsel %vm4992, %v4437, -inf
    %v5169 = vrot.slane %v5168, 4
    %v5170 = vmax.f32 %v5168, %v5169
    %v5171 = vrot.slane %v5170, 2
    %v5172 = vmax.f32 %v5170, %v5171
    %v5173 = vrot.slane %v5172, 1
    %v5174 = vmax.f32 %v5172, %v5173
    %v5175 = vsel %vm4992, %v4436, -inf
    %v5176 = vrot.slane %v5175, 4
    %v5177 = vmax.f32 %v5175, %v5176
    %v5178 = vrot.slane %v5177, 2
    %v5179 = vmax.f32 %v5177, %v5178
    %v5180 = vrot.slane %v5179, 1
    %v5181 = vmax.f32 %v5179, %v5180
    %v5182 = vsel %vm4992, %v4438, -inf
    %v5183 = vrot.slane %v5182, 4
    %v5184 = vmax.f32 %v5182, %v5183
    %v5185 = vrot.slane %v5184, 2
    %v5186 = vmax.f32 %v5184, %v5185
    %v5187 = vrot.slane %v5186, 1
    %v5188 = vmax.f32 %v5186, %v5187
    %v5189 = vsel %vm4992, %v4446, -inf
    %v5190 = vrot.slane %v5189, 4
    %v5191 = vmax.f32 %v5189, %v5190
    %v5192 = vrot.slane %v5191, 2
    %v5193 = vmax.f32 %v5191, %v5192
    %v5194 = vrot.slane %v5193, 1
    %v5195 = vmax.f32 %v5193, %v5194
    %v5196 = vsel %vm4992, %v4454, -inf
    %v5197 = vrot.slane %v5196, 4
    %v5198 = vmax.f32 %v5196, %v5197
    %v5199 = vrot.slane %v5198, 2
    %v5200 = vmax.f32 %v5198, %v5199
    %v5201 = vrot.slane %v5200, 1
    %v5202 = vmax.f32 %v5200, %v5201
    %v5203 = vsel %vm4992, %v4453, -inf
    %v5204 = vrot.slane %v5203, 4
    %v5205 = vmax.f32 %v5203, %v5204
    %v5206 = vrot.slane %v5205, 2
    %v5207 = vmax.f32 %v5205, %v5206
    %v5208 = vrot.slane %v5207, 1
    %v5209 = vmax.f32 %v5207, %v5208
    %v5210 = vsel %vm4992, %v4455, -inf
    %v5211 = vrot.slane %v5210, 4
    %v5212 = vmax.f32 %v5210, %v5211
    %v5213 = vrot.slane %v5212, 2
    %v5214 = vmax.f32 %v5212, %v5213
    %v5215 = vrot.slane %v5214, 1
    %v5216 = vmax.f32 %v5214, %v5215
    %v5217 = vsel %vm4992, %v4463, -inf
    %v5218 = vrot.slane %v5217, 4
    %v5219 = vmax.f32 %v5217, %v5218
    %v5220 = vrot.slane %v5219, 2
    %v5221 = vmax.f32 %v5219, %v5220
    %v5222 = vrot.slane %v5221, 1
    %v5223 = vmax.f32 %v5221, %v5222
    %v5224 = vsel %vm4992, %v4471, -inf
    %v5225 = vrot.slane %v5224, 4
    %v5226 = vmax.f32 %v5224, %v5225
    %v5227 = vrot.slane %v5226, 2
    %v5228 = vmax.f32 %v5226, %v5227
    %v5229 = vrot.slane %v5228, 1
    %v5230 = vmax.f32 %v5228, %v5229
    %v5231 = vsel %vm4992, %v4470, -inf
    %v5232 = vrot.slane %v5231, 4
    %v5233 = vmax.f32 %v5231, %v5232
    %v5234 = vrot.slane %v5233, 2
    %v5235 = vmax.f32 %v5233, %v5234
    %v5236 = vrot.slane %v5235, 1
    %v5237 = vmax.f32 %v5235, %v5236
    %v5238 = vsel %vm4992, %v4472, -inf
    %v5239 = vrot.slane %v5238, 4
    %v5240 = vmax.f32 %v5238, %v5239
    %v5241 = vrot.slane %v5240, 2
    %v5242 = vmax.f32 %v5240, %v5241
    %v5243 = vrot.slane %v5242, 1
    %v5244 = vmax.f32 %v5242, %v5243
    %v5245 = vsel %vm4992, %v4480, -inf
    %v5246 = vrot.slane %v5245, 4
    %v5247 = vmax.f32 %v5245, %v5246
    %v5248 = vrot.slane %v5247, 2
    %v5249 = vmax.f32 %v5247, %v5248
    %v5250 = vrot.slane %v5249, 1
    %v5251 = vmax.f32 %v5249, %v5250
    %v5252 = vsel %vm4992, %v4488, -inf
    %v5253 = vrot.slane %v5252, 4
    %v5254 = vmax.f32 %v5252, %v5253
    %v5255 = vrot.slane %v5254, 2
    %v5256 = vmax.f32 %v5254, %v5255
    %v5257 = vrot.slane %v5256, 1
    %v5258 = vmax.f32 %v5256, %v5257
    %v5259 = vsel %vm4992, %v4487, -inf
    %v5260 = vrot.slane %v5259, 4
    %v5261 = vmax.f32 %v5259, %v5260
    %v5262 = vrot.slane %v5261, 2
    %v5263 = vmax.f32 %v5261, %v5262
    %v5264 = vrot.slane %v5263, 1
    %v5265 = vmax.f32 %v5263, %v5264
    %v5266 = vsel %vm4992, %v4489, -inf
    %v5267 = vrot.slane %v5266, 4
    %v5268 = vmax.f32 %v5266, %v5267
    %v5269 = vrot.slane %v5268, 2
    %v5270 = vmax.f32 %v5268, %v5269
    %v5271 = vrot.slane %v5270, 1
    %v5272 = vmax.f32 %v5270, %v5271
    %v5273 = vsel %vm4992, %v4497, -inf
    %v5274 = vrot.slane %v5273, 4
    %v5275 = vmax.f32 %v5273, %v5274
    %v5276 = vrot.slane %v5275, 2
    %v5277 = vmax.f32 %v5275, %v5276
    %v5278 = vrot.slane %v5277, 1
    %v5279 = vmax.f32 %v5277, %v5278
    %v5280 = vsel %vm4992, %v4505, -inf
    %v5281 = vrot.slane %v5280, 4
    %v5282 = vmax.f32 %v5280, %v5281
    %v5283 = vrot.slane %v5282, 2
    %v5284 = vmax.f32 %v5282, %v5283
    %v5285 = vrot.slane %v5284, 1
    %v5286 = vmax.f32 %v5284, %v5285
    %v5287 = vsel %vm4992, %v4504, -inf
    %v5288 = vrot.slane %v5287, 4
    %v5289 = vmax.f32 %v5287, %v5288
    %v5290 = vrot.slane %v5289, 2
    %v5291 = vmax.f32 %v5289, %v5290
    %v5292 = vrot.slane %v5291, 1
    %v5293 = vmax.f32 %v5291, %v5292
    %v5294 = vsel %vm4992, %v4506, -inf
    %v5295 = vrot.slane %v5294, 4
    %v5296 = vmax.f32 %v5294, %v5295
    %v5297 = vrot.slane %v5296, 2
    %v5298 = vmax.f32 %v5296, %v5297
    %v5299 = vrot.slane %v5298, 1
    %v5300 = vmax.f32 %v5298, %v5299
    %v5301 = vsel %vm4992, %v4514, -inf
    %v5302 = vrot.slane %v5301, 4
    %v5303 = vmax.f32 %v5301, %v5302
    %v5304 = vrot.slane %v5303, 2
    %v5305 = vmax.f32 %v5303, %v5304
    %v5306 = vrot.slane %v5305, 1
    %v5307 = vmax.f32 %v5305, %v5306
    %v5308 = vsel %vm4992, %v4522, -inf
    %v5309 = vrot.slane %v5308, 4
    %v5310 = vmax.f32 %v5308, %v5309
    %v5311 = vrot.slane %v5310, 2
    %v5312 = vmax.f32 %v5310, %v5311
    %v5313 = vrot.slane %v5312, 1
    %v5314 = vmax.f32 %v5312, %v5313
    %v5315 = vsel %vm4992, %v4521, -inf
    %v5316 = vrot.slane %v5315, 4
    %v5317 = vmax.f32 %v5315, %v5316
    %v5318 = vrot.slane %v5317, 2
    %v5319 = vmax.f32 %v5317, %v5318
    %v5320 = vrot.slane %v5319, 1
    %v5321 = vmax.f32 %v5319, %v5320
    %v5322 = vsel %vm4992, %v4523, -inf
    %v5323 = vrot.slane %v5322, 4
    %v5324 = vmax.f32 %v5322, %v5323
    %v5325 = vrot.slane %v5324, 2
    %v5326 = vmax.f32 %v5324, %v5325
    %v5327 = vrot.slane %v5326, 1
    %v5328 = vmax.f32 %v5326, %v5327
    %v5329 = vsel %vm4992, %v4531, -inf
    %v5330 = vrot.slane %v5329, 4
    %v5331 = vmax.f32 %v5329, %v5330
    %v5332 = vrot.slane %v5331, 2
    %v5333 = vmax.f32 %v5331, %v5332
    %v5334 = vrot.slane %v5333, 1
    %v5335 = vmax.f32 %v5333, %v5334
    %v5336 = vsel %vm4992, %v4539, -inf
    %v5337 = vrot.slane %v5336, 4
    %v5338 = vmax.f32 %v5336, %v5337
    %v5339 = vrot.slane %v5338, 2
    %v5340 = vmax.f32 %v5338, %v5339
    %v5341 = vrot.slane %v5340, 1
    %v5342 = vmax.f32 %v5340, %v5341
    %v5343 = vsel %vm4992, %v4538, -inf
    %v5344 = vrot.slane %v5343, 4
    %v5345 = vmax.f32 %v5343, %v5344
    %v5346 = vrot.slane %v5345, 2
    %v5347 = vmax.f32 %v5345, %v5346
    %v5348 = vrot.slane %v5347, 1
    %v5349 = vmax.f32 %v5347, %v5348
    %v5350 = vsel %vm4992, %v4540, -inf
    %v5351 = vrot.slane %v5350, 4
    %v5352 = vmax.f32 %v5350, %v5351
    %v5353 = vrot.slane %v5352, 2
    %v5354 = vmax.f32 %v5352, %v5353
    %v5355 = vrot.slane %v5354, 1
    %v5356 = vmax.f32 %v5354, %v5355
    %v5357 = vsel %vm4992, %v4548, -inf
    %v5358 = vrot.slane %v5357, 4
    %v5359 = vmax.f32 %v5357, %v5358
    %v5360 = vrot.slane %v5359, 2
    %v5361 = vmax.f32 %v5359, %v5360
    %v5362 = vrot.slane %v5361, 1
    %v5363 = vmax.f32 %v5361, %v5362
    %v5364 = vsel %vm4992, %v4556, -inf
    %v5365 = vrot.slane %v5364, 4
    %v5366 = vmax.f32 %v5364, %v5365
    %v5367 = vrot.slane %v5366, 2
    %v5368 = vmax.f32 %v5366, %v5367
    %v5369 = vrot.slane %v5368, 1
    %v5370 = vmax.f32 %v5368, %v5369
    %v5371 = vsel %vm4992, %v4555, -inf
    %v5372 = vrot.slane %v5371, 4
    %v5373 = vmax.f32 %v5371, %v5372
    %v5374 = vrot.slane %v5373, 2
    %v5375 = vmax.f32 %v5373, %v5374
    %v5376 = vrot.slane %v5375, 1
    %v5377 = vmax.f32 %v5375, %v5376
    %v5378 = vsel %vm4992, %v4557, -inf
    %v5379 = vrot.slane %v5378, 4
    %v5380 = vmax.f32 %v5378, %v5379
    %v5381 = vrot.slane %v5380, 2
    %v5382 = vmax.f32 %v5380, %v5381
    %v5383 = vrot.slane %v5382, 1
    %v5384 = vmax.f32 %v5382, %v5383
    %v5385 = vsel %vm4992, %v4565, -inf
    %v5386 = vrot.slane %v5385, 4
    %v5387 = vmax.f32 %v5385, %v5386
    %v5388 = vrot.slane %v5387, 2
    %v5389 = vmax.f32 %v5387, %v5388
    %v5390 = vrot.slane %v5389, 1
    %v5391 = vmax.f32 %v5389, %v5390
    %v5392 = vsel %vm4992, %v4573, -inf
    %v5393 = vrot.slane %v5392, 4
    %v5394 = vmax.f32 %v5392, %v5393
    %v5395 = vrot.slane %v5394, 2
    %v5396 = vmax.f32 %v5394, %v5395
    %v5397 = vrot.slane %v5396, 1
    %v5398 = vmax.f32 %v5396, %v5397
    %v5399 = vsel %vm4992, %v4572, -inf
    %v5400 = vrot.slane %v5399, 4
    %v5401 = vmax.f32 %v5399, %v5400
    %v5402 = vrot.slane %v5401, 2
    %v5403 = vmax.f32 %v5401, %v5402
    %v5404 = vrot.slane %v5403, 1
    %v5405 = vmax.f32 %v5403, %v5404
    %v5406 = vsel %vm4992, %v4574, -inf
    %v5407 = vrot.slane %v5406, 4
    %v5408 = vmax.f32 %v5406, %v5407
    %v5409 = vrot.slane %v5408, 2
    %v5410 = vmax.f32 %v5408, %v5409
    %v5411 = vrot.slane %v5410, 1
    %v5412 = vmax.f32 %v5410, %v5411
    %v5413 = vsel %vm4992, %v4582, -inf
    %v5414 = vrot.slane %v5413, 4
    %v5415 = vmax.f32 %v5413, %v5414
    %v5416 = vrot.slane %v5415, 2
    %v5417 = vmax.f32 %v5415, %v5416
    %v5418 = vrot.slane %v5417, 1
    %v5419 = vmax.f32 %v5417, %v5418
    %v5420 = vsel %vm4992, %v4590, -inf
    %v5421 = vrot.slane %v5420, 4
    %v5422 = vmax.f32 %v5420, %v5421
    %v5423 = vrot.slane %v5422, 2
    %v5424 = vmax.f32 %v5422, %v5423
    %v5425 = vrot.slane %v5424, 1
    %v5426 = vmax.f32 %v5424, %v5425
    %v5427 = vsel %vm4992, %v4589, -inf
    %v5428 = vrot.slane %v5427, 4
    %v5429 = vmax.f32 %v5427, %v5428
    %v5430 = vrot.slane %v5429, 2
    %v5431 = vmax.f32 %v5429, %v5430
    %v5432 = vrot.slane %v5431, 1
    %v5433 = vmax.f32 %v5431, %v5432
    %v5434 = vsel %vm4992, %v4591, -inf
    %v5435 = vrot.slane %v5434, 4
    %v5436 = vmax.f32 %v5434, %v5435
    %v5437 = vrot.slane %v5436, 2
    %v5438 = vmax.f32 %v5436, %v5437
    %v5439 = vrot.slane %v5438, 1
    %v5440 = vmax.f32 %v5438, %v5439
    %v5441 = vsel %vm4992, %v4599, -inf
    %v5442 = vrot.slane %v5441, 4
    %v5443 = vmax.f32 %v5441, %v5442
    %v5444 = vrot.slane %v5443, 2
    %v5445 = vmax.f32 %v5443, %v5444
    %v5446 = vrot.slane %v5445, 1
    %v5447 = vmax.f32 %v5445, %v5446
    %v5448 = vsel %vm4992, %v4607, -inf
    %v5449 = vrot.slane %v5448, 4
    %v5450 = vmax.f32 %v5448, %v5449
    %v5451 = vrot.slane %v5450, 2
    %v5452 = vmax.f32 %v5450, %v5451
    %v5453 = vrot.slane %v5452, 1
    %v5454 = vmax.f32 %v5452, %v5453
    %v5455 = vsel %vm4992, %v4606, -inf
    %v5456 = vrot.slane %v5455, 4
    %v5457 = vmax.f32 %v5455, %v5456
    %v5458 = vrot.slane %v5457, 2
    %v5459 = vmax.f32 %v5457, %v5458
    %v5460 = vrot.slane %v5459, 1
    %v5461 = vmax.f32 %v5459, %v5460
    %v5462 = vsel %vm4992, %v4608, -inf
    %v5463 = vrot.slane %v5462, 4
    %v5464 = vmax.f32 %v5462, %v5463
    %v5465 = vrot.slane %v5464, 2
    %v5466 = vmax.f32 %v5464, %v5465
    %v5467 = vrot.slane %v5466, 1
    %v5468 = vmax.f32 %v5466, %v5467
    %v5469 = vsel %vm4992, %v4616, -inf
    %v5470 = vrot.slane %v5469, 4
    %v5471 = vmax.f32 %v5469, %v5470
    %v5472 = vrot.slane %v5471, 2
    %v5473 = vmax.f32 %v5471, %v5472
    %v5474 = vrot.slane %v5473, 1
    %v5475 = vmax.f32 %v5473, %v5474
    %v5476 = vsel %vm4992, %v4624, -inf
    %v5477 = vrot.slane %v5476, 4
    %v5478 = vmax.f32 %v5476, %v5477
    %v5479 = vrot.slane %v5478, 2
    %v5480 = vmax.f32 %v5478, %v5479
    %v5481 = vrot.slane %v5480, 1
    %v5482 = vmax.f32 %v5480, %v5481
    %v5483 = vsel %vm4992, %v4623, -inf
    %v5484 = vrot.slane %v5483, 4
    %v5485 = vmax.f32 %v5483, %v5484
    %v5486 = vrot.slane %v5485, 2
    %v5487 = vmax.f32 %v5485, %v5486
    %v5488 = vrot.slane %v5487, 1
    %v5489 = vmax.f32 %v5487, %v5488
    %v5490 = vsel %vm4992, %v4625, -inf
    %v5491 = vrot.slane %v5490, 4
    %v5492 = vmax.f32 %v5490, %v5491
    %v5493 = vrot.slane %v5492, 2
    %v5494 = vmax.f32 %v5492, %v5493
    %v5495 = vrot.slane %v5494, 1
    %v5496 = vmax.f32 %v5494, %v5495
    %v5497 = vsel %vm4992, %v4633, -inf
    %v5498 = vrot.slane %v5497, 4
    %v5499 = vmax.f32 %v5497, %v5498
    %v5500 = vrot.slane %v5499, 2
    %v5501 = vmax.f32 %v5499, %v5500
    %v5502 = vrot.slane %v5501, 1
    %v5503 = vmax.f32 %v5501, %v5502
    %v5504 = vsel %vm4992, %v4641, -inf
    %v5505 = vrot.slane %v5504, 4
    %v5506 = vmax.f32 %v5504, %v5505
    %v5507 = vrot.slane %v5506, 2
    %v5508 = vmax.f32 %v5506, %v5507
    %v5509 = vrot.slane %v5508, 1
    %v5510 = vmax.f32 %v5508, %v5509
    %v5511 = vsel %vm4992, %v4640, -inf
    %v5512 = vrot.slane %v5511, 4
    %v5513 = vmax.f32 %v5511, %v5512
    %v5514 = vrot.slane %v5513, 2
    %v5515 = vmax.f32 %v5513, %v5514
    %v5516 = vrot.slane %v5515, 1
    %v5517 = vmax.f32 %v5515, %v5516
    %v5518 = vsel %vm4992, %v4642, -inf
    %v5519 = vrot.slane %v5518, 4
    %v5520 = vmax.f32 %v5518, %v5519
    %v5521 = vrot.slane %v5520, 2
    %v5522 = vmax.f32 %v5520, %v5521
    %v5523 = vrot.slane %v5522, 1
    %v5524 = vmax.f32 %v5522, %v5523
    %v5525 = vsel %vm4992, %v4650, -inf
    %v5526 = vrot.slane %v5525, 4
    %v5527 = vmax.f32 %v5525, %v5526
    %v5528 = vrot.slane %v5527, 2
    %v5529 = vmax.f32 %v5527, %v5528
    %v5530 = vrot.slane %v5529, 1
    %v5531 = vmax.f32 %v5529, %v5530
    %v5532 = vsel %vm4992, %v4658, -inf
    %v5533 = vrot.slane %v5532, 4
    %v5534 = vmax.f32 %v5532, %v5533
    %v5535 = vrot.slane %v5534, 2
    %v5536 = vmax.f32 %v5534, %v5535
    %v5537 = vrot.slane %v5536, 1
    %v5538 = vmax.f32 %v5536, %v5537
    %v5539 = vsel %vm4992, %v4657, -inf
    %v5540 = vrot.slane %v5539, 4
    %v5541 = vmax.f32 %v5539, %v5540
    %v5542 = vrot.slane %v5541, 2
    %v5543 = vmax.f32 %v5541, %v5542
    %v5544 = vrot.slane %v5543, 1
    %v5545 = vmax.f32 %v5543, %v5544
    %v5546 = vsel %vm4992, %v4659, -inf
    %v5547 = vrot.slane %v5546, 4
    %v5548 = vmax.f32 %v5546, %v5547
    %v5549 = vrot.slane %v5548, 2
    %v5550 = vmax.f32 %v5548, %v5549
    %v5551 = vrot.slane %v5550, 1
    %v5552 = vmax.f32 %v5550, %v5551
    %v5553 = vsel %vm4992, %v4667, -inf
    %v5554 = vrot.slane %v5553, 4
    %v5555 = vmax.f32 %v5553, %v5554
    %v5556 = vrot.slane %v5555, 2
    %v5557 = vmax.f32 %v5555, %v5556
    %v5558 = vrot.slane %v5557, 1
    %v5559 = vmax.f32 %v5557, %v5558
    %v5560 = vsel %vm4992, %v4675, -inf
    %v5561 = vrot.slane %v5560, 4
    %v5562 = vmax.f32 %v5560, %v5561
    %v5563 = vrot.slane %v5562, 2
    %v5564 = vmax.f32 %v5562, %v5563
    %v5565 = vrot.slane %v5564, 1
    %v5566 = vmax.f32 %v5564, %v5565
    %v5567 = vsel %vm4992, %v4674, -inf
    %v5568 = vrot.slane %v5567, 4
    %v5569 = vmax.f32 %v5567, %v5568
    %v5570 = vrot.slane %v5569, 2
    %v5571 = vmax.f32 %v5569, %v5570
    %v5572 = vrot.slane %v5571, 1
    %v5573 = vmax.f32 %v5571, %v5572
    %v5574 = vsel %vm4992, %v4676, -inf
    %v5575 = vrot.slane %v5574, 4
    %v5576 = vmax.f32 %v5574, %v5575
    %v5577 = vrot.slane %v5576, 2
    %v5578 = vmax.f32 %v5576, %v5577
    %v5579 = vrot.slane %v5578, 1
    %v5580 = vmax.f32 %v5578, %v5579
    %v5581 = vsel %vm4992, %v4684, -inf
    %v5582 = vrot.slane %v5581, 4
    %v5583 = vmax.f32 %v5581, %v5582
    %v5584 = vrot.slane %v5583, 2
    %v5585 = vmax.f32 %v5583, %v5584
    %v5586 = vrot.slane %v5585, 1
    %v5587 = vmax.f32 %v5585, %v5586
    %v5588 = vsel %vm4992, %v4692, -inf
    %v5589 = vrot.slane %v5588, 4
    %v5590 = vmax.f32 %v5588, %v5589
    %v5591 = vrot.slane %v5590, 2
    %v5592 = vmax.f32 %v5590, %v5591
    %v5593 = vrot.slane %v5592, 1
    %v5594 = vmax.f32 %v5592, %v5593
    %v5595 = vsel %vm4992, %v4691, -inf
    %v5596 = vrot.slane %v5595, 4
    %v5597 = vmax.f32 %v5595, %v5596
    %v5598 = vrot.slane %v5597, 2
    %v5599 = vmax.f32 %v5597, %v5598
    %v5600 = vrot.slane %v5599, 1
    %v5601 = vmax.f32 %v5599, %v5600
    %v5602 = vsel %vm4992, %v4693, -inf
    %v5603 = vrot.slane %v5602, 4
    %v5604 = vmax.f32 %v5602, %v5603
    %v5605 = vrot.slane %v5604, 2
    %v5606 = vmax.f32 %v5604, %v5605
    %v5607 = vrot.slane %v5606, 1
    %v5608 = vmax.f32 %v5606, %v5607
    %v5609 = vsel %vm4992, %v4701, -inf
    %v5610 = vrot.slane %v5609, 4
    %v5611 = vmax.f32 %v5609, %v5610
    %v5612 = vrot.slane %v5611, 2
    %v5613 = vmax.f32 %v5611, %v5612
    %v5614 = vrot.slane %v5613, 1
    %v5615 = vmax.f32 %v5613, %v5614
    %v5616 = vsel %vm4992, %v4709, -inf
    %v5617 = vrot.slane %v5616, 4
    %v5618 = vmax.f32 %v5616, %v5617
    %v5619 = vrot.slane %v5618, 2
    %v5620 = vmax.f32 %v5618, %v5619
    %v5621 = vrot.slane %v5620, 1
    %v5622 = vmax.f32 %v5620, %v5621
    %v5623 = vsel %vm4992, %v4708, -inf
    %v5624 = vrot.slane %v5623, 4
    %v5625 = vmax.f32 %v5623, %v5624
    %v5626 = vrot.slane %v5625, 2
    %v5627 = vmax.f32 %v5625, %v5626
    %v5628 = vrot.slane %v5627, 1
    %v5629 = vmax.f32 %v5627, %v5628
    %v5630 = vsel %vm4992, %v4710, -inf
    %v5631 = vrot.slane %v5630, 4
    %v5632 = vmax.f32 %v5630, %v5631
    %v5633 = vrot.slane %v5632, 2
    %v5634 = vmax.f32 %v5632, %v5633
    %v5635 = vrot.slane %v5634, 1
    %v5636 = vmax.f32 %v5634, %v5635
    %v5637 = vsel %vm4992, %v4718, -inf
    %v5638 = vrot.slane %v5637, 4
    %v5639 = vmax.f32 %v5637, %v5638
    %v5640 = vrot.slane %v5639, 2
    %v5641 = vmax.f32 %v5639, %v5640
    %v5642 = vrot.slane %v5641, 1
    %v5643 = vmax.f32 %v5641, %v5642
    %v5644 = vsel %vm4992, %v4726, -inf
    %v5645 = vrot.slane %v5644, 4
    %v5646 = vmax.f32 %v5644, %v5645
    %v5647 = vrot.slane %v5646, 2
    %v5648 = vmax.f32 %v5646, %v5647
    %v5649 = vrot.slane %v5648, 1
    %v5650 = vmax.f32 %v5648, %v5649
    %v5651 = vsel %vm4992, %v4725, -inf
    %v5652 = vrot.slane %v5651, 4
    %v5653 = vmax.f32 %v5651, %v5652
    %v5654 = vrot.slane %v5653, 2
    %v5655 = vmax.f32 %v5653, %v5654
    %v5656 = vrot.slane %v5655, 1
    %v5657 = vmax.f32 %v5655, %v5656
    %v5658 = vsel %vm4992, %v4727, -inf
    %v5659 = vrot.slane %v5658, 4
    %v5660 = vmax.f32 %v5658, %v5659
    %v5661 = vrot.slane %v5660, 2
    %v5662 = vmax.f32 %v5660, %v5661
    %v5663 = vrot.slane %v5662, 1
    %v5664 = vmax.f32 %v5662, %v5663
    %v5665 = vsel %vm4992, %v4735, -inf
    %v5666 = vrot.slane %v5665, 4
    %v5667 = vmax.f32 %v5665, %v5666
    %v5668 = vrot.slane %v5667, 2
    %v5669 = vmax.f32 %v5667, %v5668
    %v5670 = vrot.slane %v5669, 1
    %v5671 = vmax.f32 %v5669, %v5670
    %v5672 = vsel %vm4992, %v4743, -inf
    %v5673 = vrot.slane %v5672, 4
    %v5674 = vmax.f32 %v5672, %v5673
    %v5675 = vrot.slane %v5674, 2
    %v5676 = vmax.f32 %v5674, %v5675
    %v5677 = vrot.slane %v5676, 1
    %v5678 = vmax.f32 %v5676, %v5677
    %v5679 = vsel %vm4992, %v4742, -inf
    %v5680 = vrot.slane %v5679, 4
    %v5681 = vmax.f32 %v5679, %v5680
    %v5682 = vrot.slane %v5681, 2
    %v5683 = vmax.f32 %v5681, %v5682
    %v5684 = vrot.slane %v5683, 1
    %v5685 = vmax.f32 %v5683, %v5684
    %v5686 = vsel %vm4992, %v4744, -inf
    %v5687 = vrot.slane %v5686, 4
    %v5688 = vmax.f32 %v5686, %v5687
    %v5689 = vrot.slane %v5688, 2
    %v5690 = vmax.f32 %v5688, %v5689
    %v5691 = vrot.slane %v5690, 1
    %v5692 = vmax.f32 %v5690, %v5691
    %v5693 = vsel %vm4992, %v4752, -inf
    %v5694 = vrot.slane %v5693, 4
    %v5695 = vmax.f32 %v5693, %v5694
    %v5696 = vrot.slane %v5695, 2
    %v5697 = vmax.f32 %v5695, %v5696
    %v5698 = vrot.slane %v5697, 1
    %v5699 = vmax.f32 %v5697, %v5698
    %v5700 = vsel %vm4992, %v4760, -inf
    %v5701 = vrot.slane %v5700, 4
    %v5702 = vmax.f32 %v5700, %v5701
    %v5703 = vrot.slane %v5702, 2
    %v5704 = vmax.f32 %v5702, %v5703
    %v5705 = vrot.slane %v5704, 1
    %v5706 = vmax.f32 %v5704, %v5705
    %v5707 = vsel %vm4992, %v4759, -inf
    %v5708 = vrot.slane %v5707, 4
    %v5709 = vmax.f32 %v5707, %v5708
    %v5710 = vrot.slane %v5709, 2
    %v5711 = vmax.f32 %v5709, %v5710
    %v5712 = vrot.slane %v5711, 1
    %v5713 = vmax.f32 %v5711, %v5712
    %v5714 = vsel %vm4992, %v4761, -inf
    %v5715 = vrot.slane %v5714, 4
    %v5716 = vmax.f32 %v5714, %v5715
    %v5717 = vrot.slane %v5716, 2
    %v5718 = vmax.f32 %v5716, %v5717
    %v5719 = vrot.slane %v5718, 1
    %v5720 = vmax.f32 %v5718, %v5719
    %v5721 = vsel %vm4992, %v4769, -inf
    %v5722 = vrot.slane %v5721, 4
    %v5723 = vmax.f32 %v5721, %v5722
    %v5724 = vrot.slane %v5723, 2
    %v5725 = vmax.f32 %v5723, %v5724
    %v5726 = vrot.slane %v5725, 1
    %v5727 = vmax.f32 %v5725, %v5726
    %v5728 = vsel %vm4992, %v4777, -inf
    %v5729 = vrot.slane %v5728, 4
    %v5730 = vmax.f32 %v5728, %v5729
    %v5731 = vrot.slane %v5730, 2
    %v5732 = vmax.f32 %v5730, %v5731
    %v5733 = vrot.slane %v5732, 1
    %v5734 = vmax.f32 %v5732, %v5733
    %v5735 = vsel %vm4992, %v4776, -inf
    %v5736 = vrot.slane %v5735, 4
    %v5737 = vmax.f32 %v5735, %v5736
    %v5738 = vrot.slane %v5737, 2
    %v5739 = vmax.f32 %v5737, %v5738
    %v5740 = vrot.slane %v5739, 1
    %v5741 = vmax.f32 %v5739, %v5740
    %v5742 = vsel %vm4992, %v4778, -inf
    %v5743 = vrot.slane %v5742, 4
    %v5744 = vmax.f32 %v5742, %v5743
    %v5745 = vrot.slane %v5744, 2
    %v5746 = vmax.f32 %v5744, %v5745
    %v5747 = vrot.slane %v5746, 1
    %v5748 = vmax.f32 %v5746, %v5747
    %v5749 = vsel %vm4992, %v4786, -inf
    %v5750 = vrot.slane %v5749, 4
    %v5751 = vmax.f32 %v5749, %v5750
    %v5752 = vrot.slane %v5751, 2
    %v5753 = vmax.f32 %v5751, %v5752
    %v5754 = vrot.slane %v5753, 1
    %v5755 = vmax.f32 %v5753, %v5754
    %v5756 = vsel %vm4992, %v4794, -inf
    %v5757 = vrot.slane %v5756, 4
    %v5758 = vmax.f32 %v5756, %v5757
    %v5759 = vrot.slane %v5758, 2
    %v5760 = vmax.f32 %v5758, %v5759
    %v5761 = vrot.slane %v5760, 1
    %v5762 = vmax.f32 %v5760, %v5761
    %v5763 = vsel %vm4992, %v4793, -inf
    %v5764 = vrot.slane %v5763, 4
    %v5765 = vmax.f32 %v5763, %v5764
    %v5766 = vrot.slane %v5765, 2
    %v5767 = vmax.f32 %v5765, %v5766
    %v5768 = vrot.slane %v5767, 1
    %v5769 = vmax.f32 %v5767, %v5768
    %v5770 = vsel %vm4992, %v4795, -inf
    %v5771 = vrot.slane %v5770, 4
    %v5772 = vmax.f32 %v5770, %v5771
    %v5773 = vrot.slane %v5772, 2
    %v5774 = vmax.f32 %v5772, %v5773
    %v5775 = vrot.slane %v5774, 1
    %v5776 = vmax.f32 %v5774, %v5775
    %v5777 = vsel %vm4992, %v4803, -inf
    %v5778 = vrot.slane %v5777, 4
    %v5779 = vmax.f32 %v5777, %v5778
    %v5780 = vrot.slane %v5779, 2
    %v5781 = vmax.f32 %v5779, %v5780
    %v5782 = vrot.slane %v5781, 1
    %v5783 = vmax.f32 %v5781, %v5782
    %v5784 = vsel %vm4992, %v4811, -inf
    %v5785 = vrot.slane %v5784, 4
    %v5786 = vmax.f32 %v5784, %v5785
    %v5787 = vrot.slane %v5786, 2
    %v5788 = vmax.f32 %v5786, %v5787
    %v5789 = vrot.slane %v5788, 1
    %v5790 = vmax.f32 %v5788, %v5789
    %v5791 = vsel %vm4992, %v4810, -inf
    %v5792 = vrot.slane %v5791, 4
    %v5793 = vmax.f32 %v5791, %v5792
    %v5794 = vrot.slane %v5793, 2
    %v5795 = vmax.f32 %v5793, %v5794
    %v5796 = vrot.slane %v5795, 1
    %v5797 = vmax.f32 %v5795, %v5796
    %v5798 = vsel %vm4992, %v4812, -inf
    %v5799 = vrot.slane %v5798, 4
    %v5800 = vmax.f32 %v5798, %v5799
    %v5801 = vrot.slane %v5800, 2
    %v5802 = vmax.f32 %v5800, %v5801
    %v5803 = vrot.slane %v5802, 1
    %v5804 = vmax.f32 %v5802, %v5803
    %v5805 = vsel %vm4992, %v4820, -inf
    %v5806 = vrot.slane %v5805, 4
    %v5807 = vmax.f32 %v5805, %v5806
    %v5808 = vrot.slane %v5807, 2
    %v5809 = vmax.f32 %v5807, %v5808
    %v5810 = vrot.slane %v5809, 1
    %v5811 = vmax.f32 %v5809, %v5810
    %v5812 = vsel %vm4992, %v4828, -inf
    %v5813 = vrot.slane %v5812, 4
    %v5814 = vmax.f32 %v5812, %v5813
    %v5815 = vrot.slane %v5814, 2
    %v5816 = vmax.f32 %v5814, %v5815
    %v5817 = vrot.slane %v5816, 1
    %v5818 = vmax.f32 %v5816, %v5817
    %v5819 = vsel %vm4992, %v4827, -inf
    %v5820 = vrot.slane %v5819, 4
    %v5821 = vmax.f32 %v5819, %v5820
    %v5822 = vrot.slane %v5821, 2
    %v5823 = vmax.f32 %v5821, %v5822
    %v5824 = vrot.slane %v5823, 1
    %v5825 = vmax.f32 %v5823, %v5824
    %v5826 = vsel %vm4992, %v4829, -inf
    %v5827 = vrot.slane %v5826, 4
    %v5828 = vmax.f32 %v5826, %v5827
    %v5829 = vrot.slane %v5828, 2
    %v5830 = vmax.f32 %v5828, %v5829
    %v5831 = vrot.slane %v5830, 1
    %v5832 = vmax.f32 %v5830, %v5831
    %v5833 = vsel %vm4992, %v4837, -inf
    %v5834 = vrot.slane %v5833, 4
    %v5835 = vmax.f32 %v5833, %v5834
    %v5836 = vrot.slane %v5835, 2
    %v5837 = vmax.f32 %v5835, %v5836
    %v5838 = vrot.slane %v5837, 1
    %v5839 = vmax.f32 %v5837, %v5838
    %v5840 = vsel %vm4992, %v4845, -inf
    %v5841 = vrot.slane %v5840, 4
    %v5842 = vmax.f32 %v5840, %v5841
    %v5843 = vrot.slane %v5842, 2
    %v5844 = vmax.f32 %v5842, %v5843
    %v5845 = vrot.slane %v5844, 1
    %v5846 = vmax.f32 %v5844, %v5845
    %v5847 = vsel %vm4992, %v4844, -inf
    %v5848 = vrot.slane %v5847, 4
    %v5849 = vmax.f32 %v5847, %v5848
    %v5850 = vrot.slane %v5849, 2
    %v5851 = vmax.f32 %v5849, %v5850
    %v5852 = vrot.slane %v5851, 1
    %v5853 = vmax.f32 %v5851, %v5852
    %v5854 = vsel %vm4992, %v4846, -inf
    %v5855 = vrot.slane %v5854, 4
    %v5856 = vmax.f32 %v5854, %v5855
    %v5857 = vrot.slane %v5856, 2
    %v5858 = vmax.f32 %v5856, %v5857
    %v5859 = vrot.slane %v5858, 1
    %v5860 = vmax.f32 %v5858, %v5859
    %v5861 = vsel %vm4992, %v4854, -inf
    %v5862 = vrot.slane %v5861, 4
    %v5863 = vmax.f32 %v5861, %v5862
    %v5864 = vrot.slane %v5863, 2
    %v5865 = vmax.f32 %v5863, %v5864
    %v5866 = vrot.slane %v5865, 1
    %v5867 = vmax.f32 %v5865, %v5866
    %v5868 = vsel %vm4992, %v4862, -inf
    %v5869 = vrot.slane %v5868, 4
    %v5870 = vmax.f32 %v5868, %v5869
    %v5871 = vrot.slane %v5870, 2
    %v5872 = vmax.f32 %v5870, %v5871
    %v5873 = vrot.slane %v5872, 1
    %v5874 = vmax.f32 %v5872, %v5873
    %v5875 = vsel %vm4992, %v4861, -inf
    %v5876 = vrot.slane %v5875, 4
    %v5877 = vmax.f32 %v5875, %v5876
    %v5878 = vrot.slane %v5877, 2
    %v5879 = vmax.f32 %v5877, %v5878
    %v5880 = vrot.slane %v5879, 1
    %v5881 = vmax.f32 %v5879, %v5880
    %v5882 = vsel %vm4992, %v4863, -inf
    %v5883 = vrot.slane %v5882, 4
    %v5884 = vmax.f32 %v5882, %v5883
    %v5885 = vrot.slane %v5884, 2
    %v5886 = vmax.f32 %v5884, %v5885
    %v5887 = vrot.slane %v5886, 1
    %v5888 = vmax.f32 %v5886, %v5887
    %5889 = vst.msk [vmem:[#allocation4] sm:$0xff] %vm4191, 0.0
    %5890 = vst.msk [vmem:[#allocation4 + $0x8] sm:$0x3] %vm4992, 0.0
    %5891 = vst.msk [vmem:[#allocation4 + $0x10] sm:$0xff] %vm4191, 0.0
    %5892 = vst.msk [vmem:[#allocation4 + $0x18] sm:$0x3] %vm4992, 0.0
    %5893 = vst.msk [vmem:[#allocation4 + $0x20] sm:$0xff] %vm4191, 0.0
    %5894 = vst.msk [vmem:[#allocation4 + $0x28] sm:$0x3] %vm4992, 0.0
    %5895 = vst.msk [vmem:[#allocation4 + $0x30] sm:$0xff] %vm4191, 0.0
    %5896 = vst.msk [vmem:[#allocation4 + $0x38] sm:$0x3] %vm4992, 0.0
    %5897 = vst.msk [vmem:[#allocation4 + $0x40] sm:$0xff] %vm4191, 0.0
    %5898 = vst.msk [vmem:[#allocation4 + $0x48] sm:$0x3] %vm4992, 0.0
    %5899 = vst.msk [vmem:[#allocation4 + $0x50] sm:$0xff] %vm4191, 0.0
    %5900 = vst.msk [vmem:[#allocation4 + $0x58] sm:$0x3] %vm4992, 0.0
    %5901 = vst.msk [vmem:[#allocation4 + $0x60] sm:$0xff] %vm4191, 0.0
    %5902 = vst.msk [vmem:[#allocation4 + $0x68] sm:$0x3] %vm4992, 0.0
    %5903 = vst.msk [vmem:[#allocation4 + $0x70] sm:$0xff] %vm4191, 0.0
    %5904 = vst.msk [vmem:[#allocation4 + $0x78] sm:$0x3] %vm4992, 0.0
    %5905 = vst.msk [vmem:[#allocation4 + $0x80] sm:$0xff] %vm4191, 0.0
    %5906 = vst.msk [vmem:[#allocation4 + $0x88] sm:$0x3] %vm4992, 0.0
    %5907 = vst.msk [vmem:[#allocation4 + $0x90] sm:$0xff] %vm4191, 0.0
    %5908 = vst.msk [vmem:[#allocation4 + $0x98] sm:$0x3] %vm4992, 0.0
    %5909 = vst.msk [vmem:[#allocation4 + $0xa0] sm:$0xff] %vm4191, 0.0
    %5910 = vst.msk [vmem:[#allocation4 + $0xa8] sm:$0x3] %vm4992, 0.0
    %5911 = vst.msk [vmem:[#allocation4 + $0xb0] sm:$0xff] %vm4191, 0.0
    %5912 = vst.msk [vmem:[#allocation4 + $0xb8] sm:$0x3] %vm4992, 0.0
    %5913 = vst.msk [vmem:[#allocation4 + $0xc0] sm:$0xff] %vm4191, 0.0
    %5914 = vst.msk [vmem:[#allocation4 + $0xc8] sm:$0x3] %vm4992, 0.0
    %5915 = vst.msk [vmem:[#allocation4 + $0xd0] sm:$0xff] %vm4191, 0.0
    %5916 = vst.msk [vmem:[#allocation4 + $0xd8] sm:$0x3] %vm4992, 0.0
    %5917 = vst.msk [vmem:[#allocation4 + $0xe0] sm:$0xff] %vm4191, 0.0
    %5918 = vst.msk [vmem:[#allocation4 + $0xe8] sm:$0x3] %vm4992, 0.0
    %5919 = vst.msk [vmem:[#allocation4 + $0xf0] sm:$0xff] %vm4191, 0.0
    %5920 = vst.msk [vmem:[#allocation4 + $0xf8] sm:$0x3] %vm4992, 0.0
    %5921 = vst.msk [vmem:[#allocation4 + $0x100] sm:$0xff] %vm4191, 0.0
    %5922 = vst.msk [vmem:[#allocation4 + $0x108] sm:$0x3] %vm4992, 0.0
    %5923 = vst.msk [vmem:[#allocation4 + $0x110] sm:$0xff] %vm4191, 0.0
    %5924 = vst.msk [vmem:[#allocation4 + $0x118] sm:$0x3] %vm4992, 0.0
    %5925 = vst.msk [vmem:[#allocation4 + $0x120] sm:$0xff] %vm4191, 0.0
    %5926 = vst.msk [vmem:[#allocation4 + $0x128] sm:$0x3] %vm4992, 0.0
    %5927 = vst.msk [vmem:[#allocation4 + $0x130] sm:$0xff] %vm4191, 0.0
    %5928 = vst.msk [vmem:[#allocation4 + $0x138] sm:$0x3] %vm4992, 0.0
    %vm6057 = vcmask 1041409
    %v6058 = vsel %vm6057, %v5006, %v4999
    %vm6059 = vcmask 1042434
    %v6060 = vsel %vm6059, %v5013, %v6058
    %vm6061 = vcmask 1043459
    %v6062 = vsel %vm6061, %v5020, %v6060
    %vm6063 = vcmask 1044484
    %v6064 = vsel %vm6063, %v5027, %v6062
    %vm6065 = vcmask 1045509
    %v6066 = vsel %vm6065, %v5034, %v6064
    %vm6067 = vcmask 1046534
    %v6068 = vsel %vm6067, %v5041, %v6066
    %vm6069 = vcmask 1047559
    %v6070 = vsel %vm6069, %v5048, %v6068
    %v6071 = vsel %vm6057, %v5062, %v5055
    %v6072 = vsel %vm6059, %v5069, %v6071
    %v6073 = vsel %vm6061, %v5076, %v6072
    %v6074 = vsel %vm6063, %v5083, %v6073
    %v6075 = vsel %vm6065, %v5090, %v6074
    %v6076 = vsel %vm6067, %v5097, %v6075
    %v6077 = vsel %vm6069, %v5104, %v6076
    %v6078 = vsel %vm6057, %v5118, %v5111
    %v6079 = vsel %vm6059, %v5125, %v6078
    %v6080 = vsel %vm6061, %v5132, %v6079
    %v6081 = vsel %vm6063, %v5139, %v6080
    %v6082 = vsel %vm6065, %v5146, %v6081
    %v6083 = vsel %vm6067, %v5153, %v6082
    %v6084 = vsel %vm6069, %v5160, %v6083
    %v6085 = vsel %vm6057, %v5174, %v5167
    %v6086 = vsel %vm6059, %v5181, %v6085
    %v6087 = vsel %vm6061, %v5188, %v6086
    %v6088 = vsel %vm6063, %v5195, %v6087
    %v6089 = vsel %vm6065, %v5202, %v6088
    %v6090 = vsel %vm6067, %v5209, %v6089
    %v6091 = vsel %vm6069, %v5216, %v6090
    %v6092 = vsel %vm6057, %v5230, %v5223
    %v6093 = vsel %vm6059, %v5237, %v6092
    %v6094 = vsel %vm6061, %v5244, %v6093
    %v6095 = vsel %vm6063, %v5251, %v6094
    %v6096 = vsel %vm6065, %v5258, %v6095
    %v6097 = vsel %vm6067, %v5265, %v6096
    %v6098 = vsel %vm6069, %v5272, %v6097
    %v6099 = vsel %vm6057, %v5286, %v5279
    %v6100 = vsel %vm6059, %v5293, %v6099
    %v6101 = vsel %vm6061, %v5300, %v6100
    %v6102 = vsel %vm6063, %v5307, %v6101
    %v6103 = vsel %vm6065, %v5314, %v6102
    %v6104 = vsel %vm6067, %v5321, %v6103
    %v6105 = vsel %vm6069, %v5328, %v6104
    %v6106 = vsel %vm6057, %v5342, %v5335
    %v6107 = vsel %vm6059, %v5349, %v6106
    %v6108 = vsel %vm6061, %v5356, %v6107
    %v6109 = vsel %vm6063, %v5363, %v6108
    %v6110 = vsel %vm6065, %v5370, %v6109
    %v6111 = vsel %vm6067, %v5377, %v6110
    %v6112 = vsel %vm6069, %v5384, %v6111
    %v6113 = vsel %vm6057, %v5398, %v5391
    %v6114 = vsel %vm6059, %v5405, %v6113
    %v6115 = vsel %vm6061, %v5412, %v6114
    %v6116 = vsel %vm6063, %v5419, %v6115
    %v6117 = vsel %vm6065, %v5426, %v6116
    %v6118 = vsel %vm6067, %v5433, %v6117
    %v6119 = vsel %vm6069, %v5440, %v6118
    %v6120 = vsel %vm6057, %v5454, %v5447
    %v6121 = vsel %vm6059, %v5461, %v6120
    %v6122 = vsel %vm6061, %v5468, %v6121
    %v6123 = vsel %vm6063, %v5475, %v6122
    %v6124 = vsel %vm6065, %v5482, %v6123
    %v6125 = vsel %vm6067, %v5489, %v6124
    %v6126 = vsel %vm6069, %v5496, %v6125
    %v6127 = vsel %vm6057, %v5510, %v5503
    %v6128 = vsel %vm6059, %v5517, %v6127
    %v6129 = vsel %vm6061, %v5524, %v6128
    %v6130 = vsel %vm6063, %v5531, %v6129
    %v6131 = vsel %vm6065, %v5538, %v6130
    %v6132 = vsel %vm6067, %v5545, %v6131
    %v6133 = vsel %vm6069, %v5552, %v6132
    %v6134 = vsel %vm6057, %v5566, %v5559
    %v6135 = vsel %vm6059, %v5573, %v6134
    %v6136 = vsel %vm6061, %v5580, %v6135
    %v6137 = vsel %vm6063, %v5587, %v6136
    %v6138 = vsel %vm6065, %v5594, %v6137
    %v6139 = vsel %vm6067, %v5601, %v6138
    %v6140 = vsel %vm6069, %v5608, %v6139
    %v6141 = vsel %vm6057, %v5622, %v5615
    %v6142 = vsel %vm6059, %v5629, %v6141
    %v6143 = vsel %vm6061, %v5636, %v6142
    %v6144 = vsel %vm6063, %v5643, %v6143
    %v6145 = vsel %vm6065, %v5650, %v6144
    %v6146 = vsel %vm6067, %v5657, %v6145
    %v6147 = vsel %vm6069, %v5664, %v6146
    %v6148 = vsel %vm6057, %v5678, %v5671
    %v6149 = vsel %vm6059, %v5685, %v6148
    %v6150 = vsel %vm6061, %v5692, %v6149
    %v6151 = vsel %vm6063, %v5699, %v6150
    %v6152 = vsel %vm6065, %v5706, %v6151
    %v6153 = vsel %vm6067, %v5713, %v6152
    %v6154 = vsel %vm6069, %v5720, %v6153
    %v6155 = vsel %vm6057, %v5734, %v5727
    %v6156 = vsel %vm6059, %v5741, %v6155
    %v6157 = vsel %vm6061, %v5748, %v6156
    %v6158 = vsel %vm6063, %v5755, %v6157
    %v6159 = vsel %vm6065, %v5762, %v6158
    %v6160 = vsel %vm6067, %v5769, %v6159
    %v6161 = vsel %vm6069, %v5776, %v6160
    %v6162 = vsel %vm6057, %v5790, %v5783
    %v6163 = vsel %vm6059, %v5797, %v6162
    %v6164 = vsel %vm6061, %v5804, %v6163
    %v6165 = vsel %vm6063, %v5811, %v6164
    %v6166 = vsel %vm6065, %v5818, %v6165
    %v6167 = vsel %vm6067, %v5825, %v6166
    %v6168 = vsel %vm6069, %v5832, %v6167
    %v6169 = vsel %vm6057, %v5846, %v5839
    %v6170 = vsel %vm6059, %v5853, %v6169
    %v6171 = vsel %vm6061, %v5860, %v6170
    %v6172 = vsel %vm6063, %v5867, %v6171
    %v6173 = vsel %vm6065, %v5874, %v6172
    %v6174 = vsel %vm6067, %v5881, %v6173
    %v6175 = vsel %vm6069, %v5888, %v6174
    %s6192 = scalar_lea.vmem [#allocation4], 16
    %6193 = vst.msk [vmem:[%s6192 + $0x1] sm:$0xff] %vm4191, %v6070
    %6194 = vst.msk [vmem:[%s6192 + $0x11] sm:$0xff] %vm4191, %v6077
    %6195 = vst.msk [vmem:[%s6192 + $0x21] sm:$0xff] %vm4191, %v6084
    %6196 = vst.msk [vmem:[%s6192 + $0x31] sm:$0xff] %vm4191, %v6091
    %6197 = vst.msk [vmem:[%s6192 + $0x41] sm:$0xff] %vm4191, %v6098
    %6198 = vst.msk [vmem:[%s6192 + $0x51] sm:$0xff] %vm4191, %v6105
    %6199 = vst.msk [vmem:[%s6192 + $0x61] sm:$0xff] %vm4191, %v6112
    %6200 = vst.msk [vmem:[%s6192 + $0x71] sm:$0xff] %vm4191, %v6119
    %6201 = vst.msk [vmem:[%s6192 + $0xa1] sm:$0xff] %vm4191, %v6126
    %6202 = vst.msk [vmem:[%s6192 + $0xb1] sm:$0xff] %vm4191, %v6133
    %6203 = vst.msk [vmem:[%s6192 + $0xc1] sm:$0xff] %vm4191, %v6140
    %6204 = vst.msk [vmem:[%s6192 + $0xd1] sm:$0xff] %vm4191, %v6147
    %6205 = vst.msk [vmem:[%s6192 + $0xe1] sm:$0xff] %vm4191, %v6154
    %6206 = vst.msk [vmem:[%s6192 + $0xf1] sm:$0xff] %vm4191, %v6161
    %6207 = vst.msk [vmem:[%s6192 + $0x101] sm:$0xff] %vm4191, %v6168
    %6208 = vst.msk [vmem:[%s6192 + $0x111] sm:$0xff] %vm4191, %v6175
    %v6209 = vld [vmem:[#allocation4] sm:$0xff]
    %v6210 = vld [vmem:[#allocation4 + $0x10] sm:$0xff]
    %v6211 = vld [vmem:[#allocation4 + $0x20] sm:$0xff]
    %v6212 = vld [vmem:[#allocation4 + $0x30] sm:$0xff]
    %v6213 = vld [vmem:[#allocation4 + $0x40] sm:$0xff]
    %v6214 = vld [vmem:[#allocation4 + $0x50] sm:$0xff]
    %v6215 = vld [vmem:[#allocation4 + $0x60] sm:$0xff]
    %v6216 = vld [vmem:[#allocation4 + $0x70] sm:$0xff]
    %v6217 = vld [vmem:[#allocation4 + $0xa0] sm:$0xff]
    %v6218 = vld [vmem:[#allocation4 + $0xb0] sm:$0xff]
    %v6219 = vld [vmem:[#allocation4 + $0xc0] sm:$0xff]
    %v6220 = vld [vmem:[#allocation4 + $0xd0] sm:$0xff]
    %v6221 = vld [vmem:[#allocation4 + $0xe0] sm:$0xff]
    %v6222 = vld [vmem:[#allocation4 + $0xf0] sm:$0xff]
    %v6223 = vld [vmem:[#allocation4 + $0x100] sm:$0xff]
    %v6224 = vld [vmem:[#allocation4 + $0x110] sm:$0xff]
    %6225 = vst.msk [vmem:[#allocation5] sm:$0xff] %vm4191, %v6209
    %6226 = vst.msk [vmem:[#allocation5 + $0x8] sm:$0xff] %vm4191, %v6210
    %6227 = vst.msk [vmem:[#allocation5 + $0x10] sm:$0xff] %vm4191, %v6211
    %6228 = vst.msk [vmem:[#allocation5 + $0x18] sm:$0xff] %vm4191, %v6212
    %6229 = vst.msk [vmem:[#allocation5 + $0x20] sm:$0xff] %vm4191, %v6213
    %6230 = vst.msk [vmem:[#allocation5 + $0x28] sm:$0xff] %vm4191, %v6214
    %6231 = vst.msk [vmem:[#allocation5 + $0x30] sm:$0xff] %vm4191, %v6215
    %6232 = vst.msk [vmem:[#allocation5 + $0x38] sm:$0xff] %vm4191, %v6216
    %6233 = vst.msk [vmem:[#allocation5 + $0x40] sm:$0xff] %vm4191, %v6217
    %6234 = vst.msk [vmem:[#allocation5 + $0x48] sm:$0xff] %vm4191, %v6218
    %6235 = vst.msk [vmem:[#allocation5 + $0x50] sm:$0xff] %vm4191, %v6219
    %6236 = vst.msk [vmem:[#allocation5 + $0x58] sm:$0xff] %vm4191, %v6220
    %6237 = vst.msk [vmem:[#allocation5 + $0x60] sm:$0xff] %vm4191, %v6221
    %6238 = vst.msk [vmem:[#allocation5 + $0x68] sm:$0xff] %vm4191, %v6222
    %6239 = vst.msk [vmem:[#allocation5 + $0x70] sm:$0xff] %vm4191, %v6223
    %6240 = vst.msk [vmem:[#allocation5 + $0x78] sm:$0xff] %vm4191, %v6224
    %v6241 = vld [vmem:[#allocation4 + $0x1] sm:$0xff]
    %v6242 = vld [vmem:[#allocation4 + $0x11] sm:$0xff]
    %v6243 = vld [vmem:[#allocation4 + $0x21] sm:$0xff]
    %v6244 = vld [vmem:[#allocation4 + $0x31] sm:$0xff]
    %v6245 = vld [vmem:[#allocation4 + $0x41] sm:$0xff]
    %v6246 = vld [vmem:[#allocation4 + $0x51] sm:$0xff]
    %v6247 = vld [vmem:[#allocation4 + $0x61] sm:$0xff]
    %v6248 = vld [vmem:[#allocation4 + $0x71] sm:$0xff]
    %v6249 = vld [vmem:[#allocation4 + $0xa1] sm:$0xff]
    %v6250 = vld [vmem:[#allocation4 + $0xb1] sm:$0xff]
    %v6251 = vld [vmem:[#allocation4 + $0xc1] sm:$0xff]
    %v6252 = vld [vmem:[#allocation4 + $0xd1] sm:$0xff]
    %v6253 = vld [vmem:[#allocation4 + $0xe1] sm:$0xff]
    %v6254 = vld [vmem:[#allocation4 + $0xf1] sm:$0xff]
    %v6255 = vld [vmem:[#allocation4 + $0x101] sm:$0xff]
    %v6256 = vld [vmem:[#allocation4 + $0x111] sm:$0xff]
    %6273 = vrot.lane.b32.xlu0 %v6241, 8
    %v6274 = vpop.permute.xlu0 %6273
    %6275 = vrot.lane.b32.xlu0 %v6242, 8
    %v6276 = vpop.permute.xlu0 %6275
    %6277 = vrot.lane.b32.xlu0 %v6243, 8
    %v6278 = vpop.permute.xlu0 %6277
    %6279 = vrot.lane.b32.xlu0 %v6244, 8
    %v6280 = vpop.permute.xlu0 %6279
    %6281 = vrot.lane.b32.xlu0 %v6245, 8
    %v6282 = vpop.permute.xlu0 %6281
    %6283 = vrot.lane.b32.xlu0 %v6246, 8
    %v6284 = vpop.permute.xlu0 %6283
    %6285 = vrot.lane.b32.xlu0 %v6247, 8
    %v6286 = vpop.permute.xlu0 %6285
    %6287 = vrot.lane.b32.xlu0 %v6248, 8
    %v6288 = vpop.permute.xlu0 %6287
    %6289 = vrot.lane.b32.xlu0 %v6249, 8
    %v6290 = vpop.permute.xlu0 %6289
    %6291 = vrot.lane.b32.xlu0 %v6250, 8
    %v6292 = vpop.permute.xlu0 %6291
    %6293 = vrot.lane.b32.xlu0 %v6251, 8
    %v6294 = vpop.permute.xlu0 %6293
    %6295 = vrot.lane.b32.xlu0 %v6252, 8
    %v6296 = vpop.permute.xlu0 %6295
    %6297 = vrot.lane.b32.xlu0 %v6253, 8
    %v6298 = vpop.permute.xlu0 %6297
    %6299 = vrot.lane.b32.xlu0 %v6254, 8
    %v6300 = vpop.permute.xlu0 %6299
    %6301 = vrot.lane.b32.xlu0 %v6255, 8
    %v6302 = vpop.permute.xlu0 %6301
    %6303 = vrot.lane.b32.xlu0 %v6256, 8
    %v6304 = vpop.permute.xlu0 %6303
    %vm6321 = vcmask 130112
    %6322 = vst.msk [vmem:[#allocation5] sm:$0xff] %vm6321, %v6274
    %6323 = vst.msk [vmem:[#allocation5 + $0x8] sm:$0xff] %vm6321, %v6276
    %6324 = vst.msk [vmem:[#allocation5 + $0x10] sm:$0xff] %vm6321, %v6278
    %6325 = vst.msk [vmem:[#allocation5 + $0x18] sm:$0xff] %vm6321, %v6280
    %6326 = vst.msk [vmem:[#allocation5 + $0x20] sm:$0xff] %vm6321, %v6282
    %6327 = vst.msk [vmem:[#allocation5 + $0x28] sm:$0xff] %vm6321, %v6284
    %6328 = vst.msk [vmem:[#allocation5 + $0x30] sm:$0xff] %vm6321, %v6286
    %6329 = vst.msk [vmem:[#allocation5 + $0x38] sm:$0xff] %vm6321, %v6288
    %6330 = vst.msk [vmem:[#allocation5 + $0x40] sm:$0xff] %vm6321, %v6290
    %6331 = vst.msk [vmem:[#allocation5 + $0x48] sm:$0xff] %vm6321, %v6292
    %6332 = vst.msk [vmem:[#allocation5 + $0x50] sm:$0xff] %vm6321, %v6294
    %6333 = vst.msk [vmem:[#allocation5 + $0x58] sm:$0xff] %vm6321, %v6296
    %6334 = vst.msk [vmem:[#allocation5 + $0x60] sm:$0xff] %vm6321, %v6298
    %6335 = vst.msk [vmem:[#allocation5 + $0x68] sm:$0xff] %vm6321, %v6300
    %6336 = vst.msk [vmem:[#allocation5 + $0x70] sm:$0xff] %vm6321, %v6302
    %6337 = vst.msk [vmem:[#allocation5 + $0x78] sm:$0xff] %vm6321, %v6304
    %v6338 = vld [vmem:[#allocation4 + $0x2] sm:$0xff]
    %v6339 = vld [vmem:[#allocation4 + $0x12] sm:$0xff]
    %v6340 = vld [vmem:[#allocation4 + $0x22] sm:$0xff]
    %v6341 = vld [vmem:[#allocation4 + $0x32] sm:$0xff]
    %v6342 = vld [vmem:[#allocation4 + $0x42] sm:$0xff]
    %v6343 = vld [vmem:[#allocation4 + $0x52] sm:$0xff]
    %v6344 = vld [vmem:[#allocation4 + $0x62] sm:$0xff]
    %v6345 = vld [vmem:[#allocation4 + $0x72] sm:$0xff]
    %v6346 = vld [vmem:[#allocation4 + $0xa2] sm:$0xff]
    %v6347 = vld [vmem:[#allocation4 + $0xb2] sm:$0xff]
    %v6348 = vld [vmem:[#allocation4 + $0xc2] sm:$0xff]
    %v6349 = vld [vmem:[#allocation4 + $0xd2] sm:$0xff]
    %v6350 = vld [vmem:[#allocation4 + $0xe2] sm:$0xff]
    %v6351 = vld [vmem:[#allocation4 + $0xf2] sm:$0xff]
    %v6352 = vld [vmem:[#allocation4 + $0x102] sm:$0xff]
    %v6353 = vld [vmem:[#allocation4 + $0x112] sm:$0xff]
    %6370 = vrot.lane.b32.xlu0 %v6338, 16
    %v6371 = vpop.permute.xlu0 %6370
    %6372 = vrot.lane.b32.xlu0 %v6339, 16
    %v6373 = vpop.permute.xlu0 %6372
    %6374 = vrot.lane.b32.xlu0 %v6340, 16
    %v6375 = vpop.permute.xlu0 %6374
    %6376 = vrot.lane.b32.xlu0 %v6341, 16
    %v6377 = vpop.permute.xlu0 %6376
    %6378 = vrot.lane.b32.xlu0 %v6342, 16
    %v6379 = vpop.permute.xlu0 %6378
    %6380 = vrot.lane.b32.xlu0 %v6343, 16
    %v6381 = vpop.permute.xlu0 %6380
    %6382 = vrot.lane.b32.xlu0 %v6344, 16
    %v6383 = vpop.permute.xlu0 %6382
    %6384 = vrot.lane.b32.xlu0 %v6345, 16
    %v6385 = vpop.permute.xlu0 %6384
    %6386 = vrot.lane.b32.xlu0 %v6346, 16
    %v6387 = vpop.permute.xlu0 %6386
    %6388 = vrot.lane.b32.xlu0 %v6347, 16
    %v6389 = vpop.permute.xlu0 %6388
    %6390 = vrot.lane.b32.xlu0 %v6348, 16
    %v6391 = vpop.permute.xlu0 %6390
    %6392 = vrot.lane.b32.xlu0 %v6349, 16
    %v6393 = vpop.permute.xlu0 %6392
    %6394 = vrot.lane.b32.xlu0 %v6350, 16
    %v6395 = vpop.permute.xlu0 %6394
    %6396 = vrot.lane.b32.xlu0 %v6351, 16
    %v6397 = vpop.permute.xlu0 %6396
    %6398 = vrot.lane.b32.xlu0 %v6352, 16
    %v6399 = vpop.permute.xlu0 %6398
    %6400 = vrot.lane.b32.xlu0 %v6353, 16
    %v6401 = vpop.permute.xlu0 %6400
    %vm6418 = vcmask 195712
    %6419 = vst.msk [vmem:[#allocation5] sm:$0xff] %vm6418, %v6371
    %6420 = vst.msk [vmem:[#allocation5 + $0x8] sm:$0xff] %vm6418, %v6373
    %6421 = vst.msk [vmem:[#allocation5 + $0x10] sm:$0xff] %vm6418, %v6375
    %6422 = vst.msk [vmem:[#allocation5 + $0x18] sm:$0xff] %vm6418, %v6377
    %6423 = vst.msk [vmem:[#allocation5 + $0x20] sm:$0xff] %vm6418, %v6379
    %6424 = vst.msk [vmem:[#allocation5 + $0x28] sm:$0xff] %vm6418, %v6381
    %6425 = vst.msk [vmem:[#allocation5 + $0x30] sm:$0xff] %vm6418, %v6383
    %6426 = vst.msk [vmem:[#allocation5 + $0x38] sm:$0xff] %vm6418, %v6385
    %6427 = vst.msk [vmem:[#allocation5 + $0x40] sm:$0xff] %vm6418, %v6387
    %6428 = vst.msk [vmem:[#allocation5 + $0x48] sm:$0xff] %vm6418, %v6389
    %6429 = vst.msk [vmem:[#allocation5 + $0x50] sm:$0xff] %vm6418, %v6391
    %6430 = vst.msk [vmem:[#allocation5 + $0x58] sm:$0xff] %vm6418, %v6393
    %6431 = vst.msk [vmem:[#allocation5 + $0x60] sm:$0xff] %vm6418, %v6395
    %6432 = vst.msk [vmem:[#allocation5 + $0x68] sm:$0xff] %vm6418, %v6397
    %6433 = vst.msk [vmem:[#allocation5 + $0x70] sm:$0xff] %vm6418, %v6399
    %6434 = vst.msk [vmem:[#allocation5 + $0x78] sm:$0xff] %vm6418, %v6401
    %v6435 = vld [vmem:[%s6192] sm:$0xff]
    %v6436 = vld [vmem:[%s6192 + $0x10] sm:$0xff]
    %v6437 = vld [vmem:[%s6192 + $0x20] sm:$0xff]
    %v6438 = vld [vmem:[%s6192 + $0x30] sm:$0xff]
    %v6439 = vld [vmem:[%s6192 + $0x40] sm:$0xff]
    %v6440 = vld [vmem:[%s6192 + $0x50] sm:$0xff]
    %v6441 = vld [vmem:[%s6192 + $0x60] sm:$0xff]
    %v6442 = vld [vmem:[%s6192 + $0x70] sm:$0xff]
    %v6443 = vld [vmem:[%s6192 + $0xa0] sm:$0xff]
    %v6444 = vld [vmem:[%s6192 + $0xb0] sm:$0xff]
    %v6445 = vld [vmem:[%s6192 + $0xc0] sm:$0xff]
    %v6446 = vld [vmem:[%s6192 + $0xd0] sm:$0xff]
    %v6447 = vld [vmem:[%s6192 + $0xe0] sm:$0xff]
    %v6448 = vld [vmem:[%s6192 + $0xf0] sm:$0xff]
    %v6449 = vld [vmem:[%s6192 + $0x100] sm:$0xff]
    %v6450 = vld [vmem:[%s6192 + $0x110] sm:$0xff]
    %6467 = vrot.lane.b32.xlu0 %v6435, 24
    %v6468 = vpop.permute.xlu0 %6467
    %6469 = vrot.lane.b32.xlu0 %v6436, 24
    %v6470 = vpop.permute.xlu0 %6469
    %6471 = vrot.lane.b32.xlu0 %v6437, 24
    %v6472 = vpop.permute.xlu0 %6471
    %6473 = vrot.lane.b32.xlu0 %v6438, 24
    %v6474 = vpop.permute.xlu0 %6473
    %6475 = vrot.lane.b32.xlu0 %v6439, 24
    %v6476 = vpop.permute.xlu0 %6475
    %6477 = vrot.lane.b32.xlu0 %v6440, 24
    %v6478 = vpop.permute.xlu0 %6477
    %6479 = vrot.lane.b32.xlu0 %v6441, 24
    %v6480 = vpop.permute.xlu0 %6479
    %6481 = vrot.lane.b32.xlu0 %v6442, 24
    %v6482 = vpop.permute.xlu0 %6481
    %6483 = vrot.lane.b32.xlu0 %v6443, 24
    %v6484 = vpop.permute.xlu0 %6483
    %6485 = vrot.lane.b32.xlu0 %v6444, 24
    %v6486 = vpop.permute.xlu0 %6485
    %6487 = vrot.lane.b32.xlu0 %v6445, 24
    %v6488 = vpop.permute.xlu0 %6487
    %6489 = vrot.lane.b32.xlu0 %v6446, 24
    %v6490 = vpop.permute.xlu0 %6489
    %6491 = vrot.lane.b32.xlu0 %v6447, 24
    %v6492 = vpop.permute.xlu0 %6491
    %6493 = vrot.lane.b32.xlu0 %v6448, 24
    %v6494 = vpop.permute.xlu0 %6493
    %6495 = vrot.lane.b32.xlu0 %v6449, 24
    %v6496 = vpop.permute.xlu0 %6495
    %6497 = vrot.lane.b32.xlu0 %v6450, 24
    %v6498 = vpop.permute.xlu0 %6497
    %vm6515 = vcmask 261312
    %6516 = vst.msk [vmem:[#allocation5] sm:$0xff] %vm6515, %v6468
    %6517 = vst.msk [vmem:[#allocation5 + $0x8] sm:$0xff] %vm6515, %v6470
    %6518 = vst.msk [vmem:[#allocation5 + $0x10] sm:$0xff] %vm6515, %v6472
    %6519 = vst.msk [vmem:[#allocation5 + $0x18] sm:$0xff] %vm6515, %v6474
    %6520 = vst.msk [vmem:[#allocation5 + $0x20] sm:$0xff] %vm6515, %v6476
    %6521 = vst.msk [vmem:[#allocation5 + $0x28] sm:$0xff] %vm6515, %v6478
    %6522 = vst.msk [vmem:[#allocation5 + $0x30] sm:$0xff] %vm6515, %v6480
    %6523 = vst.msk [vmem:[#allocation5 + $0x38] sm:$0xff] %vm6515, %v6482
    %6524 = vst.msk [vmem:[#allocation5 + $0x40] sm:$0xff] %vm6515, %v6484
    %6525 = vst.msk [vmem:[#allocation5 + $0x48] sm:$0xff] %vm6515, %v6486
    %6526 = vst.msk [vmem:[#allocation5 + $0x50] sm:$0xff] %vm6515, %v6488
    %6527 = vst.msk [vmem:[#allocation5 + $0x58] sm:$0xff] %vm6515, %v6490
    %6528 = vst.msk [vmem:[#allocation5 + $0x60] sm:$0xff] %vm6515, %v6492
    %6529 = vst.msk [vmem:[#allocation5 + $0x68] sm:$0xff] %vm6515, %v6494
    %6530 = vst.msk [vmem:[#allocation5 + $0x70] sm:$0xff] %vm6515, %v6496
    %6531 = vst.msk [vmem:[#allocation5 + $0x78] sm:$0xff] %vm6515, %v6498
    %v6532 = vld [vmem:[%s6192 + $0x1] sm:$0xff]
    %v6533 = vld [vmem:[%s6192 + $0x11] sm:$0xff]
    %v6534 = vld [vmem:[%s6192 + $0x21] sm:$0xff]
    %v6535 = vld [vmem:[%s6192 + $0x31] sm:$0xff]
    %v6536 = vld [vmem:[%s6192 + $0x41] sm:$0xff]
    %v6537 = vld [vmem:[%s6192 + $0x51] sm:$0xff]
    %v6538 = vld [vmem:[%s6192 + $0x61] sm:$0xff]
    %v6539 = vld [vmem:[%s6192 + $0x71] sm:$0xff]
    %v6540 = vld [vmem:[%s6192 + $0xa1] sm:$0xff]
    %v6541 = vld [vmem:[%s6192 + $0xb1] sm:$0xff]
    %v6542 = vld [vmem:[%s6192 + $0xc1] sm:$0xff]
    %v6543 = vld [vmem:[%s6192 + $0xd1] sm:$0xff]
    %v6544 = vld [vmem:[%s6192 + $0xe1] sm:$0xff]
    %v6545 = vld [vmem:[%s6192 + $0xf1] sm:$0xff]
    %v6546 = vld [vmem:[%s6192 + $0x101] sm:$0xff]
    %v6547 = vld [vmem:[%s6192 + $0x111] sm:$0xff]
    %6564 = vrot.lane.b32.xlu0 %v6532, 32
    %v6565 = vpop.permute.xlu0 %6564
    %6566 = vrot.lane.b32.xlu0 %v6533, 32
    %v6567 = vpop.permute.xlu0 %6566
    %6568 = vrot.lane.b32.xlu0 %v6534, 32
    %v6569 = vpop.permute.xlu0 %6568
    %6570 = vrot.lane.b32.xlu0 %v6535, 32
    %v6571 = vpop.permute.xlu0 %6570
    %6572 = vrot.lane.b32.xlu0 %v6536, 32
    %v6573 = vpop.permute.xlu0 %6572
    %6574 = vrot.lane.b32.xlu0 %v6537, 32
    %v6575 = vpop.permute.xlu0 %6574
    %6576 = vrot.lane.b32.xlu0 %v6538, 32
    %v6577 = vpop.permute.xlu0 %6576
    %6578 = vrot.lane.b32.xlu0 %v6539, 32
    %v6579 = vpop.permute.xlu0 %6578
    %6580 = vrot.lane.b32.xlu0 %v6540, 32
    %v6581 = vpop.permute.xlu0 %6580
    %6582 = vrot.lane.b32.xlu0 %v6541, 32
    %v6583 = vpop.permute.xlu0 %6582
    %6584 = vrot.lane.b32.xlu0 %v6542, 32
    %v6585 = vpop.permute.xlu0 %6584
    %6586 = vrot.lane.b32.xlu0 %v6543, 32
    %v6587 = vpop.permute.xlu0 %6586
    %6588 = vrot.lane.b32.xlu0 %v6544, 32
    %v6589 = vpop.permute.xlu0 %6588
    %6590 = vrot.lane.b32.xlu0 %v6545, 32
    %v6591 = vpop.permute.xlu0 %6590
    %6592 = vrot.lane.b32.xlu0 %v6546, 32
    %v6593 = vpop.permute.xlu0 %6592
    %6594 = vrot.lane.b32.xlu0 %v6547, 32
    %v6595 = vpop.permute.xlu0 %6594
    %vm6612 = vcmask 326912
    %6613 = vst.msk [vmem:[#allocation5] sm:$0xff] %vm6612, %v6565
    %6614 = vst.msk [vmem:[#allocation5 + $0x8] sm:$0xff] %vm6612, %v6567
    %6615 = vst.msk [vmem:[#allocation5 + $0x10] sm:$0xff] %vm6612, %v6569
    %6616 = vst.msk [vmem:[#allocation5 + $0x18] sm:$0xff] %vm6612, %v6571
    %6617 = vst.msk [vmem:[#allocation5 + $0x20] sm:$0xff] %vm6612, %v6573
    %6618 = vst.msk [vmem:[#allocation5 + $0x28] sm:$0xff] %vm6612, %v6575
    %6619 = vst.msk [vmem:[#allocation5 + $0x30] sm:$0xff] %vm6612, %v6577
    %6620 = vst.msk [vmem:[#allocation5 + $0x38] sm:$0xff] %vm6612, %v6579
    %6621 = vst.msk [vmem:[#allocation5 + $0x40] sm:$0xff] %vm6612, %v6581
    %6622 = vst.msk [vmem:[#allocation5 + $0x48] sm:$0xff] %vm6612, %v6583
    %6623 = vst.msk [vmem:[#allocation5 + $0x50] sm:$0xff] %vm6612, %v6585
    %6624 = vst.msk [vmem:[#allocation5 + $0x58] sm:$0xff] %vm6612, %v6587
    %6625 = vst.msk [vmem:[#allocation5 + $0x60] sm:$0xff] %vm6612, %v6589
    %6626 = vst.msk [vmem:[#allocation5 + $0x68] sm:$0xff] %vm6612, %v6591
    %6627 = vst.msk [vmem:[#allocation5 + $0x70] sm:$0xff] %vm6612, %v6593
    %6628 = vst.msk [vmem:[#allocation5 + $0x78] sm:$0xff] %vm6612, %v6595
    %v6629 = vld [vmem:[%s6192 + $0x2] sm:$0xff]
    %v6630 = vld [vmem:[%s6192 + $0x12] sm:$0xff]
    %v6631 = vld [vmem:[%s6192 + $0x22] sm:$0xff]
    %v6632 = vld [vmem:[%s6192 + $0x32] sm:$0xff]
    %v6633 = vld [vmem:[%s6192 + $0x42] sm:$0xff]
    %v6634 = vld [vmem:[%s6192 + $0x52] sm:$0xff]
    %v6635 = vld [vmem:[%s6192 + $0x62] sm:$0xff]
    %v6636 = vld [vmem:[%s6192 + $0x72] sm:$0xff]
    %v6637 = vld [vmem:[%s6192 + $0xa2] sm:$0xff]
    %v6638 = vld [vmem:[%s6192 + $0xb2] sm:$0xff]
    %v6639 = vld [vmem:[%s6192 + $0xc2] sm:$0xff]
    %v6640 = vld [vmem:[%s6192 + $0xd2] sm:$0xff]
    %v6641 = vld [vmem:[%s6192 + $0xe2] sm:$0xff]
    %v6642 = vld [vmem:[%s6192 + $0xf2] sm:$0xff]
    %v6643 = vld [vmem:[%s6192 + $0x102] sm:$0xff]
    %v6644 = vld [vmem:[%s6192 + $0x112] sm:$0xff]
    %6661 = vrot.lane.b32.xlu0 %v6629, 40
    %v6662 = vpop.permute.xlu0 %6661
    %6663 = vrot.lane.b32.xlu0 %v6630, 40
    %v6664 = vpop.permute.xlu0 %6663
    %6665 = vrot.lane.b32.xlu0 %v6631, 40
    %v6666 = vpop.permute.xlu0 %6665
    %6667 = vrot.lane.b32.xlu0 %v6632, 40
    %v6668 = vpop.permute.xlu0 %6667
    %6669 = vrot.lane.b32.xlu0 %v6633, 40
    %v6670 = vpop.permute.xlu0 %6669
    %6671 = vrot.lane.b32.xlu0 %v6634, 40
    %v6672 = vpop.permute.xlu0 %6671
    %6673 = vrot.lane.b32.xlu0 %v6635, 40
    %v6674 = vpop.permute.xlu0 %6673
    %6675 = vrot.lane.b32.xlu0 %v6636, 40
    %v6676 = vpop.permute.xlu0 %6675
    %6677 = vrot.lane.b32.xlu0 %v6637, 40
    %v6678 = vpop.permute.xlu0 %6677
    %6679 = vrot.lane.b32.xlu0 %v6638, 40
    %v6680 = vpop.permute.xlu0 %6679
    %6681 = vrot.lane.b32.xlu0 %v6639, 40
    %v6682 = vpop.permute.xlu0 %6681
    %6683 = vrot.lane.b32.xlu0 %v6640, 40
    %v6684 = vpop.permute.xlu0 %6683
    %6685 = vrot.lane.b32.xlu0 %v6641, 40
    %v6686 = vpop.permute.xlu0 %6685
    %6687 = vrot.lane.b32.xlu0 %v6642, 40
    %v6688 = vpop.permute.xlu0 %6687
    %6689 = vrot.lane.b32.xlu0 %v6643, 40
    %v6690 = vpop.permute.xlu0 %6689
    %6691 = vrot.lane.b32.xlu0 %v6644, 40
    %v6692 = vpop.permute.xlu0 %6691
    %vm6709 = vcmask 392512
    %6710 = vst.msk [vmem:[#allocation5] sm:$0xff] %vm6709, %v6662
    %6711 = vst.msk [vmem:[#allocation5 + $0x8] sm:$0xff] %vm6709, %v6664
    %6712 = vst.msk [vmem:[#allocation5 + $0x10] sm:$0xff] %vm6709, %v6666
    %6713 = vst.msk [vmem:[#allocation5 + $0x18] sm:$0xff] %vm6709, %v6668
    %6714 = vst.msk [vmem:[#allocation5 + $0x20] sm:$0xff] %vm6709, %v6670
    %6715 = vst.msk [vmem:[#allocation5 + $0x28] sm:$0xff] %vm6709, %v6672
    %6716 = vst.msk [vmem:[#allocation5 + $0x30] sm:$0xff] %vm6709, %v6674
    %6717 = vst.msk [vmem:[#allocation5 + $0x38] sm:$0xff] %vm6709, %v6676
    %6718 = vst.msk [vmem:[#allocation5 + $0x40] sm:$0xff] %vm6709, %v6678
    %6719 = vst.msk [vmem:[#allocation5 + $0x48] sm:$0xff] %vm6709, %v6680
    %6720 = vst.msk [vmem:[#allocation5 + $0x50] sm:$0xff] %vm6709, %v6682
    %6721 = vst.msk [vmem:[#allocation5 + $0x58] sm:$0xff] %vm6709, %v6684
    %6722 = vst.msk [vmem:[#allocation5 + $0x60] sm:$0xff] %vm6709, %v6686
    %6723 = vst.msk [vmem:[#allocation5 + $0x68] sm:$0xff] %vm6709, %v6688
    %6724 = vst.msk [vmem:[#allocation5 + $0x70] sm:$0xff] %vm6709, %v6690
    %6725 = vst.msk [vmem:[#allocation5 + $0x78] sm:$0xff] %vm6709, %v6692
    %s6726 = scalar_lea.vmem [#allocation4], 32
    %v6727 = vld [vmem:[%s6726] sm:$0xff]
    %v6728 = vld [vmem:[%s6726 + $0x10] sm:$0xff]
    %v6729 = vld [vmem:[%s6726 + $0x20] sm:$0xff]
    %v6730 = vld [vmem:[%s6726 + $0x30] sm:$0xff]
    %v6731 = vld [vmem:[%s6726 + $0x40] sm:$0xff]
    %v6732 = vld [vmem:[%s6726 + $0x50] sm:$0xff]
    %v6733 = vld [vmem:[%s6726 + $0x60] sm:$0xff]
    %v6734 = vld [vmem:[%s6726 + $0x70] sm:$0xff]
    %v6735 = vld [vmem:[%s6726 + $0xa0] sm:$0xff]
    %v6736 = vld [vmem:[%s6726 + $0xb0] sm:$0xff]
    %v6737 = vld [vmem:[%s6726 + $0xc0] sm:$0xff]
    %v6738 = vld [vmem:[%s6726 + $0xd0] sm:$0xff]
    %v6739 = vld [vmem:[%s6726 + $0xe0] sm:$0xff]
    %v6740 = vld [vmem:[%s6726 + $0xf0] sm:$0xff]
    %v6741 = vld [vmem:[%s6726 + $0x100] sm:$0xff]
    %v6742 = vld [vmem:[%s6726 + $0x110] sm:$0xff]
    %6759 = vrot.lane.b32.xlu0 %v6727, 48
    %v6760 = vpop.permute.xlu0 %6759
    %6761 = vrot.lane.b32.xlu0 %v6728, 48
    %v6762 = vpop.permute.xlu0 %6761
    %6763 = vrot.lane.b32.xlu0 %v6729, 48
    %v6764 = vpop.permute.xlu0 %6763
    %6765 = vrot.lane.b32.xlu0 %v6730, 48
    %v6766 = vpop.permute.xlu0 %6765
    %6767 = vrot.lane.b32.xlu0 %v6731, 48
    %v6768 = vpop.permute.xlu0 %6767
    %6769 = vrot.lane.b32.xlu0 %v6732, 48
    %v6770 = vpop.permute.xlu0 %6769
    %6771 = vrot.lane.b32.xlu0 %v6733, 48
    %v6772 = vpop.permute.xlu0 %6771
    %6773 = vrot.lane.b32.xlu0 %v6734, 48
    %v6774 = vpop.permute.xlu0 %6773
    %6775 = vrot.lane.b32.xlu0 %v6735, 48
    %v6776 = vpop.permute.xlu0 %6775
    %6777 = vrot.lane.b32.xlu0 %v6736, 48
    %v6778 = vpop.permute.xlu0 %6777
    %6779 = vrot.lane.b32.xlu0 %v6737, 48
    %v6780 = vpop.permute.xlu0 %6779
    %6781 = vrot.lane.b32.xlu0 %v6738, 48
    %v6782 = vpop.permute.xlu0 %6781
    %6783 = vrot.lane.b32.xlu0 %v6739, 48
    %v6784 = vpop.permute.xlu0 %6783
    %6785 = vrot.lane.b32.xlu0 %v6740, 48
    %v6786 = vpop.permute.xlu0 %6785
    %6787 = vrot.lane.b32.xlu0 %v6741, 48
    %v6788 = vpop.permute.xlu0 %6787
    %6789 = vrot.lane.b32.xlu0 %v6742, 48
    %v6790 = vpop.permute.xlu0 %6789
    %vm6807 = vcmask 458112
    %6808 = vst.msk [vmem:[#allocation5] sm:$0xff] %vm6807, %v6760
    %6809 = vst.msk [vmem:[#allocation5 + $0x8] sm:$0xff] %vm6807, %v6762
    %6810 = vst.msk [vmem:[#allocation5 + $0x10] sm:$0xff] %vm6807, %v6764
    %6811 = vst.msk [vmem:[#allocation5 + $0x18] sm:$0xff] %vm6807, %v6766
    %6812 = vst.msk [vmem:[#allocation5 + $0x20] sm:$0xff] %vm6807, %v6768
    %6813 = vst.msk [vmem:[#allocation5 + $0x28] sm:$0xff] %vm6807, %v6770
    %6814 = vst.msk [vmem:[#allocation5 + $0x30] sm:$0xff] %vm6807, %v6772
    %6815 = vst.msk [vmem:[#allocation5 + $0x38] sm:$0xff] %vm6807, %v6774
    %6816 = vst.msk [vmem:[#allocation5 + $0x40] sm:$0xff] %vm6807, %v6776
    %6817 = vst.msk [vmem:[#allocation5 + $0x48] sm:$0xff] %vm6807, %v6778
    %6818 = vst.msk [vmem:[#allocation5 + $0x50] sm:$0xff] %vm6807, %v6780
    %6819 = vst.msk [vmem:[#allocation5 + $0x58] sm:$0xff] %vm6807, %v6782
    %6820 = vst.msk [vmem:[#allocation5 + $0x60] sm:$0xff] %vm6807, %v6784
    %6821 = vst.msk [vmem:[#allocation5 + $0x68] sm:$0xff] %vm6807, %v6786
    %6822 = vst.msk [vmem:[#allocation5 + $0x70] sm:$0xff] %vm6807, %v6788
    %6823 = vst.msk [vmem:[#allocation5 + $0x78] sm:$0xff] %vm6807, %v6790
    %v6824 = vld [vmem:[%s6726 + $0x1] sm:$0xff]
    %v6825 = vld [vmem:[%s6726 + $0x11] sm:$0xff]
    %v6826 = vld [vmem:[%s6726 + $0x21] sm:$0xff]
    %v6827 = vld [vmem:[%s6726 + $0x31] sm:$0xff]
    %v6828 = vld [vmem:[%s6726 + $0x41] sm:$0xff]
    %v6829 = vld [vmem:[%s6726 + $0x51] sm:$0xff]
    %v6830 = vld [vmem:[%s6726 + $0x61] sm:$0xff]
    %v6831 = vld [vmem:[%s6726 + $0x71] sm:$0xff]
    %v6832 = vld [vmem:[%s6726 + $0xa1] sm:$0xff]
    %v6833 = vld [vmem:[%s6726 + $0xb1] sm:$0xff]
    %v6834 = vld [vmem:[%s6726 + $0xc1] sm:$0xff]
    %v6835 = vld [vmem:[%s6726 + $0xd1] sm:$0xff]
    %v6836 = vld [vmem:[%s6726 + $0xe1] sm:$0xff]
    %v6837 = vld [vmem:[%s6726 + $0xf1] sm:$0xff]
    %v6838 = vld [vmem:[%s6726 + $0x101] sm:$0xff]
    %v6839 = vld [vmem:[%s6726 + $0x111] sm:$0xff]
    %6856 = vrot.lane.b32.xlu0 %v6824, 56
    %v6857 = vpop.permute.xlu0 %6856
    %6858 = vrot.lane.b32.xlu0 %v6825, 56
    %v6859 = vpop.permute.xlu0 %6858
    %6860 = vrot.lane.b32.xlu0 %v6826, 56
    %v6861 = vpop.permute.xlu0 %6860
    %6862 = vrot.lane.b32.xlu0 %v6827, 56
    %v6863 = vpop.permute.xlu0 %6862
    %6864 = vrot.lane.b32.xlu0 %v6828, 56
    %v6865 = vpop.permute.xlu0 %6864
    %6866 = vrot.lane.b32.xlu0 %v6829, 56
    %v6867 = vpop.permute.xlu0 %6866
    %6868 = vrot.lane.b32.xlu0 %v6830, 56
    %v6869 = vpop.permute.xlu0 %6868
    %6870 = vrot.lane.b32.xlu0 %v6831, 56
    %v6871 = vpop.permute.xlu0 %6870
    %6872 = vrot.lane.b32.xlu0 %v6832, 56
    %v6873 = vpop.permute.xlu0 %6872
    %6874 = vrot.lane.b32.xlu0 %v6833, 56
    %v6875 = vpop.permute.xlu0 %6874
    %6876 = vrot.lane.b32.xlu0 %v6834, 56
    %v6877 = vpop.permute.xlu0 %6876
    %6878 = vrot.lane.b32.xlu0 %v6835, 56
    %v6879 = vpop.permute.xlu0 %6878
    %6880 = vrot.lane.b32.xlu0 %v6836, 56
    %v6881 = vpop.permute.xlu0 %6880
    %6882 = vrot.lane.b32.xlu0 %v6837, 56
    %v6883 = vpop.permute.xlu0 %6882
    %6884 = vrot.lane.b32.xlu0 %v6838, 56
    %v6885 = vpop.permute.xlu0 %6884
    %6886 = vrot.lane.b32.xlu0 %v6839, 56
    %v6887 = vpop.permute.xlu0 %6886
    %vm6904 = vcmask 523712
    %6905 = vst.msk [vmem:[#allocation5] sm:$0xff] %vm6904, %v6857
    %6906 = vst.msk [vmem:[#allocation5 + $0x8] sm:$0xff] %vm6904, %v6859
    %6907 = vst.msk [vmem:[#allocation5 + $0x10] sm:$0xff] %vm6904, %v6861
    %6908 = vst.msk [vmem:[#allocation5 + $0x18] sm:$0xff] %vm6904, %v6863
    %6909 = vst.msk [vmem:[#allocation5 + $0x20] sm:$0xff] %vm6904, %v6865
    %6910 = vst.msk [vmem:[#allocation5 + $0x28] sm:$0xff] %vm6904, %v6867
    %6911 = vst.msk [vmem:[#allocation5 + $0x30] sm:$0xff] %vm6904, %v6869
    %6912 = vst.msk [vmem:[#allocation5 + $0x38] sm:$0xff] %vm6904, %v6871
    %6913 = vst.msk [vmem:[#allocation5 + $0x40] sm:$0xff] %vm6904, %v6873
    %6914 = vst.msk [vmem:[#allocation5 + $0x48] sm:$0xff] %vm6904, %v6875
    %6915 = vst.msk [vmem:[#allocation5 + $0x50] sm:$0xff] %vm6904, %v6877
    %6916 = vst.msk [vmem:[#allocation5 + $0x58] sm:$0xff] %vm6904, %v6879
    %6917 = vst.msk [vmem:[#allocation5 + $0x60] sm:$0xff] %vm6904, %v6881
    %6918 = vst.msk [vmem:[#allocation5 + $0x68] sm:$0xff] %vm6904, %v6883
    %6919 = vst.msk [vmem:[#allocation5 + $0x70] sm:$0xff] %vm6904, %v6885
    %6920 = vst.msk [vmem:[#allocation5 + $0x78] sm:$0xff] %vm6904, %v6887
    %v6921 = vld [vmem:[%s6726 + $0x2] sm:$0xff]
    %v6922 = vld [vmem:[%s6726 + $0x12] sm:$0xff]
    %v6923 = vld [vmem:[%s6726 + $0x22] sm:$0xff]
    %v6924 = vld [vmem:[%s6726 + $0x32] sm:$0xff]
    %v6925 = vld [vmem:[%s6726 + $0x42] sm:$0xff]
    %v6926 = vld [vmem:[%s6726 + $0x52] sm:$0xff]
    %v6927 = vld [vmem:[%s6726 + $0x62] sm:$0xff]
    %v6928 = vld [vmem:[%s6726 + $0x72] sm:$0xff]
    %v6929 = vld [vmem:[%s6726 + $0xa2] sm:$0xff]
    %v6930 = vld [vmem:[%s6726 + $0xb2] sm:$0xff]
    %v6931 = vld [vmem:[%s6726 + $0xc2] sm:$0xff]
    %v6932 = vld [vmem:[%s6726 + $0xd2] sm:$0xff]
    %v6933 = vld [vmem:[%s6726 + $0xe2] sm:$0xff]
    %v6934 = vld [vmem:[%s6726 + $0xf2] sm:$0xff]
    %v6935 = vld [vmem:[%s6726 + $0x102] sm:$0xff]
    %v6936 = vld [vmem:[%s6726 + $0x112] sm:$0xff]
    %6953 = vrot.lane.b32.xlu0 %v6921, 64
    %v6954 = vpop.permute.xlu0 %6953
    %6955 = vrot.lane.b32.xlu0 %v6922, 64
    %v6956 = vpop.permute.xlu0 %6955
    %6957 = vrot.lane.b32.xlu0 %v6923, 64
    %v6958 = vpop.permute.xlu0 %6957
    %6959 = vrot.lane.b32.xlu0 %v6924, 64
    %v6960 = vpop.permute.xlu0 %6959
    %6961 = vrot.lane.b32.xlu0 %v6925, 64
    %v6962 = vpop.permute.xlu0 %6961
    %6963 = vrot.lane.b32.xlu0 %v6926, 64
    %v6964 = vpop.permute.xlu0 %6963
    %6965 = vrot.lane.b32.xlu0 %v6927, 64
    %v6966 = vpop.permute.xlu0 %6965
    %6967 = vrot.lane.b32.xlu0 %v6928, 64
    %v6968 = vpop.permute.xlu0 %6967
    %6969 = vrot.lane.b32.xlu0 %v6929, 64
    %v6970 = vpop.permute.xlu0 %6969
    %6971 = vrot.lane.b32.xlu0 %v6930, 64
    %v6972 = vpop.permute.xlu0 %6971
    %6973 = vrot.lane.b32.xlu0 %v6931, 64
    %v6974 = vpop.permute.xlu0 %6973
    %6975 = vrot.lane.b32.xlu0 %v6932, 64
    %v6976 = vpop.permute.xlu0 %6975
    %6977 = vrot.lane.b32.xlu0 %v6933, 64
    %v6978 = vpop.permute.xlu0 %6977
    %6979 = vrot.lane.b32.xlu0 %v6934, 64
    %v6980 = vpop.permute.xlu0 %6979
    %6981 = vrot.lane.b32.xlu0 %v6935, 64
    %v6982 = vpop.permute.xlu0 %6981
    %6983 = vrot.lane.b32.xlu0 %v6936, 64
    %v6984 = vpop.permute.xlu0 %6983
    %vm7001 = vcmask 589312
    %7002 = vst.msk [vmem:[#allocation5] sm:$0xff] %vm7001, %v6954
    %7003 = vst.msk [vmem:[#allocation5 + $0x8] sm:$0xff] %vm7001, %v6956
    %7004 = vst.msk [vmem:[#allocation5 + $0x10] sm:$0xff] %vm7001, %v6958
    %7005 = vst.msk [vmem:[#allocation5 + $0x18] sm:$0xff] %vm7001, %v6960
    %7006 = vst.msk [vmem:[#allocation5 + $0x20] sm:$0xff] %vm7001, %v6962
    %7007 = vst.msk [vmem:[#allocation5 + $0x28] sm:$0xff] %vm7001, %v6964
    %7008 = vst.msk [vmem:[#allocation5 + $0x30] sm:$0xff] %vm7001, %v6966
    %7009 = vst.msk [vmem:[#allocation5 + $0x38] sm:$0xff] %vm7001, %v6968
    %7010 = vst.msk [vmem:[#allocation5 + $0x40] sm:$0xff] %vm7001, %v6970
    %7011 = vst.msk [vmem:[#allocation5 + $0x48] sm:$0xff] %vm7001, %v6972
    %7012 = vst.msk [vmem:[#allocation5 + $0x50] sm:$0xff] %vm7001, %v6974
    %7013 = vst.msk [vmem:[#allocation5 + $0x58] sm:$0xff] %vm7001, %v6976
    %7014 = vst.msk [vmem:[#allocation5 + $0x60] sm:$0xff] %vm7001, %v6978
    %7015 = vst.msk [vmem:[#allocation5 + $0x68] sm:$0xff] %vm7001, %v6980
    %7016 = vst.msk [vmem:[#allocation5 + $0x70] sm:$0xff] %vm7001, %v6982
    %7017 = vst.msk [vmem:[#allocation5 + $0x78] sm:$0xff] %vm7001, %v6984
    %v7018 = vld [vmem:[#allocation5] sm:$0xff]
    %v7019 = vld [vmem:[#allocation5 + $0x8] sm:$0xff]
    %v7020 = vld [vmem:[#allocation5 + $0x10] sm:$0xff]
    %v7021 = vld [vmem:[#allocation5 + $0x18] sm:$0xff]
    %v7022 = vld [vmem:[#allocation5 + $0x20] sm:$0xff]
    %v7023 = vld [vmem:[#allocation5 + $0x28] sm:$0xff]
    %v7024 = vld [vmem:[#allocation5 + $0x30] sm:$0xff]
    %v7025 = vld [vmem:[#allocation5 + $0x38] sm:$0xff]
    %v7026 = vld [vmem:[#allocation5 + $0x40] sm:$0xff]
    %v7027 = vld [vmem:[#allocation5 + $0x48] sm:$0xff]
    %v7028 = vld [vmem:[#allocation5 + $0x50] sm:$0xff]
    %v7029 = vld [vmem:[#allocation5 + $0x58] sm:$0xff]
    %v7030 = vld [vmem:[#allocation5 + $0x60] sm:$0xff]
    %v7031 = vld [vmem:[#allocation5 + $0x68] sm:$0xff]
    %v7032 = vld [vmem:[#allocation5 + $0x70] sm:$0xff]
    %v7033 = vld [vmem:[#allocation5 + $0x78] sm:$0xff]
    %v7034 = vld [vmem:[%s3] sm:$0xff]
    %v7035 = vld [vmem:[%s3 + $0x8] sm:$0xff]
    %v7036 = vld [vmem:[%s3 + $0x10] sm:$0xff]
    %v7037 = vld [vmem:[%s3 + $0x18] sm:$0xff]
    %v7038 = vld [vmem:[%s3 + $0x20] sm:$0xff]
    %v7039 = vld [vmem:[%s3 + $0x28] sm:$0xff]
    %v7040 = vld [vmem:[%s3 + $0x30] sm:$0xff]
    %v7041 = vld [vmem:[%s3 + $0x38] sm:$0xff]
    %v7042 = vld [vmem:[%s3 + $0x40] sm:$0xff]
    %v7043 = vld [vmem:[%s4] sm:$0x1]
    %v7045 = vlaneseq
    %v7046 = vshrl.u32 %v7045, 7
    %v7047 = vsub.s32 0, %v7046
    %v7048 = vrot.slane %v7043, %v7047
    %vm7050 = vcmask 588800
    %v7052 = vsel %vm7050, %v7018, 0
    %v7055 = vsel %vm7050, %v7019, 0
    %v7058 = vsel %vm7050, %v7020, 0
    %v7061 = vsel %vm7050, %v7021, 0
    %v7064 = vsel %vm7050, %v7022, 0
    %v7067 = vsel %vm7050, %v7023, 0
    %v7070 = vsel %vm7050, %v7024, 0
    %v7073 = vsel %vm7050, %v7025, 0
    %v7076 = vsel %vm7050, %v7026, 0
    %v7079 = vsel %vm7050, %v7027, 0
    %v7082 = vsel %vm7050, %v7028, 0
    %v7085 = vsel %vm7050, %v7029, 0
    %v7088 = vsel %vm7050, %v7030, 0
    %v7091 = vsel %vm7050, %v7031, 0
    %v7094 = vsel %vm7050, %v7032, 0
    %v7097 = vsel %vm7050, %v7033, 0
    %7099 = vmatprep.subr.mxu0 0.0
    %7100 = vmatpush1.msra.mxu0 %v7034
    %7101 = vmatprep.subr.mxu0 0.0
    %7102 = vmatpush1.msra.mxu0 %v7035
    %7103 = vmatprep.subr.mxu0 0.0
    %7104 = vmatpush1.msra.mxu0 %v7036
    %7105 = vmatprep.subr.mxu0 0.0
    %7106 = vmatpush1.msra.mxu0 %v7037
    %7107 = vmatprep.subr.mxu0 0.0
    %7108 = vmatpush1.msra.mxu0 %v7038
    %7109 = vmatprep.subr.mxu0 0.0
    %7110 = vmatpush1.msra.mxu0 %v7039
    %7111 = vmatprep.subr.mxu0 0.0
    %7112 = vmatpush1.msra.mxu0 %v7040
    %7113 = vmatprep.subr.mxu0 0.0
    %7114 = vmatpush1.msra.mxu0 %v7041
    %7115 = vmatprep.subr.mxu0 0.0
    %7116 = vmatpush1.msra.mxu0 %v7042
    %7117 = vmatprep.subr.mxu0 0.0
    %7118 = vmatpush1.msra.mxu0 0.0
    %7119 = vmatprep.subr.mxu0 0.0
    %7120 = vmatpush1.msra.mxu0 0.0
    %7121 = vmatprep.subr.mxu0 0.0
    %7122 = vmatpush1.msra.mxu0 0.0
    %7123 = vmatprep.subr.mxu0 0.0
    %7124 = vmatpush1.msra.mxu0 0.0
    %7125 = vmatprep.subr.mxu0 0.0
    %7126 = vmatpush1.msra.mxu0 0.0
    %7127 = vmatprep.subr.mxu0 0.0
    %7128 = vmatpush1.msra.mxu0 0.0
    %7129 = vmatprep.subr.mxu0 0.0
    %7130 = vmatpush1.msra.mxu0 0.0
    %7131 = vmatprep.subr.mxu0 0.0
    %7132 = vmatpush1.msra.mxu0 0.0
    %7133 = vmatprep.subr.mxu0 0.0
    %7134 = vmatpush1.msra.mxu0 0.0
    %7135 = vmatprep.subr.mxu0 0.0
    %7136 = vmatpush1.msra.mxu0 0.0
    %7137 = vmatprep.subr.mxu0 0.0
    %7138 = vmatpush1.msra.mxu0 0.0
    %7139 = vmatprep.subr.mxu0 0.0
    %7140 = vmatpush1.msra.mxu0 0.0
    %7141 = vmatprep.subr.mxu0 0.0
    %7142 = vmatpush1.msra.mxu0 0.0
    %7143 = vmatprep.subr.mxu0 0.0
    %7144 = vmatpush1.msra.mxu0 0.0
    %7145 = vmatprep.subr.mxu0 0.0
    %7146 = vmatpush1.msra.mxu0 0.0
    %7147 = vmatprep.subr.mxu0 0.0
    %7148 = vmatpush1.msra.mxu0 0.0
    %7149 = vmatprep.subr.mxu0 0.0
    %7150 = vmatpush1.msra.mxu0 0.0
    %7151 = vmatprep.subr.mxu0 0.0
    %7152 = vmatpush1.msra.mxu0 0.0
    %7153 = vmatprep.subr.mxu0 0.0
    %7154 = vmatpush1.msra.mxu0 0.0
    %7155 = vmatprep.subr.mxu0 0.0
    %7156 = vmatpush1.msra.mxu0 0.0
    %7157 = vmatprep.subr.mxu0 0.0
    %7158 = vmatpush1.msra.mxu0 0.0
    %7159 = vmatprep.subr.mxu0 0.0
    %7160 = vmatpush1.msra.mxu0 0.0
    %7161 = vmatprep.subr.mxu0 0.0
    %7162 = vmatpush1.msra.mxu0 0.0
    %7163 = vmatprep.mubr.f32.mxu0 0.0
    %7164 = vmatmul.mubr.f32.gmra.mrb[0].mxu0 %v7052
    %v7165 = vpop.f32.mrb[0].mxu0
    %v7166 = vadd.f32 %v7048, %v7165
    %v7167 = vpop.f32.mrb[0].mxu0
    %7168 = vmatprep.mubr.f32.mxu0 0.0
    %7169 = vmatmul.mubr.f32.gmra.mrb[0].mxu0 %v7055
    %v7170 = vpop.f32.mrb[0].mxu0
    %v7171 = vadd.f32 %v7048, %v7170
    %v7172 = vpop.f32.mrb[0].mxu0
    %7173 = vmatprep.mubr.f32.mxu0 0.0
    %7174 = vmatmul.mubr.f32.gmra.mrb[0].mxu0 %v7058
    %v7175 = vpop.f32.mrb[0].mxu0
    %v7176 = vadd.f32 %v7048, %v7175
    %v7177 = vpop.f32.mrb[0].mxu0
    %7178 = vmatprep.mubr.f32.mxu0 0.0
    %7179 = vmatmul.mubr.f32.gmra.mrb[0].mxu0 %v7061
    %v7180 = vpop.f32.mrb[0].mxu0
    %v7181 = vadd.f32 %v7048, %v7180
    %v7182 = vpop.f32.mrb[0].mxu0
    %7183 = vmatprep.mubr.f32.mxu0 0.0
    %7184 = vmatmul.mubr.f32.gmra.mrb[0].mxu0 %v7064
    %v7185 = vpop.f32.mrb[0].mxu0
    %v7186 = vadd.f32 %v7048, %v7185
    %v7187 = vpop.f32.mrb[0].mxu0
    %7188 = vmatprep.mubr.f32.mxu0 0.0
    %7189 = vmatmul.mubr.f32.gmra.mrb[0].mxu0 %v7067
    %v7190 = vpop.f32.mrb[0].mxu0
    %v7191 = vadd.f32 %v7048, %v7190
    %v7192 = vpop.f32.mrb[0].mxu0
    %7193 = vmatprep.mubr.f32.mxu0 0.0
    %7194 = vmatmul.mubr.f32.gmra.mrb[0].mxu0 %v7070
    %v7195 = vpop.f32.mrb[0].mxu0
    %v7196 = vadd.f32 %v7048, %v7195
    %v7197 = vpop.f32.mrb[0].mxu0
    %7198 = vmatprep.mubr.f32.mxu0 0.0
    %7199 = vmatmul.mubr.f32.gmra.mrb[0].mxu0 %v7073
    %v7200 = vpop.f32.mrb[0].mxu0
    %v7201 = vadd.f32 %v7048, %v7200
    %v7202 = vpop.f32.mrb[0].mxu0
    %7203 = vmatprep.mubr.f32.mxu0 0.0
    %7204 = vmatmul.mubr.f32.gmra.mrb[0].mxu0 %v7076
    %v7205 = vpop.f32.mrb[0].mxu0
    %v7206 = vadd.f32 %v7048, %v7205
    %v7207 = vpop.f32.mrb[0].mxu0
    %7208 = vmatprep.mubr.f32.mxu0 0.0
    %7209 = vmatmul.mubr.f32.gmra.mrb[0].mxu0 %v7079
    %v7210 = vpop.f32.mrb[0].mxu0
    %v7211 = vadd.f32 %v7048, %v7210
    %v7212 = vpop.f32.mrb[0].mxu0
    %7213 = vmatprep.mubr.f32.mxu0 0.0
    %7214 = vmatmul.mubr.f32.gmra.mrb[0].mxu0 %v7082
    %v7215 = vpop.f32.mrb[0].mxu0
    %v7216 = vadd.f32 %v7048, %v7215
    %v7217 = vpop.f32.mrb[0].mxu0
    %7218 = vmatprep.mubr.f32.mxu0 0.0
    %7219 = vmatmul.mubr.f32.gmra.mrb[0].mxu0 %v7085
    %v7220 = vpop.f32.mrb[0].mxu0
    %v7221 = vadd.f32 %v7048, %v7220
    %v7222 = vpop.f32.mrb[0].mxu0
    %7223 = vmatprep.mubr.f32.mxu0 0.0
    %7224 = vmatmul.mubr.f32.gmra.mrb[0].mxu0 %v7088
    %v7225 = vpop.f32.mrb[0].mxu0
    %v7226 = vadd.f32 %v7048, %v7225
    %v7227 = vpop.f32.mrb[0].mxu0
    %7228 = vmatprep.mubr.f32.mxu0 0.0
    %7229 = vmatmul.mubr.f32.gmra.mrb[0].mxu0 %v7091
    %v7230 = vpop.f32.mrb[0].mxu0
    %v7231 = vadd.f32 %v7048, %v7230
    %v7232 = vpop.f32.mrb[0].mxu0
    %7233 = vmatprep.mubr.f32.mxu0 0.0
    %7234 = vmatmul.mubr.f32.gmra.mrb[0].mxu0 %v7094
    %v7235 = vpop.f32.mrb[0].mxu0
    %v7236 = vadd.f32 %v7048, %v7235
    %v7237 = vpop.f32.mrb[0].mxu0
    %7238 = vmatprep.mubr.f32.mxu0 0.0
    %7239 = vmatmul.mubr.f32.gmra.mrb[0].mxu0 %v7097
    %v7240 = vpop.f32.mrb[0].mxu0
    %v7241 = vadd.f32 %v7048, %v7240
    %v7242 = vpop.f32.mrb[0].mxu0
    %7243 = vdwg.mxu0
    %v7244 = vmax.f32 %v7166, 0.0
    %v7245 = vmax.f32 %v7171, 0.0
    %v7246 = vmax.f32 %v7176, 0.0
    %v7247 = vmax.f32 %v7181, 0.0
    %v7248 = vmax.f32 %v7186, 0.0
    %v7249 = vmax.f32 %v7191, 0.0
    %v7250 = vmax.f32 %v7196, 0.0
    %v7251 = vmax.f32 %v7201, 0.0
    %v7252 = vmax.f32 %v7206, 0.0
    %v7253 = vmax.f32 %v7211, 0.0
    %v7254 = vmax.f32 %v7216, 0.0
    %v7255 = vmax.f32 %v7221, 0.0
    %v7256 = vmax.f32 %v7226, 0.0
    %v7257 = vmax.f32 %v7231, 0.0
    %v7258 = vmax.f32 %v7236, 0.0
    %v7259 = vmax.f32 %v7241, 0.0
    %v7260 = vsel %vm4191, %v7244, -inf
    %v7261 = vsel %vm4191, %v7245, -inf
    %v7262 = vmax.f32 %v7260, %v7261
    %v7263 = vsel %vm4191, %v7246, -inf
    %v7264 = vsel %vm4191, %v7247, -inf
    %v7265 = vmax.f32 %v7263, %v7264
    %v7266 = vsel %vm4191, %v7248, -inf
    %v7267 = vsel %vm4191, %v7249, -inf
    %v7268 = vmax.f32 %v7266, %v7267
    %v7269 = vsel %vm4191, %v7250, -inf
    %v7270 = vsel %vm4191, %v7251, -inf
    %v7271 = vmax.f32 %v7269, %v7270
    %v7272 = vsel %vm4191, %v7252, -inf
    %v7273 = vsel %vm4191, %v7253, -inf
    %v7274 = vmax.f32 %v7272, %v7273
    %v7275 = vsel %vm4191, %v7254, -inf
    %v7276 = vsel %vm4191, %v7255, -inf
    %v7277 = vmax.f32 %v7275, %v7276
    %v7278 = vsel %vm4191, %v7256, -inf
    %v7279 = vsel %vm4191, %v7257, -inf
    %v7280 = vmax.f32 %v7278, %v7279
    %v7281 = vsel %vm4191, %v7258, -inf
    %v7282 = vsel %vm4191, %v7259, -inf
    %v7283 = vmax.f32 %v7281, %v7282
    %v7292 = vcombine.high %v7262, %v7262
    %v7294 = vunpack.c.l.s4 1983009808
    %v7295 = vunpack.c.0.s8 %v7294
    %v7296 = vlaneseq
    %v7297 = vshrl.u32 %v7296, 7
    %v7298 = vsub.s32 %v7295, %v7297
    %v7299 = vrot.slane %v7262, %v7298
    %v7301 = vunpack.c.l.s4 1983009808
    %v7302 = vunpack.c.0.s8 %v7301
    %v7303 = vlaneseq
    %v7304 = vshrl.u32 %v7303, 7
    %v7305 = vsub.s32 %v7302, %v7304
    %v7306 = vrot.slane %v7292, %v7305
    %v7307 = vcombine.high %v7299, %v7299
    %v7308 = vcombine.high %v7306, %v7306
    %v7309 = vcombine.high %v7265, %v7265
    %v7311 = vunpack.c.l.s4 1983009808
    %v7312 = vunpack.c.0.s8 %v7311
    %v7313 = vlaneseq
    %v7314 = vshrl.u32 %v7313, 7
    %v7315 = vsub.s32 %v7312, %v7314
    %v7316 = vrot.slane %v7265, %v7315
    %v7318 = vunpack.c.l.s4 1983009808
    %v7319 = vunpack.c.0.s8 %v7318
    %v7320 = vlaneseq
    %v7321 = vshrl.u32 %v7320, 7
    %v7322 = vsub.s32 %v7319, %v7321
    %v7323 = vrot.slane %v7309, %v7322
    %v7324 = vcombine.high %v7316, %v7316
    %v7325 = vcombine.high %v7323, %v7323
    %v7326 = vcombine.high %v7268, %v7268
    %v7328 = vunpack.c.l.s4 1983009808
    %v7329 = vunpack.c.0.s8 %v7328
    %v7330 = vlaneseq
    %v7331 = vshrl.u32 %v7330, 7
    %v7332 = vsub.s32 %v7329, %v7331
    %v7333 = vrot.slane %v7268, %v7332
    %v7335 = vunpack.c.l.s4 1983009808
    %v7336 = vunpack.c.0.s8 %v7335
    %v7337 = vlaneseq
    %v7338 = vshrl.u32 %v7337, 7
    %v7339 = vsub.s32 %v7336, %v7338
    %v7340 = vrot.slane %v7326, %v7339
    %v7341 = vcombine.high %v7333, %v7333
    %v7342 = vcombine.high %v7340, %v7340
    %v7343 = vcombine.high %v7271, %v7271
    %v7345 = vunpack.c.l.s4 1983009808
    %v7346 = vunpack.c.0.s8 %v7345
    %v7347 = vlaneseq
    %v7348 = vshrl.u32 %v7347, 7
    %v7349 = vsub.s32 %v7346, %v7348
    %v7350 = vrot.slane %v7271, %v7349
    %v7352 = vunpack.c.l.s4 1983009808
    %v7353 = vunpack.c.0.s8 %v7352
    %v7354 = vlaneseq
    %v7355 = vshrl.u32 %v7354, 7
    %v7356 = vsub.s32 %v7353, %v7355
    %v7357 = vrot.slane %v7343, %v7356
    %v7358 = vcombine.high %v7350, %v7350
    %v7359 = vcombine.high %v7357, %v7357
    %v7360 = vcombine.high %v7274, %v7274
    %v7362 = vunpack.c.l.s4 1983009808
    %v7363 = vunpack.c.0.s8 %v7362
    %v7364 = vlaneseq
    %v7365 = vshrl.u32 %v7364, 7
    %v7366 = vsub.s32 %v7363, %v7365
    %v7367 = vrot.slane %v7274, %v7366
    %v7369 = vunpack.c.l.s4 1983009808
    %v7370 = vunpack.c.0.s8 %v7369
    %v7371 = vlaneseq
    %v7372 = vshrl.u32 %v7371, 7
    %v7373 = vsub.s32 %v7370, %v7372
    %v7374 = vrot.slane %v7360, %v7373
    %v7375 = vcombine.high %v7367, %v7367
    %v7376 = vcombine.high %v7374, %v7374
    %v7377 = vcombine.high %v7277, %v7277
    %v7379 = vunpack.c.l.s4 1983009808
    %v7380 = vunpack.c.0.s8 %v7379
    %v7381 = vlaneseq
    %v7382 = vshrl.u32 %v7381, 7
    %v7383 = vsub.s32 %v7380, %v7382
    %v7384 = vrot.slane %v7277, %v7383
    %v7386 = vunpack.c.l.s4 1983009808
    %v7387 = vunpack.c.0.s8 %v7386
    %v7388 = vlaneseq
    %v7389 = vshrl.u32 %v7388, 7
    %v7390 = vsub.s32 %v7387, %v7389
    %v7391 = vrot.slane %v7377, %v7390
    %v7392 = vcombine.high %v7384, %v7384
    %v7393 = vcombine.high %v7391, %v7391
    %v7394 = vcombine.high %v7280, %v7280
    %v7396 = vunpack.c.l.s4 1983009808
    %v7397 = vunpack.c.0.s8 %v7396
    %v7398 = vlaneseq
    %v7399 = vshrl.u32 %v7398, 7
    %v7400 = vsub.s32 %v7397, %v7399
    %v7401 = vrot.slane %v7280, %v7400
    %v7403 = vunpack.c.l.s4 1983009808
    %v7404 = vunpack.c.0.s8 %v7403
    %v7405 = vlaneseq
    %v7406 = vshrl.u32 %v7405, 7
    %v7407 = vsub.s32 %v7404, %v7406
    %v7408 = vrot.slane %v7394, %v7407
    %v7409 = vcombine.high %v7401, %v7401
    %v7410 = vcombine.high %v7408, %v7408
    %v7411 = vcombine.high %v7283, %v7283
    %v7413 = vunpack.c.l.s4 1983009808
    %v7414 = vunpack.c.0.s8 %v7413
    %v7415 = vlaneseq
    %v7416 = vshrl.u32 %v7415, 7
    %v7417 = vsub.s32 %v7414, %v7416
    %v7418 = vrot.slane %v7283, %v7417
    %v7420 = vunpack.c.l.s4 1983009808
    %v7421 = vunpack.c.0.s8 %v7420
    %v7422 = vlaneseq
    %v7423 = vshrl.u32 %v7422, 7
    %v7424 = vsub.s32 %v7421, %v7423
    %v7425 = vrot.slane %v7411, %v7424
    %v7426 = vcombine.high %v7418, %v7418
    %v7427 = vcombine.high %v7425, %v7425
    %v7460 = vsel %vm4992, %v7299, -inf
    %v7461 = vrot.slane %v7460, 4
    %v7462 = vmax.f32 %v7460, %v7461
    %v7463 = vrot.slane %v7462, 2
    %v7464 = vmax.f32 %v7462, %v7463
    %v7465 = vrot.slane %v7464, 1
    %v7466 = vmax.f32 %v7464, %v7465
    %v7467 = vsel %vm4992, %v7307, -inf
    %v7468 = vrot.slane %v7467, 4
    %v7469 = vmax.f32 %v7467, %v7468
    %v7470 = vrot.slane %v7469, 2
    %v7471 = vmax.f32 %v7469, %v7470
    %v7472 = vrot.slane %v7471, 1
    %v7473 = vmax.f32 %v7471, %v7472
    %v7474 = vsel %vm4992, %v7306, -inf
    %v7475 = vrot.slane %v7474, 4
    %v7476 = vmax.f32 %v7474, %v7475
    %v7477 = vrot.slane %v7476, 2
    %v7478 = vmax.f32 %v7476, %v7477
    %v7479 = vrot.slane %v7478, 1
    %v7480 = vmax.f32 %v7478, %v7479
    %v7481 = vsel %vm4992, %v7308, -inf
    %v7482 = vrot.slane %v7481, 4
    %v7483 = vmax.f32 %v7481, %v7482
    %v7484 = vrot.slane %v7483, 2
    %v7485 = vmax.f32 %v7483, %v7484
    %v7486 = vrot.slane %v7485, 1
    %v7487 = vmax.f32 %v7485, %v7486
    %v7488 = vsel %vm4992, %v7316, -inf
    %v7489 = vrot.slane %v7488, 4
    %v7490 = vmax.f32 %v7488, %v7489
    %v7491 = vrot.slane %v7490, 2
    %v7492 = vmax.f32 %v7490, %v7491
    %v7493 = vrot.slane %v7492, 1
    %v7494 = vmax.f32 %v7492, %v7493
    %v7495 = vsel %vm4992, %v7324, -inf
    %v7496 = vrot.slane %v7495, 4
    %v7497 = vmax.f32 %v7495, %v7496
    %v7498 = vrot.slane %v7497, 2
    %v7499 = vmax.f32 %v7497, %v7498
    %v7500 = vrot.slane %v7499, 1
    %v7501 = vmax.f32 %v7499, %v7500
    %v7502 = vsel %vm4992, %v7323, -inf
    %v7503 = vrot.slane %v7502, 4
    %v7504 = vmax.f32 %v7502, %v7503
    %v7505 = vrot.slane %v7504, 2
    %v7506 = vmax.f32 %v7504, %v7505
    %v7507 = vrot.slane %v7506, 1
    %v7508 = vmax.f32 %v7506, %v7507
    %v7509 = vsel %vm4992, %v7325, -inf
    %v7510 = vrot.slane %v7509, 4
    %v7511 = vmax.f32 %v7509, %v7510
    %v7512 = vrot.slane %v7511, 2
    %v7513 = vmax.f32 %v7511, %v7512
    %v7514 = vrot.slane %v7513, 1
    %v7515 = vmax.f32 %v7513, %v7514
    %v7516 = vsel %vm4992, %v7333, -inf
    %v7517 = vrot.slane %v7516, 4
    %v7518 = vmax.f32 %v7516, %v7517
    %v7519 = vrot.slane %v7518, 2
    %v7520 = vmax.f32 %v7518, %v7519
    %v7521 = vrot.slane %v7520, 1
    %v7522 = vmax.f32 %v7520, %v7521
    %v7523 = vsel %vm4992, %v7341, -inf
    %v7524 = vrot.slane %v7523, 4
    %v7525 = vmax.f32 %v7523, %v7524
    %v7526 = vrot.slane %v7525, 2
    %v7527 = vmax.f32 %v7525, %v7526
    %v7528 = vrot.slane %v7527, 1
    %v7529 = vmax.f32 %v7527, %v7528
    %v7530 = vsel %vm4992, %v7340, -inf
    %v7531 = vrot.slane %v7530, 4
    %v7532 = vmax.f32 %v7530, %v7531
    %v7533 = vrot.slane %v7532, 2
    %v7534 = vmax.f32 %v7532, %v7533
    %v7535 = vrot.slane %v7534, 1
    %v7536 = vmax.f32 %v7534, %v7535
    %v7537 = vsel %vm4992, %v7342, -inf
    %v7538 = vrot.slane %v7537, 4
    %v7539 = vmax.f32 %v7537, %v7538
    %v7540 = vrot.slane %v7539, 2
    %v7541 = vmax.f32 %v7539, %v7540
    %v7542 = vrot.slane %v7541, 1
    %v7543 = vmax.f32 %v7541, %v7542
    %v7544 = vsel %vm4992, %v7350, -inf
    %v7545 = vrot.slane %v7544, 4
    %v7546 = vmax.f32 %v7544, %v7545
    %v7547 = vrot.slane %v7546, 2
    %v7548 = vmax.f32 %v7546, %v7547
    %v7549 = vrot.slane %v7548, 1
    %v7550 = vmax.f32 %v7548, %v7549
    %v7551 = vsel %vm4992, %v7358, -inf
    %v7552 = vrot.slane %v7551, 4
    %v7553 = vmax.f32 %v7551, %v7552
    %v7554 = vrot.slane %v7553, 2
    %v7555 = vmax.f32 %v7553, %v7554
    %v7556 = vrot.slane %v7555, 1
    %v7557 = vmax.f32 %v7555, %v7556
    %v7558 = vsel %vm4992, %v7357, -inf
    %v7559 = vrot.slane %v7558, 4
    %v7560 = vmax.f32 %v7558, %v7559
    %v7561 = vrot.slane %v7560, 2
    %v7562 = vmax.f32 %v7560, %v7561
    %v7563 = vrot.slane %v7562, 1
    %v7564 = vmax.f32 %v7562, %v7563
    %v7565 = vsel %vm4992, %v7359, -inf
    %v7566 = vrot.slane %v7565, 4
    %v7567 = vmax.f32 %v7565, %v7566
    %v7568 = vrot.slane %v7567, 2
    %v7569 = vmax.f32 %v7567, %v7568
    %v7570 = vrot.slane %v7569, 1
    %v7571 = vmax.f32 %v7569, %v7570
    %v7572 = vsel %vm4992, %v7367, -inf
    %v7573 = vrot.slane %v7572, 4
    %v7574 = vmax.f32 %v7572, %v7573
    %v7575 = vrot.slane %v7574, 2
    %v7576 = vmax.f32 %v7574, %v7575
    %v7577 = vrot.slane %v7576, 1
    %v7578 = vmax.f32 %v7576, %v7577
    %v7579 = vsel %vm4992, %v7375, -inf
    %v7580 = vrot.slane %v7579, 4
    %v7581 = vmax.f32 %v7579, %v7580
    %v7582 = vrot.slane %v7581, 2
    %v7583 = vmax.f32 %v7581, %v7582
    %v7584 = vrot.slane %v7583, 1
    %v7585 = vmax.f32 %v7583, %v7584
    %v7586 = vsel %vm4992, %v7374, -inf
    %v7587 = vrot.slane %v7586, 4
    %v7588 = vmax.f32 %v7586, %v7587
    %v7589 = vrot.slane %v7588, 2
    %v7590 = vmax.f32 %v7588, %v7589
    %v7591 = vrot.slane %v7590, 1
    %v7592 = vmax.f32 %v7590, %v7591
    %v7593 = vsel %vm4992, %v7376, -inf
    %v7594 = vrot.slane %v7593, 4
    %v7595 = vmax.f32 %v7593, %v7594
    %v7596 = vrot.slane %v7595, 2
    %v7597 = vmax.f32 %v7595, %v7596
    %v7598 = vrot.slane %v7597, 1
    %v7599 = vmax.f32 %v7597, %v7598
    %v7600 = vsel %vm4992, %v7384, -inf
    %v7601 = vrot.slane %v7600, 4
    %v7602 = vmax.f32 %v7600, %v7601
    %v7603 = vrot.slane %v7602, 2
    %v7604 = vmax.f32 %v7602, %v7603
    %v7605 = vrot.slane %v7604, 1
    %v7606 = vmax.f32 %v7604, %v7605
    %v7607 = vsel %vm4992, %v7392, -inf
    %v7608 = vrot.slane %v7607, 4
    %v7609 = vmax.f32 %v7607, %v7608
    %v7610 = vrot.slane %v7609, 2
    %v7611 = vmax.f32 %v7609, %v7610
    %v7612 = vrot.slane %v7611, 1
    %v7613 = vmax.f32 %v7611, %v7612
    %v7614 = vsel %vm4992, %v7391, -inf
    %v7615 = vrot.slane %v7614, 4
    %v7616 = vmax.f32 %v7614, %v7615
    %v7617 = vrot.slane %v7616, 2
    %v7618 = vmax.f32 %v7616, %v7617
    %v7619 = vrot.slane %v7618, 1
    %v7620 = vmax.f32 %v7618, %v7619
    %v7621 = vsel %vm4992, %v7393, -inf
    %v7622 = vrot.slane %v7621, 4
    %v7623 = vmax.f32 %v7621, %v7622
    %v7624 = vrot.slane %v7623, 2
    %v7625 = vmax.f32 %v7623, %v7624
    %v7626 = vrot.slane %v7625, 1
    %v7627 = vmax.f32 %v7625, %v7626
    %v7628 = vsel %vm4992, %v7401, -inf
    %v7629 = vrot.slane %v7628, 4
    %v7630 = vmax.f32 %v7628, %v7629
    %v7631 = vrot.slane %v7630, 2
    %v7632 = vmax.f32 %v7630, %v7631
    %v7633 = vrot.slane %v7632, 1
    %v7634 = vmax.f32 %v7632, %v7633
    %v7635 = vsel %vm4992, %v7409, -inf
    %v7636 = vrot.slane %v7635, 4
    %v7637 = vmax.f32 %v7635, %v7636
    %v7638 = vrot.slane %v7637, 2
    %v7639 = vmax.f32 %v7637, %v7638
    %v7640 = vrot.slane %v7639, 1
    %v7641 = vmax.f32 %v7639, %v7640
    %v7642 = vsel %vm4992, %v7408, -inf
    %v7643 = vrot.slane %v7642, 4
    %v7644 = vmax.f32 %v7642, %v7643
    %v7645 = vrot.slane %v7644, 2
    %v7646 = vmax.f32 %v7644, %v7645
    %v7647 = vrot.slane %v7646, 1
    %v7648 = vmax.f32 %v7646, %v7647
    %v7649 = vsel %vm4992, %v7410, -inf
    %v7650 = vrot.slane %v7649, 4
    %v7651 = vmax.f32 %v7649, %v7650
    %v7652 = vrot.slane %v7651, 2
    %v7653 = vmax.f32 %v7651, %v7652
    %v7654 = vrot.slane %v7653, 1
    %v7655 = vmax.f32 %v7653, %v7654
    %v7656 = vsel %vm4992, %v7418, -inf
    %v7657 = vrot.slane %v7656, 4
    %v7658 = vmax.f32 %v7656, %v7657
    %v7659 = vrot.slane %v7658, 2
    %v7660 = vmax.f32 %v7658, %v7659
    %v7661 = vrot.slane %v7660, 1
    %v7662 = vmax.f32 %v7660, %v7661
    %v7663 = vsel %vm4992, %v7426, -inf
    %v7664 = vrot.slane %v7663, 4
    %v7665 = vmax.f32 %v7663, %v7664
    %v7666 = vrot.slane %v7665, 2
    %v7667 = vmax.f32 %v7665, %v7666
    %v7668 = vrot.slane %v7667, 1
    %v7669 = vmax.f32 %v7667, %v7668
    %v7670 = vsel %vm4992, %v7425, -inf
    %v7671 = vrot.slane %v7670, 4
    %v7672 = vmax.f32 %v7670, %v7671
    %v7673 = vrot.slane %v7672, 2
    %v7674 = vmax.f32 %v7672, %v7673
    %v7675 = vrot.slane %v7674, 1
    %v7676 = vmax.f32 %v7674, %v7675
    %v7677 = vsel %vm4992, %v7427, -inf
    %v7678 = vrot.slane %v7677, 4
    %v7679 = vmax.f32 %v7677, %v7678
    %v7680 = vrot.slane %v7679, 2
    %v7681 = vmax.f32 %v7679, %v7680
    %v7682 = vrot.slane %v7681, 1
    %v7683 = vmax.f32 %v7681, %v7682
    %v7716 = vsel %vm6057, %v7473, %v7466
    %v7717 = vsel %vm6059, %v7480, %v7716
    %v7718 = vsel %vm6061, %v7487, %v7717
    %v7719 = vsel %vm6057, %v7501, %v7494
    %v7720 = vsel %vm6059, %v7508, %v7719
    %v7721 = vsel %vm6061, %v7515, %v7720
    %v7722 = vsel %vm6057, %v7529, %v7522
    %v7723 = vsel %vm6059, %v7536, %v7722
    %v7724 = vsel %vm6061, %v7543, %v7723
    %v7725 = vsel %vm6057, %v7557, %v7550
    %v7726 = vsel %vm6059, %v7564, %v7725
    %v7727 = vsel %vm6061, %v7571, %v7726
    %v7728 = vsel %vm6057, %v7585, %v7578
    %v7729 = vsel %vm6059, %v7592, %v7728
    %v7730 = vsel %vm6061, %v7599, %v7729
    %v7731 = vsel %vm6057, %v7613, %v7606
    %v7732 = vsel %vm6059, %v7620, %v7731
    %v7733 = vsel %vm6061, %v7627, %v7732
    %v7734 = vsel %vm6057, %v7641, %v7634
    %v7735 = vsel %vm6059, %v7648, %v7734
    %v7736 = vsel %vm6061, %v7655, %v7735
    %v7737 = vsel %vm6057, %v7669, %v7662
    %v7738 = vsel %vm6059, %v7676, %v7737
    %v7739 = vsel %vm6061, %v7683, %v7738
    %vm7748 = vcmask 60416
    %7749 = vst.msk [vmem:[#allocation6] sm:$0xf] %vm7748, %v7718
    %7750 = vst.msk [vmem:[#allocation6 + $0x4] sm:$0xf] %vm7748, %v7721
    %7751 = vst.msk [vmem:[#allocation6 + $0x8] sm:$0xf] %vm7748, %v7724
    %7752 = vst.msk [vmem:[#allocation6 + $0xc] sm:$0xf] %vm7748, %v7727
    %7753 = vst.msk [vmem:[#allocation6 + $0x10] sm:$0xf] %vm7748, %v7730
    %7754 = vst.msk [vmem:[#allocation6 + $0x14] sm:$0xf] %vm7748, %v7733
    %7755 = vst.msk [vmem:[#allocation6 + $0x18] sm:$0xf] %vm7748, %v7736
    %7756 = vst.msk [vmem:[#allocation6 + $0x1c] sm:$0xf] %vm7748, %v7739
    // Predicated region
    $region22: #{tpu_custom_call.1} parent=1 // pred_check
      _
    $region23: #{tpu_custom_call.1} parent=1 // pred_check_branch
      %7758 = sbr.rel (0) target = $region25
    $region24: #{tpu_custom_call.1} parent=1 // pred_region
      %s7760 = ssub.s32 512, 512
      %7761 = vsyncadd [#allocation7], %s7760
      %s7762 = sshll.u32 [#allocation6], 4
      %s7763 = int_to_ptr.vmem [resolvable:$true] %s7762
      %7768 = dma.vmem_to_hbm [thread:$0]  %s7763, 512, %s5, [#allocation7], 64, 64, 4
    $region25: #{tpu_custom_call.1} parent=1 // pred_fallthru
      _
    // Predicated region
    $region26: #{tpu_custom_call.1} parent=1 // pred_check
      _
    $region27: #{tpu_custom_call.1} parent=1 // pred_check_branch
      %7770 = sbr.rel (0) target = $region29
    $region28: #{tpu_custom_call.1} parent=1 // pred_region
      %7771 = dma.done [#allocation7], 512
    $region29: #{tpu_custom_call.1} parent=1 // pred_fallthru
      _
    %7772 = vsyncpa [#allocation7], 1

</llo_original>
